<compile_context>
chip_gen: v6e
topology: v6e:2x2x1
jax: 0.10.0
libtpu: 0.0.40
codegen_flags: <defaults>
</compile_context>

<pallas_src>
import numpy as np
import jax
import jax.numpy as jnp
from jax.experimental import pallas as pl
from jax.experimental.pallas import tpu as pltpu

# ---------------- model dims (small, consistent with the module) ----------------
HID = 32          # emb_dim = enc_hid_dim = dec_hid_dim  (HID_DIM)
INPUT_DIM = 50    # en vocab
OUTPUT_DIM = 64   # zh vocab (trg_vocab_size)
PAD_IDX = 1
S_LEN = 8         # src length
T_LEN = 6         # trg length (max_len)
BATCH = 2

V_PAD = 128       # output vocab padded to a full lane width
F32 = jnp.float32


def _const_map(ndim):
    zeros = (0,) * ndim
    return lambda t: zeros


# ============================ encoder kernel ============================
# grid = (2,): one grid step per GRU direction (fwd / bwd), "parallel" so v7x can
# shard the two directions across its two TensorCores.  The time recurrence is a
# fully unrolled in-kernel loop over the whole VMEM-resident emb_src block.

def _enc_dir_kernel(emb_ref, wi_ref, wh_ref, bi_ref, bhn_ref, out_ref):
    S, B, E = emb_ref.shape
    H = wh_ref.shape[1]
    d = pl.program_id(0)
    is_fwd = d == 0

    wi = wi_ref[0]            # [E, 3H]
    wh = wh_ref[0]            # [H, 3H]
    bi = bi_ref[0]            # [1, 3H]
    bhn = bhn_ref[0]          # [1, H]

    # input-gate preactivations for ALL time steps in one matmul (off the serial chain)
    emb = emb_ref[...]                                                   # [S, B, E]
    gi_all = jnp.dot(emb.reshape(S * B, E), wi,
                     preferred_element_type=F32) + bi                    # [S*B, 3H]

    h = jnp.zeros((B, H), F32)
    hs = []
    for t in range(S):
        # source position processed at step t: t (fwd) or S-1-t (bwd); static slices + select
        gi = jnp.where(is_fwd,
                       gi_all[t * B:(t + 1) * B],
                       gi_all[(S - 1 - t) * B:(S - t) * B])              # [B, 3H]
        gh = jnp.dot(h, wh, preferred_element_type=F32)                  # [B, 3H]
        rz = jax.nn.sigmoid(gi[:, :2 * H] + gh[:, :2 * H])               # merged r/z sigmoid
        r, z = rz[:, :H], rz[:, H:]
        n = jnp.tanh(gi[:, 2 * H:] + r * (gh[:, 2 * H:] + bhn))
        h = (1.0 - z) * n + z * h
        hs.append(h)

    # write hidden states in source-position order (static stores, scalar select)
    for p in range(S):
        out_ref[0, p] = jnp.where(is_fwd, hs[p], hs[S - 1 - p])


def encoder_bigru(emb_src, pf, pb):
    """emb_src: [S, B, E] -> (out_f [S,B,H], out_b [S,B,H]).
    Final hiddens are out_f[-1] and out_b[0]."""
    S, B, E = emb_src.shape
    H = pf['wh'].shape[0]
    wi_st = jnp.stack([pf['wi'], pb['wi']])      # [2, E, 3H]
    wh_st = jnp.stack([pf['wh'], pb['wh']])      # [2, H, 3H]
    bi_st = jnp.stack([pf['bi'], pb['bi']])      # [2, 1, 3H]
    bhn_st = jnp.stack([pf['bhn'], pb['bhn']])   # [2, 1, H]

    out = pl.pallas_call(
        _enc_dir_kernel,
        grid=(2,),
        in_specs=[pl.BlockSpec((S, B, E), lambda d: (0, 0, 0)),
                  pl.BlockSpec((1, E, 3 * H), lambda d: (d, 0, 0)),
                  pl.BlockSpec((1, H, 3 * H), lambda d: (d, 0, 0)),
                  pl.BlockSpec((1, 1, 3 * H), lambda d: (d, 0, 0)),
                  pl.BlockSpec((1, 1, H), lambda d: (d, 0, 0))],
        out_specs=pl.BlockSpec((1, S, B, H), lambda d: (d, 0, 0, 0)),
        out_shape=jax.ShapeDtypeStruct((2, S, B, H), F32),
        compiler_params=pltpu.CompilerParams(dimension_semantics=("parallel",)),
    )(emb_src, wi_st, wh_st, bi_st, bhn_st)
    return out[0], out[1]


# ============================ fused decoder kernel ============================
# Single grid step.  Prologue computes hidden0 (encoder fc) and the attention encoder
# projection in-kernel; then a fully unrolled loop over the T-1 decode steps does
# attention + context + GRU cell (fused input matmul) + fused output projection +
# argmax feedback + embedding gather.  All outputs are written back to HBM once.

def _decoder_kernel(emb0_ref, hf_ref, hb_ref, enc_ref, mask_ref,
                    wfc_ref, bfc_ref,
                    wah_ref, we_ref, ab_ref, v_ref,
                    wi_ref, wh_ref, bi_ref, bhn_ref,
                    wo_ref, bo_ref, etab_ref,
                    logits_ref, attn_ref):
    B, E = emb0_ref.shape
    H = wah_ref.shape[0]
    S = mask_ref.shape[1]
    n_steps, _, VP = logits_ref.shape

    enc = enc_ref[...]                        # [B, S, 2H]
    mask = mask_ref[...]                      # [B, S]
    v = v_ref[...]                            # [1, H]
    wah = wah_ref[...]
    wi = wi_ref[...]                          # [E+2H, 3H]  (fused [wi_e; wi_c])
    wh = wh_ref[...]
    bi = bi_ref[...]
    bhn = bhn_ref[...]
    wo = wo_ref[...]                          # [H+2H+E, VP] (fused [wo_h; wo_c; wo_e])
    bo = bo_ref[...]
    etab = etab_ref[...]                      # [VP, E]

    # ---- prologue: encoder fc + attention encoder projection (fused into the kernel) ----
    hcat = jnp.concatenate([hf_ref[...], hb_ref[...]], axis=1)                     # [B, 2H]
    hidden = jnp.tanh(jnp.dot(hcat, wfc_ref[...], preferred_element_type=F32)
                      + bfc_ref[...])                                              # [B, H]
    enc_proj = (jnp.dot(enc.reshape(B * S, 2 * H), we_ref[...],
                        preferred_element_type=F32)
                + ab_ref[...]).reshape(B, S, H)                                    # [B, S, H]
    emb = emb0_ref[...]                                                            # [B, E]
    lane = jax.lax.broadcasted_iota(jnp.int32, (B, VP), 1).astype(F32)             # hoisted

    for t in range(n_steps):
        # ---- additive attention (masked_fill on NON-pad positions, per original torch) ----
        hid_part = jnp.dot(hidden, wah, preferred_element_type=F32)                # [B, H]
        energy = jnp.tanh(hid_part[:, None, :] + enc_proj)                         # [B, S, H]
        scores = jnp.sum(energy * v[None, :, :], axis=-1)                          # [B, S]
        scores = jnp.where(mask > 0.5, jnp.float32(-1e6), scores)
        scores = scores - jnp.max(scores, axis=1, keepdims=True)
        ex = jnp.exp(scores)
        a = ex * pl.reciprocal(jnp.sum(ex, axis=1, keepdims=True), approx=True)    # [B, S]
        attn_ref[t] = a

        # ---- context = bmm(attn, encoder_outputs) ----
        ctx = jnp.sum(a[:, :, None] * enc, axis=1)                                 # [B, 2H]

        # ---- GRU cell: fused [emb, ctx] input matmul, merged r/z sigmoid ----
        xin = jnp.concatenate([emb, ctx], axis=1)                                  # [B, E+2H]
        gi = jnp.dot(xin, wi, preferred_element_type=F32) + bi                     # [B, 3H]
        gh = jnp.dot(hidden, wh, preferred_element_type=F32)                       # [B, 3H]
        rz = jax.nn.sigmoid(gi[:, :2 * H] + gh[:, :2 * H])
        r, z = rz[:, :H], rz[:, H:]
        n = jnp.tanh(gi[:, 2 * H:] + r * (gh[:, 2 * H:] + bhn))
        hidden = (1.0 - z) * n + z * hidden

        # ---- fused output projection: one [B,128]x[128,VP] matmul ----
        feats = jnp.concatenate([hidden, ctx, emb], axis=1)                        # [B, H+2H+E]
        logits = jnp.dot(feats, wo, preferred_element_type=F32) + bo               # [B, VP]
        logits_ref[t] = logits

        # ---- argmax feedback + embedding gather via one-hot matmul ----
        # padded lanes carry a -1e9 bias so they can never win the argmax
        m = jnp.max(logits, axis=1, keepdims=True)
        cand = jnp.where(logits >= m, lane, jnp.float32(VP))
        idx = jnp.min(cand, axis=1, keepdims=True)                                 # first max
        onehot = (lane == idx).astype(F32)                                         # [B, VP]
        emb = jnp.dot(onehot, etab, preferred_element_type=F32)                    # [B, E]


def decoder_loop(emb0, hf, hb, enc_bse, mask, enc_p, ap, dec_k, n_steps):
    B, S, _ = enc_bse.shape
    VP = dec_k['wo'].shape[1]
    args = (emb0, hf, hb, enc_bse, mask,
            enc_p['w_fc'], enc_p['b_fc'],
            ap['w_h'], ap['w_e'], ap['b'], ap['v'],
            dec_k['wi'], dec_k['wh'], dec_k['bi'], dec_k['bhn'],
            dec_k['wo'], dec_k['bo'], dec_k['emb_pad'])
    in_specs = [pl.BlockSpec(a.shape, _const_map(a.ndim)) for a in args]

    logits_all, attn_all = pl.pallas_call(
        _decoder_kernel,
        grid=(1,),
        in_specs=in_specs,
        out_specs=(pl.BlockSpec((n_steps, B, VP), lambda i: (0, 0, 0)),
                   pl.BlockSpec((n_steps, B, S), lambda i: (0, 0, 0))),
        out_shape=(jax.ShapeDtypeStruct((n_steps, B, VP), F32),
                   jax.ShapeDtypeStruct((n_steps, B, S), F32)),
        compiler_params=pltpu.CompilerParams(dimension_semantics=("arbitrary",)),
    )(*args)
    return logits_all, attn_all


# ============================ model (glue) ============================

def _prep_decoder_params(dec):
    V = dec['wo_h'].shape[1]
    padc = lambda w: jnp.pad(w, ((0, 0), (0, V_PAD - V)))
    return dict(
        wi=jnp.concatenate([dec['wi_e'], dec['wi_c']], axis=0),                # [E+2H, 3H]
        wh=dec['wh'], bi=dec['bi'], bhn=dec['bhn'],
        wo=jnp.concatenate([padc(dec['wo_h']), padc(dec['wo_c']),
                            padc(dec['wo_e'])], axis=0),                       # [H+2H+E, VP]
        bo=jnp.pad(dec['bo'], ((0, 0), (0, V_PAD - V)), constant_values=-1e9),
        emb_pad=jnp.pad(dec['emb'], ((0, V_PAD - V), (0, 0))),
    )


def seq2seq_forward(src, src_len, trg, params):
    """src: [S, B] int32, trg: [T, B] int32 -> (outputs [T, B, V], attn [B, T-1, S])."""
    del src_len  # only used for packing in the original dataloader
    S, B = src.shape
    T = trg.shape[0]
    enc, dec, ap = params['enc'], params['dec'], params['attn']

    # pad the batch (sublane) dim to a multiple of 8; extra rows are discarded
    BP = max(8, ((B + 7) // 8) * 8)
    pad = BP - B
    src_p = jnp.pad(src, ((0, 0), (0, pad)), constant_values=PAD_IDX)
    trg0_p = jnp.pad(trg[0, :], ((0, pad),), constant_values=2)

    # -------- encoder (one pallas_call, two direction-parallel grid steps) --------
    emb_src = enc['emb'][src_p]                                   # [S, BP, E]  (dropout = identity)
    out_f, out_b = encoder_bigru(emb_src, enc['gru_f'], enc['gru_b'])
    hf, hb = out_f[S - 1], out_b[0]
    enc_bse = jnp.transpose(jnp.concatenate([out_f, out_b], axis=2), (1, 0, 2))  # [BP, S, 2H]

    # exactly create_mask(): (src != pad).permute(1, 0)
    mask = (src_p != PAD_IDX).astype(F32).T                       # [BP, S]

    # -------- decoder (fc + attention projection + entire time loop in one kernel) --------
    dec_k = _prep_decoder_params(dec)
    emb0 = dec['emb'][trg0_p]                                     # [BP, E] (dropout = identity)
    logits_all, attn_all = decoder_loop(emb0, hf, hb, enc_bse, mask, enc, ap, dec_k, T - 1)

    logits_all = logits_all[:, :B, :OUTPUT_DIM]                   # [T-1, B, V]
    attn_all = attn_all[:, :B, :]                                 # [T-1, B, S]
    outputs = jnp.concatenate([jnp.zeros((1, B, OUTPUT_DIM), F32), logits_all], axis=0)
    attn_scores = jnp.transpose(attn_all, (1, 0, 2))              # [B, T-1, S]
    return outputs, attn_scores


# ============================ params ============================

def _u(key, shape, scale=0.1):
    return jax.random.uniform(key, shape, F32, -scale, scale)


def make_params(key):
    ks = iter(jax.random.split(key, 40))
    E = H = HID

    def gru_params(in_dim):
        # packed gate weights, gate order (r, z, n)
        return dict(wi=_u(next(ks), (in_dim, 3 * H)),
                    wh=_u(next(ks), (H, 3 * H)),
                    bi=_u(next(ks), (1, 3 * H)),
                    bhn=_u(next(ks), (1, H)))

    enc = dict(emb=_u(next(ks), (INPUT_DIM, E), 0.5),
               gru_f=gru_params(E), gru_b=gru_params(E),
               w_fc=_u(next(ks), (2 * H, H)), b_fc=_u(next(ks), (1, H)))

    attn = dict(w_h=_u(next(ks), (H, H)), w_e=_u(next(ks), (2 * H, H)),
                b=_u(next(ks), (1, H)), v=_u(next(ks), (1, H), 0.5))

    dec = dict(emb=_u(next(ks), (OUTPUT_DIM, E), 0.5),
               wi_e=_u(next(ks), (E, 3 * H)), wi_c=_u(next(ks), (2 * H, 3 * H)),
               wh=_u(next(ks), (H, 3 * H)),
               bi=_u(next(ks), (1, 3 * H)), bhn=_u(next(ks), (1, H)),
               wo_h=_u(next(ks), (H, OUTPUT_DIM)), wo_c=_u(next(ks), (2 * H, OUTPUT_DIM)),
               wo_e=_u(next(ks), (E, OUTPUT_DIM)), bo=_u(next(ks), (1, OUTPUT_DIM)))
    return dict(enc=enc, dec=dec, attn=attn)


# ============================ pure-JAX references (sanity checks) ============================

def ref_gru_seq(x, p, reverse):
    H = p['wh'].shape[0]

    def cell(h, xt):
        gi = xt @ p['wi'] + p['bi']
        gh = h @ p['wh']
        r = jax.nn.sigmoid(gi[:, :H] + gh[:, :H])
        z = jax.nn.sigmoid(gi[:, H:2 * H] + gh[:, H:2 * H])
        n = jnp.tanh(gi[:, 2 * H:] + r * (gh[:, 2 * H:] + p['bhn']))
        hn = (1 - z) * n + z * h
        return hn, hn

    h0 = jnp.zeros((x.shape[1], H), F32)
    xs = x[::-1] if reverse else x
    hf, outs = jax.lax.scan(cell, h0, xs)
    return (outs[::-1] if reverse else outs), hf


def ref_decoder_step(emb, h, enc_out_bse, mask, dec, ap):
    H = HID
    hid_part = h @ ap['w_h']
    enc_part = jnp.einsum('bse,eh->bsh', enc_out_bse, ap['w_e']) + ap['b']
    energy = jnp.tanh(hid_part[:, None, :] + enc_part)
    scores = jnp.einsum('bsh,h->bs', energy, ap['v'][0])
    scores = jnp.where(mask > 0.5, -1e6, scores)
    a = jax.nn.softmax(scores, axis=1)
    ctx = jnp.einsum('bs,bse->be', a, enc_out_bse)
    gi = emb @ dec['wi_e'] + ctx @ dec['wi_c'] + dec['bi']
    gh = h @ dec['wh']
    r = jax.nn.sigmoid(gi[:, :H] + gh[:, :H])
    z = jax.nn.sigmoid(gi[:, H:2 * H] + gh[:, H:2 * H])
    n = jnp.tanh(gi[:, 2 * H:] + r * (gh[:, 2 * H:] + dec['bhn']))
    hnew = (1 - z) * n + z * h
    logits = hnew @ dec['wo_h'] + ctx @ dec['wo_c'] + emb @ dec['wo_e'] + dec['bo']
    return logits, hnew, a


def _close(a, b, tol=2e-2):
    a = np.asarray(a); b = np.asarray(b)
    assert np.allclose(a, b, atol=tol, rtol=tol), float(np.max(np.abs(a - b)))


# ============================ main ============================

if __name__ == "__main__":
    key = jax.random.PRNGKey(0)
    kp, ks, kt = jax.random.split(key, 3)
    params = make_params(kp)

    src = jax.random.randint(ks, (S_LEN, BATCH), 2, INPUT_DIM, dtype=jnp.int32)
    src = src.at[S_LEN - 2:, 1].set(PAD_IDX)            # a little padding in batch item 1
    src_len = jnp.array([S_LEN, S_LEN - 2], jnp.int32)
    trg = jax.random.randint(kt, (T_LEN, BATCH), 2, OUTPUT_DIM, dtype=jnp.int32)
    trg = trg.at[0, :].set(2)                           # <sos>

    fwd = jax.jit(seq2seq_forward)
    outputs, attn = fwd(src, src_len, trg, params)
    outputs, attn = jax.block_until_ready((outputs, attn))

    # ---------------- correctness checks vs pure-JAX references ----------------
    enc, dec, ap = params['enc'], params['dec'], params['attn']

    # encoder (kernel runs on the batch-padded input; compare the real rows)
    src_p = jnp.pad(src, ((0, 0), (0, 8 - BATCH)), constant_values=PAD_IDX)
    of_k, ob_k = encoder_bigru(enc['emb'][src_p], enc['gru_f'], enc['gru_b'])
    of_k, ob_k = of_k[:, :BATCH], ob_k[:, :BATCH]
    emb_src = enc['emb'][src]
    of_r, hf_r = ref_gru_seq(emb_src, enc['gru_f'], reverse=False)
    ob_r, hb_r = ref_gru_seq(emb_src, enc['gru_b'], reverse=True)
    _close(of_k, of_r); _close(ob_k, ob_r)
    _close(of_k[-1], hf_r); _close(ob_k[0], hb_r)

    # decoder: re-run the per-step reference, forced with the kernel's own argmax feedback
    enc_out_r = jnp.concatenate([of_r, ob_r], axis=2)
    hidden = jnp.tanh(jnp.concatenate([hf_r, hb_r], axis=1) @ enc['w_fc'] + enc['b_fc'])
    enc_out_bse = jnp.transpose(enc_out_r, (1, 0, 2))
    mask = (src != PAD_IDX).astype(F32).T
    inp = trg[0, :]
    for t in range(1, T_LEN):
        embt = dec['emb'][inp]
        l_r, hidden, a_r = ref_decoder_step(embt, hidden, enc_out_bse, mask, dec, ap)
        _close(outputs[t], l_r)
        _close(attn[:, t - 1, :], a_r)
        inp = jnp.argmax(outputs[t], axis=1)            # same feedback the kernel used

    assert outputs.shape == (T_LEN, BATCH, OUTPUT_DIM)
    assert attn.shape == (BATCH, T_LEN - 1, S_LEN)
    assert bool(jnp.all(jnp.isfinite(outputs))) and bool(jnp.all(jnp.isfinite(attn)))
    print("KERNEL_OK")
</pallas_src>

<mosaic_0001>
module attributes {stable_mosaic.version = 11 : i64} {
  func.func @_enc_dir_kernel(%arg0: i32, %arg1: memref<8x8x32xf32, #tpu.memory_space<vmem>>, %arg2: memref<1x32x96xf32, #tpu.memory_space<vmem>>, %arg3: memref<1x32x96xf32, #tpu.memory_space<vmem>>, %arg4: memref<1x1x96xf32, #tpu.memory_space<vmem>>, %arg5: memref<1x1x32xf32, #tpu.memory_space<vmem>>, %arg6: memref<1x8x8x32xf32, #tpu.memory_space<vmem>>) attributes {dimension_semantics = [#tpu.dimension_semantics<parallel>], iteration_bounds = array<i64: 2>, scalar_prefetch = 0 : i64, scratch_operands = 0 : i64, tpu.core_type = #tpu.core_type<tc>, window_params = [{pipeline_mode = #tpu.pipeline_mode<synchronous>, transform_indices = @transform_0, window_bounds = array<i64: 8, 8, 32>}, {transform_indices = @transform_1, window_bounds = array<i64: 1, 32, 96>}, {transform_indices = @transform_2, window_bounds = array<i64: 1, 32, 96>}, {transform_indices = @transform_3, window_bounds = array<i64: 1, 1, 96>}, {transform_indices = @transform_4, window_bounds = array<i64: 1, 1, 32>}, {transform_indices = @transform_5, window_bounds = array<i64: 1, 8, 8, 32>}]} {
    %c0_i32 = arith.constant 0 : i32
    %0 = arith.cmpi eq, %arg0, %c0_i32 : i32
    %c0 = arith.constant 0 : index
    %c0_0 = arith.constant 0 : index
    %c0_1 = arith.constant 0 : index
    %1 = vector.load %arg2[%c0, %c0_0, %c0_1] : memref<1x32x96xf32, #tpu.memory_space<vmem>>, vector<1x32x96xf32>
    %2 = vector.shape_cast %1 : vector<1x32x96xf32> to vector<32x96xf32>
    %c0_2 = arith.constant 0 : index
    %c0_3 = arith.constant 0 : index
    %c0_4 = arith.constant 0 : index
    %3 = vector.load %arg3[%c0_2, %c0_3, %c0_4] : memref<1x32x96xf32, #tpu.memory_space<vmem>>, vector<1x32x96xf32>
    %4 = vector.shape_cast %3 : vector<1x32x96xf32> to vector<32x96xf32>
    %c0_5 = arith.constant 0 : index
    %c0_6 = arith.constant 0 : index
    %c0_7 = arith.constant 0 : index
    %5 = vector.load %arg4[%c0_5, %c0_6, %c0_7] : memref<1x1x96xf32, #tpu.memory_space<vmem>>, vector<1x1x96xf32>
    %6 = vector.shape_cast %5 : vector<1x1x96xf32> to vector<1x96xf32>
    %c0_8 = arith.constant 0 : index
    %c0_9 = arith.constant 0 : index
    %c0_10 = arith.constant 0 : index
    %7 = vector.load %arg5[%c0_8, %c0_9, %c0_10] : memref<1x1x32xf32, #tpu.memory_space<vmem>>, vector<1x1x32xf32>
    %8 = vector.shape_cast %7 : vector<1x1x32xf32> to vector<1x32xf32>
    %c0_11 = arith.constant 0 : index
    %c0_12 = arith.constant 0 : index
    %c0_13 = arith.constant 0 : index
    %9 = vector.load %arg1[%c0_11, %c0_12, %c0_13] : memref<8x8x32xf32, #tpu.memory_space<vmem>>, vector<8x8x32xf32>
    %10 = vector.shape_cast %9 : vector<8x8x32xf32> to vector<64x32xf32>
    %cst = arith.constant dense<0.000000e+00> : vector<64x96xf32>
    %11 = tpu.matmul %10, %2, %cst {dimension_numbers = #tpu.dot_dimension_numbers<[1], [0], [0], [1], [0, 0, 1, 1], [], []>} : vector<64x32xf32>, vector<32x96xf32>, vector<64x96xf32> -> vector<64x96xf32>
    %12 = vector.broadcast %6 : vector<1x96xf32> to vector<64x96xf32>
    %13 = arith.addf %11, %12 : vector<64x96xf32>
    %cst_14 = arith.constant 0.000000e+00 : f32
    %14 = vector.broadcast %cst_14 : f32 to vector<8x32xf32>
    %15 = vector.extract_strided_slice %13 {offsets = [0, 0], sizes = [8, 96], strides = [1, 1]} : vector<64x96xf32> to vector<8x96xf32>
    %16 = vector.extract_strided_slice %13 {offsets = [56, 0], sizes = [8, 96], strides = [1, 1]} : vector<64x96xf32> to vector<8x96xf32>
    %17 = arith.select %0, %15, %16 : vector<8x96xf32>
    %cst_15 = arith.constant dense<0.000000e+00> : vector<8x96xf32>
    %18 = tpu.matmul %14, %4, %cst_15 {dimension_numbers = #tpu.dot_dimension_numbers<[1], [0], [0], [1], [0, 0, 1, 1], [], []>} : vector<8x32xf32>, vector<32x96xf32>, vector<8x96xf32> -> vector<8x96xf32>
    %19 = vector.extract_strided_slice %17 {offsets = [0, 0], sizes = [8, 64], strides = [1, 1]} : vector<8x96xf32> to vector<8x64xf32>
    %20 = vector.extract_strided_slice %18 {offsets = [0, 0], sizes = [8, 64], strides = [1, 1]} : vector<8x96xf32> to vector<8x64xf32>
    %21 = arith.addf %19, %20 : vector<8x64xf32>
    %22 = arith.negf %21 : vector<8x64xf32>
    %23 = math.exp %22 : vector<8x64xf32>
    %cst_16 = arith.constant 1.000000e+00 : f32
    %24 = vector.broadcast %cst_16 : f32 to vector<8x64xf32>
    %25 = arith.addf %24, %23 : vector<8x64xf32>
    %26 = arith.divf %24, %25 : vector<8x64xf32>
    %27 = vector.extract_strided_slice %26 {offsets = [0, 0], sizes = [8, 32], strides = [1, 1]} : vector<8x64xf32> to vector<8x32xf32>
    %28 = vector.extract_strided_slice %26 {offsets = [0, 32], sizes = [8, 32], strides = [1, 1]} : vector<8x64xf32> to vector<8x32xf32>
    %29 = vector.extract_strided_slice %17 {offsets = [0, 64], sizes = [8, 32], strides = [1, 1]} : vector<8x96xf32> to vector<8x32xf32>
    %30 = vector.extract_strided_slice %18 {offsets = [0, 64], sizes = [8, 32], strides = [1, 1]} : vector<8x96xf32> to vector<8x32xf32>
    %31 = vector.broadcast %8 : vector<1x32xf32> to vector<8x32xf32>
    %32 = arith.addf %30, %31 : vector<8x32xf32>
    %33 = arith.mulf %27, %32 : vector<8x32xf32>
    %34 = arith.addf %29, %33 : vector<8x32xf32>
    %35 = math.tanh %34 : vector<8x32xf32>
    %cst_17 = arith.constant 1.000000e+00 : f32
    %36 = vector.broadcast %cst_17 : f32 to vector<8x32xf32>
    %37 = arith.subf %36, %28 : vector<8x32xf32>
    %38 = arith.mulf %37, %35 : vector<8x32xf32>
    %39 = arith.mulf %28, %14 : vector<8x32xf32>
    %40 = arith.addf %38, %39 : vector<8x32xf32>
    %41 = vector.extract_strided_slice %13 {offsets = [8, 0], sizes = [8, 96], strides = [1, 1]} : vector<64x96xf32> to vector<8x96xf32>
    %42 = vector.extract_strided_slice %13 {offsets = [48, 0], sizes = [8, 96], strides = [1, 1]} : vector<64x96xf32> to vector<8x96xf32>
    %43 = arith.select %0, %41, %42 : vector<8x96xf32>
    %cst_18 = arith.constant dense<0.000000e+00> : vector<8x96xf32>
    %44 = tpu.matmul %40, %4, %cst_18 {dimension_numbers = #tpu.dot_dimension_numbers<[1], [0], [0], [1], [0, 0, 1, 1], [], []>} : vector<8x32xf32>, vector<32x96xf32>, vector<8x96xf32> -> vector<8x96xf32>
    %45 = vector.extract_strided_slice %43 {offsets = [0, 0], sizes = [8, 64], strides = [1, 1]} : vector<8x96xf32> to vector<8x64xf32>
    %46 = vector.extract_strided_slice %44 {offsets = [0, 0], sizes = [8, 64], strides = [1, 1]} : vector<8x96xf32> to vector<8x64xf32>
    %47 = arith.addf %45, %46 : vector<8x64xf32>
    %48 = arith.negf %47 : vector<8x64xf32>
    %49 = math.exp %48 : vector<8x64xf32>
    %cst_19 = arith.constant 1.000000e+00 : f32
    %50 = vector.broadcast %cst_19 : f32 to vector<8x64xf32>
    %51 = arith.addf %50, %49 : vector<8x64xf32>
    %52 = arith.divf %50, %51 : vector<8x64xf32>
    %53 = vector.extract_strided_slice %52 {offsets = [0, 0], sizes = [8, 32], strides = [1, 1]} : vector<8x64xf32> to vector<8x32xf32>
    %54 = vector.extract_strided_slice %52 {offsets = [0, 32], sizes = [8, 32], strides = [1, 1]} : vector<8x64xf32> to vector<8x32xf32>
    %55 = vector.extract_strided_slice %43 {offsets = [0, 64], sizes = [8, 32], strides = [1, 1]} : vector<8x96xf32> to vector<8x32xf32>
    %56 = vector.extract_strided_slice %44 {offsets = [0, 64], sizes = [8, 32], strides = [1, 1]} : vector<8x96xf32> to vector<8x32xf32>
    %57 = vector.broadcast %8 : vector<1x32xf32> to vector<8x32xf32>
    %58 = arith.addf %56, %57 : vector<8x32xf32>
    %59 = arith.mulf %53, %58 : vector<8x32xf32>
    %60 = arith.addf %55, %59 : vector<8x32xf32>
    %61 = math.tanh %60 : vector<8x32xf32>
    %cst_20 = arith.constant 1.000000e+00 : f32
    %62 = vector.broadcast %cst_20 : f32 to vector<8x32xf32>
    %63 = arith.subf %62, %54 : vector<8x32xf32>
    %64 = arith.mulf %63, %61 : vector<8x32xf32>
    %65 = arith.mulf %54, %40 : vector<8x32xf32>
    %66 = arith.addf %64, %65 : vector<8x32xf32>
    %67 = vector.extract_strided_slice %13 {offsets = [16, 0], sizes = [8, 96], strides = [1, 1]} : vector<64x96xf32> to vector<8x96xf32>
    %68 = vector.extract_strided_slice %13 {offsets = [40, 0], sizes = [8, 96], strides = [1, 1]} : vector<64x96xf32> to vector<8x96xf32>
    %69 = arith.select %0, %67, %68 : vector<8x96xf32>
    %cst_21 = arith.constant dense<0.000000e+00> : vector<8x96xf32>
    %70 = tpu.matmul %66, %4, %cst_21 {dimension_numbers = #tpu.dot_dimension_numbers<[1], [0], [0], [1], [0, 0, 1, 1], [], []>} : vector<8x32xf32>, vector<32x96xf32>, vector<8x96xf32> -> vector<8x96xf32>
    %71 = vector.extract_strided_slice %69 {offsets = [0, 0], sizes = [8, 64], strides = [1, 1]} : vector<8x96xf32> to vector<8x64xf32>
    %72 = vector.extract_strided_slice %70 {offsets = [0, 0], sizes = [8, 64], strides = [1, 1]} : vector<8x96xf32> to vector<8x64xf32>
    %73 = arith.addf %71, %72 : vector<8x64xf32>
    %74 = arith.negf %73 : vector<8x64xf32>
    %75 = math.exp %74 : vector<8x64xf32>
    %cst_22 = arith.constant 1.000000e+00 : f32
    %76 = vector.broadcast %cst_22 : f32 to vector<8x64xf32>
    %77 = arith.addf %76, %75 : vector<8x64xf32>
    %78 = arith.divf %76, %77 : vector<8x64xf32>
    %79 = vector.extract_strided_slice %78 {offsets = [0, 0], sizes = [8, 32], strides = [1, 1]} : vector<8x64xf32> to vector<8x32xf32>
    %80 = vector.extract_strided_slice %78 {offsets = [0, 32], sizes = [8, 32], strides = [1, 1]} : vector<8x64xf32> to vector<8x32xf32>
    %81 = vector.extract_strided_slice %69 {offsets = [0, 64], sizes = [8, 32], strides = [1, 1]} : vector<8x96xf32> to vector<8x32xf32>
    %82 = vector.extract_strided_slice %70 {offsets = [0, 64], sizes = [8, 32], strides = [1, 1]} : vector<8x96xf32> to vector<8x32xf32>
    %83 = vector.broadcast %8 : vector<1x32xf32> to vector<8x32xf32>
    %84 = arith.addf %82, %83 : vector<8x32xf32>
    %85 = arith.mulf %79, %84 : vector<8x32xf32>
    %86 = arith.addf %81, %85 : vector<8x32xf32>
    %87 = math.tanh %86 : vector<8x32xf32>
    %cst_23 = arith.constant 1.000000e+00 : f32
    %88 = vector.broadcast %cst_23 : f32 to vector<8x32xf32>
    %89 = arith.subf %88, %80 : vector<8x32xf32>
    %90 = arith.mulf %89, %87 : vector<8x32xf32>
    %91 = arith.mulf %80, %66 : vector<8x32xf32>
    %92 = arith.addf %90, %91 : vector<8x32xf32>
    %93 = vector.extract_strided_slice %13 {offsets = [24, 0], sizes = [8, 96], strides = [1, 1]} : vector<64x96xf32> to vector<8x96xf32>
    %94 = vector.extract_strided_slice %13 {offsets = [32, 0], sizes = [8, 96], strides = [1, 1]} : vector<64x96xf32> to vector<8x96xf32>
    %95 = arith.select %0, %93, %94 : vector<8x96xf32>
    %cst_24 = arith.constant dense<0.000000e+00> : vector<8x96xf32>
    %96 = tpu.matmul %92, %4, %cst_24 {dimension_numbers = #tpu.dot_dimension_numbers<[1], [0], [0], [1], [0, 0, 1, 1], [], []>} : vector<8x32xf32>, vector<32x96xf32>, vector<8x96xf32> -> vector<8x96xf32>
    %97 = vector.extract_strided_slice %95 {offsets = [0, 0], sizes = [8, 64], strides = [1, 1]} : vector<8x96xf32> to vector<8x64xf32>
    %98 = vector.extract_strided_slice %96 {offsets = [0, 0], sizes = [8, 64], strides = [1, 1]} : vector<8x96xf32> to vector<8x64xf32>
    %99 = arith.addf %97, %98 : vector<8x64xf32>
    %100 = arith.negf %99 : vector<8x64xf32>
    %101 = math.exp %100 : vector<8x64xf32>
    %cst_25 = arith.constant 1.000000e+00 : f32
    %102 = vector.broadcast %cst_25 : f32 to vector<8x64xf32>
    %103 = arith.addf %102, %101 : vector<8x64xf32>
    %104 = arith.divf %102, %103 : vector<8x64xf32>
    %105 = vector.extract_strided_slice %104 {offsets = [0, 0], sizes = [8, 32], strides = [1, 1]} : vector<8x64xf32> to vector<8x32xf32>
    %106 = vector.extract_strided_slice %104 {offsets = [0, 32], sizes = [8, 32], strides = [1, 1]} : vector<8x64xf32> to vector<8x32xf32>
    %107 = vector.extract_strided_slice %95 {offsets = [0, 64], sizes = [8, 32], strides = [1, 1]} : vector<8x96xf32> to vector<8x32xf32>
    %108 = vector.extract_strided_slice %96 {offsets = [0, 64], sizes = [8, 32], strides = [1, 1]} : vector<8x96xf32> to vector<8x32xf32>
    %109 = vector.broadcast %8 : vector<1x32xf32> to vector<8x32xf32>
    %110 = arith.addf %108, %109 : vector<8x32xf32>
    %111 = arith.mulf %105, %110 : vector<8x32xf32>
    %112 = arith.addf %107, %111 : vector<8x32xf32>
    %113 = math.tanh %112 : vector<8x32xf32>
    %cst_26 = arith.constant 1.000000e+00 : f32
    %114 = vector.broadcast %cst_26 : f32 to vector<8x32xf32>
    %115 = arith.subf %114, %106 : vector<8x32xf32>
    %116 = arith.mulf %115, %113 : vector<8x32xf32>
    %117 = arith.mulf %106, %92 : vector<8x32xf32>
    %118 = arith.addf %116, %117 : vector<8x32xf32>
    %119 = vector.extract_strided_slice %13 {offsets = [32, 0], sizes = [8, 96], strides = [1, 1]} : vector<64x96xf32> to vector<8x96xf32>
    %120 = vector.extract_strided_slice %13 {offsets = [24, 0], sizes = [8, 96], strides = [1, 1]} : vector<64x96xf32> to vector<8x96xf32>
    %121 = arith.select %0, %119, %120 : vector<8x96xf32>
    %cst_27 = arith.constant dense<0.000000e+00> : vector<8x96xf32>
    %122 = tpu.matmul %118, %4, %cst_27 {dimension_numbers = #tpu.dot_dimension_numbers<[1], [0], [0], [1], [0, 0, 1, 1], [], []>} : vector<8x32xf32>, vector<32x96xf32>, vector<8x96xf32> -> vector<8x96xf32>
    %123 = vector.extract_strided_slice %121 {offsets = [0, 0], sizes = [8, 64], strides = [1, 1]} : vector<8x96xf32> to vector<8x64xf32>
    %124 = vector.extract_strided_slice %122 {offsets = [0, 0], sizes = [8, 64], strides = [1, 1]} : vector<8x96xf32> to vector<8x64xf32>
    %125 = arith.addf %123, %124 : vector<8x64xf32>
    %126 = arith.negf %125 : vector<8x64xf32>
    %127 = math.exp %126 : vector<8x64xf32>
    %cst_28 = arith.constant 1.000000e+00 : f32
    %128 = vector.broadcast %cst_28 : f32 to vector<8x64xf32>
    %129 = arith.addf %128, %127 : vector<8x64xf32>
    %130 = arith.divf %128, %129 : vector<8x64xf32>
    %131 = vector.extract_strided_slice %130 {offsets = [0, 0], sizes = [8, 32], strides = [1, 1]} : vector<8x64xf32> to vector<8x32xf32>
    %132 = vector.extract_strided_slice %130 {offsets = [0, 32], sizes = [8, 32], strides = [1, 1]} : vector<8x64xf32> to vector<8x32xf32>
    %133 = vector.extract_strided_slice %121 {offsets = [0, 64], sizes = [8, 32], strides = [1, 1]} : vector<8x96xf32> to vector<8x32xf32>
    %134 = vector.extract_strided_slice %122 {offsets = [0, 64], sizes = [8, 32], strides = [1, 1]} : vector<8x96xf32> to vector<8x32xf32>
    %135 = vector.broadcast %8 : vector<1x32xf32> to vector<8x32xf32>
    %136 = arith.addf %134, %135 : vector<8x32xf32>
    %137 = arith.mulf %131, %136 : vector<8x32xf32>
    %138 = arith.addf %133, %137 : vector<8x32xf32>
    %139 = math.tanh %138 : vector<8x32xf32>
    %cst_29 = arith.constant 1.000000e+00 : f32
    %140 = vector.broadcast %cst_29 : f32 to vector<8x32xf32>
    %141 = arith.subf %140, %132 : vector<8x32xf32>
    %142 = arith.mulf %141, %139 : vector<8x32xf32>
    %143 = arith.mulf %132, %118 : vector<8x32xf32>
    %144 = arith.addf %142, %143 : vector<8x32xf32>
    %145 = vector.extract_strided_slice %13 {offsets = [40, 0], sizes = [8, 96], strides = [1, 1]} : vector<64x96xf32> to vector<8x96xf32>
    %146 = vector.extract_strided_slice %13 {offsets = [16, 0], sizes = [8, 96], strides = [1, 1]} : vector<64x96xf32> to vector<8x96xf32>
    %147 = arith.select %0, %145, %146 : vector<8x96xf32>
    %cst_30 = arith.constant dense<0.000000e+00> : vector<8x96xf32>
    %148 = tpu.matmul %144, %4, %cst_30 {dimension_numbers = #tpu.dot_dimension_numbers<[1], [0], [0], [1], [0, 0, 1, 1], [], []>} : vector<8x32xf32>, vector<32x96xf32>, vector<8x96xf32> -> vector<8x96xf32>
    %149 = vector.extract_strided_slice %147 {offsets = [0, 0], sizes = [8, 64], strides = [1, 1]} : vector<8x96xf32> to vector<8x64xf32>
    %150 = vector.extract_strided_slice %148 {offsets = [0, 0], sizes = [8, 64], strides = [1, 1]} : vector<8x96xf32> to vector<8x64xf32>
    %151 = arith.addf %149, %150 : vector<8x64xf32>
    %152 = arith.negf %151 : vector<8x64xf32>
    %153 = math.exp %152 : vector<8x64xf32>
    %cst_31 = arith.constant 1.000000e+00 : f32
    %154 = vector.broadcast %cst_31 : f32 to vector<8x64xf32>
    %155 = arith.addf %154, %153 : vector<8x64xf32>
    %156 = arith.divf %154, %155 : vector<8x64xf32>
    %157 = vector.extract_strided_slice %156 {offsets = [0, 0], sizes = [8, 32], strides = [1, 1]} : vector<8x64xf32> to vector<8x32xf32>
    %158 = vector.extract_strided_slice %156 {offsets = [0, 32], sizes = [8, 32], strides = [1, 1]} : vector<8x64xf32> to vector<8x32xf32>
    %159 = vector.extract_strided_slice %147 {offsets = [0, 64], sizes = [8, 32], strides = [1, 1]} : vector<8x96xf32> to vector<8x32xf32>
    %160 = vector.extract_strided_slice %148 {offsets = [0, 64], sizes = [8, 32], strides = [1, 1]} : vector<8x96xf32> to vector<8x32xf32>
    %161 = vector.broadcast %8 : vector<1x32xf32> to vector<8x32xf32>
    %162 = arith.addf %160, %161 : vector<8x32xf32>
    %163 = arith.mulf %157, %162 : vector<8x32xf32>
    %164 = arith.addf %159, %163 : vector<8x32xf32>
    %165 = math.tanh %164 : vector<8x32xf32>
    %cst_32 = arith.constant 1.000000e+00 : f32
    %166 = vector.broadcast %cst_32 : f32 to vector<8x32xf32>
    %167 = arith.subf %166, %158 : vector<8x32xf32>
    %168 = arith.mulf %167, %165 : vector<8x32xf32>
    %169 = arith.mulf %158, %144 : vector<8x32xf32>
    %170 = arith.addf %168, %169 : vector<8x32xf32>
    %171 = vector.extract_strided_slice %13 {offsets = [48, 0], sizes = [8, 96], strides = [1, 1]} : vector<64x96xf32> to vector<8x96xf32>
    %172 = vector.extract_strided_slice %13 {offsets = [8, 0], sizes = [8, 96], strides = [1, 1]} : vector<64x96xf32> to vector<8x96xf32>
    %173 = arith.select %0, %171, %172 : vector<8x96xf32>
    %cst_33 = arith.constant dense<0.000000e+00> : vector<8x96xf32>
    %174 = tpu.matmul %170, %4, %cst_33 {dimension_numbers = #tpu.dot_dimension_numbers<[1], [0], [0], [1], [0, 0, 1, 1], [], []>} : vector<8x32xf32>, vector<32x96xf32>, vector<8x96xf32> -> vector<8x96xf32>
    %175 = vector.extract_strided_slice %173 {offsets = [0, 0], sizes = [8, 64], strides = [1, 1]} : vector<8x96xf32> to vector<8x64xf32>
    %176 = vector.extract_strided_slice %174 {offsets = [0, 0], sizes = [8, 64], strides = [1, 1]} : vector<8x96xf32> to vector<8x64xf32>
    %177 = arith.addf %175, %176 : vector<8x64xf32>
    %178 = arith.negf %177 : vector<8x64xf32>
    %179 = math.exp %178 : vector<8x64xf32>
    %cst_34 = arith.constant 1.000000e+00 : f32
    %180 = vector.broadcast %cst_34 : f32 to vector<8x64xf32>
    %181 = arith.addf %180, %179 : vector<8x64xf32>
    %182 = arith.divf %180, %181 : vector<8x64xf32>
    %183 = vector.extract_strided_slice %182 {offsets = [0, 0], sizes = [8, 32], strides = [1, 1]} : vector<8x64xf32> to vector<8x32xf32>
    %184 = vector.extract_strided_slice %182 {offsets = [0, 32], sizes = [8, 32], strides = [1, 1]} : vector<8x64xf32> to vector<8x32xf32>
    %185 = vector.extract_strided_slice %173 {offsets = [0, 64], sizes = [8, 32], strides = [1, 1]} : vector<8x96xf32> to vector<8x32xf32>
    %186 = vector.extract_strided_slice %174 {offsets = [0, 64], sizes = [8, 32], strides = [1, 1]} : vector<8x96xf32> to vector<8x32xf32>
    %187 = vector.broadcast %8 : vector<1x32xf32> to vector<8x32xf32>
    %188 = arith.addf %186, %187 : vector<8x32xf32>
    %189 = arith.mulf %183, %188 : vector<8x32xf32>
    %190 = arith.addf %185, %189 : vector<8x32xf32>
    %191 = math.tanh %190 : vector<8x32xf32>
    %cst_35 = arith.constant 1.000000e+00 : f32
    %192 = vector.broadcast %cst_35 : f32 to vector<8x32xf32>
    %193 = arith.subf %192, %184 : vector<8x32xf32>
    %194 = arith.mulf %193, %191 : vector<8x32xf32>
    %195 = arith.mulf %184, %170 : vector<8x32xf32>
    %196 = arith.addf %194, %195 : vector<8x32xf32>
    %197 = vector.extract_strided_slice %13 {offsets = [56, 0], sizes = [8, 96], strides = [1, 1]} : vector<64x96xf32> to vector<8x96xf32>
    %198 = vector.extract_strided_slice %13 {offsets = [0, 0], sizes = [8, 96], strides = [1, 1]} : vector<64x96xf32> to vector<8x96xf32>
    %199 = arith.select %0, %197, %198 : vector<8x96xf32>
    %cst_36 = arith.constant dense<0.000000e+00> : vector<8x96xf32>
    %200 = tpu.matmul %196, %4, %cst_36 {dimension_numbers = #tpu.dot_dimension_numbers<[1], [0], [0], [1], [0, 0, 1, 1], [], []>} : vector<8x32xf32>, vector<32x96xf32>, vector<8x96xf32> -> vector<8x96xf32>
    %201 = vector.extract_strided_slice %199 {offsets = [0, 0], sizes = [8, 64], strides = [1, 1]} : vector<8x96xf32> to vector<8x64xf32>
    %202 = vector.extract_strided_slice %200 {offsets = [0, 0], sizes = [8, 64], strides = [1, 1]} : vector<8x96xf32> to vector<8x64xf32>
    %203 = arith.addf %201, %202 : vector<8x64xf32>
    %204 = arith.negf %203 : vector<8x64xf32>
    %205 = math.exp %204 : vector<8x64xf32>
    %cst_37 = arith.constant 1.000000e+00 : f32
    %206 = vector.broadcast %cst_37 : f32 to vector<8x64xf32>
    %207 = arith.addf %206, %205 : vector<8x64xf32>
    %208 = arith.divf %206, %207 : vector<8x64xf32>
    %209 = vector.extract_strided_slice %208 {offsets = [0, 0], sizes = [8, 32], strides = [1, 1]} : vector<8x64xf32> to vector<8x32xf32>
    %210 = vector.extract_strided_slice %208 {offsets = [0, 32], sizes = [8, 32], strides = [1, 1]} : vector<8x64xf32> to vector<8x32xf32>
    %211 = vector.extract_strided_slice %199 {offsets = [0, 64], sizes = [8, 32], strides = [1, 1]} : vector<8x96xf32> to vector<8x32xf32>
    %212 = vector.extract_strided_slice %200 {offsets = [0, 64], sizes = [8, 32], strides = [1, 1]} : vector<8x96xf32> to vector<8x32xf32>
    %213 = vector.broadcast %8 : vector<1x32xf32> to vector<8x32xf32>
    %214 = arith.addf %212, %213 : vector<8x32xf32>
    %215 = arith.mulf %209, %214 : vector<8x32xf32>
    %216 = arith.addf %211, %215 : vector<8x32xf32>
    %217 = math.tanh %216 : vector<8x32xf32>
    %cst_38 = arith.constant 1.000000e+00 : f32
    %218 = vector.broadcast %cst_38 : f32 to vector<8x32xf32>
    %219 = arith.subf %218, %210 : vector<8x32xf32>
    %220 = arith.mulf %219, %217 : vector<8x32xf32>
    %221 = arith.mulf %210, %196 : vector<8x32xf32>
    %222 = arith.addf %220, %221 : vector<8x32xf32>
    %223 = arith.select %0, %40, %222 : vector<8x32xf32>
    %c0_39 = arith.constant 0 : index
    %c0_40 = arith.constant 0 : index
    %c0_41 = arith.constant 0 : index
    %c0_42 = arith.constant 0 : index
    %224 = vector.load %arg6[%c0_39, %c0_40, %c0_41, %c0_42] : memref<1x8x8x32xf32, #tpu.memory_space<vmem>>, vector<1x1x8x32xf32>
    %225 = vector.shape_cast %224 : vector<1x1x8x32xf32> to vector<8x32xf32>
    %226 = vector.shape_cast %223 : vector<8x32xf32> to vector<1x1x8x32xf32>
    tpu.vector_store %arg6[%c0_39, %c0_40, %c0_41, %c0_42], %226 {strides = array<i32>} : memref<1x8x8x32xf32, #tpu.memory_space<vmem>>, vector<1x1x8x32xf32>,
    %227 = arith.select %0, %66, %196 : vector<8x32xf32>
    %c0_43 = arith.constant 0 : index
    %c1 = arith.constant 1 : index
    %c0_44 = arith.constant 0 : index
    %c0_45 = arith.constant 0 : index
    %228 = vector.load %arg6[%c0_43, %c1, %c0_44, %c0_45] : memref<1x8x8x32xf32, #tpu.memory_space<vmem>>, vector<1x1x8x32xf32>
    %229 = vector.shape_cast %228 : vector<1x1x8x32xf32> to vector<8x32xf32>
    %230 = vector.shape_cast %227 : vector<8x32xf32> to vector<1x1x8x32xf32>
    tpu.vector_store %arg6[%c0_43, %c1, %c0_44, %c0_45], %230 {strides = array<i32>} : memref<1x8x8x32xf32, #tpu.memory_space<vmem>>, vector<1x1x8x32xf32>,
    %231 = arith.select %0, %92, %170 : vector<8x32xf32>
    %c0_46 = arith.constant 0 : index
    %c2 = arith.constant 2 : index
    %c0_47 = arith.constant 0 : index
    %c0_48 = arith.constant 0 : index
    %232 = vector.load %arg6[%c0_46, %c2, %c0_47, %c0_48] : memref<1x8x8x32xf32, #tpu.memory_space<vmem>>, vector<1x1x8x32xf32>
    %233 = vector.shape_cast %232 : vector<1x1x8x32xf32> to vector<8x32xf32>
    %234 = vector.shape_cast %231 : vector<8x32xf32> to vector<1x1x8x32xf32>
    tpu.vector_store %arg6[%c0_46, %c2, %c0_47, %c0_48], %234 {strides = array<i32>} : memref<1x8x8x32xf32, #tpu.memory_space<vmem>>, vector<1x1x8x32xf32>,
    %235 = arith.select %0, %118, %144 : vector<8x32xf32>
    %c0_49 = arith.constant 0 : index
    %c3 = arith.constant 3 : index
    %c0_50 = arith.constant 0 : index
    %c0_51 = arith.constant 0 : index
    %236 = vector.load %arg6[%c0_49, %c3, %c0_50, %c0_51] : memref<1x8x8x32xf32, #tpu.memory_space<vmem>>, vector<1x1x8x32xf32>
    %237 = vector.shape_cast %236 : vector<1x1x8x32xf32> to vector<8x32xf32>
    %238 = vector.shape_cast %235 : vector<8x32xf32> to vector<1x1x8x32xf32>
    tpu.vector_store %arg6[%c0_49, %c3, %c0_50, %c0_51], %238 {strides = array<i32>} : memref<1x8x8x32xf32, #tpu.memory_space<vmem>>, vector<1x1x8x32xf32>,
    %239 = arith.select %0, %144, %118 : vector<8x32xf32>
    %c0_52 = arith.constant 0 : index
    %c4 = arith.constant 4 : index
    %c0_53 = arith.constant 0 : index
    %c0_54 = arith.constant 0 : index
    %240 = vector.load %arg6[%c0_52, %c4, %c0_53, %c0_54] : memref<1x8x8x32xf32, #tpu.memory_space<vmem>>, vector<1x1x8x32xf32>
    %241 = vector.shape_cast %240 : vector<1x1x8x32xf32> to vector<8x32xf32>
    %242 = vector.shape_cast %239 : vector<8x32xf32> to vector<1x1x8x32xf32>
    tpu.vector_store %arg6[%c0_52, %c4, %c0_53, %c0_54], %242 {strides = array<i32>} : memref<1x8x8x32xf32, #tpu.memory_space<vmem>>, vector<1x1x8x32xf32>,
    %243 = arith.select %0, %170, %92 : vector<8x32xf32>
    %c0_55 = arith.constant 0 : index
    %c5 = arith.constant 5 : index
    %c0_56 = arith.constant 0 : index
    %c0_57 = arith.constant 0 : index
    %244 = vector.load %arg6[%c0_55, %c5, %c0_56, %c0_57] : memref<1x8x8x32xf32, #tpu.memory_space<vmem>>, vector<1x1x8x32xf32>
    %245 = vector.shape_cast %244 : vector<1x1x8x32xf32> to vector<8x32xf32>
    %246 = vector.shape_cast %243 : vector<8x32xf32> to vector<1x1x8x32xf32>
    tpu.vector_store %arg6[%c0_55, %c5, %c0_56, %c0_57], %246 {strides = array<i32>} : memref<1x8x8x32xf32, #tpu.memory_space<vmem>>, vector<1x1x8x32xf32>,
    %247 = arith.select %0, %196, %66 : vector<8x32xf32>
    %c0_58 = arith.constant 0 : index
    %c6 = arith.constant 6 : index
    %c0_59 = arith.constant 0 : index
    %c0_60 = arith.constant 0 : index
    %248 = vector.load %arg6[%c0_58, %c6, %c0_59, %c0_60] : memref<1x8x8x32xf32, #tpu.memory_space<vmem>>, vector<1x1x8x32xf32>
    %249 = vector.shape_cast %248 : vector<1x1x8x32xf32> to vector<8x32xf32>
    %250 = vector.shape_cast %247 : vector<8x32xf32> to vector<1x1x8x32xf32>
    tpu.vector_store %arg6[%c0_58, %c6, %c0_59, %c0_60], %250 {strides = array<i32>} : memref<1x8x8x32xf32, #tpu.memory_space<vmem>>, vector<1x1x8x32xf32>,
    %251 = arith.select %0, %222, %40 : vector<8x32xf32>
    %c0_61 = arith.constant 0 : index
    %c7 = arith.constant 7 : index
    %c0_62 = arith.constant 0 : index
    %c0_63 = arith.constant 0 : index
    %252 = vector.load %arg6[%c0_61, %c7, %c0_62, %c0_63] : memref<1x8x8x32xf32, #tpu.memory_space<vmem>>, vector<1x1x8x32xf32>
    %253 = vector.shape_cast %252 : vector<1x1x8x32xf32> to vector<8x32xf32>
    %254 = vector.shape_cast %251 : vector<8x32xf32> to vector<1x1x8x32xf32>
    tpu.vector_store %arg6[%c0_61, %c7, %c0_62, %c0_63], %254 {strides = array<i32>} : memref<1x8x8x32xf32, #tpu.memory_space<vmem>>, vector<1x1x8x32xf32>,
    return
  }
  func.func @transform_0(%arg0: i32) -> (i32, i32, i32) {
    %c0_i32 = arith.constant 0 : i32
    %c0_i32_0 = arith.constant 0 : i32
    %c0_i32_1 = arith.constant 0 : i32
    %c0_i32_2 = arith.constant 0 : i32
    return %c0_i32, %c0_i32_0, %c0_i32_1 : i32, i32, i32
  }
  func.func @transform_1(%arg0: i32) -> (i32, i32, i32) {
    %c0_i32 = arith.constant 0 : i32
    %c0_i32_0 = arith.constant 0 : i32
    %c0_i32_1 = arith.constant 0 : i32
    return %arg0, %c0_i32, %c0_i32_0 : i32, i32, i32
  }
  func.func @transform_2(%arg0: i32) -> (i32, i32, i32) {
    %c0_i32 = arith.constant 0 : i32
    %c0_i32_0 = arith.constant 0 : i32
    %c0_i32_1 = arith.constant 0 : i32
    return %arg0, %c0_i32, %c0_i32_0 : i32, i32, i32
  }
  func.func @transform_3(%arg0: i32) -> (i32, i32, i32) {
    %c0_i32 = arith.constant 0 : i32
    %c0_i32_0 = arith.constant 0 : i32
    %c0_i32_1 = arith.constant 0 : i32
    return %arg0, %c0_i32, %c0_i32_0 : i32, i32, i32
  }
  func.func @transform_4(%arg0: i32) -> (i32, i32, i32) {
    %c0_i32 = arith.constant 0 : i32
    %c0_i32_0 = arith.constant 0 : i32
    %c0_i32_1 = arith.constant 0 : i32
    return %arg0, %c0_i32, %c0_i32_0 : i32, i32, i32
  }
  func.func @transform_5(%arg0: i32) -> (i32, i32, i32, i32) {
    %c0_i32 = arith.constant 0 : i32
    %c0_i32_0 = arith.constant 0 : i32
    %c0_i32_1 = arith.constant 0 : i32
    %c0_i32_2 = arith.constant 0 : i32
    return %arg0, %c0_i32, %c0_i32_0, %c0_i32_1 : i32, i32, i32, i32
  }
}

module attributes {stable_mosaic.version = 11 : i64} {
  func.func @_decoder_kernel(%arg0: i32, %arg1: memref<8x32xf32, #tpu.memory_space<vmem>>, %arg2: memref<8x32xf32, #tpu.memory_space<vmem>>, %arg3: memref<8x32xf32, #tpu.memory_space<vmem>>, %arg4: memref<8x8x64xf32, #tpu.memory_space<vmem>>, %arg5: memref<8x8xf32, #tpu.memory_space<vmem>>, %arg6: memref<64x32xf32, #tpu.memory_space<vmem>>, %arg7: memref<1x32xf32, #tpu.memory_space<vmem>>, %arg8: memref<32x32xf32, #tpu.memory_space<vmem>>, %arg9: memref<64x32xf32, #tpu.memory_space<vmem>>, %arg10: memref<1x32xf32, #tpu.memory_space<vmem>>, %arg11: memref<1x32xf32, #tpu.memory_space<vmem>>, %arg12: memref<96x96xf32, #tpu.memory_space<vmem>>, %arg13: memref<32x96xf32, #tpu.memory_space<vmem>>, %arg14: memref<1x96xf32, #tpu.memory_space<vmem>>, %arg15: memref<1x32xf32, #tpu.memory_space<vmem>>, %arg16: memref<128x128xf32, #tpu.memory_space<vmem>>, %arg17: memref<1x128xf32, #tpu.memory_space<vmem>>, %arg18: memref<128x32xf32, #tpu.memory_space<vmem>>, %arg19: memref<5x8x128xf32, #tpu.memory_space<vmem>>, %arg20: memref<5x8x8xf32, #tpu.memory_space<vmem>>) attributes {dimension_semantics = [#tpu.dimension_semantics<arbitrary>], iteration_bounds = array<i64: 1>, scalar_prefetch = 0 : i64, scratch_operands = 0 : i64, tpu.core_type = #tpu.core_type<tc>, window_params = [{pipeline_mode = #tpu.pipeline_mode<synchronous>, transform_indices = @transform_0, window_bounds = array<i64: 8, 32>}, {pipeline_mode = #tpu.pipeline_mode<synchronous>, transform_indices = @transform_1, window_bounds = array<i64: 8, 32>}, {pipeline_mode = #tpu.pipeline_mode<synchronous>, transform_indices = @transform_2, window_bounds = array<i64: 8, 32>}, {pipeline_mode = #tpu.pipeline_mode<synchronous>, transform_indices = @transform_3, window_bounds = array<i64: 8, 8, 64>}, {pipeline_mode = #tpu.pipeline_mode<synchronous>, transform_indices = @transform_4, window_bounds = array<i64: 8, 8>}, {pipeline_mode = #tpu.pipeline_mode<synchronous>, transform_indices = @transform_5, window_bounds = array<i64: 64, 32>}, {pipeline_mode = #tpu.pipeline_mode<synchronous>, transform_indices = @transform_6, window_bounds = array<i64: 1, 32>}, {pipeline_mode = #tpu.pipeline_mode<synchronous>, transform_indices = @transform_7, window_bounds = array<i64: 32, 32>}, {pipeline_mode = #tpu.pipeline_mode<synchronous>, transform_indices = @transform_8, window_bounds = array<i64: 64, 32>}, {pipeline_mode = #tpu.pipeline_mode<synchronous>, transform_indices = @transform_9, window_bounds = array<i64: 1, 32>}, {pipeline_mode = #tpu.pipeline_mode<synchronous>, transform_indices = @transform_10, window_bounds = array<i64: 1, 32>}, {pipeline_mode = #tpu.pipeline_mode<synchronous>, transform_indices = @transform_11, window_bounds = array<i64: 96, 96>}, {pipeline_mode = #tpu.pipeline_mode<synchronous>, transform_indices = @transform_12, window_bounds = array<i64: 32, 96>}, {pipeline_mode = #tpu.pipeline_mode<synchronous>, transform_indices = @transform_13, window_bounds = array<i64: 1, 96>}, {pipeline_mode = #tpu.pipeline_mode<synchronous>, transform_indices = @transform_14, window_bounds = array<i64: 1, 32>}, {pipeline_mode = #tpu.pipeline_mode<synchronous>, transform_indices = @transform_15, window_bounds = array<i64: 128, 128>}, {pipeline_mode = #tpu.pipeline_mode<synchronous>, transform_indices = @transform_16, window_bounds = array<i64: 1, 128>}, {pipeline_mode = #tpu.pipeline_mode<synchronous>, transform_indices = @transform_17, window_bounds = array<i64: 128, 32>}, {pipeline_mode = #tpu.pipeline_mode<synchronous>, transform_indices = @transform_18, window_bounds = array<i64: 5, 8, 128>}, {pipeline_mode = #tpu.pipeline_mode<synchronous>, transform_indices = @transform_19, window_bounds = array<i64: 5, 8, 8>}]} {
    %c0 = arith.constant 0 : index
    %c0_0 = arith.constant 0 : index
    %c0_1 = arith.constant 0 : index
    %0 = vector.load %arg4[%c0, %c0_0, %c0_1] : memref<8x8x64xf32, #tpu.memory_space<vmem>>, vector<8x8x64xf32>
    %c0_2 = arith.constant 0 : index
    %c0_3 = arith.constant 0 : index
    %1 = vector.load %arg5[%c0_2, %c0_3] : memref<8x8xf32, #tpu.memory_space<vmem>>, vector<8x8xf32>
    %c0_4 = arith.constant 0 : index
    %c0_5 = arith.constant 0 : index
    %2 = vector.load %arg11[%c0_4, %c0_5] : memref<1x32xf32, #tpu.memory_space<vmem>>, vector<1x32xf32>
    %c0_6 = arith.constant 0 : index
    %c0_7 = arith.constant 0 : index
    %3 = vector.load %arg8[%c0_6, %c0_7] : memref<32x32xf32, #tpu.memory_space<vmem>>, vector<32x32xf32>
    %c0_8 = arith.constant 0 : index
    %c0_9 = arith.constant 0 : index
    %4 = vector.load %arg12[%c0_8, %c0_9] : memref<96x96xf32, #tpu.memory_space<vmem>>, vector<96x96xf32>
    %c0_10 = arith.constant 0 : index
    %c0_11 = arith.constant 0 : index
    %5 = vector.load %arg13[%c0_10, %c0_11] : memref<32x96xf32, #tpu.memory_space<vmem>>, vector<32x96xf32>
    %c0_12 = arith.constant 0 : index
    %c0_13 = arith.constant 0 : index
    %6 = vector.load %arg14[%c0_12, %c0_13] : memref<1x96xf32, #tpu.memory_space<vmem>>, vector<1x96xf32>
    %c0_14 = arith.constant 0 : index
    %c0_15 = arith.constant 0 : index
    %7 = vector.load %arg15[%c0_14, %c0_15] : memref<1x32xf32, #tpu.memory_space<vmem>>, vector<1x32xf32>
    %c0_16 = arith.constant 0 : index
    %c0_17 = arith.constant 0 : index
    %8 = vector.load %arg16[%c0_16, %c0_17] : memref<128x128xf32, #tpu.memory_space<vmem>>, vector<128x128xf32>
    %c0_18 = arith.constant 0 : index
    %c0_19 = arith.constant 0 : index
    %9 = vector.load %arg17[%c0_18, %c0_19] : memref<1x128xf32, #tpu.memory_space<vmem>>, vector<1x128xf32>
    %c0_20 = arith.constant 0 : index
    %c0_21 = arith.constant 0 : index
    %10 = vector.load %arg18[%c0_20, %c0_21] : memref<128x32xf32, #tpu.memory_space<vmem>>, vector<128x32xf32>
    %c0_22 = arith.constant 0 : index
    %c0_23 = arith.constant 0 : index
    %11 = vector.load %arg2[%c0_22, %c0_23] : memref<8x32xf32, #tpu.memory_space<vmem>>, vector<8x32xf32>
    %c0_24 = arith.constant 0 : index
    %c0_25 = arith.constant 0 : index
    %12 = vector.load %arg3[%c0_24, %c0_25] : memref<8x32xf32, #tpu.memory_space<vmem>>, vector<8x32xf32>
    %13 = tpu.concatenate %11, %12 in 1 : vector<8x32xf32>, vector<8x32xf32> -> vector<8x64xf32>
    %c0_26 = arith.constant 0 : index
    %c0_27 = arith.constant 0 : index
    %14 = vector.load %arg6[%c0_26, %c0_27] : memref<64x32xf32, #tpu.memory_space<vmem>>, vector<64x32xf32>
    %cst = arith.constant dense<0.000000e+00> : vector<8x32xf32>
    %15 = tpu.matmul %13, %14, %cst {dimension_numbers = #tpu.dot_dimension_numbers<[1], [0], [0], [1], [0, 0, 1, 1], [], []>} : vector<8x64xf32>, vector<64x32xf32>, vector<8x32xf32> -> vector<8x32xf32>
    %c0_28 = arith.constant 0 : index
    %c0_29 = arith.constant 0 : index
    %16 = vector.load %arg7[%c0_28, %c0_29] : memref<1x32xf32, #tpu.memory_space<vmem>>, vector<1x32xf32>
    %17 = vector.broadcast %16 : vector<1x32xf32> to vector<8x32xf32>
    %18 = arith.addf %15, %17 : vector<8x32xf32>
    %19 = math.tanh %18 : vector<8x32xf32>
    %20 = vector.shape_cast %0 : vector<8x8x64xf32> to vector<64x64xf32>
    %c0_30 = arith.constant 0 : index
    %c0_31 = arith.constant 0 : index
    %21 = vector.load %arg9[%c0_30, %c0_31] : memref<64x32xf32, #tpu.memory_space<vmem>>, vector<64x32xf32>
    %cst_32 = arith.constant dense<0.000000e+00> : vector<64x32xf32>
    %22 = tpu.matmul %20, %21, %cst_32 {dimension_numbers = #tpu.dot_dimension_numbers<[1], [0], [0], [1], [0, 0, 1, 1], [], []>} : vector<64x64xf32>, vector<64x32xf32>, vector<64x32xf32> -> vector<64x32xf32>
    %c0_33 = arith.constant 0 : index
    %c0_34 = arith.constant 0 : index
    %23 = vector.load %arg10[%c0_33, %c0_34] : memref<1x32xf32, #tpu.memory_space<vmem>>, vector<1x32xf32>
    %24 = vector.broadcast %23 : vector<1x32xf32> to vector<64x32xf32>
    %25 = arith.addf %22, %24 : vector<64x32xf32>
    %26 = vector.shape_cast %25 : vector<64x32xf32> to vector<8x8x32xf32>
    %c0_35 = arith.constant 0 : index
    %c0_36 = arith.constant 0 : index
    %27 = vector.load %arg1[%c0_35, %c0_36] : memref<8x32xf32, #tpu.memory_space<vmem>>, vector<8x32xf32>
    %28 = tpu.iota {dimensions = array<i32: 1>} : vector<8x128xi32>
    %29 = arith.sitofp %28 : vector<8x128xi32> to vector<8x128xf32>
    %cst_37 = arith.constant dense<0.000000e+00> : vector<8x32xf32>
    %30 = tpu.matmul %19, %3, %cst_37 {dimension_numbers = #tpu.dot_dimension_numbers<[1], [0], [0], [1], [0, 0, 1, 1], [], []>} : vector<8x32xf32>, vector<32x32xf32>, vector<8x32xf32> -> vector<8x32xf32>
    %31 = vector.shape_cast %30 : vector<8x32xf32> to vector<8x1x32xf32>
    %32 = vector.broadcast %31 : vector<8x1x32xf32> to vector<8x8x32xf32>
    %33 = arith.addf %32, %26 : vector<8x8x32xf32>
    %34 = math.tanh %33 : vector<8x8x32xf32>
    %35 = vector.shape_cast %2 : vector<1x32xf32> to vector<1x1x32xf32>
    %36 = vector.broadcast %35 : vector<1x1x32xf32> to vector<8x8x32xf32>
    %37 = arith.mulf %34, %36 : vector<8x8x32xf32>
    %cst_38 = arith.constant dense<0.000000e+00> : vector<8x8xf32>
    %38 = vector.multi_reduction <add>, %37, %cst_38 [2] : vector<8x8x32xf32> to vector<8x8xf32>
    %cst_39 = arith.constant 5.000000e-01 : f32
    %39 = vector.broadcast %cst_39 : f32 to vector<8x8xf32>
    %40 = arith.cmpf ogt, %1, %39 : vector<8x8xf32>
    %cst_40 = arith.constant -1.000000e+06 : f32
    %41 = vector.broadcast %cst_40 : f32 to vector<8x8xf32>
    %42 = arith.select %40, %41, %38 : vector<8x8xi1>, vector<8x8xf32>
    %cst_41 = arith.constant dense<0xFF800000> : vector<8xf32>
    %43 = vector.multi_reduction <maximumf>, %42, %cst_41 [1] : vector<8x8xf32> to vector<8xf32>
    %44 = vector.shape_cast %43 : vector<8xf32> to vector<8x1xf32>
    %45 = vector.broadcast %44 : vector<8x1xf32> to vector<8x8xf32>
    %46 = arith.subf %42, %45 : vector<8x8xf32>
    %47 = math.exp %46 : vector<8x8xf32>
    %cst_42 = arith.constant dense<0.000000e+00> : vector<8xf32>
    %48 = vector.multi_reduction <add>, %47, %cst_42 [1] : vector<8x8xf32> to vector<8xf32>
    %49 = vector.shape_cast %48 : vector<8xf32> to vector<8x1xf32>
    %50 = tpu.reciprocal %49 {approx = true} : vector<8x1xf32> -> vector<8x1xf32>
    %51 = vector.broadcast %50 : vector<8x1xf32> to vector<8x8xf32>
    %52 = arith.mulf %47, %51 : vector<8x8xf32>
    %c0_43 = arith.constant 0 : index
    %c0_44 = arith.constant 0 : index
    %c0_45 = arith.constant 0 : index
    %53 = vector.load %arg20[%c0_43, %c0_44, %c0_45] : memref<5x8x8xf32, #tpu.memory_space<vmem>>, vector<1x8x8xf32>
    %54 = vector.shape_cast %53 : vector<1x8x8xf32> to vector<8x8xf32>
    %55 = vector.shape_cast %52 : vector<8x8xf32> to vector<1x8x8xf32>
    tpu.vector_store %arg20[%c0_43, %c0_44, %c0_45], %55 {strides = array<i32>} : memref<5x8x8xf32, #tpu.memory_space<vmem>>, vector<1x8x8xf32>,
    %56 = vector.shape_cast %52 : vector<8x8xf32> to vector<8x8x1xf32>
    %57 = vector.broadcast %56 : vector<8x8x1xf32> to vector<8x8x64xf32>
    %58 = arith.mulf %57, %0 : vector<8x8x64xf32>
    %cst_46 = arith.constant dense<0.000000e+00> : vector<8x64xf32>
    %59 = vector.multi_reduction <add>, %58, %cst_46 [1] : vector<8x8x64xf32> to vector<8x64xf32>
    %60 = tpu.concatenate %27, %59 in 1 : vector<8x32xf32>, vector<8x64xf32> -> vector<8x96xf32>
    %cst_47 = arith.constant dense<0.000000e+00> : vector<8x96xf32>
    %61 = tpu.matmul %60, %4, %cst_47 {dimension_numbers = #tpu.dot_dimension_numbers<[1], [0], [0], [1], [0, 0, 1, 1], [], []>} : vector<8x96xf32>, vector<96x96xf32>, vector<8x96xf32> -> vector<8x96xf32>
    %62 = vector.broadcast %6 : vector<1x96xf32> to vector<8x96xf32>
    %63 = arith.addf %61, %62 : vector<8x96xf32>
    %cst_48 = arith.constant dense<0.000000e+00> : vector<8x96xf32>
    %64 = tpu.matmul %19, %5, %cst_48 {dimension_numbers = #tpu.dot_dimension_numbers<[1], [0], [0], [1], [0, 0, 1, 1], [], []>} : vector<8x32xf32>, vector<32x96xf32>, vector<8x96xf32> -> vector<8x96xf32>
    %65 = vector.extract_strided_slice %63 {offsets = [0, 0], sizes = [8, 64], strides = [1, 1]} : vector<8x96xf32> to vector<8x64xf32>
    %66 = vector.extract_strided_slice %64 {offsets = [0, 0], sizes = [8, 64], strides = [1, 1]} : vector<8x96xf32> to vector<8x64xf32>
    %67 = arith.addf %65, %66 : vector<8x64xf32>
    %68 = arith.negf %67 : vector<8x64xf32>
    %69 = math.exp %68 : vector<8x64xf32>
    %cst_49 = arith.constant 1.000000e+00 : f32
    %70 = vector.broadcast %cst_49 : f32 to vector<8x64xf32>
    %71 = arith.addf %70, %69 : vector<8x64xf32>
    %72 = arith.divf %70, %71 : vector<8x64xf32>
    %73 = vector.extract_strided_slice %72 {offsets = [0, 0], sizes = [8, 32], strides = [1, 1]} : vector<8x64xf32> to vector<8x32xf32>
    %74 = vector.extract_strided_slice %72 {offsets = [0, 32], sizes = [8, 32], strides = [1, 1]} : vector<8x64xf32> to vector<8x32xf32>
    %75 = vector.extract_strided_slice %63 {offsets = [0, 64], sizes = [8, 32], strides = [1, 1]} : vector<8x96xf32> to vector<8x32xf32>
    %76 = vector.extract_strided_slice %64 {offsets = [0, 64], sizes = [8, 32], strides = [1, 1]} : vector<8x96xf32> to vector<8x32xf32>
    %77 = vector.broadcast %7 : vector<1x32xf32> to vector<8x32xf32>
    %78 = arith.addf %76, %77 : vector<8x32xf32>
    %79 = arith.mulf %73, %78 : vector<8x32xf32>
    %80 = arith.addf %75, %79 : vector<8x32xf32>
    %81 = math.tanh %80 : vector<8x32xf32>
    %cst_50 = arith.constant 1.000000e+00 : f32
    %82 = vector.broadcast %cst_50 : f32 to vector<8x32xf32>
    %83 = arith.subf %82, %74 : vector<8x32xf32>
    %84 = arith.mulf %83, %81 : vector<8x32xf32>
    %85 = arith.mulf %74, %19 : vector<8x32xf32>
    %86 = arith.addf %84, %85 : vector<8x32xf32>
    %87 = tpu.concatenate %86, %59, %27 in 1 : vector<8x32xf32>, vector<8x64xf32>, vector<8x32xf32> -> vector<8x128xf32>
    %cst_51 = arith.constant dense<0.000000e+00> : vector<8x128xf32>
    %88 = tpu.matmul %87, %8, %cst_51 {dimension_numbers = #tpu.dot_dimension_numbers<[1], [0], [0], [1], [0, 0, 1, 1], [], []>} : vector<8x128xf32>, vector<128x128xf32>, vector<8x128xf32> -> vector<8x128xf32>
    %89 = vector.broadcast %9 : vector<1x128xf32> to vector<8x128xf32>
    %90 = arith.addf %88, %89 : vector<8x128xf32>
    %c0_52 = arith.constant 0 : index
    %c0_53 = arith.constant 0 : index
    %c0_54 = arith.constant 0 : index
    %91 = vector.load %arg19[%c0_52, %c0_53, %c0_54] : memref<5x8x128xf32, #tpu.memory_space<vmem>>, vector<1x8x128xf32>
    %92 = vector.shape_cast %91 : vector<1x8x128xf32> to vector<8x128xf32>
    %93 = vector.shape_cast %90 : vector<8x128xf32> to vector<1x8x128xf32>
    tpu.vector_store %arg19[%c0_52, %c0_53, %c0_54], %93 {strides = array<i32>} : memref<5x8x128xf32, #tpu.memory_space<vmem>>, vector<1x8x128xf32>,
    %cst_55 = arith.constant dense<0xFF800000> : vector<8xf32>
    %94 = vector.multi_reduction <maximumf>, %90, %cst_55 [1] : vector<8x128xf32> to vector<8xf32>
    %95 = vector.shape_cast %94 : vector<8xf32> to vector<8x1xf32>
    %96 = vector.broadcast %95 : vector<8x1xf32> to vector<8x128xf32>
    %97 = arith.cmpf oge, %90, %96 : vector<8x128xf32>
    %cst_56 = arith.constant 1.280000e+02 : f32
    %98 = vector.broadcast %cst_56 : f32 to vector<8x128xf32>
    %99 = arith.select %97, %29, %98 : vector<8x128xi1>, vector<8x128xf32>
    %cst_57 = arith.constant dense<0x7F800000> : vector<8xf32>
    %100 = vector.multi_reduction <minimumf>, %99, %cst_57 [1] : vector<8x128xf32> to vector<8xf32>
    %101 = vector.shape_cast %100 : vector<8xf32> to vector<8x1xf32>
    %102 = vector.broadcast %101 : vector<8x1xf32> to vector<8x128xf32>
    %103 = arith.cmpf oeq, %29, %102 : vector<8x128xf32>
    %104 = arith.extui %103 : vector<8x128xi1> to vector<8x128xi32>
    %105 = arith.sitofp %104 : vector<8x128xi32> to vector<8x128xf32>
    %cst_58 = arith.constant dense<0.000000e+00> : vector<8x32xf32>
    %106 = tpu.matmul %105, %10, %cst_58 {dimension_numbers = #tpu.dot_dimension_numbers<[1], [0], [0], [1], [0, 0, 1, 1], [], []>} : vector<8x128xf32>, vector<128x32xf32>, vector<8x32xf32> -> vector<8x32xf32>
    %cst_59 = arith.constant dense<0.000000e+00> : vector<8x32xf32>
    %107 = tpu.matmul %86, %3, %cst_59 {dimension_numbers = #tpu.dot_dimension_numbers<[1], [0], [0], [1], [0, 0, 1, 1], [], []>} : vector<8x32xf32>, vector<32x32xf32>, vector<8x32xf32> -> vector<8x32xf32>
    %108 = vector.shape_cast %107 : vector<8x32xf32> to vector<8x1x32xf32>
    %109 = vector.broadcast %108 : vector<8x1x32xf32> to vector<8x8x32xf32>
    %110 = arith.addf %109, %26 : vector<8x8x32xf32>
    %111 = math.tanh %110 : vector<8x8x32xf32>
    %112 = vector.shape_cast %2 : vector<1x32xf32> to vector<1x1x32xf32>
    %113 = vector.broadcast %112 : vector<1x1x32xf32> to vector<8x8x32xf32>
    %114 = arith.mulf %111, %113 : vector<8x8x32xf32>
    %cst_60 = arith.constant dense<0.000000e+00> : vector<8x8xf32>
    %115 = vector.multi_reduction <add>, %114, %cst_60 [2] : vector<8x8x32xf32> to vector<8x8xf32>
    %cst_61 = arith.constant 5.000000e-01 : f32
    %116 = vector.broadcast %cst_61 : f32 to vector<8x8xf32>
    %117 = arith.cmpf ogt, %1, %116 : vector<8x8xf32>
    %cst_62 = arith.constant -1.000000e+06 : f32
    %118 = vector.broadcast %cst_62 : f32 to vector<8x8xf32>
    %119 = arith.select %117, %118, %115 : vector<8x8xi1>, vector<8x8xf32>
    %cst_63 = arith.constant dense<0xFF800000> : vector<8xf32>
    %120 = vector.multi_reduction <maximumf>, %119, %cst_63 [1] : vector<8x8xf32> to vector<8xf32>
    %121 = vector.shape_cast %120 : vector<8xf32> to vector<8x1xf32>
    %122 = vector.broadcast %121 : vector<8x1xf32> to vector<8x8xf32>
    %123 = arith.subf %119, %122 : vector<8x8xf32>
    %124 = math.exp %123 : vector<8x8xf32>
    %cst_64 = arith.constant dense<0.000000e+00> : vector<8xf32>
    %125 = vector.multi_reduction <add>, %124, %cst_64 [1] : vector<8x8xf32> to vector<8xf32>
    %126 = vector.shape_cast %125 : vector<8xf32> to vector<8x1xf32>
    %127 = tpu.reciprocal %126 {approx = true} : vector<8x1xf32> -> vector<8x1xf32>
    %128 = vector.broadcast %127 : vector<8x1xf32> to vector<8x8xf32>
    %129 = arith.mulf %124, %128 : vector<8x8xf32>
    %c1 = arith.constant 1 : index
    %c0_65 = arith.constant 0 : index
    %c0_66 = arith.constant 0 : index
    %130 = vector.load %arg20[%c1, %c0_65, %c0_66] : memref<5x8x8xf32, #tpu.memory_space<vmem>>, vector<1x8x8xf32>
    %131 = vector.shape_cast %130 : vector<1x8x8xf32> to vector<8x8xf32>
    %132 = vector.shape_cast %129 : vector<8x8xf32> to vector<1x8x8xf32>
    tpu.vector_store %arg20[%c1, %c0_65, %c0_66], %132 {strides = array<i32>} : memref<5x8x8xf32, #tpu.memory_space<vmem>>, vector<1x8x8xf32>,
    %133 = vector.shape_cast %129 : vector<8x8xf32> to vector<8x8x1xf32>
    %134 = vector.broadcast %133 : vector<8x8x1xf32> to vector<8x8x64xf32>
    %135 = arith.mulf %134, %0 : vector<8x8x64xf32>
    %cst_67 = arith.constant dense<0.000000e+00> : vector<8x64xf32>
    %136 = vector.multi_reduction <add>, %135, %cst_67 [1] : vector<8x8x64xf32> to vector<8x64xf32>
    %137 = tpu.concatenate %106, %136 in 1 : vector<8x32xf32>, vector<8x64xf32> -> vector<8x96xf32>
    %cst_68 = arith.constant dense<0.000000e+00> : vector<8x96xf32>
    %138 = tpu.matmul %137, %4, %cst_68 {dimension_numbers = #tpu.dot_dimension_numbers<[1], [0], [0], [1], [0, 0, 1, 1], [], []>} : vector<8x96xf32>, vector<96x96xf32>, vector<8x96xf32> -> vector<8x96xf32>
    %139 = vector.broadcast %6 : vector<1x96xf32> to vector<8x96xf32>
    %140 = arith.addf %138, %139 : vector<8x96xf32>
    %cst_69 = arith.constant dense<0.000000e+00> : vector<8x96xf32>
    %141 = tpu.matmul %86, %5, %cst_69 {dimension_numbers = #tpu.dot_dimension_numbers<[1], [0], [0], [1], [0, 0, 1, 1], [], []>} : vector<8x32xf32>, vector<32x96xf32>, vector<8x96xf32> -> vector<8x96xf32>
    %142 = vector.extract_strided_slice %140 {offsets = [0, 0], sizes = [8, 64], strides = [1, 1]} : vector<8x96xf32> to vector<8x64xf32>
    %143 = vector.extract_strided_slice %141 {offsets = [0, 0], sizes = [8, 64], strides = [1, 1]} : vector<8x96xf32> to vector<8x64xf32>
    %144 = arith.addf %142, %143 : vector<8x64xf32>
    %145 = arith.negf %144 : vector<8x64xf32>
    %146 = math.exp %145 : vector<8x64xf32>
    %cst_70 = arith.constant 1.000000e+00 : f32
    %147 = vector.broadcast %cst_70 : f32 to vector<8x64xf32>
    %148 = arith.addf %147, %146 : vector<8x64xf32>
    %149 = arith.divf %147, %148 : vector<8x64xf32>
    %150 = vector.extract_strided_slice %149 {offsets = [0, 0], sizes = [8, 32], strides = [1, 1]} : vector<8x64xf32> to vector<8x32xf32>
    %151 = vector.extract_strided_slice %149 {offsets = [0, 32], sizes = [8, 32], strides = [1, 1]} : vector<8x64xf32> to vector<8x32xf32>
    %152 = vector.extract_strided_slice %140 {offsets = [0, 64], sizes = [8, 32], strides = [1, 1]} : vector<8x96xf32> to vector<8x32xf32>
    %153 = vector.extract_strided_slice %141 {offsets = [0, 64], sizes = [8, 32], strides = [1, 1]} : vector<8x96xf32> to vector<8x32xf32>
    %154 = vector.broadcast %7 : vector<1x32xf32> to vector<8x32xf32>
    %155 = arith.addf %153, %154 : vector<8x32xf32>
    %156 = arith.mulf %150, %155 : vector<8x32xf32>
    %157 = arith.addf %152, %156 : vector<8x32xf32>
    %158 = math.tanh %157 : vector<8x32xf32>
    %cst_71 = arith.constant 1.000000e+00 : f32
    %159 = vector.broadcast %cst_71 : f32 to vector<8x32xf32>
    %160 = arith.subf %159, %151 : vector<8x32xf32>
    %161 = arith.mulf %160, %158 : vector<8x32xf32>
    %162 = arith.mulf %151, %86 : vector<8x32xf32>
    %163 = arith.addf %161, %162 : vector<8x32xf32>
    %164 = tpu.concatenate %163, %136, %106 in 1 : vector<8x32xf32>, vector<8x64xf32>, vector<8x32xf32> -> vector<8x128xf32>
    %cst_72 = arith.constant dense<0.000000e+00> : vector<8x128xf32>
    %165 = tpu.matmul %164, %8, %cst_72 {dimension_numbers = #tpu.dot_dimension_numbers<[1], [0], [0], [1], [0, 0, 1, 1], [], []>} : vector<8x128xf32>, vector<128x128xf32>, vector<8x128xf32> -> vector<8x128xf32>
    %166 = vector.broadcast %9 : vector<1x128xf32> to vector<8x128xf32>
    %167 = arith.addf %165, %166 : vector<8x128xf32>
    %c1_73 = arith.constant 1 : index
    %c0_74 = arith.constant 0 : index
    %c0_75 = arith.constant 0 : index
    %168 = vector.load %arg19[%c1_73, %c0_74, %c0_75] : memref<5x8x128xf32, #tpu.memory_space<vmem>>, vector<1x8x128xf32>
    %169 = vector.shape_cast %168 : vector<1x8x128xf32> to vector<8x128xf32>
    %170 = vector.shape_cast %167 : vector<8x128xf32> to vector<1x8x128xf32>
    tpu.vector_store %arg19[%c1_73, %c0_74, %c0_75], %170 {strides = array<i32>} : memref<5x8x128xf32, #tpu.memory_space<vmem>>, vector<1x8x128xf32>,
    %cst_76 = arith.constant dense<0xFF800000> : vector<8xf32>
    %171 = vector.multi_reduction <maximumf>, %167, %cst_76 [1] : vector<8x128xf32> to vector<8xf32>
    %172 = vector.shape_cast %171 : vector<8xf32> to vector<8x1xf32>
    %173 = vector.broadcast %172 : vector<8x1xf32> to vector<8x128xf32>
    %174 = arith.cmpf oge, %167, %173 : vector<8x128xf32>
    %cst_77 = arith.constant 1.280000e+02 : f32
    %175 = vector.broadcast %cst_77 : f32 to vector<8x128xf32>
    %176 = arith.select %174, %29, %175 : vector<8x128xi1>, vector<8x128xf32>
    %cst_78 = arith.constant dense<0x7F800000> : vector<8xf32>
    %177 = vector.multi_reduction <minimumf>, %176, %cst_78 [1] : vector<8x128xf32> to vector<8xf32>
    %178 = vector.shape_cast %177 : vector<8xf32> to vector<8x1xf32>
    %179 = vector.broadcast %178 : vector<8x1xf32> to vector<8x128xf32>
    %180 = arith.cmpf oeq, %29, %179 : vector<8x128xf32>
    %181 = arith.extui %180 : vector<8x128xi1> to vector<8x128xi32>
    %182 = arith.sitofp %181 : vector<8x128xi32> to vector<8x128xf32>
    %cst_79 = arith.constant dense<0.000000e+00> : vector<8x32xf32>
    %183 = tpu.matmul %182, %10, %cst_79 {dimension_numbers = #tpu.dot_dimension_numbers<[1], [0], [0], [1], [0, 0, 1, 1], [], []>} : vector<8x128xf32>, vector<128x32xf32>, vector<8x32xf32> -> vector<8x32xf32>
    %cst_80 = arith.constant dense<0.000000e+00> : vector<8x32xf32>
    %184 = tpu.matmul %163, %3, %cst_80 {dimension_numbers = #tpu.dot_dimension_numbers<[1], [0], [0], [1], [0, 0, 1, 1], [], []>} : vector<8x32xf32>, vector<32x32xf32>, vector<8x32xf32> -> vector<8x32xf32>
    %185 = vector.shape_cast %184 : vector<8x32xf32> to vector<8x1x32xf32>
    %186 = vector.broadcast %185 : vector<8x1x32xf32> to vector<8x8x32xf32>
    %187 = arith.addf %186, %26 : vector<8x8x32xf32>
    %188 = math.tanh %187 : vector<8x8x32xf32>
    %189 = vector.shape_cast %2 : vector<1x32xf32> to vector<1x1x32xf32>
    %190 = vector.broadcast %189 : vector<1x1x32xf32> to vector<8x8x32xf32>
    %191 = arith.mulf %188, %190 : vector<8x8x32xf32>
    %cst_81 = arith.constant dense<0.000000e+00> : vector<8x8xf32>
    %192 = vector.multi_reduction <add>, %191, %cst_81 [2] : vector<8x8x32xf32> to vector<8x8xf32>
    %cst_82 = arith.constant 5.000000e-01 : f32
    %193 = vector.broadcast %cst_82 : f32 to vector<8x8xf32>
    %194 = arith.cmpf ogt, %1, %193 : vector<8x8xf32>
    %cst_83 = arith.constant -1.000000e+06 : f32
    %195 = vector.broadcast %cst_83 : f32 to vector<8x8xf32>
    %196 = arith.select %194, %195, %192 : vector<8x8xi1>, vector<8x8xf32>
    %cst_84 = arith.constant dense<0xFF800000> : vector<8xf32>
    %197 = vector.multi_reduction <maximumf>, %196, %cst_84 [1] : vector<8x8xf32> to vector<8xf32>
    %198 = vector.shape_cast %197 : vector<8xf32> to vector<8x1xf32>
    %199 = vector.broadcast %198 : vector<8x1xf32> to vector<8x8xf32>
    %200 = arith.subf %196, %199 : vector<8x8xf32>
    %201 = math.exp %200 : vector<8x8xf32>
    %cst_85 = arith.constant dense<0.000000e+00> : vector<8xf32>
    %202 = vector.multi_reduction <add>, %201, %cst_85 [1] : vector<8x8xf32> to vector<8xf32>
    %203 = vector.shape_cast %202 : vector<8xf32> to vector<8x1xf32>
    %204 = tpu.reciprocal %203 {approx = true} : vector<8x1xf32> -> vector<8x1xf32>
    %205 = vector.broadcast %204 : vector<8x1xf32> to vector<8x8xf32>
    %206 = arith.mulf %201, %205 : vector<8x8xf32>
    %c2 = arith.constant 2 : index
    %c0_86 = arith.constant 0 : index
    %c0_87 = arith.constant 0 : index
    %207 = vector.load %arg20[%c2, %c0_86, %c0_87] : memref<5x8x8xf32, #tpu.memory_space<vmem>>, vector<1x8x8xf32>
    %208 = vector.shape_cast %207 : vector<1x8x8xf32> to vector<8x8xf32>
    %209 = vector.shape_cast %206 : vector<8x8xf32> to vector<1x8x8xf32>
    tpu.vector_store %arg20[%c2, %c0_86, %c0_87], %209 {strides = array<i32>} : memref<5x8x8xf32, #tpu.memory_space<vmem>>, vector<1x8x8xf32>,
    %210 = vector.shape_cast %206 : vector<8x8xf32> to vector<8x8x1xf32>
    %211 = vector.broadcast %210 : vector<8x8x1xf32> to vector<8x8x64xf32>
    %212 = arith.mulf %211, %0 : vector<8x8x64xf32>
    %cst_88 = arith.constant dense<0.000000e+00> : vector<8x64xf32>
    %213 = vector.multi_reduction <add>, %212, %cst_88 [1] : vector<8x8x64xf32> to vector<8x64xf32>
    %214 = tpu.concatenate %183, %213 in 1 : vector<8x32xf32>, vector<8x64xf32> -> vector<8x96xf32>
    %cst_89 = arith.constant dense<0.000000e+00> : vector<8x96xf32>
    %215 = tpu.matmul %214, %4, %cst_89 {dimension_numbers = #tpu.dot_dimension_numbers<[1], [0], [0], [1], [0, 0, 1, 1], [], []>} : vector<8x96xf32>, vector<96x96xf32>, vector<8x96xf32> -> vector<8x96xf32>
    %216 = vector.broadcast %6 : vector<1x96xf32> to vector<8x96xf32>
    %217 = arith.addf %215, %216 : vector<8x96xf32>
    %cst_90 = arith.constant dense<0.000000e+00> : vector<8x96xf32>
    %218 = tpu.matmul %163, %5, %cst_90 {dimension_numbers = #tpu.dot_dimension_numbers<[1], [0], [0], [1], [0, 0, 1, 1], [], []>} : vector<8x32xf32>, vector<32x96xf32>, vector<8x96xf32> -> vector<8x96xf32>
    %219 = vector.extract_strided_slice %217 {offsets = [0, 0], sizes = [8, 64], strides = [1, 1]} : vector<8x96xf32> to vector<8x64xf32>
    %220 = vector.extract_strided_slice %218 {offsets = [0, 0], sizes = [8, 64], strides = [1, 1]} : vector<8x96xf32> to vector<8x64xf32>
    %221 = arith.addf %219, %220 : vector<8x64xf32>
    %222 = arith.negf %221 : vector<8x64xf32>
    %223 = math.exp %222 : vector<8x64xf32>
    %cst_91 = arith.constant 1.000000e+00 : f32
    %224 = vector.broadcast %cst_91 : f32 to vector<8x64xf32>
    %225 = arith.addf %224, %223 : vector<8x64xf32>
    %226 = arith.divf %224, %225 : vector<8x64xf32>
    %227 = vector.extract_strided_slice %226 {offsets = [0, 0], sizes = [8, 32], strides = [1, 1]} : vector<8x64xf32> to vector<8x32xf32>
    %228 = vector.extract_strided_slice %226 {offsets = [0, 32], sizes = [8, 32], strides = [1, 1]} : vector<8x64xf32> to vector<8x32xf32>
    %229 = vector.extract_strided_slice %217 {offsets = [0, 64], sizes = [8, 32], strides = [1, 1]} : vector<8x96xf32> to vector<8x32xf32>
    %230 = vector.extract_strided_slice %218 {offsets = [0, 64], sizes = [8, 32], strides = [1, 1]} : vector<8x96xf32> to vector<8x32xf32>
    %231 = vector.broadcast %7 : vector<1x32xf32> to vector<8x32xf32>
    %232 = arith.addf %230, %231 : vector<8x32xf32>
    %233 = arith.mulf %227, %232 : vector<8x32xf32>
    %234 = arith.addf %229, %233 : vector<8x32xf32>
    %235 = math.tanh %234 : vector<8x32xf32>
    %cst_92 = arith.constant 1.000000e+00 : f32
    %236 = vector.broadcast %cst_92 : f32 to vector<8x32xf32>
    %237 = arith.subf %236, %228 : vector<8x32xf32>
    %238 = arith.mulf %237, %235 : vector<8x32xf32>
    %239 = arith.mulf %228, %163 : vector<8x32xf32>
    %240 = arith.addf %238, %239 : vector<8x32xf32>
    %241 = tpu.concatenate %240, %213, %183 in 1 : vector<8x32xf32>, vector<8x64xf32>, vector<8x32xf32> -> vector<8x128xf32>
    %cst_93 = arith.constant dense<0.000000e+00> : vector<8x128xf32>
    %242 = tpu.matmul %241, %8, %cst_93 {dimension_numbers = #tpu.dot_dimension_numbers<[1], [0], [0], [1], [0, 0, 1, 1], [], []>} : vector<8x128xf32>, vector<128x128xf32>, vector<8x128xf32> -> vector<8x128xf32>
    %243 = vector.broadcast %9 : vector<1x128xf32> to vector<8x128xf32>
    %244 = arith.addf %242, %243 : vector<8x128xf32>
    %c2_94 = arith.constant 2 : index
    %c0_95 = arith.constant 0 : index
    %c0_96 = arith.constant 0 : index
    %245 = vector.load %arg19[%c2_94, %c0_95, %c0_96] : memref<5x8x128xf32, #tpu.memory_space<vmem>>, vector<1x8x128xf32>
    %246 = vector.shape_cast %245 : vector<1x8x128xf32> to vector<8x128xf32>
    %247 = vector.shape_cast %244 : vector<8x128xf32> to vector<1x8x128xf32>
    tpu.vector_store %arg19[%c2_94, %c0_95, %c0_96], %247 {strides = array<i32>} : memref<5x8x128xf32, #tpu.memory_space<vmem>>, vector<1x8x128xf32>,
    %cst_97 = arith.constant dense<0xFF800000> : vector<8xf32>
    %248 = vector.multi_reduction <maximumf>, %244, %cst_97 [1] : vector<8x128xf32> to vector<8xf32>
    %249 = vector.shape_cast %248 : vector<8xf32> to vector<8x1xf32>
    %250 = vector.broadcast %249 : vector<8x1xf32> to vector<8x128xf32>
    %251 = arith.cmpf oge, %244, %250 : vector<8x128xf32>
    %cst_98 = arith.constant 1.280000e+02 : f32
    %252 = vector.broadcast %cst_98 : f32 to vector<8x128xf32>
    %253 = arith.select %251, %29, %252 : vector<8x128xi1>, vector<8x128xf32>
    %cst_99 = arith.constant dense<0x7F800000> : vector<8xf32>
    %254 = vector.multi_reduction <minimumf>, %253, %cst_99 [1] : vector<8x128xf32> to vector<8xf32>
    %255 = vector.shape_cast %254 : vector<8xf32> to vector<8x1xf32>
    %256 = vector.broadcast %255 : vector<8x1xf32> to vector<8x128xf32>
    %257 = arith.cmpf oeq, %29, %256 : vector<8x128xf32>
    %258 = arith.extui %257 : vector<8x128xi1> to vector<8x128xi32>
    %259 = arith.sitofp %258 : vector<8x128xi32> to vector<8x128xf32>
    %cst_100 = arith.constant dense<0.000000e+00> : vector<8x32xf32>
    %260 = tpu.matmul %259, %10, %cst_100 {dimension_numbers = #tpu.dot_dimension_numbers<[1], [0], [0], [1], [0, 0, 1, 1], [], []>} : vector<8x128xf32>, vector<128x32xf32>, vector<8x32xf32> -> vector<8x32xf32>
    %cst_101 = arith.constant dense<0.000000e+00> : vector<8x32xf32>
    %261 = tpu.matmul %240, %3, %cst_101 {dimension_numbers = #tpu.dot_dimension_numbers<[1], [0], [0], [1], [0, 0, 1, 1], [], []>} : vector<8x32xf32>, vector<32x32xf32>, vector<8x32xf32> -> vector<8x32xf32>
    %262 = vector.shape_cast %261 : vector<8x32xf32> to vector<8x1x32xf32>
    %263 = vector.broadcast %262 : vector<8x1x32xf32> to vector<8x8x32xf32>
    %264 = arith.addf %263, %26 : vector<8x8x32xf32>
    %265 = math.tanh %264 : vector<8x8x32xf32>
    %266 = vector.shape_cast %2 : vector<1x32xf32> to vector<1x1x32xf32>
    %267 = vector.broadcast %266 : vector<1x1x32xf32> to vector<8x8x32xf32>
    %268 = arith.mulf %265, %267 : vector<8x8x32xf32>
    %cst_102 = arith.constant dense<0.000000e+00> : vector<8x8xf32>
    %269 = vector.multi_reduction <add>, %268, %cst_102 [2] : vector<8x8x32xf32> to vector<8x8xf32>
    %cst_103 = arith.constant 5.000000e-01 : f32
    %270 = vector.broadcast %cst_103 : f32 to vector<8x8xf32>
    %271 = arith.cmpf ogt, %1, %270 : vector<8x8xf32>
    %cst_104 = arith.constant -1.000000e+06 : f32
    %272 = vector.broadcast %cst_104 : f32 to vector<8x8xf32>
    %273 = arith.select %271, %272, %269 : vector<8x8xi1>, vector<8x8xf32>
    %cst_105 = arith.constant dense<0xFF800000> : vector<8xf32>
    %274 = vector.multi_reduction <maximumf>, %273, %cst_105 [1] : vector<8x8xf32> to vector<8xf32>
    %275 = vector.shape_cast %274 : vector<8xf32> to vector<8x1xf32>
    %276 = vector.broadcast %275 : vector<8x1xf32> to vector<8x8xf32>
    %277 = arith.subf %273, %276 : vector<8x8xf32>
    %278 = math.exp %277 : vector<8x8xf32>
    %cst_106 = arith.constant dense<0.000000e+00> : vector<8xf32>
    %279 = vector.multi_reduction <add>, %278, %cst_106 [1] : vector<8x8xf32> to vector<8xf32>
    %280 = vector.shape_cast %279 : vector<8xf32> to vector<8x1xf32>
    %281 = tpu.reciprocal %280 {approx = true} : vector<8x1xf32> -> vector<8x1xf32>
    %282 = vector.broadcast %281 : vector<8x1xf32> to vector<8x8xf32>
    %283 = arith.mulf %278, %282 : vector<8x8xf32>
    %c3 = arith.constant 3 : index
    %c0_107 = arith.constant 0 : index
    %c0_108 = arith.constant 0 : index
    %284 = vector.load %arg20[%c3, %c0_107, %c0_108] : memref<5x8x8xf32, #tpu.memory_space<vmem>>, vector<1x8x8xf32>
    %285 = vector.shape_cast %284 : vector<1x8x8xf32> to vector<8x8xf32>
    %286 = vector.shape_cast %283 : vector<8x8xf32> to vector<1x8x8xf32>
    tpu.vector_store %arg20[%c3, %c0_107, %c0_108], %286 {strides = array<i32>} : memref<5x8x8xf32, #tpu.memory_space<vmem>>, vector<1x8x8xf32>,
    %287 = vector.shape_cast %283 : vector<8x8xf32> to vector<8x8x1xf32>
    %288 = vector.broadcast %287 : vector<8x8x1xf32> to vector<8x8x64xf32>
    %289 = arith.mulf %288, %0 : vector<8x8x64xf32>
    %cst_109 = arith.constant dense<0.000000e+00> : vector<8x64xf32>
    %290 = vector.multi_reduction <add>, %289, %cst_109 [1] : vector<8x8x64xf32> to vector<8x64xf32>
    %291 = tpu.concatenate %260, %290 in 1 : vector<8x32xf32>, vector<8x64xf32> -> vector<8x96xf32>
    %cst_110 = arith.constant dense<0.000000e+00> : vector<8x96xf32>
    %292 = tpu.matmul %291, %4, %cst_110 {dimension_numbers = #tpu.dot_dimension_numbers<[1], [0], [0], [1], [0, 0, 1, 1], [], []>} : vector<8x96xf32>, vector<96x96xf32>, vector<8x96xf32> -> vector<8x96xf32>
    %293 = vector.broadcast %6 : vector<1x96xf32> to vector<8x96xf32>
    %294 = arith.addf %292, %293 : vector<8x96xf32>
    %cst_111 = arith.constant dense<0.000000e+00> : vector<8x96xf32>
    %295 = tpu.matmul %240, %5, %cst_111 {dimension_numbers = #tpu.dot_dimension_numbers<[1], [0], [0], [1], [0, 0, 1, 1], [], []>} : vector<8x32xf32>, vector<32x96xf32>, vector<8x96xf32> -> vector<8x96xf32>
    %296 = vector.extract_strided_slice %294 {offsets = [0, 0], sizes = [8, 64], strides = [1, 1]} : vector<8x96xf32> to vector<8x64xf32>
    %297 = vector.extract_strided_slice %295 {offsets = [0, 0], sizes = [8, 64], strides = [1, 1]} : vector<8x96xf32> to vector<8x64xf32>
    %298 = arith.addf %296, %297 : vector<8x64xf32>
    %299 = arith.negf %298 : vector<8x64xf32>
    %300 = math.exp %299 : vector<8x64xf32>
    %cst_112 = arith.constant 1.000000e+00 : f32
    %301 = vector.broadcast %cst_112 : f32 to vector<8x64xf32>
    %302 = arith.addf %301, %300 : vector<8x64xf32>
    %303 = arith.divf %301, %302 : vector<8x64xf32>
    %304 = vector.extract_strided_slice %303 {offsets = [0, 0], sizes = [8, 32], strides = [1, 1]} : vector<8x64xf32> to vector<8x32xf32>
    %305 = vector.extract_strided_slice %303 {offsets = [0, 32], sizes = [8, 32], strides = [1, 1]} : vector<8x64xf32> to vector<8x32xf32>
    %306 = vector.extract_strided_slice %294 {offsets = [0, 64], sizes = [8, 32], strides = [1, 1]} : vector<8x96xf32> to vector<8x32xf32>
    %307 = vector.extract_strided_slice %295 {offsets = [0, 64], sizes = [8, 32], strides = [1, 1]} : vector<8x96xf32> to vector<8x32xf32>
    %308 = vector.broadcast %7 : vector<1x32xf32> to vector<8x32xf32>
    %309 = arith.addf %307, %308 : vector<8x32xf32>
    %310 = arith.mulf %304, %309 : vector<8x32xf32>
    %311 = arith.addf %306, %310 : vector<8x32xf32>
    %312 = math.tanh %311 : vector<8x32xf32>
    %cst_113 = arith.constant 1.000000e+00 : f32
    %313 = vector.broadcast %cst_113 : f32 to vector<8x32xf32>
    %314 = arith.subf %313, %305 : vector<8x32xf32>
    %315 = arith.mulf %314, %312 : vector<8x32xf32>
    %316 = arith.mulf %305, %240 : vector<8x32xf32>
    %317 = arith.addf %315, %316 : vector<8x32xf32>
    %318 = tpu.concatenate %317, %290, %260 in 1 : vector<8x32xf32>, vector<8x64xf32>, vector<8x32xf32> -> vector<8x128xf32>
    %cst_114 = arith.constant dense<0.000000e+00> : vector<8x128xf32>
    %319 = tpu.matmul %318, %8, %cst_114 {dimension_numbers = #tpu.dot_dimension_numbers<[1], [0], [0], [1], [0, 0, 1, 1], [], []>} : vector<8x128xf32>, vector<128x128xf32>, vector<8x128xf32> -> vector<8x128xf32>
    %320 = vector.broadcast %9 : vector<1x128xf32> to vector<8x128xf32>
    %321 = arith.addf %319, %320 : vector<8x128xf32>
    %c3_115 = arith.constant 3 : index
    %c0_116 = arith.constant 0 : index
    %c0_117 = arith.constant 0 : index
    %322 = vector.load %arg19[%c3_115, %c0_116, %c0_117] : memref<5x8x128xf32, #tpu.memory_space<vmem>>, vector<1x8x128xf32>
    %323 = vector.shape_cast %322 : vector<1x8x128xf32> to vector<8x128xf32>
    %324 = vector.shape_cast %321 : vector<8x128xf32> to vector<1x8x128xf32>
    tpu.vector_store %arg19[%c3_115, %c0_116, %c0_117], %324 {strides = array<i32>} : memref<5x8x128xf32, #tpu.memory_space<vmem>>, vector<1x8x128xf32>,
    %cst_118 = arith.constant dense<0xFF800000> : vector<8xf32>
    %325 = vector.multi_reduction <maximumf>, %321, %cst_118 [1] : vector<8x128xf32> to vector<8xf32>
    %326 = vector.shape_cast %325 : vector<8xf32> to vector<8x1xf32>
    %327 = vector.broadcast %326 : vector<8x1xf32> to vector<8x128xf32>
    %328 = arith.cmpf oge, %321, %327 : vector<8x128xf32>
    %cst_119 = arith.constant 1.280000e+02 : f32
    %329 = vector.broadcast %cst_119 : f32 to vector<8x128xf32>
    %330 = arith.select %328, %29, %329 : vector<8x128xi1>, vector<8x128xf32>
    %cst_120 = arith.constant dense<0x7F800000> : vector<8xf32>
    %331 = vector.multi_reduction <minimumf>, %330, %cst_120 [1] : vector<8x128xf32> to vector<8xf32>
    %332 = vector.shape_cast %331 : vector<8xf32> to vector<8x1xf32>
    %333 = vector.broadcast %332 : vector<8x1xf32> to vector<8x128xf32>
    %334 = arith.cmpf oeq, %29, %333 : vector<8x128xf32>
    %335 = arith.extui %334 : vector<8x128xi1> to vector<8x128xi32>
    %336 = arith.sitofp %335 : vector<8x128xi32> to vector<8x128xf32>
    %cst_121 = arith.constant dense<0.000000e+00> : vector<8x32xf32>
    %337 = tpu.matmul %336, %10, %cst_121 {dimension_numbers = #tpu.dot_dimension_numbers<[1], [0], [0], [1], [0, 0, 1, 1], [], []>} : vector<8x128xf32>, vector<128x32xf32>, vector<8x32xf32> -> vector<8x32xf32>
    %cst_122 = arith.constant dense<0.000000e+00> : vector<8x32xf32>
    %338 = tpu.matmul %317, %3, %cst_122 {dimension_numbers = #tpu.dot_dimension_numbers<[1], [0], [0], [1], [0, 0, 1, 1], [], []>} : vector<8x32xf32>, vector<32x32xf32>, vector<8x32xf32> -> vector<8x32xf32>
    %339 = vector.shape_cast %338 : vector<8x32xf32> to vector<8x1x32xf32>
    %340 = vector.broadcast %339 : vector<8x1x32xf32> to vector<8x8x32xf32>
    %341 = arith.addf %340, %26 : vector<8x8x32xf32>
    %342 = math.tanh %341 : vector<8x8x32xf32>
    %343 = vector.shape_cast %2 : vector<1x32xf32> to vector<1x1x32xf32>
    %344 = vector.broadcast %343 : vector<1x1x32xf32> to vector<8x8x32xf32>
    %345 = arith.mulf %342, %344 : vector<8x8x32xf32>
    %cst_123 = arith.constant dense<0.000000e+00> : vector<8x8xf32>
    %346 = vector.multi_reduction <add>, %345, %cst_123 [2] : vector<8x8x32xf32> to vector<8x8xf32>
    %cst_124 = arith.constant 5.000000e-01 : f32
    %347 = vector.broadcast %cst_124 : f32 to vector<8x8xf32>
    %348 = arith.cmpf ogt, %1, %347 : vector<8x8xf32>
    %cst_125 = arith.constant -1.000000e+06 : f32
    %349 = vector.broadcast %cst_125 : f32 to vector<8x8xf32>
    %350 = arith.select %348, %349, %346 : vector<8x8xi1>, vector<8x8xf32>
    %cst_126 = arith.constant dense<0xFF800000> : vector<8xf32>
    %351 = vector.multi_reduction <maximumf>, %350, %cst_126 [1] : vector<8x8xf32> to vector<8xf32>
    %352 = vector.shape_cast %351 : vector<8xf32> to vector<8x1xf32>
    %353 = vector.broadcast %352 : vector<8x1xf32> to vector<8x8xf32>
    %354 = arith.subf %350, %353 : vector<8x8xf32>
    %355 = math.exp %354 : vector<8x8xf32>
    %cst_127 = arith.constant dense<0.000000e+00> : vector<8xf32>
    %356 = vector.multi_reduction <add>, %355, %cst_127 [1] : vector<8x8xf32> to vector<8xf32>
    %357 = vector.shape_cast %356 : vector<8xf32> to vector<8x1xf32>
    %358 = tpu.reciprocal %357 {approx = true} : vector<8x1xf32> -> vector<8x1xf32>
    %359 = vector.broadcast %358 : vector<8x1xf32> to vector<8x8xf32>
    %360 = arith.mulf %355, %359 : vector<8x8xf32>
    %c4 = arith.constant 4 : index
    %c0_128 = arith.constant 0 : index
    %c0_129 = arith.constant 0 : index
    %361 = vector.load %arg20[%c4, %c0_128, %c0_129] : memref<5x8x8xf32, #tpu.memory_space<vmem>>, vector<1x8x8xf32>
    %362 = vector.shape_cast %361 : vector<1x8x8xf32> to vector<8x8xf32>
    %363 = vector.shape_cast %360 : vector<8x8xf32> to vector<1x8x8xf32>
    tpu.vector_store %arg20[%c4, %c0_128, %c0_129], %363 {strides = array<i32>} : memref<5x8x8xf32, #tpu.memory_space<vmem>>, vector<1x8x8xf32>,
    %364 = vector.shape_cast %360 : vector<8x8xf32> to vector<8x8x1xf32>
    %365 = vector.broadcast %364 : vector<8x8x1xf32> to vector<8x8x64xf32>
    %366 = arith.mulf %365, %0 : vector<8x8x64xf32>
    %cst_130 = arith.constant dense<0.000000e+00> : vector<8x64xf32>
    %367 = vector.multi_reduction <add>, %366, %cst_130 [1] : vector<8x8x64xf32> to vector<8x64xf32>
    %368 = tpu.concatenate %337, %367 in 1 : vector<8x32xf32>, vector<8x64xf32> -> vector<8x96xf32>
    %cst_131 = arith.constant dense<0.000000e+00> : vector<8x96xf32>
    %369 = tpu.matmul %368, %4, %cst_131 {dimension_numbers = #tpu.dot_dimension_numbers<[1], [0], [0], [1], [0, 0, 1, 1], [], []>} : vector<8x96xf32>, vector<96x96xf32>, vector<8x96xf32> -> vector<8x96xf32>
    %370 = vector.broadcast %6 : vector<1x96xf32> to vector<8x96xf32>
    %371 = arith.addf %369, %370 : vector<8x96xf32>
    %cst_132 = arith.constant dense<0.000000e+00> : vector<8x96xf32>
    %372 = tpu.matmul %317, %5, %cst_132 {dimension_numbers = #tpu.dot_dimension_numbers<[1], [0], [0], [1], [0, 0, 1, 1], [], []>} : vector<8x32xf32>, vector<32x96xf32>, vector<8x96xf32> -> vector<8x96xf32>
    %373 = vector.extract_strided_slice %371 {offsets = [0, 0], sizes = [8, 64], strides = [1, 1]} : vector<8x96xf32> to vector<8x64xf32>
    %374 = vector.extract_strided_slice %372 {offsets = [0, 0], sizes = [8, 64], strides = [1, 1]} : vector<8x96xf32> to vector<8x64xf32>
    %375 = arith.addf %373, %374 : vector<8x64xf32>
    %376 = arith.negf %375 : vector<8x64xf32>
    %377 = math.exp %376 : vector<8x64xf32>
    %cst_133 = arith.constant 1.000000e+00 : f32
    %378 = vector.broadcast %cst_133 : f32 to vector<8x64xf32>
    %379 = arith.addf %378, %377 : vector<8x64xf32>
    %380 = arith.divf %378, %379 : vector<8x64xf32>
    %381 = vector.extract_strided_slice %380 {offsets = [0, 0], sizes = [8, 32], strides = [1, 1]} : vector<8x64xf32> to vector<8x32xf32>
    %382 = vector.extract_strided_slice %380 {offsets = [0, 32], sizes = [8, 32], strides = [1, 1]} : vector<8x64xf32> to vector<8x32xf32>
    %383 = vector.extract_strided_slice %371 {offsets = [0, 64], sizes = [8, 32], strides = [1, 1]} : vector<8x96xf32> to vector<8x32xf32>
    %384 = vector.extract_strided_slice %372 {offsets = [0, 64], sizes = [8, 32], strides = [1, 1]} : vector<8x96xf32> to vector<8x32xf32>
    %385 = vector.broadcast %7 : vector<1x32xf32> to vector<8x32xf32>
    %386 = arith.addf %384, %385 : vector<8x32xf32>
    %387 = arith.mulf %381, %386 : vector<8x32xf32>
    %388 = arith.addf %383, %387 : vector<8x32xf32>
    %389 = math.tanh %388 : vector<8x32xf32>
    %cst_134 = arith.constant 1.000000e+00 : f32
    %390 = vector.broadcast %cst_134 : f32 to vector<8x32xf32>
    %391 = arith.subf %390, %382 : vector<8x32xf32>
    %392 = arith.mulf %391, %389 : vector<8x32xf32>
    %393 = arith.mulf %382, %317 : vector<8x32xf32>
    %394 = arith.addf %392, %393 : vector<8x32xf32>
    %395 = tpu.concatenate %394, %367, %337 in 1 : vector<8x32xf32>, vector<8x64xf32>, vector<8x32xf32> -> vector<8x128xf32>
    %cst_135 = arith.constant dense<0.000000e+00> : vector<8x128xf32>
    %396 = tpu.matmul %395, %8, %cst_135 {dimension_numbers = #tpu.dot_dimension_numbers<[1], [0], [0], [1], [0, 0, 1, 1], [], []>} : vector<8x128xf32>, vector<128x128xf32>, vector<8x128xf32> -> vector<8x128xf32>
    %397 = vector.broadcast %9 : vector<1x128xf32> to vector<8x128xf32>
    %398 = arith.addf %396, %397 : vector<8x128xf32>
    %c4_136 = arith.constant 4 : index
    %c0_137 = arith.constant 0 : index
    %c0_138 = arith.constant 0 : index
    %399 = vector.load %arg19[%c4_136, %c0_137, %c0_138] : memref<5x8x128xf32, #tpu.memory_space<vmem>>, vector<1x8x128xf32>
    %400 = vector.shape_cast %399 : vector<1x8x128xf32> to vector<8x128xf32>
    %401 = vector.shape_cast %398 : vector<8x128xf32> to vector<1x8x128xf32>
    tpu.vector_store %arg19[%c4_136, %c0_137, %c0_138], %401 {strides = array<i32>} : memref<5x8x128xf32, #tpu.memory_space<vmem>>, vector<1x8x128xf32>,
    return
  }
  func.func @transform_0(%arg0: i32) -> (i32, i32) {
    %c0_i32 = arith.constant 0 : i32
    %c0_i32_0 = arith.constant 0 : i32
    %c0_i32_1 = arith.constant 0 : i32
    return %c0_i32, %c0_i32_0 : i32, i32
  }
  func.func @transform_1(%arg0: i32) -> (i32, i32) {
    %c0_i32 = arith.constant 0 : i32
    %c0_i32_0 = arith.constant 0 : i32
    %c0_i32_1 = arith.constant 0 : i32
    return %c0_i32, %c0_i32_0 : i32, i32
  }
  func.func @transform_2(%arg0: i32) -> (i32, i32) {
    %c0_i32 = arith.constant 0 : i32
    %c0_i32_0 = arith.constant 0 : i32
    %c0_i32_1 = arith.constant 0 : i32
    return %c0_i32, %c0_i32_0 : i32, i32
  }
  func.func @transform_3(%arg0: i32) -> (i32, i32, i32) {
    %c0_i32 = arith.constant 0 : i32
    %c0_i32_0 = arith.constant 0 : i32
    %c0_i32_1 = arith.constant 0 : i32
    %c0_i32_2 = arith.constant 0 : i32
    return %c0_i32, %c0_i32_0, %c0_i32_1 : i32, i32, i32
  }
  func.func @transform_4(%arg0: i32) -> (i32, i32) {
    %c0_i32 = arith.constant 0 : i32
    %c0_i32_0 = arith.constant 0 : i32
    %c0_i32_1 = arith.constant 0 : i32
    return %c0_i32, %c0_i32_0 : i32, i32
  }
  func.func @transform_5(%arg0: i32) -> (i32, i32) {
    %c0_i32 = arith.constant 0 : i32
    %c0_i32_0 = arith.constant 0 : i32
    %c0_i32_1 = arith.constant 0 : i32
    return %c0_i32, %c0_i32_0 : i32, i32
  }
  func.func @transform_6(%arg0: i32) -> (i32, i32) {
    %c0_i32 = arith.constant 0 : i32
    %c0_i32_0 = arith.constant 0 : i32
    %c0_i32_1 = arith.constant 0 : i32
    return %c0_i32, %c0_i32_0 : i32, i32
  }
  func.func @transform_7(%arg0: i32) -> (i32, i32) {
    %c0_i32 = arith.constant 0 : i32
    %c0_i32_0 = arith.constant 0 : i32
    %c0_i32_1 = arith.constant 0 : i32
    return %c0_i32, %c0_i32_0 : i32, i32
  }
  func.func @transform_8(%arg0: i32) -> (i32, i32) {
    %c0_i32 = arith.constant 0 : i32
    %c0_i32_0 = arith.constant 0 : i32
    %c0_i32_1 = arith.constant 0 : i32
    return %c0_i32, %c0_i32_0 : i32, i32
  }
  func.func @transform_9(%arg0: i32) -> (i32, i32) {
    %c0_i32 = arith.constant 0 : i32
    %c0_i32_0 = arith.constant 0 : i32
    %c0_i32_1 = arith.constant 0 : i32
    return %c0_i32, %c0_i32_0 : i32, i32
  }
  func.func @transform_10(%arg0: i32) -> (i32, i32) {
    %c0_i32 = arith.constant 0 : i32
    %c0_i32_0 = arith.constant 0 : i32
    %c0_i32_1 = arith.constant 0 : i32
    return %c0_i32, %c0_i32_0 : i32, i32
  }
  func.func @transform_11(%arg0: i32) -> (i32, i32) {
    %c0_i32 = arith.constant 0 : i32
    %c0_i32_0 = arith.constant 0 : i32
    %c0_i32_1 = arith.constant 0 : i32
    return %c0_i32, %c0_i32_0 : i32, i32
  }
  func.func @transform_12(%arg0: i32) -> (i32, i32) {
    %c0_i32 = arith.constant 0 : i32
    %c0_i32_0 = arith.constant 0 : i32
    %c0_i32_1 = arith.constant 0 : i32
    return %c0_i32, %c0_i32_0 : i32, i32
  }
  func.func @transform_13(%arg0: i32) -> (i32, i32) {
    %c0_i32 = arith.constant 0 : i32
    %c0_i32_0 = arith.constant 0 : i32
    %c0_i32_1 = arith.constant 0 : i32
    return %c0_i32, %c0_i32_0 : i32, i32
  }
  func.func @transform_14(%arg0: i32) -> (i32, i32) {
    %c0_i32 = arith.constant 0 : i32
    %c0_i32_0 = arith.constant 0 : i32
    %c0_i32_1 = arith.constant 0 : i32
    return %c0_i32, %c0_i32_0 : i32, i32
  }
  func.func @transform_15(%arg0: i32) -> (i32, i32) {
    %c0_i32 = arith.constant 0 : i32
    %c0_i32_0 = arith.constant 0 : i32
    %c0_i32_1 = arith.constant 0 : i32
    return %c0_i32, %c0_i32_0 : i32, i32
  }
  func.func @transform_16(%arg0: i32) -> (i32, i32) {
    %c0_i32 = arith.constant 0 : i32
    %c0_i32_0 = arith.constant 0 : i32
    %c0_i32_1 = arith.constant 0 : i32
    return %c0_i32, %c0_i32_0 : i32, i32
  }
  func.func @transform_17(%arg0: i32) -> (i32, i32) {
    %c0_i32 = arith.constant 0 : i32
    %c0_i32_0 = arith.constant 0 : i32
    %c0_i32_1 = arith.constant 0 : i32
    return %c0_i32, %c0_i32_0 : i32, i32
  }
  func.func @transform_18(%arg0: i32) -> (i32, i32, i32) {
    %c0_i32 = arith.constant 0 : i32
    %c0_i32_0 = arith.constant 0 : i32
    %c0_i32_1 = arith.constant 0 : i32
    %c0_i32_2 = arith.constant 0 : i32
    return %c0_i32, %c0_i32_0, %c0_i32_1 : i32, i32, i32
  }
  func.func @transform_19(%arg0: i32) -> (i32, i32, i32) {
    %c0_i32 = arith.constant 0 : i32
    %c0_i32_0 = arith.constant 0 : i32
    %c0_i32_1 = arith.constant 0 : i32
    %c0_i32_2 = arith.constant 0 : i32
    return %c0_i32, %c0_i32_0, %c0_i32_1 : i32, i32, i32
  }
}

</mosaic_0001>

<llo_original>
// kernel: seq2seq_forward.2
$region0: #{seq2seq_forward.2}
  #allocation0 [shape = 'u32[]', space=smem, size = 0x4, offset = 0x4, fixed_abs, tag = 'smem constant byte address 0x4 - core index']
  #allocation1 [shape = 'u32[144,128]{1,0:T(1,128)}', space=vmem, size = 0x12000, scoped, tag = 'internal scratch']
  %s0 = inlined_call_operand.vmem [shape: f32[8,8,32], index: 0, kind: input, shape index: {}]
  %s1 = inlined_call_operand.vmem [shape: f32[2,32,96], index: 1, kind: input, shape index: {}]
  %s2 = inlined_call_operand.vmem [shape: f32[2,32,96], index: 2, kind: input, shape index: {}]
  %s3 = inlined_call_operand.vmem [shape: f32[2,1,96], index: 3, kind: input, shape index: {}]
  %s4 = inlined_call_operand.vmem [shape: f32[2,1,32], index: 4, kind: input, shape index: {}]
  %s5 = inlined_call_operand.vmem [shape: f32[2,8,8,32], index: 5, kind: output, shape index: {}]
  %s6 = sld [smem:[#allocation0]]
  $region53: #{seq2seq_forward.2} parent=0
    _
  %s8 = ssub.s32 1, %s6
  %s9 = scalar_select 0, %s8, %s6
  loop: start=0, step=1, limit=4
  $region2: #{seq2seq_forward.2} parent=0 // loop_pre_header
    _
  $region3: #{seq2seq_forward.2} parent=0 // loop_header
    %s11 = sphi 0, %s15
    %p12 = scmp.ge.s32.totalorder %s11, 4
    %s19 = sphi 0, %s19
    %s21 = sphi 0, %s19
    %s22 = sphi 0, %s21
    %s36 = sphi 0, %s22
    %s42 = sphi 0, %s44
    %s45 = sphi 0, %s42
    %s46 = sphi 0, %s45
    %s62 = sphi 0, %s46
    %s68 = sphi 0, %s70
    %s71 = sphi 0, %s68
    %s72 = sphi 0, %s71
    %s88 = sphi 0, %s72
    %s94 = sphi 0, %s96
    %s97 = sphi 0, %s94
    %s98 = sphi 0, %s97
    %s114 = sphi 0, %s98
    %s120 = sphi 0, %s122
    %s123 = sphi 0, %s120
    %s124 = sphi 0, %s123
    %s140 = sphi 0, %s124
    %s146 = sphi 0, %s148
    %s149 = sphi 0, %s146
    %s150 = sphi 0, %s149
    %s166 = sphi 0, %s150
  $region4: #{seq2seq_forward.2} parent=0 // loop_header_branch
    %14 = sbr.rel (%p12) target = $region8
  $region5: #{seq2seq_forward.2} parent=0 // loop_body
    %s16 = ssub.s32 %s11, 1
    %s17 = ssub.s32 %s11, 2
    %s18 = sadd.s32 %s11, 1
    %s20 = sadd.s32 %s19, 1
    %p23 = scmp.eq.s32.totalorder %s11, 1
    %p24 = scmp.ne.s32.totalorder %s19, %s21
    %p25 = scmp.eq.s32.totalorder %s11, 0
    %p26 = por %p24, %p25
    %p27 = scmp.ne.s32.totalorder %s19, %s21
    %p28 = scmp.eq.s32.totalorder %s16, 1
    %p29 = por %p27, %p28
    %p30 = scmp.ne.s32.totalorder %s21, %s22
    %p31 = scmp.eq.s32.totalorder %s16, 0
    %p32 = por %p30, %p31
    %p33 = scmp.ne.s32.totalorder %s21, %s22
    %p34 = scmp.eq.s32.totalorder %s17, 1
    %p35 = por %p33, %p34
    %p37 = scmp.ne.s32.totalorder %s22, %s36
    %p38 = scmp.eq.s32.totalorder %s17, 0
    %p39 = por %p37, %p38
    %s40 = ssub.s32 %s11, %s18
    %p41 = scmp.eq.s32.totalorder %s40, 0
    %s43 = sadd.s32 %s42, 1
    %s44 = scalar_select %p41, %s42, %s43
    %p47 = pneg %p41
    %p48 = scmp.eq.s32.totalorder %s11, 1
    %p49 = por %p47, %p48
    %p50 = scmp.ne.s32.totalorder %s42, %s45
    %p51 = scmp.eq.s32.totalorder %s11, 0
    %p52 = por %p50, %p51
    %p53 = scmp.ne.s32.totalorder %s42, %s45
    %p54 = scmp.eq.s32.totalorder %s16, 1
    %p55 = por %p53, %p54
    %p56 = scmp.ne.s32.totalorder %s45, %s46
    %p57 = scmp.eq.s32.totalorder %s16, 0
    %p58 = por %p56, %p57
    %p59 = scmp.ne.s32.totalorder %s45, %s46
    %p60 = scmp.eq.s32.totalorder %s17, 1
    %p61 = por %p59, %p60
    %p63 = scmp.ne.s32.totalorder %s46, %s62
    %p64 = scmp.eq.s32.totalorder %s17, 0
    %p65 = por %p63, %p64
    %s66 = ssub.s32 %s11, %s18
    %p67 = scmp.eq.s32.totalorder %s66, 0
    %s69 = sadd.s32 %s68, 1
    %s70 = scalar_select %p67, %s68, %s69
    %p73 = pneg %p67
    %p74 = scmp.eq.s32.totalorder %s11, 1
    %p75 = por %p73, %p74
    %p76 = scmp.ne.s32.totalorder %s68, %s71
    %p77 = scmp.eq.s32.totalorder %s11, 0
    %p78 = por %p76, %p77
    %p79 = scmp.ne.s32.totalorder %s68, %s71
    %p80 = scmp.eq.s32.totalorder %s16, 1
    %p81 = por %p79, %p80
    %p82 = scmp.ne.s32.totalorder %s71, %s72
    %p83 = scmp.eq.s32.totalorder %s16, 0
    %p84 = por %p82, %p83
    %p85 = scmp.ne.s32.totalorder %s71, %s72
    %p86 = scmp.eq.s32.totalorder %s17, 1
    %p87 = por %p85, %p86
    %p89 = scmp.ne.s32.totalorder %s72, %s88
    %p90 = scmp.eq.s32.totalorder %s17, 0
    %p91 = por %p89, %p90
    %s92 = ssub.s32 %s11, %s18
    %p93 = scmp.eq.s32.totalorder %s92, 0
    %s95 = sadd.s32 %s94, 1
    %s96 = scalar_select %p93, %s94, %s95
    %p99 = pneg %p93
    %p100 = scmp.eq.s32.totalorder %s11, 1
    %p101 = por %p99, %p100
    %p102 = scmp.ne.s32.totalorder %s94, %s97
    %p103 = scmp.eq.s32.totalorder %s11, 0
    %p104 = por %p102, %p103
    %p105 = scmp.ne.s32.totalorder %s94, %s97
    %p106 = scmp.eq.s32.totalorder %s16, 1
    %p107 = por %p105, %p106
    %p108 = scmp.ne.s32.totalorder %s97, %s98
    %p109 = scmp.eq.s32.totalorder %s16, 0
    %p110 = por %p108, %p109
    %p111 = scmp.ne.s32.totalorder %s97, %s98
    %p112 = scmp.eq.s32.totalorder %s17, 1
    %p113 = por %p111, %p112
    %p115 = scmp.ne.s32.totalorder %s98, %s114
    %p116 = scmp.eq.s32.totalorder %s17, 0
    %p117 = por %p115, %p116
    %s118 = ssub.s32 %s11, %s18
    %p119 = scmp.eq.s32.totalorder %s118, 0
    %s121 = sadd.s32 %s120, 1
    %s122 = scalar_select %p119, %s120, %s121
    %p125 = pneg %p119
    %p126 = scmp.eq.s32.totalorder %s11, 1
    %p127 = por %p125, %p126
    %p128 = scmp.ne.s32.totalorder %s120, %s123
    %p129 = scmp.eq.s32.totalorder %s11, 0
    %p130 = por %p128, %p129
    %p131 = scmp.ne.s32.totalorder %s120, %s123
    %p132 = scmp.eq.s32.totalorder %s16, 1
    %p133 = por %p131, %p132
    %p134 = scmp.ne.s32.totalorder %s123, %s124
    %p135 = scmp.eq.s32.totalorder %s16, 0
    %p136 = por %p134, %p135
    %p137 = scmp.ne.s32.totalorder %s123, %s124
    %p138 = scmp.eq.s32.totalorder %s17, 1
    %p139 = por %p137, %p138
    %p141 = scmp.ne.s32.totalorder %s124, %s140
    %p142 = scmp.eq.s32.totalorder %s17, 0
    %p143 = por %p141, %p142
    %s144 = ssub.s32 %s11, %s18
    %p145 = scmp.eq.s32.totalorder %s144, 0
    %s147 = sadd.s32 %s146, 1
    %s148 = scalar_select %p145, %s146, %s147
    %p151 = pneg %p145
    %p152 = scmp.eq.s32.totalorder %s11, 1
    %p153 = por %p151, %p152
    %p154 = scmp.ne.s32.totalorder %s146, %s149
    %p155 = scmp.eq.s32.totalorder %s11, 0
    %p156 = por %p154, %p155
    %p157 = scmp.ne.s32.totalorder %s146, %s149
    %p158 = scmp.eq.s32.totalorder %s16, 1
    %p159 = por %p157, %p158
    %p160 = scmp.ne.s32.totalorder %s149, %s150
    %p161 = scmp.eq.s32.totalorder %s16, 0
    %p162 = por %p160, %p161
    %p163 = scmp.ne.s32.totalorder %s149, %s150
    %p164 = scmp.eq.s32.totalorder %s17, 1
    %p165 = por %p163, %p164
    %p167 = scmp.ne.s32.totalorder %s150, %s166
    %p168 = scmp.eq.s32.totalorder %s17, 0
    %p169 = por %p167, %p168
    %p170 = scmp.le.s32.totalorder 1, %s11
    %p171 = scmp.lt.s32.totalorder %s11, 3
    %p172 = pnand %p170, %p171
    %p173 = pneg %p172
    // Predicated region
    $region9: #{seq2seq_forward.2} parent=5 // pred_check
      _
    $region10: #{seq2seq_forward.2} parent=5 // pred_check_branch
      %175 = sbr.rel (%p172) target = $region12
    $region11: #{seq2seq_forward.2} parent=5 // pred_region
      %s176 = ssub.s32 %s11, 1
      // Predicated region
      $region13: #{seq2seq_forward.2} parent=11 // pred_check
        %p177 = pneg %p32
      $region14: #{seq2seq_forward.2} parent=11 // pred_check_branch
        %179 = sbr.rel (%p177) target = $region16
      $region15: #{seq2seq_forward.2} parent=11 // pred_region
        _
      $region16: #{seq2seq_forward.2} parent=11 // pred_fallthru
        _
    $region12: #{seq2seq_forward.2} parent=5 // pred_fallthru
      _
    %p180 = scmp.lt.s32.totalorder %s11, 2
    // Predicated region
    $region17: #{seq2seq_forward.2} parent=5 // pred_check
      %p181 = pneg %p180
    $region18: #{seq2seq_forward.2} parent=5 // pred_check_branch
      %183 = sbr.rel (%p181) target = $region20
    $region19: #{seq2seq_forward.2} parent=5 // pred_region
      // Predicated region
      $region21: #{seq2seq_forward.2} parent=19 // pred_check
        %p184 = pneg %p52
      $region22: #{seq2seq_forward.2} parent=19 // pred_check_branch
        %186 = sbr.rel (%p184) target = $region24
      $region23: #{seq2seq_forward.2} parent=19 // pred_region
        %p187 = scmp.lt.s32.totalorder %s11, 1
        %s188 = scalar_select %p187, %s11, 1
        %s189 = smul.addr %s188, 4
        %s190 = smul.addr %s189, 8
        %s191 = scalar_lea.vmem %s1, %s190
      $region24: #{seq2seq_forward.2} parent=19 // pred_fallthru
        _
      // Predicated region
      $region25: #{seq2seq_forward.2} parent=19 // pred_check
        %p192 = pneg %p78
      $region26: #{seq2seq_forward.2} parent=19 // pred_check_branch
        %194 = sbr.rel (%p192) target = $region28
      $region27: #{seq2seq_forward.2} parent=19 // pred_region
        %p195 = scmp.lt.s32.totalorder %s11, 1
        %s196 = scalar_select %p195, %s11, 1
        %s197 = smul.addr %s196, 4
        %s198 = smul.addr %s197, 8
        %s199 = scalar_lea.vmem %s2, %s198
      $region28: #{seq2seq_forward.2} parent=19 // pred_fallthru
        _
      // Predicated region
      $region29: #{seq2seq_forward.2} parent=19 // pred_check
        %p200 = pneg %p104
      $region30: #{seq2seq_forward.2} parent=19 // pred_check_branch
        %202 = sbr.rel (%p200) target = $region32
      $region31: #{seq2seq_forward.2} parent=19 // pred_region
        %p203 = scmp.lt.s32.totalorder %s11, 1
        %s204 = scalar_select %p203, %s11, 1
        %s205 = scalar_lea.vmem %s3, %s204
      $region32: #{seq2seq_forward.2} parent=19 // pred_fallthru
        _
      // Predicated region
      $region33: #{seq2seq_forward.2} parent=19 // pred_check
        %p206 = pneg %p130
      $region34: #{seq2seq_forward.2} parent=19 // pred_check_branch
        %208 = sbr.rel (%p206) target = $region36
      $region35: #{seq2seq_forward.2} parent=19 // pred_region
        %p209 = scmp.lt.s32.totalorder %s11, 1
        %s210 = scalar_select %p209, %s11, 1
        %s211 = scalar_lea.vmem %s4, %s210
      $region36: #{seq2seq_forward.2} parent=19 // pred_fallthru
        _
    $region20: #{seq2seq_forward.2} parent=5 // pred_fallthru
      _
    %p212 = scmp.le.s32.totalorder 1, %s11
    %p213 = scmp.lt.s32.totalorder %s11, 3
    %p214 = pnand %p212, %p213
    %p215 = pneg %p214
    // Predicated region
    $region37: #{seq2seq_forward.2} parent=5 // pred_check
      _
    $region38: #{seq2seq_forward.2} parent=5 // pred_check_branch
      %217 = sbr.rel (%p214) target = $region40
    $region39: #{seq2seq_forward.2} parent=5 // pred_region
      %s218 = ssub.s32 %s11, 1
      %p219 = pneg %p32
      %p220 = pneg %p29
      %p221 = scmp.lt.s32.totalorder %s16, 1
      %s222 = scalar_select %p221, %s16, 1
      %s223 = smul.addr %s222, 4
      %s224 = smul.addr %s223, 8
      %s225 = scalar_lea.vmem %s1, %s224
      %p226 = pneg %p58
      %p227 = pneg %p55
      %p228 = scmp.lt.s32.totalorder %s16, 1
      %s229 = scalar_select %p228, %s16, 1
      %s230 = smul.addr %s229, 4
      %s231 = smul.addr %s230, 8
      %s232 = scalar_lea.vmem %s2, %s231
      %p233 = pneg %p84
      %p234 = pneg %p81
      %p235 = scmp.lt.s32.totalorder %s16, 1
      %s236 = scalar_select %p235, %s16, 1
      %s237 = scalar_lea.vmem %s3, %s236
      %p238 = pneg %p110
      %p239 = pneg %p107
      %p240 = scmp.lt.s32.totalorder %s16, 1
      %s241 = scalar_select %p240, %s16, 1
      %s242 = scalar_lea.vmem %s4, %s241
      %p243 = pneg %p136
      %p244 = pneg %p133
      %p245 = pneg %p162
      %p246 = pneg %p159
      %p247 = scmp.lt.s32.totalorder %s16, 1
      %s248 = scalar_select %p247, %s16, 1
      %s249 = smul.addr %s248, 8
      %s250 = smul.addr %s249, 8
      %s251 = scalar_lea.vmem %s5, %s250
      %p252 = scmp.lt.s32.totalorder %s16, 1
      %s253 = scalar_select %p252, %s16, 1
      %s254 = smul.addr %s253, 4
      %s255 = smul.addr %s254, 8
      %s256 = scalar_lea.vmem %s1, %s255
      %p257 = scmp.lt.s32.totalorder %s16, 1
      %s258 = scalar_select %p257, %s16, 1
      %s259 = smul.addr %s258, 4
      %s260 = smul.addr %s259, 8
      %s261 = scalar_lea.vmem %s2, %s260
      %p262 = scmp.lt.s32.totalorder %s16, 1
      %s263 = scalar_select %p262, %s16, 1
      %s264 = scalar_lea.vmem %s3, %s263
      %p265 = scmp.lt.s32.totalorder %s16, 1
      %s266 = scalar_select %p265, %s16, 1
      %s267 = scalar_lea.vmem %s4, %s266
      %p268 = scmp.lt.s32.totalorder %s16, 1
      %s269 = scalar_select %p268, %s16, 1
      %s270 = smul.addr %s269, 8
      %s271 = smul.addr %s270, 8
      %s272 = scalar_lea.vmem %s5, %s271
      %p273 = scmp.eq.s32.totalorder %s16, 0
      %v274 = vld [vmem:[%s256] sm:$0xff]
      %v275 = vld [vmem:[%s256 + $0x8] sm:$0xff]
      %v276 = vld [vmem:[%s256 + $0x10] sm:$0xff]
      %v277 = vld [vmem:[%s256 + $0x18] sm:$0xff]
      %v278 = vld [vmem:[%s261] sm:$0xff]
      %v279 = vld [vmem:[%s261 + $0x8] sm:$0xff]
      %v280 = vld [vmem:[%s261 + $0x10] sm:$0xff]
      %v281 = vld [vmem:[%s261 + $0x18] sm:$0xff]
      %v282 = vld [vmem:[%s264] sm:$0x1]
      %v283 = vld [vmem:[%s267] sm:$0x1]
      %v284 = vld [vmem:[%s0] sm:$0xff]
      %v285 = vld [vmem:[%s0 + $0x8] sm:$0xff]
      %v286 = vld [vmem:[%s0 + $0x10] sm:$0xff]
      %v287 = vld [vmem:[%s0 + $0x18] sm:$0xff]
      %v288 = vld [vmem:[%s0 + $0x20] sm:$0xff]
      %v289 = vld [vmem:[%s0 + $0x28] sm:$0xff]
      %v290 = vld [vmem:[%s0 + $0x30] sm:$0xff]
      %v291 = vld [vmem:[%s0 + $0x38] sm:$0xff]
      %v293 = vlaneseq
      %v294 = vshrl.u32 %v293, 7
      %v295 = vsub.s32 0, %v294
      %v296 = vrot.slane %v282, %v295
      %vm298 = vcmask 261120
      %v300 = vsel %vm298, %v284, 0
      %v303 = vsel %vm298, %v285, 0
      %v306 = vsel %vm298, %v286, 0
      %v309 = vsel %vm298, %v287, 0
      %v312 = vsel %vm298, %v288, 0
      %v315 = vsel %vm298, %v289, 0
      %v318 = vsel %vm298, %v290, 0
      %v321 = vsel %vm298, %v291, 0
      %323 = vmatprep.subr.mxu0 0.0
      %324 = vmatpush1.msra.mxu0 0.0
      %325 = vmatprep.subr.mxu0 0.0
      %326 = vmatpush1.msra.mxu0 0.0
      %327 = vmatprep.subr.mxu0 0.0
      %328 = vmatpush1.msra.mxu0 0.0
      %329 = vmatprep.subr.mxu0 0.0
      %330 = vmatpush1.msra.mxu0 0.0
      %331 = vmatprep.subr.mxu0 0.0
      %332 = vmatpush1.msra.mxu0 0.0
      %333 = vmatprep.subr.mxu0 0.0
      %334 = vmatpush1.msra.mxu0 0.0
      %335 = vmatprep.subr.mxu0 0.0
      %336 = vmatpush1.msra.mxu0 0.0
      %337 = vmatprep.subr.mxu0 0.0
      %338 = vmatpush1.msra.mxu0 0.0
      %339 = vmatprep.subr.mxu0 0.0
      %340 = vmatpush1.msra.mxu0 0.0
      %341 = vmatprep.subr.mxu0 0.0
      %342 = vmatpush1.msra.mxu0 0.0
      %343 = vmatprep.subr.mxu0 0.0
      %344 = vmatpush1.msra.mxu0 0.0
      %345 = vmatprep.subr.mxu0 0.0
      %346 = vmatpush1.msra.mxu0 0.0
      %347 = vmatprep.subr.mxu0 0.0
      %348 = vmatpush1.msra.mxu0 %v277
      %349 = vmatprep.subr.mxu0 0.0
      %350 = vmatpush1.msra.mxu0 %v276
      %351 = vmatprep.subr.mxu0 0.0
      %352 = vmatpush1.msra.mxu0 %v275
      %353 = vmatprep.subr.mxu0 0.0
      %354 = vmatpush1.msra.mxu0 %v274
      %355 = vmatprep.subr.mxu0 0.0
      %356 = vmatpush2.msra.mxu0 0.0
      %357 = vmatprep.subr.mxu0 0.0
      %358 = vmatpush2.msra.mxu0 0.0
      %359 = vmatprep.subr.mxu0 0.0
      %360 = vmatpush2.msra.mxu0 0.0
      %361 = vmatprep.subr.mxu0 0.0
      %362 = vmatpush2.msra.mxu0 0.0
      %363 = vmatprep.subr.mxu0 0.0
      %364 = vmatpush2.msra.mxu0 0.0
      %365 = vmatprep.subr.mxu0 0.0
      %366 = vmatpush2.msra.mxu0 0.0
      %367 = vmatprep.subr.mxu0 0.0
      %368 = vmatpush2.msra.mxu0 0.0
      %369 = vmatprep.subr.mxu0 0.0
      %370 = vmatpush2.msra.mxu0 0.0
      %371 = vmatprep.subr.mxu0 0.0
      %372 = vmatpush2.msra.mxu0 0.0
      %373 = vmatprep.subr.mxu0 0.0
      %374 = vmatpush2.msra.mxu0 0.0
      %375 = vmatprep.subr.mxu0 0.0
      %376 = vmatpush2.msra.mxu0 0.0
      %377 = vmatprep.subr.mxu0 0.0
      %378 = vmatpush2.msra.mxu0 0.0
      %379 = vmatprep.subr.mxu0 0.0
      %380 = vmatpush2.msra.mxu0 0.0
      %381 = vmatprep.subr.mxu0 0.0
      %382 = vmatpush2.msra.mxu0 0.0
      %383 = vmatprep.subr.mxu0 0.0
      %384 = vmatpush2.msra.mxu0 0.0
      %385 = vmatprep.subr.mxu0 0.0
      %386 = vmatpush2.msra.mxu0 0.0
      %387 = vmatprep.mubr.f32.mxu0 0.0
      %388 = vmatmul.mubr.f32.gmra.mxu0 %v300
      %v389 = vpop.f32.mrf.mxu0
      %v390 = vadd.f32 %v296, %v389
      %v391 = vpop.f32.mrf.mxu0
      %392 = vmatprep.mubr.f32.mxu0 0.0
      %393 = vmatmul.mubr.f32.gmra.mxu0 %v303
      %v394 = vpop.f32.mrf.mxu0
      %v395 = vadd.f32 %v296, %v394
      %v396 = vpop.f32.mrf.mxu0
      %397 = vmatprep.mubr.f32.mxu0 0.0
      %398 = vmatmul.mubr.f32.gmra.mxu0 %v306
      %v399 = vpop.f32.mrf.mxu0
      %v400 = vadd.f32 %v296, %v399
      %v401 = vpop.f32.mrf.mxu0
      %402 = vmatprep.mubr.f32.mxu0 0.0
      %403 = vmatmul.mubr.f32.gmra.mxu0 %v309
      %v404 = vpop.f32.mrf.mxu0
      %v405 = vadd.f32 %v296, %v404
      %v406 = vpop.f32.mrf.mxu0
      %407 = vmatprep.mubr.f32.mxu0 0.0
      %408 = vmatmul.mubr.f32.gmra.mxu0 %v312
      %v409 = vpop.f32.mrf.mxu0
      %v410 = vadd.f32 %v296, %v409
      %v411 = vpop.f32.mrf.mxu0
      %412 = vmatprep.mubr.f32.mxu0 0.0
      %413 = vmatmul.mubr.f32.gmra.mxu0 %v315
      %v414 = vpop.f32.mrf.mxu0
      %v415 = vadd.f32 %v296, %v414
      %v416 = vpop.f32.mrf.mxu0
      %417 = vmatprep.mubr.f32.mxu0 0.0
      %418 = vmatmul.mubr.f32.gmra.mxu0 %v318
      %v419 = vpop.f32.mrf.mxu0
      %v420 = vadd.f32 %v296, %v419
      %v421 = vpop.f32.mrf.mxu0
      %422 = vmatprep.mubr.f32.mxu0 0.0
      %423 = vmatmul.mubr.f32.gmra.mxu0 %v321
      %v424 = vpop.f32.mrf.mxu0
      %v425 = vadd.f32 %v296, %v424
      %v426 = vpop.f32.mrf.mxu0
      %427 = vdwg.mxu0
      %s428 = scalar_select %p273, 1, 0
      %v429 = vstv %s428
      %vm430 = vcmp.eq.s32.totalorder %v429, 1
      %v431 = vsel %vm430, %v390, %v425
      %v433 = vsel %vm298, 0.0, 0
      %435 = vmatprep.subr.mxu0 0.0
      %436 = vmatpush1.msra.mxu0 0.0
      %437 = vmatprep.subr.mxu0 0.0
      %438 = vmatpush1.msra.mxu0 0.0
      %439 = vmatprep.subr.mxu0 0.0
      %440 = vmatpush1.msra.mxu0 0.0
      %441 = vmatprep.subr.mxu0 0.0
      %442 = vmatpush1.msra.mxu0 0.0
      %443 = vmatprep.subr.mxu0 0.0
      %444 = vmatpush1.msra.mxu0 0.0
      %445 = vmatprep.subr.mxu0 0.0
      %446 = vmatpush1.msra.mxu0 0.0
      %447 = vmatprep.subr.mxu0 0.0
      %448 = vmatpush1.msra.mxu0 0.0
      %449 = vmatprep.subr.mxu0 0.0
      %450 = vmatpush1.msra.mxu0 0.0
      %451 = vmatprep.subr.mxu0 0.0
      %452 = vmatpush1.msra.mxu0 0.0
      %453 = vmatprep.subr.mxu0 0.0
      %454 = vmatpush1.msra.mxu0 0.0
      %455 = vmatprep.subr.mxu0 0.0
      %456 = vmatpush1.msra.mxu0 0.0
      %457 = vmatprep.subr.mxu0 0.0
      %458 = vmatpush1.msra.mxu0 0.0
      %459 = vmatprep.subr.mxu0 0.0
      %460 = vmatpush1.msra.mxu0 %v281
      %461 = vmatprep.subr.mxu0 0.0
      %462 = vmatpush1.msra.mxu0 %v280
      %463 = vmatprep.subr.mxu0 0.0
      %464 = vmatpush1.msra.mxu0 %v279
      %465 = vmatprep.subr.mxu0 0.0
      %466 = vmatpush1.msra.mxu0 %v278
      %467 = vmatprep.subr.mxu0 0.0
      %468 = vmatpush2.msra.mxu0 0.0
      %469 = vmatprep.subr.mxu0 0.0
      %470 = vmatpush2.msra.mxu0 0.0
      %471 = vmatprep.subr.mxu0 0.0
      %472 = vmatpush2.msra.mxu0 0.0
      %473 = vmatprep.subr.mxu0 0.0
      %474 = vmatpush2.msra.mxu0 0.0
      %475 = vmatprep.subr.mxu0 0.0
      %476 = vmatpush2.msra.mxu0 0.0
      %477 = vmatprep.subr.mxu0 0.0
      %478 = vmatpush2.msra.mxu0 0.0
      %479 = vmatprep.subr.mxu0 0.0
      %480 = vmatpush2.msra.mxu0 0.0
      %481 = vmatprep.subr.mxu0 0.0
      %482 = vmatpush2.msra.mxu0 0.0
      %483 = vmatprep.subr.mxu0 0.0
      %484 = vmatpush2.msra.mxu0 0.0
      %485 = vmatprep.subr.mxu0 0.0
      %486 = vmatpush2.msra.mxu0 0.0
      %487 = vmatprep.subr.mxu0 0.0
      %488 = vmatpush2.msra.mxu0 0.0
      %489 = vmatprep.subr.mxu0 0.0
      %490 = vmatpush2.msra.mxu0 0.0
      %491 = vmatprep.subr.mxu0 0.0
      %492 = vmatpush2.msra.mxu0 0.0
      %493 = vmatprep.subr.mxu0 0.0
      %494 = vmatpush2.msra.mxu0 0.0
      %495 = vmatprep.subr.mxu0 0.0
      %496 = vmatpush2.msra.mxu0 0.0
      %497 = vmatprep.subr.mxu0 0.0
      %498 = vmatpush2.msra.mxu0 0.0
      %499 = vmatprep.mubr.f32.mxu0 0.0
      %500 = vmatmul.mubr.f32.gmra.mxu0 %v433
      %v501 = vpop.f32.mrf.mxu0
      %v502 = vadd.f32 0.0, %v501
      %v503 = vpop.f32.mrf.mxu0
      %504 = vdwg.mxu0
      %v505 = vadd.f32 %v431, %v502
      %v506 = vxor.u32 %v505, 2147483648
      %v507 = vmul.f32 %v506, 1.442695
      %v508 = vpow.pop %v507
      %v509 = vadd.f32 %v508, 1.0
      %v510 = vrcp.pop %v509
      %v511 = vmul.f32 1.0, %v510
      %v513 = vlaneseq
      %v514 = vshrl.u32 %v513, 7
      %v515 = vsub.s32 0, %v514
      %v516 = vrot.slane %v283, %v515
      %517 = vrot.lane.b32.xlu0 %v516, 64
      %v518 = vpop.permute.xlu0 %517
      %v520 = vadd.f32 %v502, %v518
      %522 = vrot.lane.b32.xlu0 %v520, 64
      %v523 = vpop.permute.xlu0 %522
      %v525 = vmul.f32 %v511, %v523
      %527 = vrot.lane.b32.xlu0 %v525, 64
      %v528 = vpop.permute.xlu0 %527
      %v530 = vadd.f32 %v431, %v528
      %v531 = vtanh.pop %v530
      %v532 = vsub.f32 1.0, %v511
      %534 = vrot.lane.b32.xlu0 %v531, 96
      %v535 = vpop.permute.xlu0 %534
      %v537 = vmul.f32 %v532, %v535
      %v538 = vmul.f32 %v511, 0.0
      %v539 = vadd.f32 %v537, %v538
      %v540 = vsel %vm430, %v395, %v420
      %542 = vrot.lane.b32.xlu0 %v539, 96
      %v543 = vpop.permute.xlu0 %542
      %v544 = vsel %vm298, %v543, 0
      %546 = vmatprep.subr.mxu0 0.0
      %547 = vmatpush1.msra.mxu0 0.0
      %548 = vmatprep.subr.mxu0 0.0
      %549 = vmatpush1.msra.mxu0 0.0
      %550 = vmatprep.subr.mxu0 0.0
      %551 = vmatpush1.msra.mxu0 0.0
      %552 = vmatprep.subr.mxu0 0.0
      %553 = vmatpush1.msra.mxu0 0.0
      %554 = vmatprep.subr.mxu0 0.0
      %555 = vmatpush1.msra.mxu0 0.0
      %556 = vmatprep.subr.mxu0 0.0
      %557 = vmatpush1.msra.mxu0 0.0
      %558 = vmatprep.subr.mxu0 0.0
      %559 = vmatpush1.msra.mxu0 0.0
      %560 = vmatprep.subr.mxu0 0.0
      %561 = vmatpush1.msra.mxu0 0.0
      %562 = vmatprep.subr.mxu0 0.0
      %563 = vmatpush1.msra.mxu0 0.0
      %564 = vmatprep.subr.mxu0 0.0
      %565 = vmatpush1.msra.mxu0 0.0
      %566 = vmatprep.subr.mxu0 0.0
      %567 = vmatpush1.msra.mxu0 0.0
      %568 = vmatprep.subr.mxu0 0.0
      %569 = vmatpush1.msra.mxu0 0.0
      %570 = vmatprep.subr.mxu0 0.0
      %571 = vmatpush1.msra.mxu0 %v281
      %572 = vmatprep.subr.mxu0 0.0
      %573 = vmatpush1.msra.mxu0 %v280
      %574 = vmatprep.subr.mxu0 0.0
      %575 = vmatpush1.msra.mxu0 %v279
      %576 = vmatprep.subr.mxu0 0.0
      %577 = vmatpush1.msra.mxu0 %v278
      %578 = vmatprep.subr.mxu0 0.0
      %579 = vmatpush2.msra.mxu0 0.0
      %580 = vmatprep.subr.mxu0 0.0
      %581 = vmatpush2.msra.mxu0 0.0
      %582 = vmatprep.subr.mxu0 0.0
      %583 = vmatpush2.msra.mxu0 0.0
      %584 = vmatprep.subr.mxu0 0.0
      %585 = vmatpush2.msra.mxu0 0.0
      %586 = vmatprep.subr.mxu0 0.0
      %587 = vmatpush2.msra.mxu0 0.0
      %588 = vmatprep.subr.mxu0 0.0
      %589 = vmatpush2.msra.mxu0 0.0
      %590 = vmatprep.subr.mxu0 0.0
      %591 = vmatpush2.msra.mxu0 0.0
      %592 = vmatprep.subr.mxu0 0.0
      %593 = vmatpush2.msra.mxu0 0.0
      %594 = vmatprep.subr.mxu0 0.0
      %595 = vmatpush2.msra.mxu0 0.0
      %596 = vmatprep.subr.mxu0 0.0
      %597 = vmatpush2.msra.mxu0 0.0
      %598 = vmatprep.subr.mxu0 0.0
      %599 = vmatpush2.msra.mxu0 0.0
      %600 = vmatprep.subr.mxu0 0.0
      %601 = vmatpush2.msra.mxu0 0.0
      %602 = vmatprep.subr.mxu0 0.0
      %603 = vmatpush2.msra.mxu0 0.0
      %604 = vmatprep.subr.mxu0 0.0
      %605 = vmatpush2.msra.mxu0 0.0
      %606 = vmatprep.subr.mxu0 0.0
      %607 = vmatpush2.msra.mxu0 0.0
      %608 = vmatprep.subr.mxu0 0.0
      %609 = vmatpush2.msra.mxu0 0.0
      %610 = vmatprep.mubr.f32.mxu0 0.0
      %611 = vmatmul.mubr.f32.gmra.mxu0 %v544
      %v612 = vpop.f32.mrf.mxu0
      %v613 = vadd.f32 0.0, %v612
      %v614 = vpop.f32.mrf.mxu0
      %615 = vdwg.mxu0
      %v616 = vadd.f32 %v540, %v613
      %v617 = vxor.u32 %v616, 2147483648
      %v618 = vmul.f32 %v617, 1.442695
      %v619 = vpow.pop %v618
      %v620 = vadd.f32 %v619, 1.0
      %v621 = vrcp.pop %v620
      %v622 = vmul.f32 1.0, %v621
      %v623 = vadd.f32 %v613, %v518
      %625 = vrot.lane.b32.xlu0 %v623, 64
      %v626 = vpop.permute.xlu0 %625
      %v628 = vmul.f32 %v622, %v626
      %630 = vrot.lane.b32.xlu0 %v628, 64
      %v631 = vpop.permute.xlu0 %630
      %v633 = vadd.f32 %v540, %v631
      %v634 = vtanh.pop %v633
      %v635 = vsub.f32 1.0, %v622
      %637 = vrot.lane.b32.xlu0 %v634, 96
      %v638 = vpop.permute.xlu0 %637
      %v640 = vmul.f32 %v635, %v638
      %v641 = vmul.f32 %v622, %v539
      %v642 = vadd.f32 %v640, %v641
      %v643 = vsel %vm430, %v400, %v415
      %645 = vrot.lane.b32.xlu0 %v642, 96
      %v646 = vpop.permute.xlu0 %645
      %v647 = vsel %vm298, %v646, 0
      %649 = vmatprep.subr.mxu0 0.0
      %650 = vmatpush1.msra.mxu0 0.0
      %651 = vmatprep.subr.mxu0 0.0
      %652 = vmatpush1.msra.mxu0 0.0
      %653 = vmatprep.subr.mxu0 0.0
      %654 = vmatpush1.msra.mxu0 0.0
      %655 = vmatprep.subr.mxu0 0.0
      %656 = vmatpush1.msra.mxu0 0.0
      %657 = vmatprep.subr.mxu0 0.0
      %658 = vmatpush1.msra.mxu0 0.0
      %659 = vmatprep.subr.mxu0 0.0
      %660 = vmatpush1.msra.mxu0 0.0
      %661 = vmatprep.subr.mxu0 0.0
      %662 = vmatpush1.msra.mxu0 0.0
      %663 = vmatprep.subr.mxu0 0.0
      %664 = vmatpush1.msra.mxu0 0.0
      %665 = vmatprep.subr.mxu0 0.0
      %666 = vmatpush1.msra.mxu0 0.0
      %667 = vmatprep.subr.mxu0 0.0
      %668 = vmatpush1.msra.mxu0 0.0
      %669 = vmatprep.subr.mxu0 0.0
      %670 = vmatpush1.msra.mxu0 0.0
      %671 = vmatprep.subr.mxu0 0.0
      %672 = vmatpush1.msra.mxu0 0.0
      %673 = vmatprep.subr.mxu0 0.0
      %674 = vmatpush1.msra.mxu0 %v281
      %675 = vmatprep.subr.mxu0 0.0
      %676 = vmatpush1.msra.mxu0 %v280
      %677 = vmatprep.subr.mxu0 0.0
      %678 = vmatpush1.msra.mxu0 %v279
      %679 = vmatprep.subr.mxu0 0.0
      %680 = vmatpush1.msra.mxu0 %v278
      %681 = vmatprep.subr.mxu0 0.0
      %682 = vmatpush2.msra.mxu0 0.0
      %683 = vmatprep.subr.mxu0 0.0
      %684 = vmatpush2.msra.mxu0 0.0
      %685 = vmatprep.subr.mxu0 0.0
      %686 = vmatpush2.msra.mxu0 0.0
      %687 = vmatprep.subr.mxu0 0.0
      %688 = vmatpush2.msra.mxu0 0.0
      %689 = vmatprep.subr.mxu0 0.0
      %690 = vmatpush2.msra.mxu0 0.0
      %691 = vmatprep.subr.mxu0 0.0
      %692 = vmatpush2.msra.mxu0 0.0
      %693 = vmatprep.subr.mxu0 0.0
      %694 = vmatpush2.msra.mxu0 0.0
      %695 = vmatprep.subr.mxu0 0.0
      %696 = vmatpush2.msra.mxu0 0.0
      %697 = vmatprep.subr.mxu0 0.0
      %698 = vmatpush2.msra.mxu0 0.0
      %699 = vmatprep.subr.mxu0 0.0
      %700 = vmatpush2.msra.mxu0 0.0
      %701 = vmatprep.subr.mxu0 0.0
      %702 = vmatpush2.msra.mxu0 0.0
      %703 = vmatprep.subr.mxu0 0.0
      %704 = vmatpush2.msra.mxu0 0.0
      %705 = vmatprep.subr.mxu0 0.0
      %706 = vmatpush2.msra.mxu0 0.0
      %707 = vmatprep.subr.mxu0 0.0
      %708 = vmatpush2.msra.mxu0 0.0
      %709 = vmatprep.subr.mxu0 0.0
      %710 = vmatpush2.msra.mxu0 0.0
      %711 = vmatprep.subr.mxu0 0.0
      %712 = vmatpush2.msra.mxu0 0.0
      %713 = vmatprep.mubr.f32.mxu0 0.0
      %714 = vmatmul.mubr.f32.gmra.mxu0 %v647
      %v715 = vpop.f32.mrf.mxu0
      %v716 = vadd.f32 0.0, %v715
      %v717 = vpop.f32.mrf.mxu0
      %718 = vdwg.mxu0
      %v719 = vadd.f32 %v643, %v716
      %v720 = vxor.u32 %v719, 2147483648
      %v721 = vmul.f32 %v720, 1.442695
      %v722 = vpow.pop %v721
      %v723 = vadd.f32 %v722, 1.0
      %v724 = vrcp.pop %v723
      %v725 = vmul.f32 1.0, %v724
      %v726 = vadd.f32 %v716, %v518
      %728 = vrot.lane.b32.xlu0 %v726, 64
      %v729 = vpop.permute.xlu0 %728
      %v731 = vmul.f32 %v725, %v729
      %733 = vrot.lane.b32.xlu0 %v731, 64
      %v734 = vpop.permute.xlu0 %733
      %v736 = vadd.f32 %v643, %v734
      %v737 = vtanh.pop %v736
      %v738 = vsub.f32 1.0, %v725
      %740 = vrot.lane.b32.xlu0 %v737, 96
      %v741 = vpop.permute.xlu0 %740
      %v743 = vmul.f32 %v738, %v741
      %v744 = vmul.f32 %v725, %v642
      %v745 = vadd.f32 %v743, %v744
      %v746 = vsel %vm430, %v405, %v410
      %748 = vrot.lane.b32.xlu0 %v745, 96
      %v749 = vpop.permute.xlu0 %748
      %v750 = vsel %vm298, %v749, 0
      %752 = vmatprep.subr.mxu0 0.0
      %753 = vmatpush1.msra.mxu0 0.0
      %754 = vmatprep.subr.mxu0 0.0
      %755 = vmatpush1.msra.mxu0 0.0
      %756 = vmatprep.subr.mxu0 0.0
      %757 = vmatpush1.msra.mxu0 0.0
      %758 = vmatprep.subr.mxu0 0.0
      %759 = vmatpush1.msra.mxu0 0.0
      %760 = vmatprep.subr.mxu0 0.0
      %761 = vmatpush1.msra.mxu0 0.0
      %762 = vmatprep.subr.mxu0 0.0
      %763 = vmatpush1.msra.mxu0 0.0
      %764 = vmatprep.subr.mxu0 0.0
      %765 = vmatpush1.msra.mxu0 0.0
      %766 = vmatprep.subr.mxu0 0.0
      %767 = vmatpush1.msra.mxu0 0.0
      %768 = vmatprep.subr.mxu0 0.0
      %769 = vmatpush1.msra.mxu0 0.0
      %770 = vmatprep.subr.mxu0 0.0
      %771 = vmatpush1.msra.mxu0 0.0
      %772 = vmatprep.subr.mxu0 0.0
      %773 = vmatpush1.msra.mxu0 0.0
      %774 = vmatprep.subr.mxu0 0.0
      %775 = vmatpush1.msra.mxu0 0.0
      %776 = vmatprep.subr.mxu0 0.0
      %777 = vmatpush1.msra.mxu0 %v281
      %778 = vmatprep.subr.mxu0 0.0
      %779 = vmatpush1.msra.mxu0 %v280
      %780 = vmatprep.subr.mxu0 0.0
      %781 = vmatpush1.msra.mxu0 %v279
      %782 = vmatprep.subr.mxu0 0.0
      %783 = vmatpush1.msra.mxu0 %v278
      %784 = vmatprep.subr.mxu0 0.0
      %785 = vmatpush2.msra.mxu0 0.0
      %786 = vmatprep.subr.mxu0 0.0
      %787 = vmatpush2.msra.mxu0 0.0
      %788 = vmatprep.subr.mxu0 0.0
      %789 = vmatpush2.msra.mxu0 0.0
      %790 = vmatprep.subr.mxu0 0.0
      %791 = vmatpush2.msra.mxu0 0.0
      %792 = vmatprep.subr.mxu0 0.0
      %793 = vmatpush2.msra.mxu0 0.0
      %794 = vmatprep.subr.mxu0 0.0
      %795 = vmatpush2.msra.mxu0 0.0
      %796 = vmatprep.subr.mxu0 0.0
      %797 = vmatpush2.msra.mxu0 0.0
      %798 = vmatprep.subr.mxu0 0.0
      %799 = vmatpush2.msra.mxu0 0.0
      %800 = vmatprep.subr.mxu0 0.0
      %801 = vmatpush2.msra.mxu0 0.0
      %802 = vmatprep.subr.mxu0 0.0
      %803 = vmatpush2.msra.mxu0 0.0
      %804 = vmatprep.subr.mxu0 0.0
      %805 = vmatpush2.msra.mxu0 0.0
      %806 = vmatprep.subr.mxu0 0.0
      %807 = vmatpush2.msra.mxu0 0.0
      %808 = vmatprep.subr.mxu0 0.0
      %809 = vmatpush2.msra.mxu0 0.0
      %810 = vmatprep.subr.mxu0 0.0
      %811 = vmatpush2.msra.mxu0 0.0
      %812 = vmatprep.subr.mxu0 0.0
      %813 = vmatpush2.msra.mxu0 0.0
      %814 = vmatprep.subr.mxu0 0.0
      %815 = vmatpush2.msra.mxu0 0.0
      %816 = vmatprep.mubr.f32.mxu0 0.0
      %817 = vmatmul.mubr.f32.gmra.mxu0 %v750
      %v818 = vpop.f32.mrf.mxu0
      %v819 = vadd.f32 0.0, %v818
      %v820 = vpop.f32.mrf.mxu0
      %821 = vdwg.mxu0
      %v822 = vadd.f32 %v746, %v819
      %v823 = vxor.u32 %v822, 2147483648
      %v824 = vmul.f32 %v823, 1.442695
      %v825 = vpow.pop %v824
      %v826 = vadd.f32 %v825, 1.0
      %v827 = vrcp.pop %v826
      %v828 = vmul.f32 1.0, %v827
      %v829 = vadd.f32 %v819, %v518
      %831 = vrot.lane.b32.xlu0 %v829, 64
      %v832 = vpop.permute.xlu0 %831
      %v834 = vmul.f32 %v828, %v832
      %836 = vrot.lane.b32.xlu0 %v834, 64
      %v837 = vpop.permute.xlu0 %836
      %v839 = vadd.f32 %v746, %v837
      %v840 = vtanh.pop %v839
      %v841 = vsub.f32 1.0, %v828
      %843 = vrot.lane.b32.xlu0 %v840, 96
      %v844 = vpop.permute.xlu0 %843
      %v846 = vmul.f32 %v841, %v844
      %v847 = vmul.f32 %v828, %v745
      %v848 = vadd.f32 %v846, %v847
      %v849 = vsel %vm430, %v410, %v405
      %851 = vrot.lane.b32.xlu0 %v848, 96
      %v852 = vpop.permute.xlu0 %851
      %v853 = vsel %vm298, %v852, 0
      %855 = vmatprep.subr.mxu0 0.0
      %856 = vmatpush1.msra.mxu0 0.0
      %857 = vmatprep.subr.mxu0 0.0
      %858 = vmatpush1.msra.mxu0 0.0
      %859 = vmatprep.subr.mxu0 0.0
      %860 = vmatpush1.msra.mxu0 0.0
      %861 = vmatprep.subr.mxu0 0.0
      %862 = vmatpush1.msra.mxu0 0.0
      %863 = vmatprep.subr.mxu0 0.0
      %864 = vmatpush1.msra.mxu0 0.0
      %865 = vmatprep.subr.mxu0 0.0
      %866 = vmatpush1.msra.mxu0 0.0
      %867 = vmatprep.subr.mxu0 0.0
      %868 = vmatpush1.msra.mxu0 0.0
      %869 = vmatprep.subr.mxu0 0.0
      %870 = vmatpush1.msra.mxu0 0.0
      %871 = vmatprep.subr.mxu0 0.0
      %872 = vmatpush1.msra.mxu0 0.0
      %873 = vmatprep.subr.mxu0 0.0
      %874 = vmatpush1.msra.mxu0 0.0
      %875 = vmatprep.subr.mxu0 0.0
      %876 = vmatpush1.msra.mxu0 0.0
      %877 = vmatprep.subr.mxu0 0.0
      %878 = vmatpush1.msra.mxu0 0.0
      %879 = vmatprep.subr.mxu0 0.0
      %880 = vmatpush1.msra.mxu0 %v281
      %881 = vmatprep.subr.mxu0 0.0
      %882 = vmatpush1.msra.mxu0 %v280
      %883 = vmatprep.subr.mxu0 0.0
      %884 = vmatpush1.msra.mxu0 %v279
      %885 = vmatprep.subr.mxu0 0.0
      %886 = vmatpush1.msra.mxu0 %v278
      %887 = vmatprep.subr.mxu0 0.0
      %888 = vmatpush2.msra.mxu0 0.0
      %889 = vmatprep.subr.mxu0 0.0
      %890 = vmatpush2.msra.mxu0 0.0
      %891 = vmatprep.subr.mxu0 0.0
      %892 = vmatpush2.msra.mxu0 0.0
      %893 = vmatprep.subr.mxu0 0.0
      %894 = vmatpush2.msra.mxu0 0.0
      %895 = vmatprep.subr.mxu0 0.0
      %896 = vmatpush2.msra.mxu0 0.0
      %897 = vmatprep.subr.mxu0 0.0
      %898 = vmatpush2.msra.mxu0 0.0
      %899 = vmatprep.subr.mxu0 0.0
      %900 = vmatpush2.msra.mxu0 0.0
      %901 = vmatprep.subr.mxu0 0.0
      %902 = vmatpush2.msra.mxu0 0.0
      %903 = vmatprep.subr.mxu0 0.0
      %904 = vmatpush2.msra.mxu0 0.0
      %905 = vmatprep.subr.mxu0 0.0
      %906 = vmatpush2.msra.mxu0 0.0
      %907 = vmatprep.subr.mxu0 0.0
      %908 = vmatpush2.msra.mxu0 0.0
      %909 = vmatprep.subr.mxu0 0.0
      %910 = vmatpush2.msra.mxu0 0.0
      %911 = vmatprep.subr.mxu0 0.0
      %912 = vmatpush2.msra.mxu0 0.0
      %913 = vmatprep.subr.mxu0 0.0
      %914 = vmatpush2.msra.mxu0 0.0
      %915 = vmatprep.subr.mxu0 0.0
      %916 = vmatpush2.msra.mxu0 0.0
      %917 = vmatprep.subr.mxu0 0.0
      %918 = vmatpush2.msra.mxu0 0.0
      %919 = vmatprep.mubr.f32.mxu0 0.0
      %920 = vmatmul.mubr.f32.gmra.mxu0 %v853
      %v921 = vpop.f32.mrf.mxu0
      %v922 = vadd.f32 0.0, %v921
      %v923 = vpop.f32.mrf.mxu0
      %924 = vdwg.mxu0
      %v925 = vadd.f32 %v849, %v922
      %v926 = vxor.u32 %v925, 2147483648
      %v927 = vmul.f32 %v926, 1.442695
      %v928 = vpow.pop %v927
      %v929 = vadd.f32 %v928, 1.0
      %v930 = vrcp.pop %v929
      %v931 = vmul.f32 1.0, %v930
      %v932 = vadd.f32 %v922, %v518
      %934 = vrot.lane.b32.xlu0 %v932, 64
      %v935 = vpop.permute.xlu0 %934
      %v937 = vmul.f32 %v931, %v935
      %939 = vrot.lane.b32.xlu0 %v937, 64
      %v940 = vpop.permute.xlu0 %939
      %v942 = vadd.f32 %v849, %v940
      %v943 = vtanh.pop %v942
      %v944 = vsub.f32 1.0, %v931
      %946 = vrot.lane.b32.xlu0 %v943, 96
      %v947 = vpop.permute.xlu0 %946
      %v949 = vmul.f32 %v944, %v947
      %v950 = vmul.f32 %v931, %v848
      %v951 = vadd.f32 %v949, %v950
      %v952 = vsel %vm430, %v415, %v400
      %954 = vrot.lane.b32.xlu0 %v951, 96
      %v955 = vpop.permute.xlu0 %954
      %v956 = vsel %vm298, %v955, 0
      %958 = vmatprep.subr.mxu0 0.0
      %959 = vmatpush1.msra.mxu0 0.0
      %960 = vmatprep.subr.mxu0 0.0
      %961 = vmatpush1.msra.mxu0 0.0
      %962 = vmatprep.subr.mxu0 0.0
      %963 = vmatpush1.msra.mxu0 0.0
      %964 = vmatprep.subr.mxu0 0.0
      %965 = vmatpush1.msra.mxu0 0.0
      %966 = vmatprep.subr.mxu0 0.0
      %967 = vmatpush1.msra.mxu0 0.0
      %968 = vmatprep.subr.mxu0 0.0
      %969 = vmatpush1.msra.mxu0 0.0
      %970 = vmatprep.subr.mxu0 0.0
      %971 = vmatpush1.msra.mxu0 0.0
      %972 = vmatprep.subr.mxu0 0.0
      %973 = vmatpush1.msra.mxu0 0.0
      %974 = vmatprep.subr.mxu0 0.0
      %975 = vmatpush1.msra.mxu0 0.0
      %976 = vmatprep.subr.mxu0 0.0
      %977 = vmatpush1.msra.mxu0 0.0
      %978 = vmatprep.subr.mxu0 0.0
      %979 = vmatpush1.msra.mxu0 0.0
      %980 = vmatprep.subr.mxu0 0.0
      %981 = vmatpush1.msra.mxu0 0.0
      %982 = vmatprep.subr.mxu0 0.0
      %983 = vmatpush1.msra.mxu0 %v281
      %984 = vmatprep.subr.mxu0 0.0
      %985 = vmatpush1.msra.mxu0 %v280
      %986 = vmatprep.subr.mxu0 0.0
      %987 = vmatpush1.msra.mxu0 %v279
      %988 = vmatprep.subr.mxu0 0.0
      %989 = vmatpush1.msra.mxu0 %v278
      %990 = vmatprep.subr.mxu0 0.0
      %991 = vmatpush2.msra.mxu0 0.0
      %992 = vmatprep.subr.mxu0 0.0
      %993 = vmatpush2.msra.mxu0 0.0
      %994 = vmatprep.subr.mxu0 0.0
      %995 = vmatpush2.msra.mxu0 0.0
      %996 = vmatprep.subr.mxu0 0.0
      %997 = vmatpush2.msra.mxu0 0.0
      %998 = vmatprep.subr.mxu0 0.0
      %999 = vmatpush2.msra.mxu0 0.0
      %1000 = vmatprep.subr.mxu0 0.0
      %1001 = vmatpush2.msra.mxu0 0.0
      %1002 = vmatprep.subr.mxu0 0.0
      %1003 = vmatpush2.msra.mxu0 0.0
      %1004 = vmatprep.subr.mxu0 0.0
      %1005 = vmatpush2.msra.mxu0 0.0
      %1006 = vmatprep.subr.mxu0 0.0
      %1007 = vmatpush2.msra.mxu0 0.0
      %1008 = vmatprep.subr.mxu0 0.0
      %1009 = vmatpush2.msra.mxu0 0.0
      %1010 = vmatprep.subr.mxu0 0.0
      %1011 = vmatpush2.msra.mxu0 0.0
      %1012 = vmatprep.subr.mxu0 0.0
      %1013 = vmatpush2.msra.mxu0 0.0
      %1014 = vmatprep.subr.mxu0 0.0
      %1015 = vmatpush2.msra.mxu0 0.0
      %1016 = vmatprep.subr.mxu0 0.0
      %1017 = vmatpush2.msra.mxu0 0.0
      %1018 = vmatprep.subr.mxu0 0.0
      %1019 = vmatpush2.msra.mxu0 0.0
      %1020 = vmatprep.subr.mxu0 0.0
      %1021 = vmatpush2.msra.mxu0 0.0
      %1022 = vmatprep.mubr.f32.mxu0 0.0
      %1023 = vmatmul.mubr.f32.gmra.mxu0 %v956
      %v1024 = vpop.f32.mrf.mxu0
      %v1025 = vadd.f32 0.0, %v1024
      %v1026 = vpop.f32.mrf.mxu0
      %1027 = vdwg.mxu0
      %v1028 = vadd.f32 %v952, %v1025
      %v1029 = vxor.u32 %v1028, 2147483648
      %v1030 = vmul.f32 %v1029, 1.442695
      %v1031 = vpow.pop %v1030
      %v1032 = vadd.f32 %v1031, 1.0
      %v1033 = vrcp.pop %v1032
      %v1034 = vmul.f32 1.0, %v1033
      %v1035 = vadd.f32 %v1025, %v518
      %1037 = vrot.lane.b32.xlu0 %v1035, 64
      %v1038 = vpop.permute.xlu0 %1037
      %v1040 = vmul.f32 %v1034, %v1038
      %1042 = vrot.lane.b32.xlu0 %v1040, 64
      %v1043 = vpop.permute.xlu0 %1042
      %v1045 = vadd.f32 %v952, %v1043
      %v1046 = vtanh.pop %v1045
      %v1047 = vsub.f32 1.0, %v1034
      %1049 = vrot.lane.b32.xlu0 %v1046, 96
      %v1050 = vpop.permute.xlu0 %1049
      %v1052 = vmul.f32 %v1047, %v1050
      %v1053 = vmul.f32 %v1034, %v951
      %v1054 = vadd.f32 %v1052, %v1053
      %v1055 = vsel %vm430, %v420, %v395
      %1057 = vrot.lane.b32.xlu0 %v1054, 96
      %v1058 = vpop.permute.xlu0 %1057
      %v1059 = vsel %vm298, %v1058, 0
      %1061 = vmatprep.subr.mxu0 0.0
      %1062 = vmatpush1.msra.mxu0 0.0
      %1063 = vmatprep.subr.mxu0 0.0
      %1064 = vmatpush1.msra.mxu0 0.0
      %1065 = vmatprep.subr.mxu0 0.0
      %1066 = vmatpush1.msra.mxu0 0.0
      %1067 = vmatprep.subr.mxu0 0.0
      %1068 = vmatpush1.msra.mxu0 0.0
      %1069 = vmatprep.subr.mxu0 0.0
      %1070 = vmatpush1.msra.mxu0 0.0
      %1071 = vmatprep.subr.mxu0 0.0
      %1072 = vmatpush1.msra.mxu0 0.0
      %1073 = vmatprep.subr.mxu0 0.0
      %1074 = vmatpush1.msra.mxu0 0.0
      %1075 = vmatprep.subr.mxu0 0.0
      %1076 = vmatpush1.msra.mxu0 0.0
      %1077 = vmatprep.subr.mxu0 0.0
      %1078 = vmatpush1.msra.mxu0 0.0
      %1079 = vmatprep.subr.mxu0 0.0
      %1080 = vmatpush1.msra.mxu0 0.0
      %1081 = vmatprep.subr.mxu0 0.0
      %1082 = vmatpush1.msra.mxu0 0.0
      %1083 = vmatprep.subr.mxu0 0.0
      %1084 = vmatpush1.msra.mxu0 0.0
      %1085 = vmatprep.subr.mxu0 0.0
      %1086 = vmatpush1.msra.mxu0 %v281
      %1087 = vmatprep.subr.mxu0 0.0
      %1088 = vmatpush1.msra.mxu0 %v280
      %1089 = vmatprep.subr.mxu0 0.0
      %1090 = vmatpush1.msra.mxu0 %v279
      %1091 = vmatprep.subr.mxu0 0.0
      %1092 = vmatpush1.msra.mxu0 %v278
      %1093 = vmatprep.subr.mxu0 0.0
      %1094 = vmatpush2.msra.mxu0 0.0
      %1095 = vmatprep.subr.mxu0 0.0
      %1096 = vmatpush2.msra.mxu0 0.0
      %1097 = vmatprep.subr.mxu0 0.0
      %1098 = vmatpush2.msra.mxu0 0.0
      %1099 = vmatprep.subr.mxu0 0.0
      %1100 = vmatpush2.msra.mxu0 0.0
      %1101 = vmatprep.subr.mxu0 0.0
      %1102 = vmatpush2.msra.mxu0 0.0
      %1103 = vmatprep.subr.mxu0 0.0
      %1104 = vmatpush2.msra.mxu0 0.0
      %1105 = vmatprep.subr.mxu0 0.0
      %1106 = vmatpush2.msra.mxu0 0.0
      %1107 = vmatprep.subr.mxu0 0.0
      %1108 = vmatpush2.msra.mxu0 0.0
      %1109 = vmatprep.subr.mxu0 0.0
      %1110 = vmatpush2.msra.mxu0 0.0
      %1111 = vmatprep.subr.mxu0 0.0
      %1112 = vmatpush2.msra.mxu0 0.0
      %1113 = vmatprep.subr.mxu0 0.0
      %1114 = vmatpush2.msra.mxu0 0.0
      %1115 = vmatprep.subr.mxu0 0.0
      %1116 = vmatpush2.msra.mxu0 0.0
      %1117 = vmatprep.subr.mxu0 0.0
      %1118 = vmatpush2.msra.mxu0 0.0
      %1119 = vmatprep.subr.mxu0 0.0
      %1120 = vmatpush2.msra.mxu0 0.0
      %1121 = vmatprep.subr.mxu0 0.0
      %1122 = vmatpush2.msra.mxu0 0.0
      %1123 = vmatprep.subr.mxu0 0.0
      %1124 = vmatpush2.msra.mxu0 0.0
      %1125 = vmatprep.mubr.f32.mxu0 0.0
      %1126 = vmatmul.mubr.f32.gmra.mxu0 %v1059
      %v1127 = vpop.f32.mrf.mxu0
      %v1128 = vadd.f32 0.0, %v1127
      %v1129 = vpop.f32.mrf.mxu0
      %1130 = vdwg.mxu0
      %v1131 = vadd.f32 %v1055, %v1128
      %v1132 = vxor.u32 %v1131, 2147483648
      %v1133 = vmul.f32 %v1132, 1.442695
      %v1134 = vpow.pop %v1133
      %v1135 = vadd.f32 %v1134, 1.0
      %v1136 = vrcp.pop %v1135
      %v1137 = vmul.f32 1.0, %v1136
      %v1138 = vadd.f32 %v1128, %v518
      %1140 = vrot.lane.b32.xlu0 %v1138, 64
      %v1141 = vpop.permute.xlu0 %1140
      %v1143 = vmul.f32 %v1137, %v1141
      %1145 = vrot.lane.b32.xlu0 %v1143, 64
      %v1146 = vpop.permute.xlu0 %1145
      %v1148 = vadd.f32 %v1055, %v1146
      %v1149 = vtanh.pop %v1148
      %v1150 = vsub.f32 1.0, %v1137
      %1152 = vrot.lane.b32.xlu0 %v1149, 96
      %v1153 = vpop.permute.xlu0 %1152
      %v1155 = vmul.f32 %v1150, %v1153
      %v1156 = vmul.f32 %v1137, %v1054
      %v1157 = vadd.f32 %v1155, %v1156
      %v1158 = vsel %vm430, %v425, %v390
      %1160 = vrot.lane.b32.xlu0 %v1157, 96
      %v1161 = vpop.permute.xlu0 %1160
      %v1162 = vsel %vm298, %v1161, 0
      %1164 = vmatprep.subr.mxu0 0.0
      %1165 = vmatpush1.msra.mxu0 0.0
      %1166 = vmatprep.subr.mxu0 0.0
      %1167 = vmatpush1.msra.mxu0 0.0
      %1168 = vmatprep.subr.mxu0 0.0
      %1169 = vmatpush1.msra.mxu0 0.0
      %1170 = vmatprep.subr.mxu0 0.0
      %1171 = vmatpush1.msra.mxu0 0.0
      %1172 = vmatprep.subr.mxu0 0.0
      %1173 = vmatpush1.msra.mxu0 0.0
      %1174 = vmatprep.subr.mxu0 0.0
      %1175 = vmatpush1.msra.mxu0 0.0
      %1176 = vmatprep.subr.mxu0 0.0
      %1177 = vmatpush1.msra.mxu0 0.0
      %1178 = vmatprep.subr.mxu0 0.0
      %1179 = vmatpush1.msra.mxu0 0.0
      %1180 = vmatprep.subr.mxu0 0.0
      %1181 = vmatpush1.msra.mxu0 0.0
      %1182 = vmatprep.subr.mxu0 0.0
      %1183 = vmatpush1.msra.mxu0 0.0
      %1184 = vmatprep.subr.mxu0 0.0
      %1185 = vmatpush1.msra.mxu0 0.0
      %1186 = vmatprep.subr.mxu0 0.0
      %1187 = vmatpush1.msra.mxu0 0.0
      %1188 = vmatprep.subr.mxu0 0.0
      %1189 = vmatpush1.msra.mxu0 %v281
      %1190 = vmatprep.subr.mxu0 0.0
      %1191 = vmatpush1.msra.mxu0 %v280
      %1192 = vmatprep.subr.mxu0 0.0
      %1193 = vmatpush1.msra.mxu0 %v279
      %1194 = vmatprep.subr.mxu0 0.0
      %1195 = vmatpush1.msra.mxu0 %v278
      %1196 = vmatprep.subr.mxu0 0.0
      %1197 = vmatpush2.msra.mxu0 0.0
      %1198 = vmatprep.subr.mxu0 0.0
      %1199 = vmatpush2.msra.mxu0 0.0
      %1200 = vmatprep.subr.mxu0 0.0
      %1201 = vmatpush2.msra.mxu0 0.0
      %1202 = vmatprep.subr.mxu0 0.0
      %1203 = vmatpush2.msra.mxu0 0.0
      %1204 = vmatprep.subr.mxu0 0.0
      %1205 = vmatpush2.msra.mxu0 0.0
      %1206 = vmatprep.subr.mxu0 0.0
      %1207 = vmatpush2.msra.mxu0 0.0
      %1208 = vmatprep.subr.mxu0 0.0
      %1209 = vmatpush2.msra.mxu0 0.0
      %1210 = vmatprep.subr.mxu0 0.0
      %1211 = vmatpush2.msra.mxu0 0.0
      %1212 = vmatprep.subr.mxu0 0.0
      %1213 = vmatpush2.msra.mxu0 0.0
      %1214 = vmatprep.subr.mxu0 0.0
      %1215 = vmatpush2.msra.mxu0 0.0
      %1216 = vmatprep.subr.mxu0 0.0
      %1217 = vmatpush2.msra.mxu0 0.0
      %1218 = vmatprep.subr.mxu0 0.0
      %1219 = vmatpush2.msra.mxu0 0.0
      %1220 = vmatprep.subr.mxu0 0.0
      %1221 = vmatpush2.msra.mxu0 0.0
      %1222 = vmatprep.subr.mxu0 0.0
      %1223 = vmatpush2.msra.mxu0 0.0
      %1224 = vmatprep.subr.mxu0 0.0
      %1225 = vmatpush2.msra.mxu0 0.0
      %1226 = vmatprep.subr.mxu0 0.0
      %1227 = vmatpush2.msra.mxu0 0.0
      %1228 = vmatprep.mubr.f32.mxu0 0.0
      %1229 = vmatmul.mubr.f32.gmra.mxu0 %v1162
      %v1230 = vpop.f32.mrf.mxu0
      %v1231 = vadd.f32 0.0, %v1230
      %v1232 = vpop.f32.mrf.mxu0
      %1233 = vdwg.mxu0
      %v1234 = vadd.f32 %v1158, %v1231
      %v1235 = vxor.u32 %v1234, 2147483648
      %v1236 = vmul.f32 %v1235, 1.442695
      %v1237 = vpow.pop %v1236
      %v1238 = vadd.f32 %v1237, 1.0
      %v1239 = vrcp.pop %v1238
      %v1240 = vmul.f32 1.0, %v1239
      %v1241 = vadd.f32 %v1231, %v518
      %1243 = vrot.lane.b32.xlu0 %v1241, 64
      %v1244 = vpop.permute.xlu0 %1243
      %v1246 = vmul.f32 %v1240, %v1244
      %1248 = vrot.lane.b32.xlu0 %v1246, 64
      %v1249 = vpop.permute.xlu0 %1248
      %v1251 = vadd.f32 %v1158, %v1249
      %v1252 = vtanh.pop %v1251
      %v1253 = vsub.f32 1.0, %v1240
      %1255 = vrot.lane.b32.xlu0 %v1252, 96
      %v1256 = vpop.permute.xlu0 %1255
      %v1258 = vmul.f32 %v1253, %v1256
      %v1259 = vmul.f32 %v1240, %v1157
      %v1260 = vadd.f32 %v1258, %v1259
      %v1261 = vsel %vm430, %v539, %v1260
      %1263 = vrot.lane.b32.xlu0 %v1261, 96
      %v1264 = vpop.permute.xlu0 %1263
      %1266 = vst.msk [vmem:[%s272] sm:$0xff] %vm298, %v1264
      %v1267 = vsel %vm430, %v642, %v1157
      %1269 = vrot.lane.b32.xlu0 %v1267, 96
      %v1270 = vpop.permute.xlu0 %1269
      %s1272 = scalar_lea.vmem %s272, 8
      %1273 = vst.msk [vmem:[%s1272] sm:$0xff] %vm298, %v1270
      %v1274 = vsel %vm430, %v745, %v1054
      %1276 = vrot.lane.b32.xlu0 %v1274, 96
      %v1277 = vpop.permute.xlu0 %1276
      %s1279 = scalar_lea.vmem %s272, 16
      %1280 = vst.msk [vmem:[%s1279] sm:$0xff] %vm298, %v1277
      %v1281 = vsel %vm430, %v848, %v951
      %1283 = vrot.lane.b32.xlu0 %v1281, 96
      %v1284 = vpop.permute.xlu0 %1283
      %s1286 = scalar_lea.vmem %s272, 24
      %1287 = vst.msk [vmem:[%s1286] sm:$0xff] %vm298, %v1284
      %v1288 = vsel %vm430, %v951, %v848
      %1290 = vrot.lane.b32.xlu0 %v1288, 96
      %v1291 = vpop.permute.xlu0 %1290
      %s1293 = scalar_lea.vmem %s272, 32
      %1294 = vst.msk [vmem:[%s1293] sm:$0xff] %vm298, %v1291
      %v1295 = vsel %vm430, %v1054, %v745
      %1297 = vrot.lane.b32.xlu0 %v1295, 96
      %v1298 = vpop.permute.xlu0 %1297
      %s1300 = scalar_lea.vmem %s272, 40
      %1301 = vst.msk [vmem:[%s1300] sm:$0xff] %vm298, %v1298
      %v1302 = vsel %vm430, %v1157, %v642
      %1304 = vrot.lane.b32.xlu0 %v1302, 96
      %v1305 = vpop.permute.xlu0 %1304
      %s1307 = scalar_lea.vmem %s272, 48
      %1308 = vst.msk [vmem:[%s1307] sm:$0xff] %vm298, %v1305
      %v1309 = vsel %vm430, %v1260, %v539
      %1311 = vrot.lane.b32.xlu0 %v1309, 96
      %v1312 = vpop.permute.xlu0 %1311
      %s1314 = scalar_lea.vmem %s272, 56
      %1315 = vst.msk [vmem:[%s1314] sm:$0xff] %vm298, %v1312
      %p1316 = scmp.lt.s32.totalorder %s16, 1
      %s1317 = scalar_select %p1316, %s16, 1
      %s1318 = smul.addr %s1317, 8
      %s1319 = smul.addr %s1318, 8
      %s1320 = scalar_lea.vmem %s5, %s1319
      // Predicated region
      $region41: #{seq2seq_forward.2} parent=39 // pred_check
        %p1321 = pneg %p159
      $region42: #{seq2seq_forward.2} parent=39 // pred_check_branch
        %1323 = sbr.rel (%p1321) target = $region44
      $region43: #{seq2seq_forward.2} parent=39 // pred_region
        _
      $region44: #{seq2seq_forward.2} parent=39 // pred_fallthru
        _
    $region40: #{seq2seq_forward.2} parent=5 // pred_fallthru
      _
    %p1324 = scmp.le.s32.totalorder 2, %s11
    // Predicated region
    $region45: #{seq2seq_forward.2} parent=5 // pred_check
      %p1325 = pneg %p1324
    $region46: #{seq2seq_forward.2} parent=5 // pred_check_branch
      %1327 = sbr.rel (%p1325) target = $region48
    $region47: #{seq2seq_forward.2} parent=5 // pred_region
      %s1328 = ssub.s32 %s11, 2
      // Predicated region
      $region49: #{seq2seq_forward.2} parent=47 // pred_check
        %p1329 = pneg %p165
      $region50: #{seq2seq_forward.2} parent=47 // pred_check_branch
        %1331 = sbr.rel (%p1329) target = $region52
      $region51: #{seq2seq_forward.2} parent=47 // pred_region
        %p1332 = scmp.lt.s32.totalorder %s17, 1
        %s1333 = scalar_select %p1332, %s17, 1
        %s1334 = smul.addr %s1333, 8
        %s1335 = smul.addr %s1334, 8
        %s1336 = scalar_lea.vmem %s5, %s1335
      $region52: #{seq2seq_forward.2} parent=47 // pred_fallthru
        _
    $region48: #{seq2seq_forward.2} parent=5 // pred_fallthru
      _
  $region6: #{seq2seq_forward.2} parent=0 // loop_footer
    %s15 = sadd.s32 1, %s11
  $region7: #{seq2seq_forward.2} parent=0 // loop_footer_branch
    %10 = sbr.rel target = $region3
  $region8: #{seq2seq_forward.2} parent=0 // loop_exit
    _

// kernel: seq2seq_forward.3
$region0: #{seq2seq_forward.3}
  #allocation0 [shape = 'u32[]', space=smem, size = 0x4, offset = 0x4, fixed_abs, tag = 'smem constant byte address 0x4 - core index']
  #allocation1 [shape = 'u32[144,128]{1,0:T(1,128)}', space=vmem, size = 0x12000, scoped, tag = 'internal scratch']
  %s0 = inlined_call_operand.vmem [shape: f32[8,32], index: 0, kind: input, shape index: {}]
  %s1 = inlined_call_operand.vmem [shape: f32[8,32], index: 1, kind: input, shape index: {}]
  %s2 = inlined_call_operand.vmem [shape: f32[8,32], index: 2, kind: input, shape index: {}]
  %s3 = inlined_call_operand.vmem [shape: f32[8,8,64], index: 3, kind: input, shape index: {}]
  %s4 = inlined_call_operand.vmem [shape: f32[8,8], index: 4, kind: input, shape index: {}]
  %s5 = inlined_call_operand.vmem [shape: f32[64,32], index: 5, kind: input, shape index: {}]
  %s6 = inlined_call_operand.vmem [shape: f32[1,32], index: 6, kind: input, shape index: {}]
  %s7 = inlined_call_operand.vmem [shape: f32[32,32], index: 7, kind: input, shape index: {}]
  %s8 = inlined_call_operand.vmem [shape: f32[64,32], index: 8, kind: input, shape index: {}]
  %s9 = inlined_call_operand.vmem [shape: f32[1,32], index: 9, kind: input, shape index: {}]
  %s10 = inlined_call_operand.vmem [shape: f32[1,32], index: 10, kind: input, shape index: {}]
  %s11 = inlined_call_operand.vmem [shape: f32[96,96], index: 11, kind: input, shape index: {}]
  %s12 = inlined_call_operand.vmem [shape: f32[32,96], index: 12, kind: input, shape index: {}]
  %s13 = inlined_call_operand.vmem [shape: f32[1,96], index: 13, kind: input, shape index: {}]
  %s14 = inlined_call_operand.vmem [shape: f32[1,32], index: 14, kind: input, shape index: {}]
  %s15 = inlined_call_operand.vmem [shape: f32[128,128], index: 15, kind: input, shape index: {}]
  %s16 = inlined_call_operand.vmem [shape: f32[1,128], index: 16, kind: input, shape index: {}]
  %s17 = inlined_call_operand.vmem [shape: f32[128,32], index: 17, kind: input, shape index: {}]
  %s18 = inlined_call_operand.vmem [shape: f32[5,8,128], index: 18, kind: output, shape index: {0}]
  %s19 = inlined_call_operand.vmem [shape: f32[5,8,8], index: 19, kind: output, shape index: {1}]
  %20 = xla_tuple %s18, %s19
  %s21 = sld [smem:[#allocation0]]
  $region90: #{seq2seq_forward.3} parent=0
    _
  %s23 = ssub.s32 1, %s21
  %s24 = scalar_select 0, %s23, %s21
  // Predicated region
  $region2: #{seq2seq_forward.3} parent=0 // pred_check
    _
  $region3: #{seq2seq_forward.3} parent=0 // pred_check_branch
    %26 = sbr.rel (0) target = $region5
  $region4: #{seq2seq_forward.3} parent=0 // pred_region
    _
  $region5: #{seq2seq_forward.3} parent=0 // pred_fallthru
    _
  // Predicated region
  $region6: #{seq2seq_forward.3} parent=0 // pred_check
    _
  $region7: #{seq2seq_forward.3} parent=0 // pred_check_branch
    %28 = sbr.rel (0) target = $region9
  $region8: #{seq2seq_forward.3} parent=0 // pred_region
    _
  $region9: #{seq2seq_forward.3} parent=0 // pred_fallthru
    _
  // Predicated region
  $region10: #{seq2seq_forward.3} parent=0 // pred_check
    _
  $region11: #{seq2seq_forward.3} parent=0 // pred_check_branch
    %30 = sbr.rel (0) target = $region13
  $region12: #{seq2seq_forward.3} parent=0 // pred_region
    _
  $region13: #{seq2seq_forward.3} parent=0 // pred_fallthru
    _
  // Predicated region
  $region14: #{seq2seq_forward.3} parent=0 // pred_check
    _
  $region15: #{seq2seq_forward.3} parent=0 // pred_check_branch
    %32 = sbr.rel (0) target = $region17
  $region16: #{seq2seq_forward.3} parent=0 // pred_region
    _
  $region17: #{seq2seq_forward.3} parent=0 // pred_fallthru
    _
  // Predicated region
  $region18: #{seq2seq_forward.3} parent=0 // pred_check
    _
  $region19: #{seq2seq_forward.3} parent=0 // pred_check_branch
    %34 = sbr.rel (0) target = $region21
  $region20: #{seq2seq_forward.3} parent=0 // pred_region
    _
  $region21: #{seq2seq_forward.3} parent=0 // pred_fallthru
    _
  // Predicated region
  $region22: #{seq2seq_forward.3} parent=0 // pred_check
    _
  $region23: #{seq2seq_forward.3} parent=0 // pred_check_branch
    %36 = sbr.rel (0) target = $region25
  $region24: #{seq2seq_forward.3} parent=0 // pred_region
    _
  $region25: #{seq2seq_forward.3} parent=0 // pred_fallthru
    _
  // Predicated region
  $region26: #{seq2seq_forward.3} parent=0 // pred_check
    _
  $region27: #{seq2seq_forward.3} parent=0 // pred_check_branch
    %38 = sbr.rel (0) target = $region29
  $region28: #{seq2seq_forward.3} parent=0 // pred_region
    _
  $region29: #{seq2seq_forward.3} parent=0 // pred_fallthru
    _
  // Predicated region
  $region30: #{seq2seq_forward.3} parent=0 // pred_check
    _
  $region31: #{seq2seq_forward.3} parent=0 // pred_check_branch
    %40 = sbr.rel (0) target = $region33
  $region32: #{seq2seq_forward.3} parent=0 // pred_region
    _
  $region33: #{seq2seq_forward.3} parent=0 // pred_fallthru
    _
  // Predicated region
  $region34: #{seq2seq_forward.3} parent=0 // pred_check
    _
  $region35: #{seq2seq_forward.3} parent=0 // pred_check_branch
    %42 = sbr.rel (0) target = $region37
  $region36: #{seq2seq_forward.3} parent=0 // pred_region
    _
  $region37: #{seq2seq_forward.3} parent=0 // pred_fallthru
    _
  // Predicated region
  $region38: #{seq2seq_forward.3} parent=0 // pred_check
    _
  $region39: #{seq2seq_forward.3} parent=0 // pred_check_branch
    %44 = sbr.rel (0) target = $region41
  $region40: #{seq2seq_forward.3} parent=0 // pred_region
    _
  $region41: #{seq2seq_forward.3} parent=0 // pred_fallthru
    _
  // Predicated region
  $region42: #{seq2seq_forward.3} parent=0 // pred_check
    _
  $region43: #{seq2seq_forward.3} parent=0 // pred_check_branch
    %46 = sbr.rel (0) target = $region45
  $region44: #{seq2seq_forward.3} parent=0 // pred_region
    _
  $region45: #{seq2seq_forward.3} parent=0 // pred_fallthru
    _
  // Predicated region
  $region46: #{seq2seq_forward.3} parent=0 // pred_check
    _
  $region47: #{seq2seq_forward.3} parent=0 // pred_check_branch
    %48 = sbr.rel (0) target = $region49
  $region48: #{seq2seq_forward.3} parent=0 // pred_region
    _
  $region49: #{seq2seq_forward.3} parent=0 // pred_fallthru
    _
  // Predicated region
  $region50: #{seq2seq_forward.3} parent=0 // pred_check
    _
  $region51: #{seq2seq_forward.3} parent=0 // pred_check_branch
    %50 = sbr.rel (0) target = $region53
  $region52: #{seq2seq_forward.3} parent=0 // pred_region
    _
  $region53: #{seq2seq_forward.3} parent=0 // pred_fallthru
    _
  // Predicated region
  $region54: #{seq2seq_forward.3} parent=0 // pred_check
    _
  $region55: #{seq2seq_forward.3} parent=0 // pred_check_branch
    %52 = sbr.rel (0) target = $region57
  $region56: #{seq2seq_forward.3} parent=0 // pred_region
    _
  $region57: #{seq2seq_forward.3} parent=0 // pred_fallthru
    _
  // Predicated region
  $region58: #{seq2seq_forward.3} parent=0 // pred_check
    _
  $region59: #{seq2seq_forward.3} parent=0 // pred_check_branch
    %54 = sbr.rel (0) target = $region61
  $region60: #{seq2seq_forward.3} parent=0 // pred_region
    _
  $region61: #{seq2seq_forward.3} parent=0 // pred_fallthru
    _
  // Predicated region
  $region62: #{seq2seq_forward.3} parent=0 // pred_check
    _
  $region63: #{seq2seq_forward.3} parent=0 // pred_check_branch
    %56 = sbr.rel (0) target = $region65
  $region64: #{seq2seq_forward.3} parent=0 // pred_region
    _
  $region65: #{seq2seq_forward.3} parent=0 // pred_fallthru
    _
  // Predicated region
  $region66: #{seq2seq_forward.3} parent=0 // pred_check
    _
  $region67: #{seq2seq_forward.3} parent=0 // pred_check_branch
    %58 = sbr.rel (0) target = $region69
  $region68: #{seq2seq_forward.3} parent=0 // pred_region
    _
  $region69: #{seq2seq_forward.3} parent=0 // pred_fallthru
    _
  // Predicated region
  $region70: #{seq2seq_forward.3} parent=0 // pred_check
    _
  $region71: #{seq2seq_forward.3} parent=0 // pred_check_branch
    %60 = sbr.rel (0) target = $region73
  $region72: #{seq2seq_forward.3} parent=0 // pred_region
    _
  $region73: #{seq2seq_forward.3} parent=0 // pred_fallthru
    _
  %v61 = vld [vmem:[%s3] sm:$0xff]
  %v62 = vld [vmem:[%s3 + $0x8] sm:$0xff]
  %v63 = vld [vmem:[%s3 + $0x10] sm:$0xff]
  %v64 = vld [vmem:[%s3 + $0x18] sm:$0xff]
  %v65 = vld [vmem:[%s3 + $0x20] sm:$0xff]
  %v66 = vld [vmem:[%s3 + $0x28] sm:$0xff]
  %v67 = vld [vmem:[%s3 + $0x30] sm:$0xff]
  %v68 = vld [vmem:[%s3 + $0x38] sm:$0xff]
  %v69 = vld [vmem:[%s4] sm:$0xff]
  %v70 = vld [vmem:[%s10] sm:$0x1]
  %v71 = vld [vmem:[%s7] sm:$0xff]
  %v72 = vld [vmem:[%s7 + $0x8] sm:$0xff]
  %v73 = vld [vmem:[%s7 + $0x10] sm:$0xff]
  %v74 = vld [vmem:[%s7 + $0x18] sm:$0xff]
  %v75 = vld [vmem:[%s11] sm:$0xff]
  %v76 = vld [vmem:[%s11 + $0x8] sm:$0xff]
  %v77 = vld [vmem:[%s11 + $0x10] sm:$0xff]
  %v78 = vld [vmem:[%s11 + $0x18] sm:$0xff]
  %v79 = vld [vmem:[%s11 + $0x20] sm:$0xff]
  %v80 = vld [vmem:[%s11 + $0x28] sm:$0xff]
  %v81 = vld [vmem:[%s11 + $0x30] sm:$0xff]
  %v82 = vld [vmem:[%s11 + $0x38] sm:$0xff]
  %v83 = vld [vmem:[%s11 + $0x40] sm:$0xff]
  %v84 = vld [vmem:[%s11 + $0x48] sm:$0xff]
  %v85 = vld [vmem:[%s11 + $0x50] sm:$0xff]
  %v86 = vld [vmem:[%s11 + $0x58] sm:$0xff]
  %v87 = vld [vmem:[%s12] sm:$0xff]
  %v88 = vld [vmem:[%s12 + $0x8] sm:$0xff]
  %v89 = vld [vmem:[%s12 + $0x10] sm:$0xff]
  %v90 = vld [vmem:[%s12 + $0x18] sm:$0xff]
  %v91 = vld [vmem:[%s13] sm:$0x1]
  %v92 = vld [vmem:[%s14] sm:$0x1]
  %v93 = vld [vmem:[%s15] sm:$0xff]
  %v94 = vld [vmem:[%s15 + $0x8] sm:$0xff]
  %v95 = vld [vmem:[%s15 + $0x10] sm:$0xff]
  %v96 = vld [vmem:[%s15 + $0x18] sm:$0xff]
  %v97 = vld [vmem:[%s15 + $0x20] sm:$0xff]
  %v98 = vld [vmem:[%s15 + $0x28] sm:$0xff]
  %v99 = vld [vmem:[%s15 + $0x30] sm:$0xff]
  %v100 = vld [vmem:[%s15 + $0x38] sm:$0xff]
  %v101 = vld [vmem:[%s15 + $0x40] sm:$0xff]
  %v102 = vld [vmem:[%s15 + $0x48] sm:$0xff]
  %v103 = vld [vmem:[%s15 + $0x50] sm:$0xff]
  %v104 = vld [vmem:[%s15 + $0x58] sm:$0xff]
  %v105 = vld [vmem:[%s15 + $0x60] sm:$0xff]
  %v106 = vld [vmem:[%s15 + $0x68] sm:$0xff]
  %v107 = vld [vmem:[%s15 + $0x70] sm:$0xff]
  %v108 = vld [vmem:[%s15 + $0x78] sm:$0xff]
  %v109 = vld [vmem:[%s16] sm:$0x1]
  %v110 = vld [vmem:[%s17] sm:$0xff]
  %v111 = vld [vmem:[%s17 + $0x8] sm:$0xff]
  %v112 = vld [vmem:[%s17 + $0x10] sm:$0xff]
  %v113 = vld [vmem:[%s17 + $0x18] sm:$0xff]
  %v114 = vld [vmem:[%s17 + $0x20] sm:$0xff]
  %v115 = vld [vmem:[%s17 + $0x28] sm:$0xff]
  %v116 = vld [vmem:[%s17 + $0x30] sm:$0xff]
  %v117 = vld [vmem:[%s17 + $0x38] sm:$0xff]
  %v118 = vld [vmem:[%s17 + $0x40] sm:$0xff]
  %v119 = vld [vmem:[%s17 + $0x48] sm:$0xff]
  %v120 = vld [vmem:[%s17 + $0x50] sm:$0xff]
  %v121 = vld [vmem:[%s17 + $0x58] sm:$0xff]
  %v122 = vld [vmem:[%s17 + $0x60] sm:$0xff]
  %v123 = vld [vmem:[%s17 + $0x68] sm:$0xff]
  %v124 = vld [vmem:[%s17 + $0x70] sm:$0xff]
  %v125 = vld [vmem:[%s17 + $0x78] sm:$0xff]
  %v126 = vld [vmem:[%s1] sm:$0xff]
  %v127 = vld [vmem:[%s2] sm:$0xff]
  %129 = vrot.lane.b32.xlu0 %v127, 32
  %v130 = vpop.permute.xlu0 %129
  %vm132 = vcmask 261120
  %v133 = vsel %vm132, %v126, %v130
  %v134 = vld [vmem:[%s5] sm:$0xff]
  %v135 = vld [vmem:[%s5 + $0x8] sm:$0xff]
  %v136 = vld [vmem:[%s5 + $0x10] sm:$0xff]
  %v137 = vld [vmem:[%s5 + $0x18] sm:$0xff]
  %v138 = vld [vmem:[%s5 + $0x20] sm:$0xff]
  %v139 = vld [vmem:[%s5 + $0x28] sm:$0xff]
  %v140 = vld [vmem:[%s5 + $0x30] sm:$0xff]
  %v141 = vld [vmem:[%s5 + $0x38] sm:$0xff]
  %v142 = vld [vmem:[%s6] sm:$0x1]
  %v144 = vlaneseq
  %v145 = vshrl.u32 %v144, 7
  %v146 = vsub.s32 0, %v145
  %v147 = vrot.slane %v142, %v146
  %vm149 = vcmask 523264
  %v151 = vsel %vm149, %v133, 0
  %153 = vmatprep.subr.mxu0 0.0
  %154 = vmatpush1.msra.mxu0 0.0
  %155 = vmatprep.subr.mxu0 0.0
  %156 = vmatpush1.msra.mxu0 0.0
  %157 = vmatprep.subr.mxu0 0.0
  %158 = vmatpush1.msra.mxu0 0.0
  %159 = vmatprep.subr.mxu0 0.0
  %160 = vmatpush1.msra.mxu0 0.0
  %161 = vmatprep.subr.mxu0 0.0
  %162 = vmatpush1.msra.mxu0 0.0
  %163 = vmatprep.subr.mxu0 0.0
  %164 = vmatpush1.msra.mxu0 0.0
  %165 = vmatprep.subr.mxu0 0.0
  %166 = vmatpush1.msra.mxu0 0.0
  %167 = vmatprep.subr.mxu0 0.0
  %168 = vmatpush1.msra.mxu0 0.0
  %169 = vmatprep.subr.mxu0 0.0
  %170 = vmatpush1.msra.mxu0 %v141
  %171 = vmatprep.subr.mxu0 0.0
  %172 = vmatpush1.msra.mxu0 %v140
  %173 = vmatprep.subr.mxu0 0.0
  %174 = vmatpush1.msra.mxu0 %v139
  %175 = vmatprep.subr.mxu0 0.0
  %176 = vmatpush1.msra.mxu0 %v138
  %177 = vmatprep.subr.mxu0 0.0
  %178 = vmatpush1.msra.mxu0 %v137
  %179 = vmatprep.subr.mxu0 0.0
  %180 = vmatpush1.msra.mxu0 %v136
  %181 = vmatprep.subr.mxu0 0.0
  %182 = vmatpush1.msra.mxu0 %v135
  %183 = vmatprep.subr.mxu0 0.0
  %184 = vmatpush1.msra.mxu0 %v134
  %185 = vmatprep.subr.mxu0 0.0
  %186 = vmatpush2.msra.mxu0 0.0
  %187 = vmatprep.subr.mxu0 0.0
  %188 = vmatpush2.msra.mxu0 0.0
  %189 = vmatprep.subr.mxu0 0.0
  %190 = vmatpush2.msra.mxu0 0.0
  %191 = vmatprep.subr.mxu0 0.0
  %192 = vmatpush2.msra.mxu0 0.0
  %193 = vmatprep.subr.mxu0 0.0
  %194 = vmatpush2.msra.mxu0 0.0
  %195 = vmatprep.subr.mxu0 0.0
  %196 = vmatpush2.msra.mxu0 0.0
  %197 = vmatprep.subr.mxu0 0.0
  %198 = vmatpush2.msra.mxu0 0.0
  %199 = vmatprep.subr.mxu0 0.0
  %200 = vmatpush2.msra.mxu0 0.0
  %201 = vmatprep.subr.mxu0 0.0
  %202 = vmatpush2.msra.mxu0 0.0
  %203 = vmatprep.subr.mxu0 0.0
  %204 = vmatpush2.msra.mxu0 0.0
  %205 = vmatprep.subr.mxu0 0.0
  %206 = vmatpush2.msra.mxu0 0.0
  %207 = vmatprep.subr.mxu0 0.0
  %208 = vmatpush2.msra.mxu0 0.0
  %209 = vmatprep.subr.mxu0 0.0
  %210 = vmatpush2.msra.mxu0 0.0
  %211 = vmatprep.subr.mxu0 0.0
  %212 = vmatpush2.msra.mxu0 0.0
  %213 = vmatprep.subr.mxu0 0.0
  %214 = vmatpush2.msra.mxu0 0.0
  %215 = vmatprep.subr.mxu0 0.0
  %216 = vmatpush2.msra.mxu0 0.0
  %217 = vmatprep.mubr.f32.mxu0 0.0
  %218 = vmatmul.mubr.f32.gmra.mxu0 %v151
  %v219 = vpop.f32.mrf.mxu0
  %v220 = vadd.f32 %v147, %v219
  %v221 = vpop.f32.mrf.mxu0
  %222 = vdwg.mxu0
  %v223 = vtanh.pop %v220
  %v224 = vld [vmem:[%s8] sm:$0xff]
  %v225 = vld [vmem:[%s8 + $0x8] sm:$0xff]
  %v226 = vld [vmem:[%s8 + $0x10] sm:$0xff]
  %v227 = vld [vmem:[%s8 + $0x18] sm:$0xff]
  %v228 = vld [vmem:[%s8 + $0x20] sm:$0xff]
  %v229 = vld [vmem:[%s8 + $0x28] sm:$0xff]
  %v230 = vld [vmem:[%s8 + $0x30] sm:$0xff]
  %v231 = vld [vmem:[%s8 + $0x38] sm:$0xff]
  %v232 = vld [vmem:[%s9] sm:$0x1]
  %v234 = vlaneseq
  %v235 = vshrl.u32 %v234, 7
  %v236 = vsub.s32 0, %v235
  %v237 = vrot.slane %v232, %v236
  %v240 = vsel %vm149, %v61, 0
  %v243 = vsel %vm149, %v62, 0
  %v246 = vsel %vm149, %v63, 0
  %v249 = vsel %vm149, %v64, 0
  %v252 = vsel %vm149, %v65, 0
  %v255 = vsel %vm149, %v66, 0
  %v258 = vsel %vm149, %v67, 0
  %v261 = vsel %vm149, %v68, 0
  %263 = vmatprep.subr.mxu0 0.0
  %264 = vmatpush1.msra.mxu0 0.0
  %265 = vmatprep.subr.mxu0 0.0
  %266 = vmatpush1.msra.mxu0 0.0
  %267 = vmatprep.subr.mxu0 0.0
  %268 = vmatpush1.msra.mxu0 0.0
  %269 = vmatprep.subr.mxu0 0.0
  %270 = vmatpush1.msra.mxu0 0.0
  %271 = vmatprep.subr.mxu0 0.0
  %272 = vmatpush1.msra.mxu0 0.0
  %273 = vmatprep.subr.mxu0 0.0
  %274 = vmatpush1.msra.mxu0 0.0
  %275 = vmatprep.subr.mxu0 0.0
  %276 = vmatpush1.msra.mxu0 0.0
  %277 = vmatprep.subr.mxu0 0.0
  %278 = vmatpush1.msra.mxu0 0.0
  %279 = vmatprep.subr.mxu0 0.0
  %280 = vmatpush1.msra.mxu0 %v231
  %281 = vmatprep.subr.mxu0 0.0
  %282 = vmatpush1.msra.mxu0 %v230
  %283 = vmatprep.subr.mxu0 0.0
  %284 = vmatpush1.msra.mxu0 %v229
  %285 = vmatprep.subr.mxu0 0.0
  %286 = vmatpush1.msra.mxu0 %v228
  %287 = vmatprep.subr.mxu0 0.0
  %288 = vmatpush1.msra.mxu0 %v227
  %289 = vmatprep.subr.mxu0 0.0
  %290 = vmatpush1.msra.mxu0 %v226
  %291 = vmatprep.subr.mxu0 0.0
  %292 = vmatpush1.msra.mxu0 %v225
  %293 = vmatprep.subr.mxu0 0.0
  %294 = vmatpush1.msra.mxu0 %v224
  %295 = vmatprep.subr.mxu0 0.0
  %296 = vmatpush2.msra.mxu0 0.0
  %297 = vmatprep.subr.mxu0 0.0
  %298 = vmatpush2.msra.mxu0 0.0
  %299 = vmatprep.subr.mxu0 0.0
  %300 = vmatpush2.msra.mxu0 0.0
  %301 = vmatprep.subr.mxu0 0.0
  %302 = vmatpush2.msra.mxu0 0.0
  %303 = vmatprep.subr.mxu0 0.0
  %304 = vmatpush2.msra.mxu0 0.0
  %305 = vmatprep.subr.mxu0 0.0
  %306 = vmatpush2.msra.mxu0 0.0
  %307 = vmatprep.subr.mxu0 0.0
  %308 = vmatpush2.msra.mxu0 0.0
  %309 = vmatprep.subr.mxu0 0.0
  %310 = vmatpush2.msra.mxu0 0.0
  %311 = vmatprep.subr.mxu0 0.0
  %312 = vmatpush2.msra.mxu0 0.0
  %313 = vmatprep.subr.mxu0 0.0
  %314 = vmatpush2.msra.mxu0 0.0
  %315 = vmatprep.subr.mxu0 0.0
  %316 = vmatpush2.msra.mxu0 0.0
  %317 = vmatprep.subr.mxu0 0.0
  %318 = vmatpush2.msra.mxu0 0.0
  %319 = vmatprep.subr.mxu0 0.0
  %320 = vmatpush2.msra.mxu0 0.0
  %321 = vmatprep.subr.mxu0 0.0
  %322 = vmatpush2.msra.mxu0 0.0
  %323 = vmatprep.subr.mxu0 0.0
  %324 = vmatpush2.msra.mxu0 0.0
  %325 = vmatprep.subr.mxu0 0.0
  %326 = vmatpush2.msra.mxu0 0.0
  %327 = vmatprep.mubr.f32.mxu0 0.0
  %328 = vmatmul.mubr.f32.gmra.mxu0 %v240
  %v329 = vpop.f32.mrf.mxu0
  %v330 = vadd.f32 %v237, %v329
  %v331 = vpop.f32.mrf.mxu0
  %332 = vmatprep.mubr.f32.mxu0 0.0
  %333 = vmatmul.mubr.f32.gmra.mxu0 %v243
  %v334 = vpop.f32.mrf.mxu0
  %v335 = vadd.f32 %v237, %v334
  %v336 = vpop.f32.mrf.mxu0
  %337 = vmatprep.mubr.f32.mxu0 0.0
  %338 = vmatmul.mubr.f32.gmra.mxu0 %v246
  %v339 = vpop.f32.mrf.mxu0
  %v340 = vadd.f32 %v237, %v339
  %v341 = vpop.f32.mrf.mxu0
  %342 = vmatprep.mubr.f32.mxu0 0.0
  %343 = vmatmul.mubr.f32.gmra.mxu0 %v249
  %v344 = vpop.f32.mrf.mxu0
  %v345 = vadd.f32 %v237, %v344
  %v346 = vpop.f32.mrf.mxu0
  %347 = vmatprep.mubr.f32.mxu0 0.0
  %348 = vmatmul.mubr.f32.gmra.mxu0 %v252
  %v349 = vpop.f32.mrf.mxu0
  %v350 = vadd.f32 %v237, %v349
  %v351 = vpop.f32.mrf.mxu0
  %352 = vmatprep.mubr.f32.mxu0 0.0
  %353 = vmatmul.mubr.f32.gmra.mxu0 %v255
  %v354 = vpop.f32.mrf.mxu0
  %v355 = vadd.f32 %v237, %v354
  %v356 = vpop.f32.mrf.mxu0
  %357 = vmatprep.mubr.f32.mxu0 0.0
  %358 = vmatmul.mubr.f32.gmra.mxu0 %v258
  %v359 = vpop.f32.mrf.mxu0
  %v360 = vadd.f32 %v237, %v359
  %v361 = vpop.f32.mrf.mxu0
  %362 = vmatprep.mubr.f32.mxu0 0.0
  %363 = vmatmul.mubr.f32.gmra.mxu0 %v261
  %v364 = vpop.f32.mrf.mxu0
  %v365 = vadd.f32 %v237, %v364
  %v366 = vpop.f32.mrf.mxu0
  %367 = vdwg.mxu0
  %v368 = vld [vmem:[%s0] sm:$0xff]
  %v369 = vlaneseq
  %v370 = vand.u32 %v369, 127
  %v371 = vcvt.s32.f32 %v370
  %v373 = vsel %vm132, %v223, 0
  %375 = vmatprep.subr.mxu0 0.0
  %376 = vmatpush1.msra.mxu0 0.0
  %377 = vmatprep.subr.mxu0 0.0
  %378 = vmatpush1.msra.mxu0 0.0
  %379 = vmatprep.subr.mxu0 0.0
  %380 = vmatpush1.msra.mxu0 0.0
  %381 = vmatprep.subr.mxu0 0.0
  %382 = vmatpush1.msra.mxu0 0.0
  %383 = vmatprep.subr.mxu0 0.0
  %384 = vmatpush1.msra.mxu0 0.0
  %385 = vmatprep.subr.mxu0 0.0
  %386 = vmatpush1.msra.mxu0 0.0
  %387 = vmatprep.subr.mxu0 0.0
  %388 = vmatpush1.msra.mxu0 0.0
  %389 = vmatprep.subr.mxu0 0.0
  %390 = vmatpush1.msra.mxu0 0.0
  %391 = vmatprep.subr.mxu0 0.0
  %392 = vmatpush1.msra.mxu0 0.0
  %393 = vmatprep.subr.mxu0 0.0
  %394 = vmatpush1.msra.mxu0 0.0
  %395 = vmatprep.subr.mxu0 0.0
  %396 = vmatpush1.msra.mxu0 0.0
  %397 = vmatprep.subr.mxu0 0.0
  %398 = vmatpush1.msra.mxu0 0.0
  %399 = vmatprep.subr.mxu0 0.0
  %400 = vmatpush1.msra.mxu0 %v74
  %401 = vmatprep.subr.mxu0 0.0
  %402 = vmatpush1.msra.mxu0 %v73
  %403 = vmatprep.subr.mxu0 0.0
  %404 = vmatpush1.msra.mxu0 %v72
  %405 = vmatprep.subr.mxu0 0.0
  %406 = vmatpush1.msra.mxu0 %v71
  %407 = vmatprep.subr.mxu0 0.0
  %408 = vmatpush2.msra.mxu0 0.0
  %409 = vmatprep.subr.mxu0 0.0
  %410 = vmatpush2.msra.mxu0 0.0
  %411 = vmatprep.subr.mxu0 0.0
  %412 = vmatpush2.msra.mxu0 0.0
  %413 = vmatprep.subr.mxu0 0.0
  %414 = vmatpush2.msra.mxu0 0.0
  %415 = vmatprep.subr.mxu0 0.0
  %416 = vmatpush2.msra.mxu0 0.0
  %417 = vmatprep.subr.mxu0 0.0
  %418 = vmatpush2.msra.mxu0 0.0
  %419 = vmatprep.subr.mxu0 0.0
  %420 = vmatpush2.msra.mxu0 0.0
  %421 = vmatprep.subr.mxu0 0.0
  %422 = vmatpush2.msra.mxu0 0.0
  %423 = vmatprep.subr.mxu0 0.0
  %424 = vmatpush2.msra.mxu0 0.0
  %425 = vmatprep.subr.mxu0 0.0
  %426 = vmatpush2.msra.mxu0 0.0
  %427 = vmatprep.subr.mxu0 0.0
  %428 = vmatpush2.msra.mxu0 0.0
  %429 = vmatprep.subr.mxu0 0.0
  %430 = vmatpush2.msra.mxu0 0.0
  %431 = vmatprep.subr.mxu0 0.0
  %432 = vmatpush2.msra.mxu0 0.0
  %433 = vmatprep.subr.mxu0 0.0
  %434 = vmatpush2.msra.mxu0 0.0
  %435 = vmatprep.subr.mxu0 0.0
  %436 = vmatpush2.msra.mxu0 0.0
  %437 = vmatprep.subr.mxu0 0.0
  %438 = vmatpush2.msra.mxu0 0.0
  %439 = vmatprep.mubr.f32.mxu0 0.0
  %440 = vmatmul.mubr.f32.gmra.mxu0 %v373
  %v441 = vpop.f32.mrf.mxu0
  %v442 = vadd.f32 0.0, %v441
  %v443 = vpop.f32.mrf.mxu0
  %444 = vdwg.mxu0
  %v446 = vcombine.high %v442, %v442
  %v448 = vunpack.c.l.s4 1966171168
  %v449 = vunpack.c.0.s8 %v448
  %v450 = vlaneseq
  %v451 = vshrl.u32 %v450, 7
  %v452 = vsub.s32 %v449, %v451
  %v453 = vrot.slane %v442, %v452
  %v455 = vunpack.c.l.s4 1966171168
  %v456 = vunpack.c.0.s8 %v455
  %v457 = vlaneseq
  %v458 = vshrl.u32 %v457, 7
  %v459 = vsub.s32 %v456, %v458
  %v460 = vrot.slane %v446, %v459
  %v461 = vcombine.high %v453, %v453
  %v462 = vcombine.high %v460, %v460
  %v464 = vunpack.c.l.s4 1966171168
  %v465 = vunpack.c.0.s8 %v464
  %v466 = vlaneseq
  %v467 = vshrl.u32 %v466, 7
  %v468 = vsub.s32 %v465, %v467
  %v469 = vrot.slane %v453, %v468
  %v471 = vunpack.c.l.s4 1966171168
  %v472 = vunpack.c.0.s8 %v471
  %v473 = vlaneseq
  %v474 = vshrl.u32 %v473, 7
  %v475 = vsub.s32 %v472, %v474
  %v476 = vrot.slane %v460, %v475
  %v478 = vunpack.c.l.s4 1966171168
  %v479 = vunpack.c.0.s8 %v478
  %v480 = vlaneseq
  %v481 = vshrl.u32 %v480, 7
  %v482 = vsub.s32 %v479, %v481
  %v483 = vrot.slane %v461, %v482
  %v485 = vunpack.c.l.s4 1966171168
  %v486 = vunpack.c.0.s8 %v485
  %v487 = vlaneseq
  %v488 = vshrl.u32 %v487, 7
  %v489 = vsub.s32 %v486, %v488
  %v490 = vrot.slane %v462, %v489
  %v491 = vcombine.high %v469, %v469
  %v492 = vcombine.high %v476, %v476
  %v493 = vcombine.high %v483, %v483
  %v494 = vcombine.high %v490, %v490
  %v495 = vlaneseq
  %v496 = vshrl.u32 %v495, 7
  %v497 = vsub.s32 0, %v496
  %v498 = vrot.slane %v469, %v497
  %v499 = vlaneseq
  %v500 = vshrl.u32 %v499, 7
  %v501 = vsub.s32 0, %v500
  %v502 = vrot.slane %v483, %v501
  %v503 = vlaneseq
  %v504 = vshrl.u32 %v503, 7
  %v505 = vsub.s32 0, %v504
  %v506 = vrot.slane %v491, %v505
  %v507 = vlaneseq
  %v508 = vshrl.u32 %v507, 7
  %v509 = vsub.s32 0, %v508
  %v510 = vrot.slane %v493, %v509
  %v511 = vlaneseq
  %v512 = vshrl.u32 %v511, 7
  %v513 = vsub.s32 0, %v512
  %v514 = vrot.slane %v476, %v513
  %v515 = vlaneseq
  %v516 = vshrl.u32 %v515, 7
  %v517 = vsub.s32 0, %v516
  %v518 = vrot.slane %v490, %v517
  %v519 = vlaneseq
  %v520 = vshrl.u32 %v519, 7
  %v521 = vsub.s32 0, %v520
  %v522 = vrot.slane %v492, %v521
  %v523 = vlaneseq
  %v524 = vshrl.u32 %v523, 7
  %v525 = vsub.s32 0, %v524
  %v526 = vrot.slane %v494, %v525
  %v535 = vadd.f32 %v498, %v330
  %v536 = vadd.f32 %v502, %v335
  %v537 = vadd.f32 %v506, %v340
  %v538 = vadd.f32 %v510, %v345
  %v539 = vadd.f32 %v514, %v350
  %v540 = vadd.f32 %v518, %v355
  %v541 = vadd.f32 %v522, %v360
  %v542 = vadd.f32 %v526, %v365
  %v543 = vtanh.pop %v535
  %v544 = vtanh.pop %v536
  %v545 = vtanh.pop %v537
  %v546 = vtanh.pop %v538
  %v547 = vtanh.pop %v539
  %v548 = vtanh.pop %v540
  %v549 = vtanh.pop %v541
  %v550 = vtanh.pop %v542
  %v552 = vlaneseq
  %v553 = vshrl.u32 %v552, 7
  %v554 = vsub.s32 0, %v553
  %v555 = vrot.slane %v70, %v554
  %v557 = vmul.f32 %v543, %v555
  %v558 = vmul.f32 %v544, %v555
  %v559 = vmul.f32 %v545, %v555
  %v560 = vmul.f32 %v546, %v555
  %v561 = vmul.f32 %v547, %v555
  %v562 = vmul.f32 %v548, %v555
  %v563 = vmul.f32 %v549, %v555
  %v564 = vmul.f32 %v550, %v555
  %v565 = vsel %vm132, %v557, 0.0
  %566 = vadd.xlane.f32.xlu0 %v565
  %v567 = vpop.xlane.xlu0 %566
  %v568 = vsel %vm132, %v558, 0.0
  %569 = vadd.xlane.f32.xlu0 %v568
  %v570 = vpop.xlane.xlu0 %569
  %v571 = vsel %vm132, %v559, 0.0
  %572 = vadd.xlane.f32.xlu0 %v571
  %v573 = vpop.xlane.xlu0 %572
  %v574 = vsel %vm132, %v560, 0.0
  %575 = vadd.xlane.f32.xlu0 %v574
  %v576 = vpop.xlane.xlu0 %575
  %v577 = vsel %vm132, %v561, 0.0
  %578 = vadd.xlane.f32.xlu0 %v577
  %v579 = vpop.xlane.xlu0 %578
  %v580 = vsel %vm132, %v562, 0.0
  %581 = vadd.xlane.f32.xlu0 %v580
  %v582 = vpop.xlane.xlu0 %581
  %v583 = vsel %vm132, %v563, 0.0
  %584 = vadd.xlane.f32.xlu0 %v583
  %v585 = vpop.xlane.xlu0 %584
  %v586 = vsel %vm132, %v564, 0.0
  %587 = vadd.xlane.f32.xlu0 %v586
  %v588 = vpop.xlane.xlu0 %587
  %vm589 = vcmp.gt.f32.partialorder %v69, 0.5
  %v598 = vlaneseq
  %v599 = vshrl.u32 %v598, 7
  %v600 = vsub.s32 %v370, %v599
  %v601 = vrot.slane %v567, %v600
  %v602 = vlaneseq
  %v603 = vshrl.u32 %v602, 7
  %v604 = vsub.s32 %v370, %v603
  %v605 = vrot.slane %v570, %v604
  %v606 = vlaneseq
  %v607 = vshrl.u32 %v606, 7
  %v608 = vsub.s32 %v370, %v607
  %v609 = vrot.slane %v573, %v608
  %v610 = vlaneseq
  %v611 = vshrl.u32 %v610, 7
  %v612 = vsub.s32 %v370, %v611
  %v613 = vrot.slane %v576, %v612
  %v614 = vlaneseq
  %v615 = vshrl.u32 %v614, 7
  %v616 = vsub.s32 %v370, %v615
  %v617 = vrot.slane %v579, %v616
  %v618 = vlaneseq
  %v619 = vshrl.u32 %v618, 7
  %v620 = vsub.s32 %v370, %v619
  %v621 = vrot.slane %v582, %v620
  %v622 = vlaneseq
  %v623 = vshrl.u32 %v622, 7
  %v624 = vsub.s32 %v370, %v623
  %v625 = vrot.slane %v585, %v624
  %v626 = vlaneseq
  %v627 = vshrl.u32 %v626, 7
  %v628 = vsub.s32 %v370, %v627
  %v629 = vrot.slane %v588, %v628
  %vm630 = vcmask 1041409
  %v631 = vsel %vm630, %v605, %v601
  %vm632 = vcmask 1042434
  %v633 = vsel %vm632, %v609, %v631
  %vm634 = vcmask 1043459
  %v635 = vsel %vm634, %v613, %v633
  %vm636 = vcmask 1044484
  %v637 = vsel %vm636, %v617, %v635
  %vm638 = vcmask 1045509
  %v639 = vsel %vm638, %v621, %v637
  %vm640 = vcmask 1046534
  %v641 = vsel %vm640, %v625, %v639
  %vm642 = vcmask 1047559
  %v643 = vsel %vm642, %v629, %v641
  %v645 = vsel %vm589, -1000000.0, %v643
  %vm646 = vcmask 64512
  %v647 = vsel %vm646, %v645, -inf
  %648 = vmax.xlane.f32.xlu0 %v647
  %v649 = vpop.xlane.xlu0 %648
  %v650 = vsub.f32 %v645, %v649
  %v651 = vmul.f32 %v650, 1.442695
  %v652 = vpow.pop %v651
  %v653 = vsel %vm646, %v652, 0.0
  %654 = vadd.xlane.f32.xlu0 %v653
  %v655 = vpop.xlane.xlu0 %654
  %v656 = vrcp.pop %v655
  %v657 = vmul.f32 %v652, %v656
  %658 = vst.msk [vmem:[%s19] sm:$0xff] %vm646, %v657
  %v659 = vlaneseq
  %v660 = vshrl.u32 %v659, 7
  %v661 = vsub.s32 0, %v660
  %v662 = vrot.slane %v657, %v661
  %664 = vbcast.lane.b32.xlu0 %v662, 256
  %v665 = vpop.permute.xlu0 %664
  %v666 = vlaneseq
  %v667 = vshrl.u32 %v666, 7
  %v668 = vsub.s32 1, %v667
  %v669 = vrot.slane %v657, %v668
  %671 = vbcast.lane.b32.xlu0 %v669, 256
  %v672 = vpop.permute.xlu0 %671
  %v673 = vlaneseq
  %v674 = vshrl.u32 %v673, 7
  %v675 = vsub.s32 2, %v674
  %v676 = vrot.slane %v657, %v675
  %678 = vbcast.lane.b32.xlu0 %v676, 256
  %v679 = vpop.permute.xlu0 %678
  %v680 = vlaneseq
  %v681 = vshrl.u32 %v680, 7
  %v682 = vsub.s32 3, %v681
  %v683 = vrot.slane %v657, %v682
  %685 = vbcast.lane.b32.xlu0 %v683, 256
  %v686 = vpop.permute.xlu0 %685
  %v687 = vlaneseq
  %v688 = vshrl.u32 %v687, 7
  %v689 = vsub.s32 4, %v688
  %v690 = vrot.slane %v657, %v689
  %692 = vbcast.lane.b32.xlu0 %v690, 256
  %v693 = vpop.permute.xlu0 %692
  %v694 = vlaneseq
  %v695 = vshrl.u32 %v694, 7
  %v696 = vsub.s32 5, %v695
  %v697 = vrot.slane %v657, %v696
  %699 = vbcast.lane.b32.xlu0 %v697, 256
  %v700 = vpop.permute.xlu0 %699
  %v701 = vlaneseq
  %v702 = vshrl.u32 %v701, 7
  %v703 = vsub.s32 6, %v702
  %v704 = vrot.slane %v657, %v703
  %706 = vbcast.lane.b32.xlu0 %v704, 256
  %v707 = vpop.permute.xlu0 %706
  %v708 = vlaneseq
  %v709 = vshrl.u32 %v708, 7
  %v710 = vsub.s32 7, %v709
  %v711 = vrot.slane %v657, %v710
  %713 = vbcast.lane.b32.xlu0 %v711, 256
  %v714 = vpop.permute.xlu0 %713
  %v715 = vmul.f32 %v665, %v61
  %v716 = vmul.f32 %v672, %v62
  %v717 = vmul.f32 %v679, %v63
  %v718 = vmul.f32 %v686, %v64
  %v719 = vmul.f32 %v693, %v65
  %v720 = vmul.f32 %v700, %v66
  %v721 = vmul.f32 %v707, %v67
  %v722 = vmul.f32 %v714, %v68
  %v723 = vsel %vm149, %v715, 0.0
  %v724 = vrot.slane %v723, 4
  %v725 = vadd.f32 %v723, %v724
  %v726 = vrot.slane %v725, 2
  %v727 = vadd.f32 %v725, %v726
  %v728 = vrot.slane %v727, 1
  %v729 = vadd.f32 %v727, %v728
  %v730 = vsel %vm149, %v716, 0.0
  %v731 = vrot.slane %v730, 4
  %v732 = vadd.f32 %v730, %v731
  %v733 = vrot.slane %v732, 2
  %v734 = vadd.f32 %v732, %v733
  %v735 = vrot.slane %v734, 1
  %v736 = vadd.f32 %v734, %v735
  %v737 = vsel %vm149, %v717, 0.0
  %v738 = vrot.slane %v737, 4
  %v739 = vadd.f32 %v737, %v738
  %v740 = vrot.slane %v739, 2
  %v741 = vadd.f32 %v739, %v740
  %v742 = vrot.slane %v741, 1
  %v743 = vadd.f32 %v741, %v742
  %v744 = vsel %vm149, %v718, 0.0
  %v745 = vrot.slane %v744, 4
  %v746 = vadd.f32 %v744, %v745
  %v747 = vrot.slane %v746, 2
  %v748 = vadd.f32 %v746, %v747
  %v749 = vrot.slane %v748, 1
  %v750 = vadd.f32 %v748, %v749
  %v751 = vsel %vm149, %v719, 0.0
  %v752 = vrot.slane %v751, 4
  %v753 = vadd.f32 %v751, %v752
  %v754 = vrot.slane %v753, 2
  %v755 = vadd.f32 %v753, %v754
  %v756 = vrot.slane %v755, 1
  %v757 = vadd.f32 %v755, %v756
  %v758 = vsel %vm149, %v720, 0.0
  %v759 = vrot.slane %v758, 4
  %v760 = vadd.f32 %v758, %v759
  %v761 = vrot.slane %v760, 2
  %v762 = vadd.f32 %v760, %v761
  %v763 = vrot.slane %v762, 1
  %v764 = vadd.f32 %v762, %v763
  %v765 = vsel %vm149, %v721, 0.0
  %v766 = vrot.slane %v765, 4
  %v767 = vadd.f32 %v765, %v766
  %v768 = vrot.slane %v767, 2
  %v769 = vadd.f32 %v767, %v768
  %v770 = vrot.slane %v769, 1
  %v771 = vadd.f32 %v769, %v770
  %v772 = vsel %vm149, %v722, 0.0
  %v773 = vrot.slane %v772, 4
  %v774 = vadd.f32 %v772, %v773
  %v775 = vrot.slane %v774, 2
  %v776 = vadd.f32 %v774, %v775
  %v777 = vrot.slane %v776, 1
  %v778 = vadd.f32 %v776, %v777
  %v787 = vsel %vm630, %v736, %v729
  %v788 = vsel %vm632, %v743, %v787
  %v789 = vsel %vm634, %v750, %v788
  %v790 = vsel %vm636, %v757, %v789
  %v791 = vsel %vm638, %v764, %v790
  %v792 = vsel %vm640, %v771, %v791
  %v793 = vsel %vm642, %v778, %v792
  %794 = vrot.lane.b32.xlu0 %v793, 32
  %v795 = vpop.permute.xlu0 %794
  %v797 = vsel %vm132, %v368, %v795
  %v799 = vlaneseq
  %v800 = vshrl.u32 %v799, 7
  %v801 = vsub.s32 0, %v800
  %v802 = vrot.slane %v91, %v801
  %vm804 = vcmask 785408
  %v806 = vsel %vm804, %v797, 0
  %808 = vmatprep.subr.mxu0 0.0
  %809 = vmatpush1.msra.mxu0 0.0
  %810 = vmatprep.subr.mxu0 0.0
  %811 = vmatpush1.msra.mxu0 0.0
  %812 = vmatprep.subr.mxu0 0.0
  %813 = vmatpush1.msra.mxu0 0.0
  %814 = vmatprep.subr.mxu0 0.0
  %815 = vmatpush1.msra.mxu0 0.0
  %816 = vmatprep.subr.mxu0 0.0
  %817 = vmatpush1.msra.mxu0 %v86
  %818 = vmatprep.subr.mxu0 0.0
  %819 = vmatpush1.msra.mxu0 %v85
  %820 = vmatprep.subr.mxu0 0.0
  %821 = vmatpush1.msra.mxu0 %v84
  %822 = vmatprep.subr.mxu0 0.0
  %823 = vmatpush1.msra.mxu0 %v83
  %824 = vmatprep.subr.mxu0 0.0
  %825 = vmatpush1.msra.mxu0 %v82
  %826 = vmatprep.subr.mxu0 0.0
  %827 = vmatpush1.msra.mxu0 %v81
  %828 = vmatprep.subr.mxu0 0.0
  %829 = vmatpush1.msra.mxu0 %v80
  %830 = vmatprep.subr.mxu0 0.0
  %831 = vmatpush1.msra.mxu0 %v79
  %832 = vmatprep.subr.mxu0 0.0
  %833 = vmatpush1.msra.mxu0 %v78
  %834 = vmatprep.subr.mxu0 0.0
  %835 = vmatpush1.msra.mxu0 %v77
  %836 = vmatprep.subr.mxu0 0.0
  %837 = vmatpush1.msra.mxu0 %v76
  %838 = vmatprep.subr.mxu0 0.0
  %839 = vmatpush1.msra.mxu0 %v75
  %840 = vmatprep.subr.mxu0 0.0
  %841 = vmatpush2.msra.mxu0 0.0
  %842 = vmatprep.subr.mxu0 0.0
  %843 = vmatpush2.msra.mxu0 0.0
  %844 = vmatprep.subr.mxu0 0.0
  %845 = vmatpush2.msra.mxu0 0.0
  %846 = vmatprep.subr.mxu0 0.0
  %847 = vmatpush2.msra.mxu0 0.0
  %848 = vmatprep.subr.mxu0 0.0
  %849 = vmatpush2.msra.mxu0 0.0
  %850 = vmatprep.subr.mxu0 0.0
  %851 = vmatpush2.msra.mxu0 0.0
  %852 = vmatprep.subr.mxu0 0.0
  %853 = vmatpush2.msra.mxu0 0.0
  %854 = vmatprep.subr.mxu0 0.0
  %855 = vmatpush2.msra.mxu0 0.0
  %856 = vmatprep.subr.mxu0 0.0
  %857 = vmatpush2.msra.mxu0 0.0
  %858 = vmatprep.subr.mxu0 0.0
  %859 = vmatpush2.msra.mxu0 0.0
  %860 = vmatprep.subr.mxu0 0.0
  %861 = vmatpush2.msra.mxu0 0.0
  %862 = vmatprep.subr.mxu0 0.0
  %863 = vmatpush2.msra.mxu0 0.0
  %864 = vmatprep.subr.mxu0 0.0
  %865 = vmatpush2.msra.mxu0 0.0
  %866 = vmatprep.subr.mxu0 0.0
  %867 = vmatpush2.msra.mxu0 0.0
  %868 = vmatprep.subr.mxu0 0.0
  %869 = vmatpush2.msra.mxu0 0.0
  %870 = vmatprep.subr.mxu0 0.0
  %871 = vmatpush2.msra.mxu0 0.0
  %872 = vmatprep.mubr.f32.mxu0 0.0
  %873 = vmatmul.mubr.f32.gmra.mxu0 %v806
  %v874 = vpop.f32.mrf.mxu0
  %v875 = vadd.f32 %v802, %v874
  %v876 = vpop.f32.mrf.mxu0
  %877 = vdwg.mxu0
  %878 = vmatprep.subr.mxu0 0.0
  %879 = vmatpush1.msra.mxu0 0.0
  %880 = vmatprep.subr.mxu0 0.0
  %881 = vmatpush1.msra.mxu0 0.0
  %882 = vmatprep.subr.mxu0 0.0
  %883 = vmatpush1.msra.mxu0 0.0
  %884 = vmatprep.subr.mxu0 0.0
  %885 = vmatpush1.msra.mxu0 0.0
  %886 = vmatprep.subr.mxu0 0.0
  %887 = vmatpush1.msra.mxu0 0.0
  %888 = vmatprep.subr.mxu0 0.0
  %889 = vmatpush1.msra.mxu0 0.0
  %890 = vmatprep.subr.mxu0 0.0
  %891 = vmatpush1.msra.mxu0 0.0
  %892 = vmatprep.subr.mxu0 0.0
  %893 = vmatpush1.msra.mxu0 0.0
  %894 = vmatprep.subr.mxu0 0.0
  %895 = vmatpush1.msra.mxu0 0.0
  %896 = vmatprep.subr.mxu0 0.0
  %897 = vmatpush1.msra.mxu0 0.0
  %898 = vmatprep.subr.mxu0 0.0
  %899 = vmatpush1.msra.mxu0 0.0
  %900 = vmatprep.subr.mxu0 0.0
  %901 = vmatpush1.msra.mxu0 0.0
  %902 = vmatprep.subr.mxu0 0.0
  %903 = vmatpush1.msra.mxu0 %v90
  %904 = vmatprep.subr.mxu0 0.0
  %905 = vmatpush1.msra.mxu0 %v89
  %906 = vmatprep.subr.mxu0 0.0
  %907 = vmatpush1.msra.mxu0 %v88
  %908 = vmatprep.subr.mxu0 0.0
  %909 = vmatpush1.msra.mxu0 %v87
  %910 = vmatprep.subr.mxu0 0.0
  %911 = vmatpush2.msra.mxu0 0.0
  %912 = vmatprep.subr.mxu0 0.0
  %913 = vmatpush2.msra.mxu0 0.0
  %914 = vmatprep.subr.mxu0 0.0
  %915 = vmatpush2.msra.mxu0 0.0
  %916 = vmatprep.subr.mxu0 0.0
  %917 = vmatpush2.msra.mxu0 0.0
  %918 = vmatprep.subr.mxu0 0.0
  %919 = vmatpush2.msra.mxu0 0.0
  %920 = vmatprep.subr.mxu0 0.0
  %921 = vmatpush2.msra.mxu0 0.0
  %922 = vmatprep.subr.mxu0 0.0
  %923 = vmatpush2.msra.mxu0 0.0
  %924 = vmatprep.subr.mxu0 0.0
  %925 = vmatpush2.msra.mxu0 0.0
  %926 = vmatprep.subr.mxu0 0.0
  %927 = vmatpush2.msra.mxu0 0.0
  %928 = vmatprep.subr.mxu0 0.0
  %929 = vmatpush2.msra.mxu0 0.0
  %930 = vmatprep.subr.mxu0 0.0
  %931 = vmatpush2.msra.mxu0 0.0
  %932 = vmatprep.subr.mxu0 0.0
  %933 = vmatpush2.msra.mxu0 0.0
  %934 = vmatprep.subr.mxu0 0.0
  %935 = vmatpush2.msra.mxu0 0.0
  %936 = vmatprep.subr.mxu0 0.0
  %937 = vmatpush2.msra.mxu0 0.0
  %938 = vmatprep.subr.mxu0 0.0
  %939 = vmatpush2.msra.mxu0 0.0
  %940 = vmatprep.subr.mxu0 0.0
  %941 = vmatpush2.msra.mxu0 0.0
  %942 = vmatprep.mubr.f32.mxu0 0.0
  %943 = vmatmul.mubr.f32.gmra.mxu0 %v373
  %v944 = vpop.f32.mrf.mxu0
  %v945 = vadd.f32 0.0, %v944
  %v946 = vpop.f32.mrf.mxu0
  %947 = vdwg.mxu0
  %v948 = vadd.f32 %v875, %v945
  %v949 = vxor.u32 %v948, 2147483648
  %v950 = vmul.f32 %v949, 1.442695
  %v951 = vpow.pop %v950
  %v952 = vadd.f32 %v951, 1.0
  %v953 = vrcp.pop %v952
  %v954 = vmul.f32 1.0, %v953
  %v956 = vlaneseq
  %v957 = vshrl.u32 %v956, 7
  %v958 = vsub.s32 0, %v957
  %v959 = vrot.slane %v92, %v958
  %960 = vrot.lane.b32.xlu0 %v959, 64
  %v961 = vpop.permute.xlu0 %960
  %v963 = vadd.f32 %v945, %v961
  %965 = vrot.lane.b32.xlu0 %v963, 64
  %v966 = vpop.permute.xlu0 %965
  %v968 = vmul.f32 %v954, %v966
  %970 = vrot.lane.b32.xlu0 %v968, 64
  %v971 = vpop.permute.xlu0 %970
  %v973 = vadd.f32 %v875, %v971
  %v974 = vtanh.pop %v973
  %v975 = vsub.f32 1.0, %v954
  %977 = vrot.lane.b32.xlu0 %v974, 96
  %v978 = vpop.permute.xlu0 %977
  %v980 = vmul.f32 %v975, %v978
  %981 = vrot.lane.b32.xlu0 %v223, 32
  %v982 = vpop.permute.xlu0 %981
  %v984 = vmul.f32 %v954, %v982
  %v985 = vadd.f32 %v980, %v984
  %987 = vrot.lane.b32.xlu0 %v985, 96
  %v988 = vpop.permute.xlu0 %987
  %991 = vrot.lane.b32.xlu0 %v368, 96
  %v992 = vpop.permute.xlu0 %991
  %v994 = vsel %vm132, %v988, %v795
  %v995 = vsel %vm804, %v994, %v992
  %v997 = vlaneseq
  %v998 = vshrl.u32 %v997, 7
  %v999 = vsub.s32 0, %v998
  %v1000 = vrot.slane %v109, %v999
  %1002 = vmatprep.subr.mxu0 0.0
  %1003 = vmatpush1.msra.mxu0 %v108
  %1004 = vmatprep.subr.mxu0 0.0
  %1005 = vmatpush1.msra.mxu0 %v107
  %1006 = vmatprep.subr.mxu0 0.0
  %1007 = vmatpush1.msra.mxu0 %v106
  %1008 = vmatprep.subr.mxu0 0.0
  %1009 = vmatpush1.msra.mxu0 %v105
  %1010 = vmatprep.subr.mxu0 0.0
  %1011 = vmatpush1.msra.mxu0 %v104
  %1012 = vmatprep.subr.mxu0 0.0
  %1013 = vmatpush1.msra.mxu0 %v103
  %1014 = vmatprep.subr.mxu0 0.0
  %1015 = vmatpush1.msra.mxu0 %v102
  %1016 = vmatprep.subr.mxu0 0.0
  %1017 = vmatpush1.msra.mxu0 %v101
  %1018 = vmatprep.subr.mxu0 0.0
  %1019 = vmatpush1.msra.mxu0 %v100
  %1020 = vmatprep.subr.mxu0 0.0
  %1021 = vmatpush1.msra.mxu0 %v99
  %1022 = vmatprep.subr.mxu0 0.0
  %1023 = vmatpush1.msra.mxu0 %v98
  %1024 = vmatprep.subr.mxu0 0.0
  %1025 = vmatpush1.msra.mxu0 %v97
  %1026 = vmatprep.subr.mxu0 0.0
  %1027 = vmatpush1.msra.mxu0 %v96
  %1028 = vmatprep.subr.mxu0 0.0
  %1029 = vmatpush1.msra.mxu0 %v95
  %1030 = vmatprep.subr.mxu0 0.0
  %1031 = vmatpush1.msra.mxu0 %v94
  %1032 = vmatprep.subr.mxu0 0.0
  %1033 = vmatpush1.msra.mxu0 %v93
  %1034 = vmatprep.subr.mxu0 0.0
  %1035 = vmatpush2.msra.mxu0 0.0
  %1036 = vmatprep.subr.mxu0 0.0
  %1037 = vmatpush2.msra.mxu0 0.0
  %1038 = vmatprep.subr.mxu0 0.0
  %1039 = vmatpush2.msra.mxu0 0.0
  %1040 = vmatprep.subr.mxu0 0.0
  %1041 = vmatpush2.msra.mxu0 0.0
  %1042 = vmatprep.subr.mxu0 0.0
  %1043 = vmatpush2.msra.mxu0 0.0
  %1044 = vmatprep.subr.mxu0 0.0
  %1045 = vmatpush2.msra.mxu0 0.0
  %1046 = vmatprep.subr.mxu0 0.0
  %1047 = vmatpush2.msra.mxu0 0.0
  %1048 = vmatprep.subr.mxu0 0.0
  %1049 = vmatpush2.msra.mxu0 0.0
  %1050 = vmatprep.subr.mxu0 0.0
  %1051 = vmatpush2.msra.mxu0 0.0
  %1052 = vmatprep.subr.mxu0 0.0
  %1053 = vmatpush2.msra.mxu0 0.0
  %1054 = vmatprep.subr.mxu0 0.0
  %1055 = vmatpush2.msra.mxu0 0.0
  %1056 = vmatprep.subr.mxu0 0.0
  %1057 = vmatpush2.msra.mxu0 0.0
  %1058 = vmatprep.subr.mxu0 0.0
  %1059 = vmatpush2.msra.mxu0 0.0
  %1060 = vmatprep.subr.mxu0 0.0
  %1061 = vmatpush2.msra.mxu0 0.0
  %1062 = vmatprep.subr.mxu0 0.0
  %1063 = vmatpush2.msra.mxu0 0.0
  %1064 = vmatprep.subr.mxu0 0.0
  %1065 = vmatpush2.msra.mxu0 0.0
  %1066 = vmatprep.mubr.f32.mxu0 0.0
  %1067 = vmatmul.mubr.f32.gmra.mxu0 %v995
  %v1068 = vpop.f32.mrf.mxu0
  %v1069 = vadd.f32 %v1000, %v1068
  %v1070 = vpop.f32.mrf.mxu0
  %1071 = vdwg.mxu0
  %1072 = vst [vmem:[%s18] sm:$0xff] %v1069
  %1073 = vmax.xlane.f32.xlu0 %v1069
  %v1074 = vpop.xlane.xlu0 %1073
  %vm1075 = vcmp.ge.f32.partialorder %v1069, %v1074
  %v1076 = vsel %vm1075, %v371, 128.0
  %1077 = vmin.xlane.f32.xlu0 %v1076
  %v1078 = vpop.xlane.xlu0 %1077
  %vm1079 = vcmp.eq.f32.partialorder %v371, %v1078
  %v1080 = vsel %vm1079, 1, 0
  %v1081 = vcvt.s32.f32 %v1080
  %1082 = vmatprep.subr.mxu0 0.0
  %1083 = vmatpush1.msra.mxu0 %v125
  %1084 = vmatprep.subr.mxu0 0.0
  %1085 = vmatpush1.msra.mxu0 %v124
  %1086 = vmatprep.subr.mxu0 0.0
  %1087 = vmatpush1.msra.mxu0 %v123
  %1088 = vmatprep.subr.mxu0 0.0
  %1089 = vmatpush1.msra.mxu0 %v122
  %1090 = vmatprep.subr.mxu0 0.0
  %1091 = vmatpush1.msra.mxu0 %v121
  %1092 = vmatprep.subr.mxu0 0.0
  %1093 = vmatpush1.msra.mxu0 %v120
  %1094 = vmatprep.subr.mxu0 0.0
  %1095 = vmatpush1.msra.mxu0 %v119
  %1096 = vmatprep.subr.mxu0 0.0
  %1097 = vmatpush1.msra.mxu0 %v118
  %1098 = vmatprep.subr.mxu0 0.0
  %1099 = vmatpush1.msra.mxu0 %v117
  %1100 = vmatprep.subr.mxu0 0.0
  %1101 = vmatpush1.msra.mxu0 %v116
  %1102 = vmatprep.subr.mxu0 0.0
  %1103 = vmatpush1.msra.mxu0 %v115
  %1104 = vmatprep.subr.mxu0 0.0
  %1105 = vmatpush1.msra.mxu0 %v114
  %1106 = vmatprep.subr.mxu0 0.0
  %1107 = vmatpush1.msra.mxu0 %v113
  %1108 = vmatprep.subr.mxu0 0.0
  %1109 = vmatpush1.msra.mxu0 %v112
  %1110 = vmatprep.subr.mxu0 0.0
  %1111 = vmatpush1.msra.mxu0 %v111
  %1112 = vmatprep.subr.mxu0 0.0
  %1113 = vmatpush1.msra.mxu0 %v110
  %1114 = vmatprep.subr.mxu0 0.0
  %1115 = vmatpush2.msra.mxu0 0.0
  %1116 = vmatprep.subr.mxu0 0.0
  %1117 = vmatpush2.msra.mxu0 0.0
  %1118 = vmatprep.subr.mxu0 0.0
  %1119 = vmatpush2.msra.mxu0 0.0
  %1120 = vmatprep.subr.mxu0 0.0
  %1121 = vmatpush2.msra.mxu0 0.0
  %1122 = vmatprep.subr.mxu0 0.0
  %1123 = vmatpush2.msra.mxu0 0.0
  %1124 = vmatprep.subr.mxu0 0.0
  %1125 = vmatpush2.msra.mxu0 0.0
  %1126 = vmatprep.subr.mxu0 0.0
  %1127 = vmatpush2.msra.mxu0 0.0
  %1128 = vmatprep.subr.mxu0 0.0
  %1129 = vmatpush2.msra.mxu0 0.0
  %1130 = vmatprep.subr.mxu0 0.0
  %1131 = vmatpush2.msra.mxu0 0.0
  %1132 = vmatprep.subr.mxu0 0.0
  %1133 = vmatpush2.msra.mxu0 0.0
  %1134 = vmatprep.subr.mxu0 0.0
  %1135 = vmatpush2.msra.mxu0 0.0
  %1136 = vmatprep.subr.mxu0 0.0
  %1137 = vmatpush2.msra.mxu0 0.0
  %1138 = vmatprep.subr.mxu0 0.0
  %1139 = vmatpush2.msra.mxu0 0.0
  %1140 = vmatprep.subr.mxu0 0.0
  %1141 = vmatpush2.msra.mxu0 0.0
  %1142 = vmatprep.subr.mxu0 0.0
  %1143 = vmatpush2.msra.mxu0 0.0
  %1144 = vmatprep.subr.mxu0 0.0
  %1145 = vmatpush2.msra.mxu0 0.0
  %1146 = vmatprep.mubr.f32.mxu0 0.0
  %1147 = vmatmul.mubr.f32.gmra.mxu0 %v1081
  %v1148 = vpop.f32.mrf.mxu0
  %v1149 = vadd.f32 0.0, %v1148
  %v1150 = vpop.f32.mrf.mxu0
  %1151 = vdwg.mxu0
  %v1152 = vsel %vm132, %v988, 0
  %1154 = vmatprep.subr.mxu0 0.0
  %1155 = vmatpush1.msra.mxu0 0.0
  %1156 = vmatprep.subr.mxu0 0.0
  %1157 = vmatpush1.msra.mxu0 0.0
  %1158 = vmatprep.subr.mxu0 0.0
  %1159 = vmatpush1.msra.mxu0 0.0
  %1160 = vmatprep.subr.mxu0 0.0
  %1161 = vmatpush1.msra.mxu0 0.0
  %1162 = vmatprep.subr.mxu0 0.0
  %1163 = vmatpush1.msra.mxu0 0.0
  %1164 = vmatprep.subr.mxu0 0.0
  %1165 = vmatpush1.msra.mxu0 0.0
  %1166 = vmatprep.subr.mxu0 0.0
  %1167 = vmatpush1.msra.mxu0 0.0
  %1168 = vmatprep.subr.mxu0 0.0
  %1169 = vmatpush1.msra.mxu0 0.0
  %1170 = vmatprep.subr.mxu0 0.0
  %1171 = vmatpush1.msra.mxu0 0.0
  %1172 = vmatprep.subr.mxu0 0.0
  %1173 = vmatpush1.msra.mxu0 0.0
  %1174 = vmatprep.subr.mxu0 0.0
  %1175 = vmatpush1.msra.mxu0 0.0
  %1176 = vmatprep.subr.mxu0 0.0
  %1177 = vmatpush1.msra.mxu0 0.0
  %1178 = vmatprep.subr.mxu0 0.0
  %1179 = vmatpush1.msra.mxu0 %v74
  %1180 = vmatprep.subr.mxu0 0.0
  %1181 = vmatpush1.msra.mxu0 %v73
  %1182 = vmatprep.subr.mxu0 0.0
  %1183 = vmatpush1.msra.mxu0 %v72
  %1184 = vmatprep.subr.mxu0 0.0
  %1185 = vmatpush1.msra.mxu0 %v71
  %1186 = vmatprep.subr.mxu0 0.0
  %1187 = vmatpush2.msra.mxu0 0.0
  %1188 = vmatprep.subr.mxu0 0.0
  %1189 = vmatpush2.msra.mxu0 0.0
  %1190 = vmatprep.subr.mxu0 0.0
  %1191 = vmatpush2.msra.mxu0 0.0
  %1192 = vmatprep.subr.mxu0 0.0
  %1193 = vmatpush2.msra.mxu0 0.0
  %1194 = vmatprep.subr.mxu0 0.0
  %1195 = vmatpush2.msra.mxu0 0.0
  %1196 = vmatprep.subr.mxu0 0.0
  %1197 = vmatpush2.msra.mxu0 0.0
  %1198 = vmatprep.subr.mxu0 0.0
  %1199 = vmatpush2.msra.mxu0 0.0
  %1200 = vmatprep.subr.mxu0 0.0
  %1201 = vmatpush2.msra.mxu0 0.0
  %1202 = vmatprep.subr.mxu0 0.0
  %1203 = vmatpush2.msra.mxu0 0.0
  %1204 = vmatprep.subr.mxu0 0.0
  %1205 = vmatpush2.msra.mxu0 0.0
  %1206 = vmatprep.subr.mxu0 0.0
  %1207 = vmatpush2.msra.mxu0 0.0
  %1208 = vmatprep.subr.mxu0 0.0
  %1209 = vmatpush2.msra.mxu0 0.0
  %1210 = vmatprep.subr.mxu0 0.0
  %1211 = vmatpush2.msra.mxu0 0.0
  %1212 = vmatprep.subr.mxu0 0.0
  %1213 = vmatpush2.msra.mxu0 0.0
  %1214 = vmatprep.subr.mxu0 0.0
  %1215 = vmatpush2.msra.mxu0 0.0
  %1216 = vmatprep.subr.mxu0 0.0
  %1217 = vmatpush2.msra.mxu0 0.0
  %1218 = vmatprep.mubr.f32.mxu0 0.0
  %1219 = vmatmul.mubr.f32.gmra.mxu0 %v1152
  %v1220 = vpop.f32.mrf.mxu0
  %v1221 = vadd.f32 0.0, %v1220
  %v1222 = vpop.f32.mrf.mxu0
  %1223 = vdwg.mxu0
  %v1225 = vcombine.high %v1221, %v1221
  %v1227 = vunpack.c.l.s4 1966171168
  %v1228 = vunpack.c.0.s8 %v1227
  %v1229 = vlaneseq
  %v1230 = vshrl.u32 %v1229, 7
  %v1231 = vsub.s32 %v1228, %v1230
  %v1232 = vrot.slane %v1221, %v1231
  %v1234 = vunpack.c.l.s4 1966171168
  %v1235 = vunpack.c.0.s8 %v1234
  %v1236 = vlaneseq
  %v1237 = vshrl.u32 %v1236, 7
  %v1238 = vsub.s32 %v1235, %v1237
  %v1239 = vrot.slane %v1225, %v1238
  %v1240 = vcombine.high %v1232, %v1232
  %v1241 = vcombine.high %v1239, %v1239
  %v1243 = vunpack.c.l.s4 1966171168
  %v1244 = vunpack.c.0.s8 %v1243
  %v1245 = vlaneseq
  %v1246 = vshrl.u32 %v1245, 7
  %v1247 = vsub.s32 %v1244, %v1246
  %v1248 = vrot.slane %v1232, %v1247
  %v1250 = vunpack.c.l.s4 1966171168
  %v1251 = vunpack.c.0.s8 %v1250
  %v1252 = vlaneseq
  %v1253 = vshrl.u32 %v1252, 7
  %v1254 = vsub.s32 %v1251, %v1253
  %v1255 = vrot.slane %v1239, %v1254
  %v1257 = vunpack.c.l.s4 1966171168
  %v1258 = vunpack.c.0.s8 %v1257
  %v1259 = vlaneseq
  %v1260 = vshrl.u32 %v1259, 7
  %v1261 = vsub.s32 %v1258, %v1260
  %v1262 = vrot.slane %v1240, %v1261
  %v1264 = vunpack.c.l.s4 1966171168
  %v1265 = vunpack.c.0.s8 %v1264
  %v1266 = vlaneseq
  %v1267 = vshrl.u32 %v1266, 7
  %v1268 = vsub.s32 %v1265, %v1267
  %v1269 = vrot.slane %v1241, %v1268
  %v1270 = vcombine.high %v1248, %v1248
  %v1271 = vcombine.high %v1255, %v1255
  %v1272 = vcombine.high %v1262, %v1262
  %v1273 = vcombine.high %v1269, %v1269
  %v1274 = vlaneseq
  %v1275 = vshrl.u32 %v1274, 7
  %v1276 = vsub.s32 0, %v1275
  %v1277 = vrot.slane %v1248, %v1276
  %v1278 = vlaneseq
  %v1279 = vshrl.u32 %v1278, 7
  %v1280 = vsub.s32 0, %v1279
  %v1281 = vrot.slane %v1262, %v1280
  %v1282 = vlaneseq
  %v1283 = vshrl.u32 %v1282, 7
  %v1284 = vsub.s32 0, %v1283
  %v1285 = vrot.slane %v1270, %v1284
  %v1286 = vlaneseq
  %v1287 = vshrl.u32 %v1286, 7
  %v1288 = vsub.s32 0, %v1287
  %v1289 = vrot.slane %v1272, %v1288
  %v1290 = vlaneseq
  %v1291 = vshrl.u32 %v1290, 7
  %v1292 = vsub.s32 0, %v1291
  %v1293 = vrot.slane %v1255, %v1292
  %v1294 = vlaneseq
  %v1295 = vshrl.u32 %v1294, 7
  %v1296 = vsub.s32 0, %v1295
  %v1297 = vrot.slane %v1269, %v1296
  %v1298 = vlaneseq
  %v1299 = vshrl.u32 %v1298, 7
  %v1300 = vsub.s32 0, %v1299
  %v1301 = vrot.slane %v1271, %v1300
  %v1302 = vlaneseq
  %v1303 = vshrl.u32 %v1302, 7
  %v1304 = vsub.s32 0, %v1303
  %v1305 = vrot.slane %v1273, %v1304
  %v1314 = vadd.f32 %v1277, %v330
  %v1315 = vadd.f32 %v1281, %v335
  %v1316 = vadd.f32 %v1285, %v340
  %v1317 = vadd.f32 %v1289, %v345
  %v1318 = vadd.f32 %v1293, %v350
  %v1319 = vadd.f32 %v1297, %v355
  %v1320 = vadd.f32 %v1301, %v360
  %v1321 = vadd.f32 %v1305, %v365
  %v1322 = vtanh.pop %v1314
  %v1323 = vtanh.pop %v1315
  %v1324 = vtanh.pop %v1316
  %v1325 = vtanh.pop %v1317
  %v1326 = vtanh.pop %v1318
  %v1327 = vtanh.pop %v1319
  %v1328 = vtanh.pop %v1320
  %v1329 = vtanh.pop %v1321
  %v1330 = vmul.f32 %v1322, %v555
  %v1331 = vmul.f32 %v1323, %v555
  %v1332 = vmul.f32 %v1324, %v555
  %v1333 = vmul.f32 %v1325, %v555
  %v1334 = vmul.f32 %v1326, %v555
  %v1335 = vmul.f32 %v1327, %v555
  %v1336 = vmul.f32 %v1328, %v555
  %v1337 = vmul.f32 %v1329, %v555
  %v1338 = vsel %vm132, %v1330, 0.0
  %1339 = vadd.xlane.f32.xlu0 %v1338
  %v1340 = vpop.xlane.xlu0 %1339
  %v1341 = vsel %vm132, %v1331, 0.0
  %1342 = vadd.xlane.f32.xlu0 %v1341
  %v1343 = vpop.xlane.xlu0 %1342
  %v1344 = vsel %vm132, %v1332, 0.0
  %1345 = vadd.xlane.f32.xlu0 %v1344
  %v1346 = vpop.xlane.xlu0 %1345
  %v1347 = vsel %vm132, %v1333, 0.0
  %1348 = vadd.xlane.f32.xlu0 %v1347
  %v1349 = vpop.xlane.xlu0 %1348
  %v1350 = vsel %vm132, %v1334, 0.0
  %1351 = vadd.xlane.f32.xlu0 %v1350
  %v1352 = vpop.xlane.xlu0 %1351
  %v1353 = vsel %vm132, %v1335, 0.0
  %1354 = vadd.xlane.f32.xlu0 %v1353
  %v1355 = vpop.xlane.xlu0 %1354
  %v1356 = vsel %vm132, %v1336, 0.0
  %1357 = vadd.xlane.f32.xlu0 %v1356
  %v1358 = vpop.xlane.xlu0 %1357
  %v1359 = vsel %vm132, %v1337, 0.0
  %1360 = vadd.xlane.f32.xlu0 %v1359
  %v1361 = vpop.xlane.xlu0 %1360
  %v1370 = vlaneseq
  %v1371 = vshrl.u32 %v1370, 7
  %v1372 = vsub.s32 %v370, %v1371
  %v1373 = vrot.slane %v1340, %v1372
  %v1374 = vlaneseq
  %v1375 = vshrl.u32 %v1374, 7
  %v1376 = vsub.s32 %v370, %v1375
  %v1377 = vrot.slane %v1343, %v1376
  %v1378 = vlaneseq
  %v1379 = vshrl.u32 %v1378, 7
  %v1380 = vsub.s32 %v370, %v1379
  %v1381 = vrot.slane %v1346, %v1380
  %v1382 = vlaneseq
  %v1383 = vshrl.u32 %v1382, 7
  %v1384 = vsub.s32 %v370, %v1383
  %v1385 = vrot.slane %v1349, %v1384
  %v1386 = vlaneseq
  %v1387 = vshrl.u32 %v1386, 7
  %v1388 = vsub.s32 %v370, %v1387
  %v1389 = vrot.slane %v1352, %v1388
  %v1390 = vlaneseq
  %v1391 = vshrl.u32 %v1390, 7
  %v1392 = vsub.s32 %v370, %v1391
  %v1393 = vrot.slane %v1355, %v1392
  %v1394 = vlaneseq
  %v1395 = vshrl.u32 %v1394, 7
  %v1396 = vsub.s32 %v370, %v1395
  %v1397 = vrot.slane %v1358, %v1396
  %v1398 = vlaneseq
  %v1399 = vshrl.u32 %v1398, 7
  %v1400 = vsub.s32 %v370, %v1399
  %v1401 = vrot.slane %v1361, %v1400
  %v1402 = vsel %vm630, %v1377, %v1373
  %v1403 = vsel %vm632, %v1381, %v1402
  %v1404 = vsel %vm634, %v1385, %v1403
  %v1405 = vsel %vm636, %v1389, %v1404
  %v1406 = vsel %vm638, %v1393, %v1405
  %v1407 = vsel %vm640, %v1397, %v1406
  %v1408 = vsel %vm642, %v1401, %v1407
  %v1410 = vsel %vm589, -1000000.0, %v1408
  %v1411 = vsel %vm646, %v1410, -inf
  %1412 = vmax.xlane.f32.xlu0 %v1411
  %v1413 = vpop.xlane.xlu0 %1412
  %v1414 = vsub.f32 %v1410, %v1413
  %v1415 = vmul.f32 %v1414, 1.442695
  %v1416 = vpow.pop %v1415
  %v1417 = vsel %vm646, %v1416, 0.0
  %1418 = vadd.xlane.f32.xlu0 %v1417
  %v1419 = vpop.xlane.xlu0 %1418
  %v1420 = vrcp.pop %v1419
  %v1421 = vmul.f32 %v1416, %v1420
  %s1422 = scalar_lea.vmem %s19, 8
  %1423 = vst.msk [vmem:[%s1422] sm:$0xff] %vm646, %v1421
  %v1424 = vlaneseq
  %v1425 = vshrl.u32 %v1424, 7
  %v1426 = vsub.s32 0, %v1425
  %v1427 = vrot.slane %v1421, %v1426
  %1429 = vbcast.lane.b32.xlu0 %v1427, 256
  %v1430 = vpop.permute.xlu0 %1429
  %v1431 = vlaneseq
  %v1432 = vshrl.u32 %v1431, 7
  %v1433 = vsub.s32 1, %v1432
  %v1434 = vrot.slane %v1421, %v1433
  %1436 = vbcast.lane.b32.xlu0 %v1434, 256
  %v1437 = vpop.permute.xlu0 %1436
  %v1438 = vlaneseq
  %v1439 = vshrl.u32 %v1438, 7
  %v1440 = vsub.s32 2, %v1439
  %v1441 = vrot.slane %v1421, %v1440
  %1443 = vbcast.lane.b32.xlu0 %v1441, 256
  %v1444 = vpop.permute.xlu0 %1443
  %v1445 = vlaneseq
  %v1446 = vshrl.u32 %v1445, 7
  %v1447 = vsub.s32 3, %v1446
  %v1448 = vrot.slane %v1421, %v1447
  %1450 = vbcast.lane.b32.xlu0 %v1448, 256
  %v1451 = vpop.permute.xlu0 %1450
  %v1452 = vlaneseq
  %v1453 = vshrl.u32 %v1452, 7
  %v1454 = vsub.s32 4, %v1453
  %v1455 = vrot.slane %v1421, %v1454
  %1457 = vbcast.lane.b32.xlu0 %v1455, 256
  %v1458 = vpop.permute.xlu0 %1457
  %v1459 = vlaneseq
  %v1460 = vshrl.u32 %v1459, 7
  %v1461 = vsub.s32 5, %v1460
  %v1462 = vrot.slane %v1421, %v1461
  %1464 = vbcast.lane.b32.xlu0 %v1462, 256
  %v1465 = vpop.permute.xlu0 %1464
  %v1466 = vlaneseq
  %v1467 = vshrl.u32 %v1466, 7
  %v1468 = vsub.s32 6, %v1467
  %v1469 = vrot.slane %v1421, %v1468
  %1471 = vbcast.lane.b32.xlu0 %v1469, 256
  %v1472 = vpop.permute.xlu0 %1471
  %v1473 = vlaneseq
  %v1474 = vshrl.u32 %v1473, 7
  %v1475 = vsub.s32 7, %v1474
  %v1476 = vrot.slane %v1421, %v1475
  %1478 = vbcast.lane.b32.xlu0 %v1476, 256
  %v1479 = vpop.permute.xlu0 %1478
  %v1480 = vmul.f32 %v1430, %v61
  %v1481 = vmul.f32 %v1437, %v62
  %v1482 = vmul.f32 %v1444, %v63
  %v1483 = vmul.f32 %v1451, %v64
  %v1484 = vmul.f32 %v1458, %v65
  %v1485 = vmul.f32 %v1465, %v66
  %v1486 = vmul.f32 %v1472, %v67
  %v1487 = vmul.f32 %v1479, %v68
  %v1488 = vsel %vm149, %v1480, 0.0
  %v1489 = vrot.slane %v1488, 4
  %v1490 = vadd.f32 %v1488, %v1489
  %v1491 = vrot.slane %v1490, 2
  %v1492 = vadd.f32 %v1490, %v1491
  %v1493 = vrot.slane %v1492, 1
  %v1494 = vadd.f32 %v1492, %v1493
  %v1495 = vsel %vm149, %v1481, 0.0
  %v1496 = vrot.slane %v1495, 4
  %v1497 = vadd.f32 %v1495, %v1496
  %v1498 = vrot.slane %v1497, 2
  %v1499 = vadd.f32 %v1497, %v1498
  %v1500 = vrot.slane %v1499, 1
  %v1501 = vadd.f32 %v1499, %v1500
  %v1502 = vsel %vm149, %v1482, 0.0
  %v1503 = vrot.slane %v1502, 4
  %v1504 = vadd.f32 %v1502, %v1503
  %v1505 = vrot.slane %v1504, 2
  %v1506 = vadd.f32 %v1504, %v1505
  %v1507 = vrot.slane %v1506, 1
  %v1508 = vadd.f32 %v1506, %v1507
  %v1509 = vsel %vm149, %v1483, 0.0
  %v1510 = vrot.slane %v1509, 4
  %v1511 = vadd.f32 %v1509, %v1510
  %v1512 = vrot.slane %v1511, 2
  %v1513 = vadd.f32 %v1511, %v1512
  %v1514 = vrot.slane %v1513, 1
  %v1515 = vadd.f32 %v1513, %v1514
  %v1516 = vsel %vm149, %v1484, 0.0
  %v1517 = vrot.slane %v1516, 4
  %v1518 = vadd.f32 %v1516, %v1517
  %v1519 = vrot.slane %v1518, 2
  %v1520 = vadd.f32 %v1518, %v1519
  %v1521 = vrot.slane %v1520, 1
  %v1522 = vadd.f32 %v1520, %v1521
  %v1523 = vsel %vm149, %v1485, 0.0
  %v1524 = vrot.slane %v1523, 4
  %v1525 = vadd.f32 %v1523, %v1524
  %v1526 = vrot.slane %v1525, 2
  %v1527 = vadd.f32 %v1525, %v1526
  %v1528 = vrot.slane %v1527, 1
  %v1529 = vadd.f32 %v1527, %v1528
  %v1530 = vsel %vm149, %v1486, 0.0
  %v1531 = vrot.slane %v1530, 4
  %v1532 = vadd.f32 %v1530, %v1531
  %v1533 = vrot.slane %v1532, 2
  %v1534 = vadd.f32 %v1532, %v1533
  %v1535 = vrot.slane %v1534, 1
  %v1536 = vadd.f32 %v1534, %v1535
  %v1537 = vsel %vm149, %v1487, 0.0
  %v1538 = vrot.slane %v1537, 4
  %v1539 = vadd.f32 %v1537, %v1538
  %v1540 = vrot.slane %v1539, 2
  %v1541 = vadd.f32 %v1539, %v1540
  %v1542 = vrot.slane %v1541, 1
  %v1543 = vadd.f32 %v1541, %v1542
  %v1552 = vsel %vm630, %v1501, %v1494
  %v1553 = vsel %vm632, %v1508, %v1552
  %v1554 = vsel %vm634, %v1515, %v1553
  %v1555 = vsel %vm636, %v1522, %v1554
  %v1556 = vsel %vm638, %v1529, %v1555
  %v1557 = vsel %vm640, %v1536, %v1556
  %v1558 = vsel %vm642, %v1543, %v1557
  %1559 = vrot.lane.b32.xlu0 %v1558, 32
  %v1560 = vpop.permute.xlu0 %1559
  %v1562 = vsel %vm132, %v1149, %v1560
  %v1564 = vsel %vm804, %v1562, 0
  %1566 = vmatprep.subr.mxu0 0.0
  %1567 = vmatpush1.msra.mxu0 0.0
  %1568 = vmatprep.subr.mxu0 0.0
  %1569 = vmatpush1.msra.mxu0 0.0
  %1570 = vmatprep.subr.mxu0 0.0
  %1571 = vmatpush1.msra.mxu0 0.0
  %1572 = vmatprep.subr.mxu0 0.0
  %1573 = vmatpush1.msra.mxu0 0.0
  %1574 = vmatprep.subr.mxu0 0.0
  %1575 = vmatpush1.msra.mxu0 %v86
  %1576 = vmatprep.subr.mxu0 0.0
  %1577 = vmatpush1.msra.mxu0 %v85
  %1578 = vmatprep.subr.mxu0 0.0
  %1579 = vmatpush1.msra.mxu0 %v84
  %1580 = vmatprep.subr.mxu0 0.0
  %1581 = vmatpush1.msra.mxu0 %v83
  %1582 = vmatprep.subr.mxu0 0.0
  %1583 = vmatpush1.msra.mxu0 %v82
  %1584 = vmatprep.subr.mxu0 0.0
  %1585 = vmatpush1.msra.mxu0 %v81
  %1586 = vmatprep.subr.mxu0 0.0
  %1587 = vmatpush1.msra.mxu0 %v80
  %1588 = vmatprep.subr.mxu0 0.0
  %1589 = vmatpush1.msra.mxu0 %v79
  %1590 = vmatprep.subr.mxu0 0.0
  %1591 = vmatpush1.msra.mxu0 %v78
  %1592 = vmatprep.subr.mxu0 0.0
  %1593 = vmatpush1.msra.mxu0 %v77
  %1594 = vmatprep.subr.mxu0 0.0
  %1595 = vmatpush1.msra.mxu0 %v76
  %1596 = vmatprep.subr.mxu0 0.0
  %1597 = vmatpush1.msra.mxu0 %v75
  %1598 = vmatprep.subr.mxu0 0.0
  %1599 = vmatpush2.msra.mxu0 0.0
  %1600 = vmatprep.subr.mxu0 0.0
  %1601 = vmatpush2.msra.mxu0 0.0
  %1602 = vmatprep.subr.mxu0 0.0
  %1603 = vmatpush2.msra.mxu0 0.0
  %1604 = vmatprep.subr.mxu0 0.0
  %1605 = vmatpush2.msra.mxu0 0.0
  %1606 = vmatprep.subr.mxu0 0.0
  %1607 = vmatpush2.msra.mxu0 0.0
  %1608 = vmatprep.subr.mxu0 0.0
  %1609 = vmatpush2.msra.mxu0 0.0
  %1610 = vmatprep.subr.mxu0 0.0
  %1611 = vmatpush2.msra.mxu0 0.0
  %1612 = vmatprep.subr.mxu0 0.0
  %1613 = vmatpush2.msra.mxu0 0.0
  %1614 = vmatprep.subr.mxu0 0.0
  %1615 = vmatpush2.msra.mxu0 0.0
  %1616 = vmatprep.subr.mxu0 0.0
  %1617 = vmatpush2.msra.mxu0 0.0
  %1618 = vmatprep.subr.mxu0 0.0
  %1619 = vmatpush2.msra.mxu0 0.0
  %1620 = vmatprep.subr.mxu0 0.0
  %1621 = vmatpush2.msra.mxu0 0.0
  %1622 = vmatprep.subr.mxu0 0.0
  %1623 = vmatpush2.msra.mxu0 0.0
  %1624 = vmatprep.subr.mxu0 0.0
  %1625 = vmatpush2.msra.mxu0 0.0
  %1626 = vmatprep.subr.mxu0 0.0
  %1627 = vmatpush2.msra.mxu0 0.0
  %1628 = vmatprep.subr.mxu0 0.0
  %1629 = vmatpush2.msra.mxu0 0.0
  %1630 = vmatprep.mubr.f32.mxu0 0.0
  %1631 = vmatmul.mubr.f32.gmra.mxu0 %v1564
  %v1632 = vpop.f32.mrf.mxu0
  %v1633 = vadd.f32 %v802, %v1632
  %v1634 = vpop.f32.mrf.mxu0
  %1635 = vdwg.mxu0
  %1636 = vmatprep.subr.mxu0 0.0
  %1637 = vmatpush1.msra.mxu0 0.0
  %1638 = vmatprep.subr.mxu0 0.0
  %1639 = vmatpush1.msra.mxu0 0.0
  %1640 = vmatprep.subr.mxu0 0.0
  %1641 = vmatpush1.msra.mxu0 0.0
  %1642 = vmatprep.subr.mxu0 0.0
  %1643 = vmatpush1.msra.mxu0 0.0
  %1644 = vmatprep.subr.mxu0 0.0
  %1645 = vmatpush1.msra.mxu0 0.0
  %1646 = vmatprep.subr.mxu0 0.0
  %1647 = vmatpush1.msra.mxu0 0.0
  %1648 = vmatprep.subr.mxu0 0.0
  %1649 = vmatpush1.msra.mxu0 0.0
  %1650 = vmatprep.subr.mxu0 0.0
  %1651 = vmatpush1.msra.mxu0 0.0
  %1652 = vmatprep.subr.mxu0 0.0
  %1653 = vmatpush1.msra.mxu0 0.0
  %1654 = vmatprep.subr.mxu0 0.0
  %1655 = vmatpush1.msra.mxu0 0.0
  %1656 = vmatprep.subr.mxu0 0.0
  %1657 = vmatpush1.msra.mxu0 0.0
  %1658 = vmatprep.subr.mxu0 0.0
  %1659 = vmatpush1.msra.mxu0 0.0
  %1660 = vmatprep.subr.mxu0 0.0
  %1661 = vmatpush1.msra.mxu0 %v90
  %1662 = vmatprep.subr.mxu0 0.0
  %1663 = vmatpush1.msra.mxu0 %v89
  %1664 = vmatprep.subr.mxu0 0.0
  %1665 = vmatpush1.msra.mxu0 %v88
  %1666 = vmatprep.subr.mxu0 0.0
  %1667 = vmatpush1.msra.mxu0 %v87
  %1668 = vmatprep.subr.mxu0 0.0
  %1669 = vmatpush2.msra.mxu0 0.0
  %1670 = vmatprep.subr.mxu0 0.0
  %1671 = vmatpush2.msra.mxu0 0.0
  %1672 = vmatprep.subr.mxu0 0.0
  %1673 = vmatpush2.msra.mxu0 0.0
  %1674 = vmatprep.subr.mxu0 0.0
  %1675 = vmatpush2.msra.mxu0 0.0
  %1676 = vmatprep.subr.mxu0 0.0
  %1677 = vmatpush2.msra.mxu0 0.0
  %1678 = vmatprep.subr.mxu0 0.0
  %1679 = vmatpush2.msra.mxu0 0.0
  %1680 = vmatprep.subr.mxu0 0.0
  %1681 = vmatpush2.msra.mxu0 0.0
  %1682 = vmatprep.subr.mxu0 0.0
  %1683 = vmatpush2.msra.mxu0 0.0
  %1684 = vmatprep.subr.mxu0 0.0
  %1685 = vmatpush2.msra.mxu0 0.0
  %1686 = vmatprep.subr.mxu0 0.0
  %1687 = vmatpush2.msra.mxu0 0.0
  %1688 = vmatprep.subr.mxu0 0.0
  %1689 = vmatpush2.msra.mxu0 0.0
  %1690 = vmatprep.subr.mxu0 0.0
  %1691 = vmatpush2.msra.mxu0 0.0
  %1692 = vmatprep.subr.mxu0 0.0
  %1693 = vmatpush2.msra.mxu0 0.0
  %1694 = vmatprep.subr.mxu0 0.0
  %1695 = vmatpush2.msra.mxu0 0.0
  %1696 = vmatprep.subr.mxu0 0.0
  %1697 = vmatpush2.msra.mxu0 0.0
  %1698 = vmatprep.subr.mxu0 0.0
  %1699 = vmatpush2.msra.mxu0 0.0
  %1700 = vmatprep.mubr.f32.mxu0 0.0
  %1701 = vmatmul.mubr.f32.gmra.mxu0 %v1152
  %v1702 = vpop.f32.mrf.mxu0
  %v1703 = vadd.f32 0.0, %v1702
  %v1704 = vpop.f32.mrf.mxu0
  %1705 = vdwg.mxu0
  %v1706 = vadd.f32 %v1633, %v1703
  %v1707 = vxor.u32 %v1706, 2147483648
  %v1708 = vmul.f32 %v1707, 1.442695
  %v1709 = vpow.pop %v1708
  %v1710 = vadd.f32 %v1709, 1.0
  %v1711 = vrcp.pop %v1710
  %v1712 = vmul.f32 1.0, %v1711
  %v1713 = vadd.f32 %v1703, %v961
  %1715 = vrot.lane.b32.xlu0 %v1713, 64
  %v1716 = vpop.permute.xlu0 %1715
  %v1718 = vmul.f32 %v1712, %v1716
  %1720 = vrot.lane.b32.xlu0 %v1718, 64
  %v1721 = vpop.permute.xlu0 %1720
  %v1723 = vadd.f32 %v1633, %v1721
  %v1724 = vtanh.pop %v1723
  %v1725 = vsub.f32 1.0, %v1712
  %1727 = vrot.lane.b32.xlu0 %v1724, 96
  %v1728 = vpop.permute.xlu0 %1727
  %v1730 = vmul.f32 %v1725, %v1728
  %v1731 = vmul.f32 %v1712, %v985
  %v1732 = vadd.f32 %v1730, %v1731
  %1734 = vrot.lane.b32.xlu0 %v1732, 96
  %v1735 = vpop.permute.xlu0 %1734
  %1738 = vrot.lane.b32.xlu0 %v1149, 96
  %v1739 = vpop.permute.xlu0 %1738
  %v1741 = vsel %vm132, %v1735, %v1560
  %v1742 = vsel %vm804, %v1741, %v1739
  %1743 = vmatprep.subr.mxu0 0.0
  %1744 = vmatpush1.msra.mxu0 %v108
  %1745 = vmatprep.subr.mxu0 0.0
  %1746 = vmatpush1.msra.mxu0 %v107
  %1747 = vmatprep.subr.mxu0 0.0
  %1748 = vmatpush1.msra.mxu0 %v106
  %1749 = vmatprep.subr.mxu0 0.0
  %1750 = vmatpush1.msra.mxu0 %v105
  %1751 = vmatprep.subr.mxu0 0.0
  %1752 = vmatpush1.msra.mxu0 %v104
  %1753 = vmatprep.subr.mxu0 0.0
  %1754 = vmatpush1.msra.mxu0 %v103
  %1755 = vmatprep.subr.mxu0 0.0
  %1756 = vmatpush1.msra.mxu0 %v102
  %1757 = vmatprep.subr.mxu0 0.0
  %1758 = vmatpush1.msra.mxu0 %v101
  %1759 = vmatprep.subr.mxu0 0.0
  %1760 = vmatpush1.msra.mxu0 %v100
  %1761 = vmatprep.subr.mxu0 0.0
  %1762 = vmatpush1.msra.mxu0 %v99
  %1763 = vmatprep.subr.mxu0 0.0
  %1764 = vmatpush1.msra.mxu0 %v98
  %1765 = vmatprep.subr.mxu0 0.0
  %1766 = vmatpush1.msra.mxu0 %v97
  %1767 = vmatprep.subr.mxu0 0.0
  %1768 = vmatpush1.msra.mxu0 %v96
  %1769 = vmatprep.subr.mxu0 0.0
  %1770 = vmatpush1.msra.mxu0 %v95
  %1771 = vmatprep.subr.mxu0 0.0
  %1772 = vmatpush1.msra.mxu0 %v94
  %1773 = vmatprep.subr.mxu0 0.0
  %1774 = vmatpush1.msra.mxu0 %v93
  %1775 = vmatprep.subr.mxu0 0.0
  %1776 = vmatpush2.msra.mxu0 0.0
  %1777 = vmatprep.subr.mxu0 0.0
  %1778 = vmatpush2.msra.mxu0 0.0
  %1779 = vmatprep.subr.mxu0 0.0
  %1780 = vmatpush2.msra.mxu0 0.0
  %1781 = vmatprep.subr.mxu0 0.0
  %1782 = vmatpush2.msra.mxu0 0.0
  %1783 = vmatprep.subr.mxu0 0.0
  %1784 = vmatpush2.msra.mxu0 0.0
  %1785 = vmatprep.subr.mxu0 0.0
  %1786 = vmatpush2.msra.mxu0 0.0
  %1787 = vmatprep.subr.mxu0 0.0
  %1788 = vmatpush2.msra.mxu0 0.0
  %1789 = vmatprep.subr.mxu0 0.0
  %1790 = vmatpush2.msra.mxu0 0.0
  %1791 = vmatprep.subr.mxu0 0.0
  %1792 = vmatpush2.msra.mxu0 0.0
  %1793 = vmatprep.subr.mxu0 0.0
  %1794 = vmatpush2.msra.mxu0 0.0
  %1795 = vmatprep.subr.mxu0 0.0
  %1796 = vmatpush2.msra.mxu0 0.0
  %1797 = vmatprep.subr.mxu0 0.0
  %1798 = vmatpush2.msra.mxu0 0.0
  %1799 = vmatprep.subr.mxu0 0.0
  %1800 = vmatpush2.msra.mxu0 0.0
  %1801 = vmatprep.subr.mxu0 0.0
  %1802 = vmatpush2.msra.mxu0 0.0
  %1803 = vmatprep.subr.mxu0 0.0
  %1804 = vmatpush2.msra.mxu0 0.0
  %1805 = vmatprep.subr.mxu0 0.0
  %1806 = vmatpush2.msra.mxu0 0.0
  %1807 = vmatprep.mubr.f32.mxu0 0.0
  %1808 = vmatmul.mubr.f32.gmra.mxu0 %v1742
  %v1809 = vpop.f32.mrf.mxu0
  %v1810 = vadd.f32 %v1000, %v1809
  %v1811 = vpop.f32.mrf.mxu0
  %1812 = vdwg.mxu0
  %s1813 = scalar_lea.vmem %s18, 8
  %1814 = vst [vmem:[%s1813] sm:$0xff] %v1810
  %1815 = vmax.xlane.f32.xlu0 %v1810
  %v1816 = vpop.xlane.xlu0 %1815
  %vm1817 = vcmp.ge.f32.partialorder %v1810, %v1816
  %v1818 = vsel %vm1817, %v371, 128.0
  %1819 = vmin.xlane.f32.xlu0 %v1818
  %v1820 = vpop.xlane.xlu0 %1819
  %vm1821 = vcmp.eq.f32.partialorder %v371, %v1820
  %v1822 = vsel %vm1821, 1, 0
  %v1823 = vcvt.s32.f32 %v1822
  %1824 = vmatprep.subr.mxu0 0.0
  %1825 = vmatpush1.msra.mxu0 %v125
  %1826 = vmatprep.subr.mxu0 0.0
  %1827 = vmatpush1.msra.mxu0 %v124
  %1828 = vmatprep.subr.mxu0 0.0
  %1829 = vmatpush1.msra.mxu0 %v123
  %1830 = vmatprep.subr.mxu0 0.0
  %1831 = vmatpush1.msra.mxu0 %v122
  %1832 = vmatprep.subr.mxu0 0.0
  %1833 = vmatpush1.msra.mxu0 %v121
  %1834 = vmatprep.subr.mxu0 0.0
  %1835 = vmatpush1.msra.mxu0 %v120
  %1836 = vmatprep.subr.mxu0 0.0
  %1837 = vmatpush1.msra.mxu0 %v119
  %1838 = vmatprep.subr.mxu0 0.0
  %1839 = vmatpush1.msra.mxu0 %v118
  %1840 = vmatprep.subr.mxu0 0.0
  %1841 = vmatpush1.msra.mxu0 %v117
  %1842 = vmatprep.subr.mxu0 0.0
  %1843 = vmatpush1.msra.mxu0 %v116
  %1844 = vmatprep.subr.mxu0 0.0
  %1845 = vmatpush1.msra.mxu0 %v115
  %1846 = vmatprep.subr.mxu0 0.0
  %1847 = vmatpush1.msra.mxu0 %v114
  %1848 = vmatprep.subr.mxu0 0.0
  %1849 = vmatpush1.msra.mxu0 %v113
  %1850 = vmatprep.subr.mxu0 0.0
  %1851 = vmatpush1.msra.mxu0 %v112
  %1852 = vmatprep.subr.mxu0 0.0
  %1853 = vmatpush1.msra.mxu0 %v111
  %1854 = vmatprep.subr.mxu0 0.0
  %1855 = vmatpush1.msra.mxu0 %v110
  %1856 = vmatprep.subr.mxu0 0.0
  %1857 = vmatpush2.msra.mxu0 0.0
  %1858 = vmatprep.subr.mxu0 0.0
  %1859 = vmatpush2.msra.mxu0 0.0
  %1860 = vmatprep.subr.mxu0 0.0
  %1861 = vmatpush2.msra.mxu0 0.0
  %1862 = vmatprep.subr.mxu0 0.0
  %1863 = vmatpush2.msra.mxu0 0.0
  %1864 = vmatprep.subr.mxu0 0.0
  %1865 = vmatpush2.msra.mxu0 0.0
  %1866 = vmatprep.subr.mxu0 0.0
  %1867 = vmatpush2.msra.mxu0 0.0
  %1868 = vmatprep.subr.mxu0 0.0
  %1869 = vmatpush2.msra.mxu0 0.0
  %1870 = vmatprep.subr.mxu0 0.0
  %1871 = vmatpush2.msra.mxu0 0.0
  %1872 = vmatprep.subr.mxu0 0.0
  %1873 = vmatpush2.msra.mxu0 0.0
  %1874 = vmatprep.subr.mxu0 0.0
  %1875 = vmatpush2.msra.mxu0 0.0
  %1876 = vmatprep.subr.mxu0 0.0
  %1877 = vmatpush2.msra.mxu0 0.0
  %1878 = vmatprep.subr.mxu0 0.0
  %1879 = vmatpush2.msra.mxu0 0.0
  %1880 = vmatprep.subr.mxu0 0.0
  %1881 = vmatpush2.msra.mxu0 0.0
  %1882 = vmatprep.subr.mxu0 0.0
  %1883 = vmatpush2.msra.mxu0 0.0
  %1884 = vmatprep.subr.mxu0 0.0
  %1885 = vmatpush2.msra.mxu0 0.0
  %1886 = vmatprep.subr.mxu0 0.0
  %1887 = vmatpush2.msra.mxu0 0.0
  %1888 = vmatprep.mubr.f32.mxu0 0.0
  %1889 = vmatmul.mubr.f32.gmra.mxu0 %v1823
  %v1890 = vpop.f32.mrf.mxu0
  %v1891 = vadd.f32 0.0, %v1890
  %v1892 = vpop.f32.mrf.mxu0
  %1893 = vdwg.mxu0
  %v1894 = vsel %vm132, %v1735, 0
  %1896 = vmatprep.subr.mxu0 0.0
  %1897 = vmatpush1.msra.mxu0 0.0
  %1898 = vmatprep.subr.mxu0 0.0
  %1899 = vmatpush1.msra.mxu0 0.0
  %1900 = vmatprep.subr.mxu0 0.0
  %1901 = vmatpush1.msra.mxu0 0.0
  %1902 = vmatprep.subr.mxu0 0.0
  %1903 = vmatpush1.msra.mxu0 0.0
  %1904 = vmatprep.subr.mxu0 0.0
  %1905 = vmatpush1.msra.mxu0 0.0
  %1906 = vmatprep.subr.mxu0 0.0
  %1907 = vmatpush1.msra.mxu0 0.0
  %1908 = vmatprep.subr.mxu0 0.0
  %1909 = vmatpush1.msra.mxu0 0.0
  %1910 = vmatprep.subr.mxu0 0.0
  %1911 = vmatpush1.msra.mxu0 0.0
  %1912 = vmatprep.subr.mxu0 0.0
  %1913 = vmatpush1.msra.mxu0 0.0
  %1914 = vmatprep.subr.mxu0 0.0
  %1915 = vmatpush1.msra.mxu0 0.0
  %1916 = vmatprep.subr.mxu0 0.0
  %1917 = vmatpush1.msra.mxu0 0.0
  %1918 = vmatprep.subr.mxu0 0.0
  %1919 = vmatpush1.msra.mxu0 0.0
  %1920 = vmatprep.subr.mxu0 0.0
  %1921 = vmatpush1.msra.mxu0 %v74
  %1922 = vmatprep.subr.mxu0 0.0
  %1923 = vmatpush1.msra.mxu0 %v73
  %1924 = vmatprep.subr.mxu0 0.0
  %1925 = vmatpush1.msra.mxu0 %v72
  %1926 = vmatprep.subr.mxu0 0.0
  %1927 = vmatpush1.msra.mxu0 %v71
  %1928 = vmatprep.subr.mxu0 0.0
  %1929 = vmatpush2.msra.mxu0 0.0
  %1930 = vmatprep.subr.mxu0 0.0
  %1931 = vmatpush2.msra.mxu0 0.0
  %1932 = vmatprep.subr.mxu0 0.0
  %1933 = vmatpush2.msra.mxu0 0.0
  %1934 = vmatprep.subr.mxu0 0.0
  %1935 = vmatpush2.msra.mxu0 0.0
  %1936 = vmatprep.subr.mxu0 0.0
  %1937 = vmatpush2.msra.mxu0 0.0
  %1938 = vmatprep.subr.mxu0 0.0
  %1939 = vmatpush2.msra.mxu0 0.0
  %1940 = vmatprep.subr.mxu0 0.0
  %1941 = vmatpush2.msra.mxu0 0.0
  %1942 = vmatprep.subr.mxu0 0.0
  %1943 = vmatpush2.msra.mxu0 0.0
  %1944 = vmatprep.subr.mxu0 0.0
  %1945 = vmatpush2.msra.mxu0 0.0
  %1946 = vmatprep.subr.mxu0 0.0
  %1947 = vmatpush2.msra.mxu0 0.0
  %1948 = vmatprep.subr.mxu0 0.0
  %1949 = vmatpush2.msra.mxu0 0.0
  %1950 = vmatprep.subr.mxu0 0.0
  %1951 = vmatpush2.msra.mxu0 0.0
  %1952 = vmatprep.subr.mxu0 0.0
  %1953 = vmatpush2.msra.mxu0 0.0
  %1954 = vmatprep.subr.mxu0 0.0
  %1955 = vmatpush2.msra.mxu0 0.0
  %1956 = vmatprep.subr.mxu0 0.0
  %1957 = vmatpush2.msra.mxu0 0.0
  %1958 = vmatprep.subr.mxu0 0.0
  %1959 = vmatpush2.msra.mxu0 0.0
  %1960 = vmatprep.mubr.f32.mxu0 0.0
  %1961 = vmatmul.mubr.f32.gmra.mxu0 %v1894
  %v1962 = vpop.f32.mrf.mxu0
  %v1963 = vadd.f32 0.0, %v1962
  %v1964 = vpop.f32.mrf.mxu0
  %1965 = vdwg.mxu0
  %v1967 = vcombine.high %v1963, %v1963
  %v1969 = vunpack.c.l.s4 1966171168
  %v1970 = vunpack.c.0.s8 %v1969
  %v1971 = vlaneseq
  %v1972 = vshrl.u32 %v1971, 7
  %v1973 = vsub.s32 %v1970, %v1972
  %v1974 = vrot.slane %v1963, %v1973
  %v1976 = vunpack.c.l.s4 1966171168
  %v1977 = vunpack.c.0.s8 %v1976
  %v1978 = vlaneseq
  %v1979 = vshrl.u32 %v1978, 7
  %v1980 = vsub.s32 %v1977, %v1979
  %v1981 = vrot.slane %v1967, %v1980
  %v1982 = vcombine.high %v1974, %v1974
  %v1983 = vcombine.high %v1981, %v1981
  %v1985 = vunpack.c.l.s4 1966171168
  %v1986 = vunpack.c.0.s8 %v1985
  %v1987 = vlaneseq
  %v1988 = vshrl.u32 %v1987, 7
  %v1989 = vsub.s32 %v1986, %v1988
  %v1990 = vrot.slane %v1974, %v1989
  %v1992 = vunpack.c.l.s4 1966171168
  %v1993 = vunpack.c.0.s8 %v1992
  %v1994 = vlaneseq
  %v1995 = vshrl.u32 %v1994, 7
  %v1996 = vsub.s32 %v1993, %v1995
  %v1997 = vrot.slane %v1981, %v1996
  %v1999 = vunpack.c.l.s4 1966171168
  %v2000 = vunpack.c.0.s8 %v1999
  %v2001 = vlaneseq
  %v2002 = vshrl.u32 %v2001, 7
  %v2003 = vsub.s32 %v2000, %v2002
  %v2004 = vrot.slane %v1982, %v2003
  %v2006 = vunpack.c.l.s4 1966171168
  %v2007 = vunpack.c.0.s8 %v2006
  %v2008 = vlaneseq
  %v2009 = vshrl.u32 %v2008, 7
  %v2010 = vsub.s32 %v2007, %v2009
  %v2011 = vrot.slane %v1983, %v2010
  %v2012 = vcombine.high %v1990, %v1990
  %v2013 = vcombine.high %v1997, %v1997
  %v2014 = vcombine.high %v2004, %v2004
  %v2015 = vcombine.high %v2011, %v2011
  %v2016 = vlaneseq
  %v2017 = vshrl.u32 %v2016, 7
  %v2018 = vsub.s32 0, %v2017
  %v2019 = vrot.slane %v1990, %v2018
  %v2020 = vlaneseq
  %v2021 = vshrl.u32 %v2020, 7
  %v2022 = vsub.s32 0, %v2021
  %v2023 = vrot.slane %v2004, %v2022
  %v2024 = vlaneseq
  %v2025 = vshrl.u32 %v2024, 7
  %v2026 = vsub.s32 0, %v2025
  %v2027 = vrot.slane %v2012, %v2026
  %v2028 = vlaneseq
  %v2029 = vshrl.u32 %v2028, 7
  %v2030 = vsub.s32 0, %v2029
  %v2031 = vrot.slane %v2014, %v2030
  %v2032 = vlaneseq
  %v2033 = vshrl.u32 %v2032, 7
  %v2034 = vsub.s32 0, %v2033
  %v2035 = vrot.slane %v1997, %v2034
  %v2036 = vlaneseq
  %v2037 = vshrl.u32 %v2036, 7
  %v2038 = vsub.s32 0, %v2037
  %v2039 = vrot.slane %v2011, %v2038
  %v2040 = vlaneseq
  %v2041 = vshrl.u32 %v2040, 7
  %v2042 = vsub.s32 0, %v2041
  %v2043 = vrot.slane %v2013, %v2042
  %v2044 = vlaneseq
  %v2045 = vshrl.u32 %v2044, 7
  %v2046 = vsub.s32 0, %v2045
  %v2047 = vrot.slane %v2015, %v2046
  %v2056 = vadd.f32 %v2019, %v330
  %v2057 = vadd.f32 %v2023, %v335
  %v2058 = vadd.f32 %v2027, %v340
  %v2059 = vadd.f32 %v2031, %v345
  %v2060 = vadd.f32 %v2035, %v350
  %v2061 = vadd.f32 %v2039, %v355
  %v2062 = vadd.f32 %v2043, %v360
  %v2063 = vadd.f32 %v2047, %v365
  %v2064 = vtanh.pop %v2056
  %v2065 = vtanh.pop %v2057
  %v2066 = vtanh.pop %v2058
  %v2067 = vtanh.pop %v2059
  %v2068 = vtanh.pop %v2060
  %v2069 = vtanh.pop %v2061
  %v2070 = vtanh.pop %v2062
  %v2071 = vtanh.pop %v2063
  %v2072 = vmul.f32 %v2064, %v555
  %v2073 = vmul.f32 %v2065, %v555
  %v2074 = vmul.f32 %v2066, %v555
  %v2075 = vmul.f32 %v2067, %v555
  %v2076 = vmul.f32 %v2068, %v555
  %v2077 = vmul.f32 %v2069, %v555
  %v2078 = vmul.f32 %v2070, %v555
  %v2079 = vmul.f32 %v2071, %v555
  %v2080 = vsel %vm132, %v2072, 0.0
  %2081 = vadd.xlane.f32.xlu0 %v2080
  %v2082 = vpop.xlane.xlu0 %2081
  %v2083 = vsel %vm132, %v2073, 0.0
  %2084 = vadd.xlane.f32.xlu0 %v2083
  %v2085 = vpop.xlane.xlu0 %2084
  %v2086 = vsel %vm132, %v2074, 0.0
  %2087 = vadd.xlane.f32.xlu0 %v2086
  %v2088 = vpop.xlane.xlu0 %2087
  %v2089 = vsel %vm132, %v2075, 0.0
  %2090 = vadd.xlane.f32.xlu0 %v2089
  %v2091 = vpop.xlane.xlu0 %2090
  %v2092 = vsel %vm132, %v2076, 0.0
  %2093 = vadd.xlane.f32.xlu0 %v2092
  %v2094 = vpop.xlane.xlu0 %2093
  %v2095 = vsel %vm132, %v2077, 0.0
  %2096 = vadd.xlane.f32.xlu0 %v2095
  %v2097 = vpop.xlane.xlu0 %2096
  %v2098 = vsel %vm132, %v2078, 0.0
  %2099 = vadd.xlane.f32.xlu0 %v2098
  %v2100 = vpop.xlane.xlu0 %2099
  %v2101 = vsel %vm132, %v2079, 0.0
  %2102 = vadd.xlane.f32.xlu0 %v2101
  %v2103 = vpop.xlane.xlu0 %2102
  %v2112 = vlaneseq
  %v2113 = vshrl.u32 %v2112, 7
  %v2114 = vsub.s32 %v370, %v2113
  %v2115 = vrot.slane %v2082, %v2114
  %v2116 = vlaneseq
  %v2117 = vshrl.u32 %v2116, 7
  %v2118 = vsub.s32 %v370, %v2117
  %v2119 = vrot.slane %v2085, %v2118
  %v2120 = vlaneseq
  %v2121 = vshrl.u32 %v2120, 7
  %v2122 = vsub.s32 %v370, %v2121
  %v2123 = vrot.slane %v2088, %v2122
  %v2124 = vlaneseq
  %v2125 = vshrl.u32 %v2124, 7
  %v2126 = vsub.s32 %v370, %v2125
  %v2127 = vrot.slane %v2091, %v2126
  %v2128 = vlaneseq
  %v2129 = vshrl.u32 %v2128, 7
  %v2130 = vsub.s32 %v370, %v2129
  %v2131 = vrot.slane %v2094, %v2130
  %v2132 = vlaneseq
  %v2133 = vshrl.u32 %v2132, 7
  %v2134 = vsub.s32 %v370, %v2133
  %v2135 = vrot.slane %v2097, %v2134
  %v2136 = vlaneseq
  %v2137 = vshrl.u32 %v2136, 7
  %v2138 = vsub.s32 %v370, %v2137
  %v2139 = vrot.slane %v2100, %v2138
  %v2140 = vlaneseq
  %v2141 = vshrl.u32 %v2140, 7
  %v2142 = vsub.s32 %v370, %v2141
  %v2143 = vrot.slane %v2103, %v2142
  %v2144 = vsel %vm630, %v2119, %v2115
  %v2145 = vsel %vm632, %v2123, %v2144
  %v2146 = vsel %vm634, %v2127, %v2145
  %v2147 = vsel %vm636, %v2131, %v2146
  %v2148 = vsel %vm638, %v2135, %v2147
  %v2149 = vsel %vm640, %v2139, %v2148
  %v2150 = vsel %vm642, %v2143, %v2149
  %v2152 = vsel %vm589, -1000000.0, %v2150
  %v2153 = vsel %vm646, %v2152, -inf
  %2154 = vmax.xlane.f32.xlu0 %v2153
  %v2155 = vpop.xlane.xlu0 %2154
  %v2156 = vsub.f32 %v2152, %v2155
  %v2157 = vmul.f32 %v2156, 1.442695
  %v2158 = vpow.pop %v2157
  %v2159 = vsel %vm646, %v2158, 0.0
  %2160 = vadd.xlane.f32.xlu0 %v2159
  %v2161 = vpop.xlane.xlu0 %2160
  %v2162 = vrcp.pop %v2161
  %v2163 = vmul.f32 %v2158, %v2162
  %s2164 = scalar_lea.vmem %s19, 16
  %2165 = vst.msk [vmem:[%s2164] sm:$0xff] %vm646, %v2163
  %v2166 = vlaneseq
  %v2167 = vshrl.u32 %v2166, 7
  %v2168 = vsub.s32 0, %v2167
  %v2169 = vrot.slane %v2163, %v2168
  %2171 = vbcast.lane.b32.xlu0 %v2169, 256
  %v2172 = vpop.permute.xlu0 %2171
  %v2173 = vlaneseq
  %v2174 = vshrl.u32 %v2173, 7
  %v2175 = vsub.s32 1, %v2174
  %v2176 = vrot.slane %v2163, %v2175
  %2178 = vbcast.lane.b32.xlu0 %v2176, 256
  %v2179 = vpop.permute.xlu0 %2178
  %v2180 = vlaneseq
  %v2181 = vshrl.u32 %v2180, 7
  %v2182 = vsub.s32 2, %v2181
  %v2183 = vrot.slane %v2163, %v2182
  %2185 = vbcast.lane.b32.xlu0 %v2183, 256
  %v2186 = vpop.permute.xlu0 %2185
  %v2187 = vlaneseq
  %v2188 = vshrl.u32 %v2187, 7
  %v2189 = vsub.s32 3, %v2188
  %v2190 = vrot.slane %v2163, %v2189
  %2192 = vbcast.lane.b32.xlu0 %v2190, 256
  %v2193 = vpop.permute.xlu0 %2192
  %v2194 = vlaneseq
  %v2195 = vshrl.u32 %v2194, 7
  %v2196 = vsub.s32 4, %v2195
  %v2197 = vrot.slane %v2163, %v2196
  %2199 = vbcast.lane.b32.xlu0 %v2197, 256
  %v2200 = vpop.permute.xlu0 %2199
  %v2201 = vlaneseq
  %v2202 = vshrl.u32 %v2201, 7
  %v2203 = vsub.s32 5, %v2202
  %v2204 = vrot.slane %v2163, %v2203
  %2206 = vbcast.lane.b32.xlu0 %v2204, 256
  %v2207 = vpop.permute.xlu0 %2206
  %v2208 = vlaneseq
  %v2209 = vshrl.u32 %v2208, 7
  %v2210 = vsub.s32 6, %v2209
  %v2211 = vrot.slane %v2163, %v2210
  %2213 = vbcast.lane.b32.xlu0 %v2211, 256
  %v2214 = vpop.permute.xlu0 %2213
  %v2215 = vlaneseq
  %v2216 = vshrl.u32 %v2215, 7
  %v2217 = vsub.s32 7, %v2216
  %v2218 = vrot.slane %v2163, %v2217
  %2220 = vbcast.lane.b32.xlu0 %v2218, 256
  %v2221 = vpop.permute.xlu0 %2220
  %v2222 = vmul.f32 %v2172, %v61
  %v2223 = vmul.f32 %v2179, %v62
  %v2224 = vmul.f32 %v2186, %v63
  %v2225 = vmul.f32 %v2193, %v64
  %v2226 = vmul.f32 %v2200, %v65
  %v2227 = vmul.f32 %v2207, %v66
  %v2228 = vmul.f32 %v2214, %v67
  %v2229 = vmul.f32 %v2221, %v68
  %v2230 = vsel %vm149, %v2222, 0.0
  %v2231 = vrot.slane %v2230, 4
  %v2232 = vadd.f32 %v2230, %v2231
  %v2233 = vrot.slane %v2232, 2
  %v2234 = vadd.f32 %v2232, %v2233
  %v2235 = vrot.slane %v2234, 1
  %v2236 = vadd.f32 %v2234, %v2235
  %v2237 = vsel %vm149, %v2223, 0.0
  %v2238 = vrot.slane %v2237, 4
  %v2239 = vadd.f32 %v2237, %v2238
  %v2240 = vrot.slane %v2239, 2
  %v2241 = vadd.f32 %v2239, %v2240
  %v2242 = vrot.slane %v2241, 1
  %v2243 = vadd.f32 %v2241, %v2242
  %v2244 = vsel %vm149, %v2224, 0.0
  %v2245 = vrot.slane %v2244, 4
  %v2246 = vadd.f32 %v2244, %v2245
  %v2247 = vrot.slane %v2246, 2
  %v2248 = vadd.f32 %v2246, %v2247
  %v2249 = vrot.slane %v2248, 1
  %v2250 = vadd.f32 %v2248, %v2249
  %v2251 = vsel %vm149, %v2225, 0.0
  %v2252 = vrot.slane %v2251, 4
  %v2253 = vadd.f32 %v2251, %v2252
  %v2254 = vrot.slane %v2253, 2
  %v2255 = vadd.f32 %v2253, %v2254
  %v2256 = vrot.slane %v2255, 1
  %v2257 = vadd.f32 %v2255, %v2256
  %v2258 = vsel %vm149, %v2226, 0.0
  %v2259 = vrot.slane %v2258, 4
  %v2260 = vadd.f32 %v2258, %v2259
  %v2261 = vrot.slane %v2260, 2
  %v2262 = vadd.f32 %v2260, %v2261
  %v2263 = vrot.slane %v2262, 1
  %v2264 = vadd.f32 %v2262, %v2263
  %v2265 = vsel %vm149, %v2227, 0.0
  %v2266 = vrot.slane %v2265, 4
  %v2267 = vadd.f32 %v2265, %v2266
  %v2268 = vrot.slane %v2267, 2
  %v2269 = vadd.f32 %v2267, %v2268
  %v2270 = vrot.slane %v2269, 1
  %v2271 = vadd.f32 %v2269, %v2270
  %v2272 = vsel %vm149, %v2228, 0.0
  %v2273 = vrot.slane %v2272, 4
  %v2274 = vadd.f32 %v2272, %v2273
  %v2275 = vrot.slane %v2274, 2
  %v2276 = vadd.f32 %v2274, %v2275
  %v2277 = vrot.slane %v2276, 1
  %v2278 = vadd.f32 %v2276, %v2277
  %v2279 = vsel %vm149, %v2229, 0.0
  %v2280 = vrot.slane %v2279, 4
  %v2281 = vadd.f32 %v2279, %v2280
  %v2282 = vrot.slane %v2281, 2
  %v2283 = vadd.f32 %v2281, %v2282
  %v2284 = vrot.slane %v2283, 1
  %v2285 = vadd.f32 %v2283, %v2284
  %v2294 = vsel %vm630, %v2243, %v2236
  %v2295 = vsel %vm632, %v2250, %v2294
  %v2296 = vsel %vm634, %v2257, %v2295
  %v2297 = vsel %vm636, %v2264, %v2296
  %v2298 = vsel %vm638, %v2271, %v2297
  %v2299 = vsel %vm640, %v2278, %v2298
  %v2300 = vsel %vm642, %v2285, %v2299
  %2301 = vrot.lane.b32.xlu0 %v2300, 32
  %v2302 = vpop.permute.xlu0 %2301
  %v2304 = vsel %vm132, %v1891, %v2302
  %v2306 = vsel %vm804, %v2304, 0
  %2308 = vmatprep.subr.mxu0 0.0
  %2309 = vmatpush1.msra.mxu0 0.0
  %2310 = vmatprep.subr.mxu0 0.0
  %2311 = vmatpush1.msra.mxu0 0.0
  %2312 = vmatprep.subr.mxu0 0.0
  %2313 = vmatpush1.msra.mxu0 0.0
  %2314 = vmatprep.subr.mxu0 0.0
  %2315 = vmatpush1.msra.mxu0 0.0
  %2316 = vmatprep.subr.mxu0 0.0
  %2317 = vmatpush1.msra.mxu0 %v86
  %2318 = vmatprep.subr.mxu0 0.0
  %2319 = vmatpush1.msra.mxu0 %v85
  %2320 = vmatprep.subr.mxu0 0.0
  %2321 = vmatpush1.msra.mxu0 %v84
  %2322 = vmatprep.subr.mxu0 0.0
  %2323 = vmatpush1.msra.mxu0 %v83
  %2324 = vmatprep.subr.mxu0 0.0
  %2325 = vmatpush1.msra.mxu0 %v82
  %2326 = vmatprep.subr.mxu0 0.0
  %2327 = vmatpush1.msra.mxu0 %v81
  %2328 = vmatprep.subr.mxu0 0.0
  %2329 = vmatpush1.msra.mxu0 %v80
  %2330 = vmatprep.subr.mxu0 0.0
  %2331 = vmatpush1.msra.mxu0 %v79
  %2332 = vmatprep.subr.mxu0 0.0
  %2333 = vmatpush1.msra.mxu0 %v78
  %2334 = vmatprep.subr.mxu0 0.0
  %2335 = vmatpush1.msra.mxu0 %v77
  %2336 = vmatprep.subr.mxu0 0.0
  %2337 = vmatpush1.msra.mxu0 %v76
  %2338 = vmatprep.subr.mxu0 0.0
  %2339 = vmatpush1.msra.mxu0 %v75
  %2340 = vmatprep.subr.mxu0 0.0
  %2341 = vmatpush2.msra.mxu0 0.0
  %2342 = vmatprep.subr.mxu0 0.0
  %2343 = vmatpush2.msra.mxu0 0.0
  %2344 = vmatprep.subr.mxu0 0.0
  %2345 = vmatpush2.msra.mxu0 0.0
  %2346 = vmatprep.subr.mxu0 0.0
  %2347 = vmatpush2.msra.mxu0 0.0
  %2348 = vmatprep.subr.mxu0 0.0
  %2349 = vmatpush2.msra.mxu0 0.0
  %2350 = vmatprep.subr.mxu0 0.0
  %2351 = vmatpush2.msra.mxu0 0.0
  %2352 = vmatprep.subr.mxu0 0.0
  %2353 = vmatpush2.msra.mxu0 0.0
  %2354 = vmatprep.subr.mxu0 0.0
  %2355 = vmatpush2.msra.mxu0 0.0
  %2356 = vmatprep.subr.mxu0 0.0
  %2357 = vmatpush2.msra.mxu0 0.0
  %2358 = vmatprep.subr.mxu0 0.0
  %2359 = vmatpush2.msra.mxu0 0.0
  %2360 = vmatprep.subr.mxu0 0.0
  %2361 = vmatpush2.msra.mxu0 0.0
  %2362 = vmatprep.subr.mxu0 0.0
  %2363 = vmatpush2.msra.mxu0 0.0
  %2364 = vmatprep.subr.mxu0 0.0
  %2365 = vmatpush2.msra.mxu0 0.0
  %2366 = vmatprep.subr.mxu0 0.0
  %2367 = vmatpush2.msra.mxu0 0.0
  %2368 = vmatprep.subr.mxu0 0.0
  %2369 = vmatpush2.msra.mxu0 0.0
  %2370 = vmatprep.subr.mxu0 0.0
  %2371 = vmatpush2.msra.mxu0 0.0
  %2372 = vmatprep.mubr.f32.mxu0 0.0
  %2373 = vmatmul.mubr.f32.gmra.mxu0 %v2306
  %v2374 = vpop.f32.mrf.mxu0
  %v2375 = vadd.f32 %v802, %v2374
  %v2376 = vpop.f32.mrf.mxu0
  %2377 = vdwg.mxu0
  %2378 = vmatprep.subr.mxu0 0.0
  %2379 = vmatpush1.msra.mxu0 0.0
  %2380 = vmatprep.subr.mxu0 0.0
  %2381 = vmatpush1.msra.mxu0 0.0
  %2382 = vmatprep.subr.mxu0 0.0
  %2383 = vmatpush1.msra.mxu0 0.0
  %2384 = vmatprep.subr.mxu0 0.0
  %2385 = vmatpush1.msra.mxu0 0.0
  %2386 = vmatprep.subr.mxu0 0.0
  %2387 = vmatpush1.msra.mxu0 0.0
  %2388 = vmatprep.subr.mxu0 0.0
  %2389 = vmatpush1.msra.mxu0 0.0
  %2390 = vmatprep.subr.mxu0 0.0
  %2391 = vmatpush1.msra.mxu0 0.0
  %2392 = vmatprep.subr.mxu0 0.0
  %2393 = vmatpush1.msra.mxu0 0.0
  %2394 = vmatprep.subr.mxu0 0.0
  %2395 = vmatpush1.msra.mxu0 0.0
  %2396 = vmatprep.subr.mxu0 0.0
  %2397 = vmatpush1.msra.mxu0 0.0
  %2398 = vmatprep.subr.mxu0 0.0
  %2399 = vmatpush1.msra.mxu0 0.0
  %2400 = vmatprep.subr.mxu0 0.0
  %2401 = vmatpush1.msra.mxu0 0.0
  %2402 = vmatprep.subr.mxu0 0.0
  %2403 = vmatpush1.msra.mxu0 %v90
  %2404 = vmatprep.subr.mxu0 0.0
  %2405 = vmatpush1.msra.mxu0 %v89
  %2406 = vmatprep.subr.mxu0 0.0
  %2407 = vmatpush1.msra.mxu0 %v88
  %2408 = vmatprep.subr.mxu0 0.0
  %2409 = vmatpush1.msra.mxu0 %v87
  %2410 = vmatprep.subr.mxu0 0.0
  %2411 = vmatpush2.msra.mxu0 0.0
  %2412 = vmatprep.subr.mxu0 0.0
  %2413 = vmatpush2.msra.mxu0 0.0
  %2414 = vmatprep.subr.mxu0 0.0
  %2415 = vmatpush2.msra.mxu0 0.0
  %2416 = vmatprep.subr.mxu0 0.0
  %2417 = vmatpush2.msra.mxu0 0.0
  %2418 = vmatprep.subr.mxu0 0.0
  %2419 = vmatpush2.msra.mxu0 0.0
  %2420 = vmatprep.subr.mxu0 0.0
  %2421 = vmatpush2.msra.mxu0 0.0
  %2422 = vmatprep.subr.mxu0 0.0
  %2423 = vmatpush2.msra.mxu0 0.0
  %2424 = vmatprep.subr.mxu0 0.0
  %2425 = vmatpush2.msra.mxu0 0.0
  %2426 = vmatprep.subr.mxu0 0.0
  %2427 = vmatpush2.msra.mxu0 0.0
  %2428 = vmatprep.subr.mxu0 0.0
  %2429 = vmatpush2.msra.mxu0 0.0
  %2430 = vmatprep.subr.mxu0 0.0
  %2431 = vmatpush2.msra.mxu0 0.0
  %2432 = vmatprep.subr.mxu0 0.0
  %2433 = vmatpush2.msra.mxu0 0.0
  %2434 = vmatprep.subr.mxu0 0.0
  %2435 = vmatpush2.msra.mxu0 0.0
  %2436 = vmatprep.subr.mxu0 0.0
  %2437 = vmatpush2.msra.mxu0 0.0
  %2438 = vmatprep.subr.mxu0 0.0
  %2439 = vmatpush2.msra.mxu0 0.0
  %2440 = vmatprep.subr.mxu0 0.0
  %2441 = vmatpush2.msra.mxu0 0.0
  %2442 = vmatprep.mubr.f32.mxu0 0.0
  %2443 = vmatmul.mubr.f32.gmra.mxu0 %v1894
  %v2444 = vpop.f32.mrf.mxu0
  %v2445 = vadd.f32 0.0, %v2444
  %v2446 = vpop.f32.mrf.mxu0
  %2447 = vdwg.mxu0
  %v2448 = vadd.f32 %v2375, %v2445
  %v2449 = vxor.u32 %v2448, 2147483648
  %v2450 = vmul.f32 %v2449, 1.442695
  %v2451 = vpow.pop %v2450
  %v2452 = vadd.f32 %v2451, 1.0
  %v2453 = vrcp.pop %v2452
  %v2454 = vmul.f32 1.0, %v2453
  %v2455 = vadd.f32 %v2445, %v961
  %2457 = vrot.lane.b32.xlu0 %v2455, 64
  %v2458 = vpop.permute.xlu0 %2457
  %v2460 = vmul.f32 %v2454, %v2458
  %2462 = vrot.lane.b32.xlu0 %v2460, 64
  %v2463 = vpop.permute.xlu0 %2462
  %v2465 = vadd.f32 %v2375, %v2463
  %v2466 = vtanh.pop %v2465
  %v2467 = vsub.f32 1.0, %v2454
  %2469 = vrot.lane.b32.xlu0 %v2466, 96
  %v2470 = vpop.permute.xlu0 %2469
  %v2472 = vmul.f32 %v2467, %v2470
  %v2473 = vmul.f32 %v2454, %v1732
  %v2474 = vadd.f32 %v2472, %v2473
  %2476 = vrot.lane.b32.xlu0 %v2474, 96
  %v2477 = vpop.permute.xlu0 %2476
  %2480 = vrot.lane.b32.xlu0 %v1891, 96
  %v2481 = vpop.permute.xlu0 %2480
  %v2483 = vsel %vm132, %v2477, %v2302
  %v2484 = vsel %vm804, %v2483, %v2481
  %2485 = vmatprep.subr.mxu0 0.0
  %2486 = vmatpush1.msra.mxu0 %v108
  %2487 = vmatprep.subr.mxu0 0.0
  %2488 = vmatpush1.msra.mxu0 %v107
  %2489 = vmatprep.subr.mxu0 0.0
  %2490 = vmatpush1.msra.mxu0 %v106
  %2491 = vmatprep.subr.mxu0 0.0
  %2492 = vmatpush1.msra.mxu0 %v105
  %2493 = vmatprep.subr.mxu0 0.0
  %2494 = vmatpush1.msra.mxu0 %v104
  %2495 = vmatprep.subr.mxu0 0.0
  %2496 = vmatpush1.msra.mxu0 %v103
  %2497 = vmatprep.subr.mxu0 0.0
  %2498 = vmatpush1.msra.mxu0 %v102
  %2499 = vmatprep.subr.mxu0 0.0
  %2500 = vmatpush1.msra.mxu0 %v101
  %2501 = vmatprep.subr.mxu0 0.0
  %2502 = vmatpush1.msra.mxu0 %v100
  %2503 = vmatprep.subr.mxu0 0.0
  %2504 = vmatpush1.msra.mxu0 %v99
  %2505 = vmatprep.subr.mxu0 0.0
  %2506 = vmatpush1.msra.mxu0 %v98
  %2507 = vmatprep.subr.mxu0 0.0
  %2508 = vmatpush1.msra.mxu0 %v97
  %2509 = vmatprep.subr.mxu0 0.0
  %2510 = vmatpush1.msra.mxu0 %v96
  %2511 = vmatprep.subr.mxu0 0.0
  %2512 = vmatpush1.msra.mxu0 %v95
  %2513 = vmatprep.subr.mxu0 0.0
  %2514 = vmatpush1.msra.mxu0 %v94
  %2515 = vmatprep.subr.mxu0 0.0
  %2516 = vmatpush1.msra.mxu0 %v93
  %2517 = vmatprep.subr.mxu0 0.0
  %2518 = vmatpush2.msra.mxu0 0.0
  %2519 = vmatprep.subr.mxu0 0.0
  %2520 = vmatpush2.msra.mxu0 0.0
  %2521 = vmatprep.subr.mxu0 0.0
  %2522 = vmatpush2.msra.mxu0 0.0
  %2523 = vmatprep.subr.mxu0 0.0
  %2524 = vmatpush2.msra.mxu0 0.0
  %2525 = vmatprep.subr.mxu0 0.0
  %2526 = vmatpush2.msra.mxu0 0.0
  %2527 = vmatprep.subr.mxu0 0.0
  %2528 = vmatpush2.msra.mxu0 0.0
  %2529 = vmatprep.subr.mxu0 0.0
  %2530 = vmatpush2.msra.mxu0 0.0
  %2531 = vmatprep.subr.mxu0 0.0
  %2532 = vmatpush2.msra.mxu0 0.0
  %2533 = vmatprep.subr.mxu0 0.0
  %2534 = vmatpush2.msra.mxu0 0.0
  %2535 = vmatprep.subr.mxu0 0.0
  %2536 = vmatpush2.msra.mxu0 0.0
  %2537 = vmatprep.subr.mxu0 0.0
  %2538 = vmatpush2.msra.mxu0 0.0
  %2539 = vmatprep.subr.mxu0 0.0
  %2540 = vmatpush2.msra.mxu0 0.0
  %2541 = vmatprep.subr.mxu0 0.0
  %2542 = vmatpush2.msra.mxu0 0.0
  %2543 = vmatprep.subr.mxu0 0.0
  %2544 = vmatpush2.msra.mxu0 0.0
  %2545 = vmatprep.subr.mxu0 0.0
  %2546 = vmatpush2.msra.mxu0 0.0
  %2547 = vmatprep.subr.mxu0 0.0
  %2548 = vmatpush2.msra.mxu0 0.0
  %2549 = vmatprep.mubr.f32.mxu0 0.0
  %2550 = vmatmul.mubr.f32.gmra.mxu0 %v2484
  %v2551 = vpop.f32.mrf.mxu0
  %v2552 = vadd.f32 %v1000, %v2551
  %v2553 = vpop.f32.mrf.mxu0
  %2554 = vdwg.mxu0
  %s2555 = scalar_lea.vmem %s18, 16
  %2556 = vst [vmem:[%s2555] sm:$0xff] %v2552
  %2557 = vmax.xlane.f32.xlu0 %v2552
  %v2558 = vpop.xlane.xlu0 %2557
  %vm2559 = vcmp.ge.f32.partialorder %v2552, %v2558
  %v2560 = vsel %vm2559, %v371, 128.0
  %2561 = vmin.xlane.f32.xlu0 %v2560
  %v2562 = vpop.xlane.xlu0 %2561
  %vm2563 = vcmp.eq.f32.partialorder %v371, %v2562
  %v2564 = vsel %vm2563, 1, 0
  %v2565 = vcvt.s32.f32 %v2564
  %2566 = vmatprep.subr.mxu0 0.0
  %2567 = vmatpush1.msra.mxu0 %v125
  %2568 = vmatprep.subr.mxu0 0.0
  %2569 = vmatpush1.msra.mxu0 %v124
  %2570 = vmatprep.subr.mxu0 0.0
  %2571 = vmatpush1.msra.mxu0 %v123
  %2572 = vmatprep.subr.mxu0 0.0
  %2573 = vmatpush1.msra.mxu0 %v122
  %2574 = vmatprep.subr.mxu0 0.0
  %2575 = vmatpush1.msra.mxu0 %v121
  %2576 = vmatprep.subr.mxu0 0.0
  %2577 = vmatpush1.msra.mxu0 %v120
  %2578 = vmatprep.subr.mxu0 0.0
  %2579 = vmatpush1.msra.mxu0 %v119
  %2580 = vmatprep.subr.mxu0 0.0
  %2581 = vmatpush1.msra.mxu0 %v118
  %2582 = vmatprep.subr.mxu0 0.0
  %2583 = vmatpush1.msra.mxu0 %v117
  %2584 = vmatprep.subr.mxu0 0.0
  %2585 = vmatpush1.msra.mxu0 %v116
  %2586 = vmatprep.subr.mxu0 0.0
  %2587 = vmatpush1.msra.mxu0 %v115
  %2588 = vmatprep.subr.mxu0 0.0
  %2589 = vmatpush1.msra.mxu0 %v114
  %2590 = vmatprep.subr.mxu0 0.0
  %2591 = vmatpush1.msra.mxu0 %v113
  %2592 = vmatprep.subr.mxu0 0.0
  %2593 = vmatpush1.msra.mxu0 %v112
  %2594 = vmatprep.subr.mxu0 0.0
  %2595 = vmatpush1.msra.mxu0 %v111
  %2596 = vmatprep.subr.mxu0 0.0
  %2597 = vmatpush1.msra.mxu0 %v110
  %2598 = vmatprep.subr.mxu0 0.0
  %2599 = vmatpush2.msra.mxu0 0.0
  %2600 = vmatprep.subr.mxu0 0.0
  %2601 = vmatpush2.msra.mxu0 0.0
  %2602 = vmatprep.subr.mxu0 0.0
  %2603 = vmatpush2.msra.mxu0 0.0
  %2604 = vmatprep.subr.mxu0 0.0
  %2605 = vmatpush2.msra.mxu0 0.0
  %2606 = vmatprep.subr.mxu0 0.0
  %2607 = vmatpush2.msra.mxu0 0.0
  %2608 = vmatprep.subr.mxu0 0.0
  %2609 = vmatpush2.msra.mxu0 0.0
  %2610 = vmatprep.subr.mxu0 0.0
  %2611 = vmatpush2.msra.mxu0 0.0
  %2612 = vmatprep.subr.mxu0 0.0
  %2613 = vmatpush2.msra.mxu0 0.0
  %2614 = vmatprep.subr.mxu0 0.0
  %2615 = vmatpush2.msra.mxu0 0.0
  %2616 = vmatprep.subr.mxu0 0.0
  %2617 = vmatpush2.msra.mxu0 0.0
  %2618 = vmatprep.subr.mxu0 0.0
  %2619 = vmatpush2.msra.mxu0 0.0
  %2620 = vmatprep.subr.mxu0 0.0
  %2621 = vmatpush2.msra.mxu0 0.0
  %2622 = vmatprep.subr.mxu0 0.0
  %2623 = vmatpush2.msra.mxu0 0.0
  %2624 = vmatprep.subr.mxu0 0.0
  %2625 = vmatpush2.msra.mxu0 0.0
  %2626 = vmatprep.subr.mxu0 0.0
  %2627 = vmatpush2.msra.mxu0 0.0
  %2628 = vmatprep.subr.mxu0 0.0
  %2629 = vmatpush2.msra.mxu0 0.0
  %2630 = vmatprep.mubr.f32.mxu0 0.0
  %2631 = vmatmul.mubr.f32.gmra.mxu0 %v2565
  %v2632 = vpop.f32.mrf.mxu0
  %v2633 = vadd.f32 0.0, %v2632
  %v2634 = vpop.f32.mrf.mxu0
  %2635 = vdwg.mxu0
  %v2636 = vsel %vm132, %v2477, 0
  %2638 = vmatprep.subr.mxu0 0.0
  %2639 = vmatpush1.msra.mxu0 0.0
  %2640 = vmatprep.subr.mxu0 0.0
  %2641 = vmatpush1.msra.mxu0 0.0
  %2642 = vmatprep.subr.mxu0 0.0
  %2643 = vmatpush1.msra.mxu0 0.0
  %2644 = vmatprep.subr.mxu0 0.0
  %2645 = vmatpush1.msra.mxu0 0.0
  %2646 = vmatprep.subr.mxu0 0.0
  %2647 = vmatpush1.msra.mxu0 0.0
  %2648 = vmatprep.subr.mxu0 0.0
  %2649 = vmatpush1.msra.mxu0 0.0
  %2650 = vmatprep.subr.mxu0 0.0
  %2651 = vmatpush1.msra.mxu0 0.0
  %2652 = vmatprep.subr.mxu0 0.0
  %2653 = vmatpush1.msra.mxu0 0.0
  %2654 = vmatprep.subr.mxu0 0.0
  %2655 = vmatpush1.msra.mxu0 0.0
  %2656 = vmatprep.subr.mxu0 0.0
  %2657 = vmatpush1.msra.mxu0 0.0
  %2658 = vmatprep.subr.mxu0 0.0
  %2659 = vmatpush1.msra.mxu0 0.0
  %2660 = vmatprep.subr.mxu0 0.0
  %2661 = vmatpush1.msra.mxu0 0.0
  %2662 = vmatprep.subr.mxu0 0.0
  %2663 = vmatpush1.msra.mxu0 %v74
  %2664 = vmatprep.subr.mxu0 0.0
  %2665 = vmatpush1.msra.mxu0 %v73
  %2666 = vmatprep.subr.mxu0 0.0
  %2667 = vmatpush1.msra.mxu0 %v72
  %2668 = vmatprep.subr.mxu0 0.0
  %2669 = vmatpush1.msra.mxu0 %v71
  %2670 = vmatprep.subr.mxu0 0.0
  %2671 = vmatpush2.msra.mxu0 0.0
  %2672 = vmatprep.subr.mxu0 0.0
  %2673 = vmatpush2.msra.mxu0 0.0
  %2674 = vmatprep.subr.mxu0 0.0
  %2675 = vmatpush2.msra.mxu0 0.0
  %2676 = vmatprep.subr.mxu0 0.0
  %2677 = vmatpush2.msra.mxu0 0.0
  %2678 = vmatprep.subr.mxu0 0.0
  %2679 = vmatpush2.msra.mxu0 0.0
  %2680 = vmatprep.subr.mxu0 0.0
  %2681 = vmatpush2.msra.mxu0 0.0
  %2682 = vmatprep.subr.mxu0 0.0
  %2683 = vmatpush2.msra.mxu0 0.0
  %2684 = vmatprep.subr.mxu0 0.0
  %2685 = vmatpush2.msra.mxu0 0.0
  %2686 = vmatprep.subr.mxu0 0.0
  %2687 = vmatpush2.msra.mxu0 0.0
  %2688 = vmatprep.subr.mxu0 0.0
  %2689 = vmatpush2.msra.mxu0 0.0
  %2690 = vmatprep.subr.mxu0 0.0
  %2691 = vmatpush2.msra.mxu0 0.0
  %2692 = vmatprep.subr.mxu0 0.0
  %2693 = vmatpush2.msra.mxu0 0.0
  %2694 = vmatprep.subr.mxu0 0.0
  %2695 = vmatpush2.msra.mxu0 0.0
  %2696 = vmatprep.subr.mxu0 0.0
  %2697 = vmatpush2.msra.mxu0 0.0
  %2698 = vmatprep.subr.mxu0 0.0
  %2699 = vmatpush2.msra.mxu0 0.0
  %2700 = vmatprep.subr.mxu0 0.0
  %2701 = vmatpush2.msra.mxu0 0.0
  %2702 = vmatprep.mubr.f32.mxu0 0.0
  %2703 = vmatmul.mubr.f32.gmra.mxu0 %v2636
  %v2704 = vpop.f32.mrf.mxu0
  %v2705 = vadd.f32 0.0, %v2704
  %v2706 = vpop.f32.mrf.mxu0
  %2707 = vdwg.mxu0
  %v2709 = vcombine.high %v2705, %v2705
  %v2711 = vunpack.c.l.s4 1966171168
  %v2712 = vunpack.c.0.s8 %v2711
  %v2713 = vlaneseq
  %v2714 = vshrl.u32 %v2713, 7
  %v2715 = vsub.s32 %v2712, %v2714
  %v2716 = vrot.slane %v2705, %v2715
  %v2718 = vunpack.c.l.s4 1966171168
  %v2719 = vunpack.c.0.s8 %v2718
  %v2720 = vlaneseq
  %v2721 = vshrl.u32 %v2720, 7
  %v2722 = vsub.s32 %v2719, %v2721
  %v2723 = vrot.slane %v2709, %v2722
  %v2724 = vcombine.high %v2716, %v2716
  %v2725 = vcombine.high %v2723, %v2723
  %v2727 = vunpack.c.l.s4 1966171168
  %v2728 = vunpack.c.0.s8 %v2727
  %v2729 = vlaneseq
  %v2730 = vshrl.u32 %v2729, 7
  %v2731 = vsub.s32 %v2728, %v2730
  %v2732 = vrot.slane %v2716, %v2731
  %v2734 = vunpack.c.l.s4 1966171168
  %v2735 = vunpack.c.0.s8 %v2734
  %v2736 = vlaneseq
  %v2737 = vshrl.u32 %v2736, 7
  %v2738 = vsub.s32 %v2735, %v2737
  %v2739 = vrot.slane %v2723, %v2738
  %v2741 = vunpack.c.l.s4 1966171168
  %v2742 = vunpack.c.0.s8 %v2741
  %v2743 = vlaneseq
  %v2744 = vshrl.u32 %v2743, 7
  %v2745 = vsub.s32 %v2742, %v2744
  %v2746 = vrot.slane %v2724, %v2745
  %v2748 = vunpack.c.l.s4 1966171168
  %v2749 = vunpack.c.0.s8 %v2748
  %v2750 = vlaneseq
  %v2751 = vshrl.u32 %v2750, 7
  %v2752 = vsub.s32 %v2749, %v2751
  %v2753 = vrot.slane %v2725, %v2752
  %v2754 = vcombine.high %v2732, %v2732
  %v2755 = vcombine.high %v2739, %v2739
  %v2756 = vcombine.high %v2746, %v2746
  %v2757 = vcombine.high %v2753, %v2753
  %v2758 = vlaneseq
  %v2759 = vshrl.u32 %v2758, 7
  %v2760 = vsub.s32 0, %v2759
  %v2761 = vrot.slane %v2732, %v2760
  %v2762 = vlaneseq
  %v2763 = vshrl.u32 %v2762, 7
  %v2764 = vsub.s32 0, %v2763
  %v2765 = vrot.slane %v2746, %v2764
  %v2766 = vlaneseq
  %v2767 = vshrl.u32 %v2766, 7
  %v2768 = vsub.s32 0, %v2767
  %v2769 = vrot.slane %v2754, %v2768
  %v2770 = vlaneseq
  %v2771 = vshrl.u32 %v2770, 7
  %v2772 = vsub.s32 0, %v2771
  %v2773 = vrot.slane %v2756, %v2772
  %v2774 = vlaneseq
  %v2775 = vshrl.u32 %v2774, 7
  %v2776 = vsub.s32 0, %v2775
  %v2777 = vrot.slane %v2739, %v2776
  %v2778 = vlaneseq
  %v2779 = vshrl.u32 %v2778, 7
  %v2780 = vsub.s32 0, %v2779
  %v2781 = vrot.slane %v2753, %v2780
  %v2782 = vlaneseq
  %v2783 = vshrl.u32 %v2782, 7
  %v2784 = vsub.s32 0, %v2783
  %v2785 = vrot.slane %v2755, %v2784
  %v2786 = vlaneseq
  %v2787 = vshrl.u32 %v2786, 7
  %v2788 = vsub.s32 0, %v2787
  %v2789 = vrot.slane %v2757, %v2788
  %v2798 = vadd.f32 %v2761, %v330
  %v2799 = vadd.f32 %v2765, %v335
  %v2800 = vadd.f32 %v2769, %v340
  %v2801 = vadd.f32 %v2773, %v345
  %v2802 = vadd.f32 %v2777, %v350
  %v2803 = vadd.f32 %v2781, %v355
  %v2804 = vadd.f32 %v2785, %v360
  %v2805 = vadd.f32 %v2789, %v365
  %v2806 = vtanh.pop %v2798
  %v2807 = vtanh.pop %v2799
  %v2808 = vtanh.pop %v2800
  %v2809 = vtanh.pop %v2801
  %v2810 = vtanh.pop %v2802
  %v2811 = vtanh.pop %v2803
  %v2812 = vtanh.pop %v2804
  %v2813 = vtanh.pop %v2805
  %v2814 = vmul.f32 %v2806, %v555
  %v2815 = vmul.f32 %v2807, %v555
  %v2816 = vmul.f32 %v2808, %v555
  %v2817 = vmul.f32 %v2809, %v555
  %v2818 = vmul.f32 %v2810, %v555
  %v2819 = vmul.f32 %v2811, %v555
  %v2820 = vmul.f32 %v2812, %v555
  %v2821 = vmul.f32 %v2813, %v555
  %v2822 = vsel %vm132, %v2814, 0.0
  %2823 = vadd.xlane.f32.xlu0 %v2822
  %v2824 = vpop.xlane.xlu0 %2823
  %v2825 = vsel %vm132, %v2815, 0.0
  %2826 = vadd.xlane.f32.xlu0 %v2825
  %v2827 = vpop.xlane.xlu0 %2826
  %v2828 = vsel %vm132, %v2816, 0.0
  %2829 = vadd.xlane.f32.xlu0 %v2828
  %v2830 = vpop.xlane.xlu0 %2829
  %v2831 = vsel %vm132, %v2817, 0.0
  %2832 = vadd.xlane.f32.xlu0 %v2831
  %v2833 = vpop.xlane.xlu0 %2832
  %v2834 = vsel %vm132, %v2818, 0.0
  %2835 = vadd.xlane.f32.xlu0 %v2834
  %v2836 = vpop.xlane.xlu0 %2835
  %v2837 = vsel %vm132, %v2819, 0.0
  %2838 = vadd.xlane.f32.xlu0 %v2837
  %v2839 = vpop.xlane.xlu0 %2838
  %v2840 = vsel %vm132, %v2820, 0.0
  %2841 = vadd.xlane.f32.xlu0 %v2840
  %v2842 = vpop.xlane.xlu0 %2841
  %v2843 = vsel %vm132, %v2821, 0.0
  %2844 = vadd.xlane.f32.xlu0 %v2843
  %v2845 = vpop.xlane.xlu0 %2844
  %v2854 = vlaneseq
  %v2855 = vshrl.u32 %v2854, 7
  %v2856 = vsub.s32 %v370, %v2855
  %v2857 = vrot.slane %v2824, %v2856
  %v2858 = vlaneseq
  %v2859 = vshrl.u32 %v2858, 7
  %v2860 = vsub.s32 %v370, %v2859
  %v2861 = vrot.slane %v2827, %v2860
  %v2862 = vlaneseq
  %v2863 = vshrl.u32 %v2862, 7
  %v2864 = vsub.s32 %v370, %v2863
  %v2865 = vrot.slane %v2830, %v2864
  %v2866 = vlaneseq
  %v2867 = vshrl.u32 %v2866, 7
  %v2868 = vsub.s32 %v370, %v2867
  %v2869 = vrot.slane %v2833, %v2868
  %v2870 = vlaneseq
  %v2871 = vshrl.u32 %v2870, 7
  %v2872 = vsub.s32 %v370, %v2871
  %v2873 = vrot.slane %v2836, %v2872
  %v2874 = vlaneseq
  %v2875 = vshrl.u32 %v2874, 7
  %v2876 = vsub.s32 %v370, %v2875
  %v2877 = vrot.slane %v2839, %v2876
  %v2878 = vlaneseq
  %v2879 = vshrl.u32 %v2878, 7
  %v2880 = vsub.s32 %v370, %v2879
  %v2881 = vrot.slane %v2842, %v2880
  %v2882 = vlaneseq
  %v2883 = vshrl.u32 %v2882, 7
  %v2884 = vsub.s32 %v370, %v2883
  %v2885 = vrot.slane %v2845, %v2884
  %v2886 = vsel %vm630, %v2861, %v2857
  %v2887 = vsel %vm632, %v2865, %v2886
  %v2888 = vsel %vm634, %v2869, %v2887
  %v2889 = vsel %vm636, %v2873, %v2888
  %v2890 = vsel %vm638, %v2877, %v2889
  %v2891 = vsel %vm640, %v2881, %v2890
  %v2892 = vsel %vm642, %v2885, %v2891
  %v2894 = vsel %vm589, -1000000.0, %v2892
  %v2895 = vsel %vm646, %v2894, -inf
  %2896 = vmax.xlane.f32.xlu0 %v2895
  %v2897 = vpop.xlane.xlu0 %2896
  %v2898 = vsub.f32 %v2894, %v2897
  %v2899 = vmul.f32 %v2898, 1.442695
  %v2900 = vpow.pop %v2899
  %v2901 = vsel %vm646, %v2900, 0.0
  %2902 = vadd.xlane.f32.xlu0 %v2901
  %v2903 = vpop.xlane.xlu0 %2902
  %v2904 = vrcp.pop %v2903
  %v2905 = vmul.f32 %v2900, %v2904
  %s2906 = scalar_lea.vmem %s19, 24
  %2907 = vst.msk [vmem:[%s2906] sm:$0xff] %vm646, %v2905
  %v2908 = vlaneseq
  %v2909 = vshrl.u32 %v2908, 7
  %v2910 = vsub.s32 0, %v2909
  %v2911 = vrot.slane %v2905, %v2910
  %2913 = vbcast.lane.b32.xlu0 %v2911, 256
  %v2914 = vpop.permute.xlu0 %2913
  %v2915 = vlaneseq
  %v2916 = vshrl.u32 %v2915, 7
  %v2917 = vsub.s32 1, %v2916
  %v2918 = vrot.slane %v2905, %v2917
  %2920 = vbcast.lane.b32.xlu0 %v2918, 256
  %v2921 = vpop.permute.xlu0 %2920
  %v2922 = vlaneseq
  %v2923 = vshrl.u32 %v2922, 7
  %v2924 = vsub.s32 2, %v2923
  %v2925 = vrot.slane %v2905, %v2924
  %2927 = vbcast.lane.b32.xlu0 %v2925, 256
  %v2928 = vpop.permute.xlu0 %2927
  %v2929 = vlaneseq
  %v2930 = vshrl.u32 %v2929, 7
  %v2931 = vsub.s32 3, %v2930
  %v2932 = vrot.slane %v2905, %v2931
  %2934 = vbcast.lane.b32.xlu0 %v2932, 256
  %v2935 = vpop.permute.xlu0 %2934
  %v2936 = vlaneseq
  %v2937 = vshrl.u32 %v2936, 7
  %v2938 = vsub.s32 4, %v2937
  %v2939 = vrot.slane %v2905, %v2938
  %2941 = vbcast.lane.b32.xlu0 %v2939, 256
  %v2942 = vpop.permute.xlu0 %2941
  %v2943 = vlaneseq
  %v2944 = vshrl.u32 %v2943, 7
  %v2945 = vsub.s32 5, %v2944
  %v2946 = vrot.slane %v2905, %v2945
  %2948 = vbcast.lane.b32.xlu0 %v2946, 256
  %v2949 = vpop.permute.xlu0 %2948
  %v2950 = vlaneseq
  %v2951 = vshrl.u32 %v2950, 7
  %v2952 = vsub.s32 6, %v2951
  %v2953 = vrot.slane %v2905, %v2952
  %2955 = vbcast.lane.b32.xlu0 %v2953, 256
  %v2956 = vpop.permute.xlu0 %2955
  %v2957 = vlaneseq
  %v2958 = vshrl.u32 %v2957, 7
  %v2959 = vsub.s32 7, %v2958
  %v2960 = vrot.slane %v2905, %v2959
  %2962 = vbcast.lane.b32.xlu0 %v2960, 256
  %v2963 = vpop.permute.xlu0 %2962
  %v2964 = vmul.f32 %v2914, %v61
  %v2965 = vmul.f32 %v2921, %v62
  %v2966 = vmul.f32 %v2928, %v63
  %v2967 = vmul.f32 %v2935, %v64
  %v2968 = vmul.f32 %v2942, %v65
  %v2969 = vmul.f32 %v2949, %v66
  %v2970 = vmul.f32 %v2956, %v67
  %v2971 = vmul.f32 %v2963, %v68
  %v2972 = vsel %vm149, %v2964, 0.0
  %v2973 = vrot.slane %v2972, 4
  %v2974 = vadd.f32 %v2972, %v2973
  %v2975 = vrot.slane %v2974, 2
  %v2976 = vadd.f32 %v2974, %v2975
  %v2977 = vrot.slane %v2976, 1
  %v2978 = vadd.f32 %v2976, %v2977
  %v2979 = vsel %vm149, %v2965, 0.0
  %v2980 = vrot.slane %v2979, 4
  %v2981 = vadd.f32 %v2979, %v2980
  %v2982 = vrot.slane %v2981, 2
  %v2983 = vadd.f32 %v2981, %v2982
  %v2984 = vrot.slane %v2983, 1
  %v2985 = vadd.f32 %v2983, %v2984
  %v2986 = vsel %vm149, %v2966, 0.0
  %v2987 = vrot.slane %v2986, 4
  %v2988 = vadd.f32 %v2986, %v2987
  %v2989 = vrot.slane %v2988, 2
  %v2990 = vadd.f32 %v2988, %v2989
  %v2991 = vrot.slane %v2990, 1
  %v2992 = vadd.f32 %v2990, %v2991
  %v2993 = vsel %vm149, %v2967, 0.0
  %v2994 = vrot.slane %v2993, 4
  %v2995 = vadd.f32 %v2993, %v2994
  %v2996 = vrot.slane %v2995, 2
  %v2997 = vadd.f32 %v2995, %v2996
  %v2998 = vrot.slane %v2997, 1
  %v2999 = vadd.f32 %v2997, %v2998
  %v3000 = vsel %vm149, %v2968, 0.0
  %v3001 = vrot.slane %v3000, 4
  %v3002 = vadd.f32 %v3000, %v3001
  %v3003 = vrot.slane %v3002, 2
  %v3004 = vadd.f32 %v3002, %v3003
  %v3005 = vrot.slane %v3004, 1
  %v3006 = vadd.f32 %v3004, %v3005
  %v3007 = vsel %vm149, %v2969, 0.0
  %v3008 = vrot.slane %v3007, 4
  %v3009 = vadd.f32 %v3007, %v3008
  %v3010 = vrot.slane %v3009, 2
  %v3011 = vadd.f32 %v3009, %v3010
  %v3012 = vrot.slane %v3011, 1
  %v3013 = vadd.f32 %v3011, %v3012
  %v3014 = vsel %vm149, %v2970, 0.0
  %v3015 = vrot.slane %v3014, 4
  %v3016 = vadd.f32 %v3014, %v3015
  %v3017 = vrot.slane %v3016, 2
  %v3018 = vadd.f32 %v3016, %v3017
  %v3019 = vrot.slane %v3018, 1
  %v3020 = vadd.f32 %v3018, %v3019
  %v3021 = vsel %vm149, %v2971, 0.0
  %v3022 = vrot.slane %v3021, 4
  %v3023 = vadd.f32 %v3021, %v3022
  %v3024 = vrot.slane %v3023, 2
  %v3025 = vadd.f32 %v3023, %v3024
  %v3026 = vrot.slane %v3025, 1
  %v3027 = vadd.f32 %v3025, %v3026
  %v3036 = vsel %vm630, %v2985, %v2978
  %v3037 = vsel %vm632, %v2992, %v3036
  %v3038 = vsel %vm634, %v2999, %v3037
  %v3039 = vsel %vm636, %v3006, %v3038
  %v3040 = vsel %vm638, %v3013, %v3039
  %v3041 = vsel %vm640, %v3020, %v3040
  %v3042 = vsel %vm642, %v3027, %v3041
  %3043 = vrot.lane.b32.xlu0 %v3042, 32
  %v3044 = vpop.permute.xlu0 %3043
  %v3046 = vsel %vm132, %v2633, %v3044
  %v3048 = vsel %vm804, %v3046, 0
  %3050 = vmatprep.subr.mxu0 0.0
  %3051 = vmatpush1.msra.mxu0 0.0
  %3052 = vmatprep.subr.mxu0 0.0
  %3053 = vmatpush1.msra.mxu0 0.0
  %3054 = vmatprep.subr.mxu0 0.0
  %3055 = vmatpush1.msra.mxu0 0.0
  %3056 = vmatprep.subr.mxu0 0.0
  %3057 = vmatpush1.msra.mxu0 0.0
  %3058 = vmatprep.subr.mxu0 0.0
  %3059 = vmatpush1.msra.mxu0 %v86
  %3060 = vmatprep.subr.mxu0 0.0
  %3061 = vmatpush1.msra.mxu0 %v85
  %3062 = vmatprep.subr.mxu0 0.0
  %3063 = vmatpush1.msra.mxu0 %v84
  %3064 = vmatprep.subr.mxu0 0.0
  %3065 = vmatpush1.msra.mxu0 %v83
  %3066 = vmatprep.subr.mxu0 0.0
  %3067 = vmatpush1.msra.mxu0 %v82
  %3068 = vmatprep.subr.mxu0 0.0
  %3069 = vmatpush1.msra.mxu0 %v81
  %3070 = vmatprep.subr.mxu0 0.0
  %3071 = vmatpush1.msra.mxu0 %v80
  %3072 = vmatprep.subr.mxu0 0.0
  %3073 = vmatpush1.msra.mxu0 %v79
  %3074 = vmatprep.subr.mxu0 0.0
  %3075 = vmatpush1.msra.mxu0 %v78
  %3076 = vmatprep.subr.mxu0 0.0
  %3077 = vmatpush1.msra.mxu0 %v77
  %3078 = vmatprep.subr.mxu0 0.0
  %3079 = vmatpush1.msra.mxu0 %v76
  %3080 = vmatprep.subr.mxu0 0.0
  %3081 = vmatpush1.msra.mxu0 %v75
  %3082 = vmatprep.subr.mxu0 0.0
  %3083 = vmatpush2.msra.mxu0 0.0
  %3084 = vmatprep.subr.mxu0 0.0
  %3085 = vmatpush2.msra.mxu0 0.0
  %3086 = vmatprep.subr.mxu0 0.0
  %3087 = vmatpush2.msra.mxu0 0.0
  %3088 = vmatprep.subr.mxu0 0.0
  %3089 = vmatpush2.msra.mxu0 0.0
  %3090 = vmatprep.subr.mxu0 0.0
  %3091 = vmatpush2.msra.mxu0 0.0
  %3092 = vmatprep.subr.mxu0 0.0
  %3093 = vmatpush2.msra.mxu0 0.0
  %3094 = vmatprep.subr.mxu0 0.0
  %3095 = vmatpush2.msra.mxu0 0.0
  %3096 = vmatprep.subr.mxu0 0.0
  %3097 = vmatpush2.msra.mxu0 0.0
  %3098 = vmatprep.subr.mxu0 0.0
  %3099 = vmatpush2.msra.mxu0 0.0
  %3100 = vmatprep.subr.mxu0 0.0
  %3101 = vmatpush2.msra.mxu0 0.0
  %3102 = vmatprep.subr.mxu0 0.0
  %3103 = vmatpush2.msra.mxu0 0.0
  %3104 = vmatprep.subr.mxu0 0.0
  %3105 = vmatpush2.msra.mxu0 0.0
  %3106 = vmatprep.subr.mxu0 0.0
  %3107 = vmatpush2.msra.mxu0 0.0
  %3108 = vmatprep.subr.mxu0 0.0
  %3109 = vmatpush2.msra.mxu0 0.0
  %3110 = vmatprep.subr.mxu0 0.0
  %3111 = vmatpush2.msra.mxu0 0.0
  %3112 = vmatprep.subr.mxu0 0.0
  %3113 = vmatpush2.msra.mxu0 0.0
  %3114 = vmatprep.mubr.f32.mxu0 0.0
  %3115 = vmatmul.mubr.f32.gmra.mxu0 %v3048
  %v3116 = vpop.f32.mrf.mxu0
  %v3117 = vadd.f32 %v802, %v3116
  %v3118 = vpop.f32.mrf.mxu0
  %3119 = vdwg.mxu0
  %3120 = vmatprep.subr.mxu0 0.0
  %3121 = vmatpush1.msra.mxu0 0.0
  %3122 = vmatprep.subr.mxu0 0.0
  %3123 = vmatpush1.msra.mxu0 0.0
  %3124 = vmatprep.subr.mxu0 0.0
  %3125 = vmatpush1.msra.mxu0 0.0
  %3126 = vmatprep.subr.mxu0 0.0
  %3127 = vmatpush1.msra.mxu0 0.0
  %3128 = vmatprep.subr.mxu0 0.0
  %3129 = vmatpush1.msra.mxu0 0.0
  %3130 = vmatprep.subr.mxu0 0.0
  %3131 = vmatpush1.msra.mxu0 0.0
  %3132 = vmatprep.subr.mxu0 0.0
  %3133 = vmatpush1.msra.mxu0 0.0
  %3134 = vmatprep.subr.mxu0 0.0
  %3135 = vmatpush1.msra.mxu0 0.0
  %3136 = vmatprep.subr.mxu0 0.0
  %3137 = vmatpush1.msra.mxu0 0.0
  %3138 = vmatprep.subr.mxu0 0.0
  %3139 = vmatpush1.msra.mxu0 0.0
  %3140 = vmatprep.subr.mxu0 0.0
  %3141 = vmatpush1.msra.mxu0 0.0
  %3142 = vmatprep.subr.mxu0 0.0
  %3143 = vmatpush1.msra.mxu0 0.0
  %3144 = vmatprep.subr.mxu0 0.0
  %3145 = vmatpush1.msra.mxu0 %v90
  %3146 = vmatprep.subr.mxu0 0.0
  %3147 = vmatpush1.msra.mxu0 %v89
  %3148 = vmatprep.subr.mxu0 0.0
  %3149 = vmatpush1.msra.mxu0 %v88
  %3150 = vmatprep.subr.mxu0 0.0
  %3151 = vmatpush1.msra.mxu0 %v87
  %3152 = vmatprep.subr.mxu0 0.0
  %3153 = vmatpush2.msra.mxu0 0.0
  %3154 = vmatprep.subr.mxu0 0.0
  %3155 = vmatpush2.msra.mxu0 0.0
  %3156 = vmatprep.subr.mxu0 0.0
  %3157 = vmatpush2.msra.mxu0 0.0
  %3158 = vmatprep.subr.mxu0 0.0
  %3159 = vmatpush2.msra.mxu0 0.0
  %3160 = vmatprep.subr.mxu0 0.0
  %3161 = vmatpush2.msra.mxu0 0.0
  %3162 = vmatprep.subr.mxu0 0.0
  %3163 = vmatpush2.msra.mxu0 0.0
  %3164 = vmatprep.subr.mxu0 0.0
  %3165 = vmatpush2.msra.mxu0 0.0
  %3166 = vmatprep.subr.mxu0 0.0
  %3167 = vmatpush2.msra.mxu0 0.0
  %3168 = vmatprep.subr.mxu0 0.0
  %3169 = vmatpush2.msra.mxu0 0.0
  %3170 = vmatprep.subr.mxu0 0.0
  %3171 = vmatpush2.msra.mxu0 0.0
  %3172 = vmatprep.subr.mxu0 0.0
  %3173 = vmatpush2.msra.mxu0 0.0
  %3174 = vmatprep.subr.mxu0 0.0
  %3175 = vmatpush2.msra.mxu0 0.0
  %3176 = vmatprep.subr.mxu0 0.0
  %3177 = vmatpush2.msra.mxu0 0.0
  %3178 = vmatprep.subr.mxu0 0.0
  %3179 = vmatpush2.msra.mxu0 0.0
  %3180 = vmatprep.subr.mxu0 0.0
  %3181 = vmatpush2.msra.mxu0 0.0
  %3182 = vmatprep.subr.mxu0 0.0
  %3183 = vmatpush2.msra.mxu0 0.0
  %3184 = vmatprep.mubr.f32.mxu0 0.0
  %3185 = vmatmul.mubr.f32.gmra.mxu0 %v2636
  %v3186 = vpop.f32.mrf.mxu0
  %v3187 = vadd.f32 0.0, %v3186
  %v3188 = vpop.f32.mrf.mxu0
  %3189 = vdwg.mxu0
  %v3190 = vadd.f32 %v3117, %v3187
  %v3191 = vxor.u32 %v3190, 2147483648
  %v3192 = vmul.f32 %v3191, 1.442695
  %v3193 = vpow.pop %v3192
  %v3194 = vadd.f32 %v3193, 1.0
  %v3195 = vrcp.pop %v3194
  %v3196 = vmul.f32 1.0, %v3195
  %v3197 = vadd.f32 %v3187, %v961
  %3199 = vrot.lane.b32.xlu0 %v3197, 64
  %v3200 = vpop.permute.xlu0 %3199
  %v3202 = vmul.f32 %v3196, %v3200
  %3204 = vrot.lane.b32.xlu0 %v3202, 64
  %v3205 = vpop.permute.xlu0 %3204
  %v3207 = vadd.f32 %v3117, %v3205
  %v3208 = vtanh.pop %v3207
  %v3209 = vsub.f32 1.0, %v3196
  %3211 = vrot.lane.b32.xlu0 %v3208, 96
  %v3212 = vpop.permute.xlu0 %3211
  %v3214 = vmul.f32 %v3209, %v3212
  %v3215 = vmul.f32 %v3196, %v2474
  %v3216 = vadd.f32 %v3214, %v3215
  %3218 = vrot.lane.b32.xlu0 %v3216, 96
  %v3219 = vpop.permute.xlu0 %3218
  %3222 = vrot.lane.b32.xlu0 %v2633, 96
  %v3223 = vpop.permute.xlu0 %3222
  %v3225 = vsel %vm132, %v3219, %v3044
  %v3226 = vsel %vm804, %v3225, %v3223
  %3227 = vmatprep.subr.mxu0 0.0
  %3228 = vmatpush1.msra.mxu0 %v108
  %3229 = vmatprep.subr.mxu0 0.0
  %3230 = vmatpush1.msra.mxu0 %v107
  %3231 = vmatprep.subr.mxu0 0.0
  %3232 = vmatpush1.msra.mxu0 %v106
  %3233 = vmatprep.subr.mxu0 0.0
  %3234 = vmatpush1.msra.mxu0 %v105
  %3235 = vmatprep.subr.mxu0 0.0
  %3236 = vmatpush1.msra.mxu0 %v104
  %3237 = vmatprep.subr.mxu0 0.0
  %3238 = vmatpush1.msra.mxu0 %v103
  %3239 = vmatprep.subr.mxu0 0.0
  %3240 = vmatpush1.msra.mxu0 %v102
  %3241 = vmatprep.subr.mxu0 0.0
  %3242 = vmatpush1.msra.mxu0 %v101
  %3243 = vmatprep.subr.mxu0 0.0
  %3244 = vmatpush1.msra.mxu0 %v100
  %3245 = vmatprep.subr.mxu0 0.0
  %3246 = vmatpush1.msra.mxu0 %v99
  %3247 = vmatprep.subr.mxu0 0.0
  %3248 = vmatpush1.msra.mxu0 %v98
  %3249 = vmatprep.subr.mxu0 0.0
  %3250 = vmatpush1.msra.mxu0 %v97
  %3251 = vmatprep.subr.mxu0 0.0
  %3252 = vmatpush1.msra.mxu0 %v96
  %3253 = vmatprep.subr.mxu0 0.0
  %3254 = vmatpush1.msra.mxu0 %v95
  %3255 = vmatprep.subr.mxu0 0.0
  %3256 = vmatpush1.msra.mxu0 %v94
  %3257 = vmatprep.subr.mxu0 0.0
  %3258 = vmatpush1.msra.mxu0 %v93
  %3259 = vmatprep.subr.mxu0 0.0
  %3260 = vmatpush2.msra.mxu0 0.0
  %3261 = vmatprep.subr.mxu0 0.0
  %3262 = vmatpush2.msra.mxu0 0.0
  %3263 = vmatprep.subr.mxu0 0.0
  %3264 = vmatpush2.msra.mxu0 0.0
  %3265 = vmatprep.subr.mxu0 0.0
  %3266 = vmatpush2.msra.mxu0 0.0
  %3267 = vmatprep.subr.mxu0 0.0
  %3268 = vmatpush2.msra.mxu0 0.0
  %3269 = vmatprep.subr.mxu0 0.0
  %3270 = vmatpush2.msra.mxu0 0.0
  %3271 = vmatprep.subr.mxu0 0.0
  %3272 = vmatpush2.msra.mxu0 0.0
  %3273 = vmatprep.subr.mxu0 0.0
  %3274 = vmatpush2.msra.mxu0 0.0
  %3275 = vmatprep.subr.mxu0 0.0
  %3276 = vmatpush2.msra.mxu0 0.0
  %3277 = vmatprep.subr.mxu0 0.0
  %3278 = vmatpush2.msra.mxu0 0.0
  %3279 = vmatprep.subr.mxu0 0.0
  %3280 = vmatpush2.msra.mxu0 0.0
  %3281 = vmatprep.subr.mxu0 0.0
  %3282 = vmatpush2.msra.mxu0 0.0
  %3283 = vmatprep.subr.mxu0 0.0
  %3284 = vmatpush2.msra.mxu0 0.0
  %3285 = vmatprep.subr.mxu0 0.0
  %3286 = vmatpush2.msra.mxu0 0.0
  %3287 = vmatprep.subr.mxu0 0.0
  %3288 = vmatpush2.msra.mxu0 0.0
  %3289 = vmatprep.subr.mxu0 0.0
  %3290 = vmatpush2.msra.mxu0 0.0
  %3291 = vmatprep.mubr.f32.mxu0 0.0
  %3292 = vmatmul.mubr.f32.gmra.mxu0 %v3226
  %v3293 = vpop.f32.mrf.mxu0
  %v3294 = vadd.f32 %v1000, %v3293
  %v3295 = vpop.f32.mrf.mxu0
  %3296 = vdwg.mxu0
  %s3297 = scalar_lea.vmem %s18, 24
  %3298 = vst [vmem:[%s3297] sm:$0xff] %v3294
  %3299 = vmax.xlane.f32.xlu0 %v3294
  %v3300 = vpop.xlane.xlu0 %3299
  %vm3301 = vcmp.ge.f32.partialorder %v3294, %v3300
  %v3302 = vsel %vm3301, %v371, 128.0
  %3303 = vmin.xlane.f32.xlu0 %v3302
  %v3304 = vpop.xlane.xlu0 %3303
  %vm3305 = vcmp.eq.f32.partialorder %v371, %v3304
  %v3306 = vsel %vm3305, 1, 0
  %v3307 = vcvt.s32.f32 %v3306
  %3308 = vmatprep.subr.mxu0 0.0
  %3309 = vmatpush1.msra.mxu0 %v125
  %3310 = vmatprep.subr.mxu0 0.0
  %3311 = vmatpush1.msra.mxu0 %v124
  %3312 = vmatprep.subr.mxu0 0.0
  %3313 = vmatpush1.msra.mxu0 %v123
  %3314 = vmatprep.subr.mxu0 0.0
  %3315 = vmatpush1.msra.mxu0 %v122
  %3316 = vmatprep.subr.mxu0 0.0
  %3317 = vmatpush1.msra.mxu0 %v121
  %3318 = vmatprep.subr.mxu0 0.0
  %3319 = vmatpush1.msra.mxu0 %v120
  %3320 = vmatprep.subr.mxu0 0.0
  %3321 = vmatpush1.msra.mxu0 %v119
  %3322 = vmatprep.subr.mxu0 0.0
  %3323 = vmatpush1.msra.mxu0 %v118
  %3324 = vmatprep.subr.mxu0 0.0
  %3325 = vmatpush1.msra.mxu0 %v117
  %3326 = vmatprep.subr.mxu0 0.0
  %3327 = vmatpush1.msra.mxu0 %v116
  %3328 = vmatprep.subr.mxu0 0.0
  %3329 = vmatpush1.msra.mxu0 %v115
  %3330 = vmatprep.subr.mxu0 0.0
  %3331 = vmatpush1.msra.mxu0 %v114
  %3332 = vmatprep.subr.mxu0 0.0
  %3333 = vmatpush1.msra.mxu0 %v113
  %3334 = vmatprep.subr.mxu0 0.0
  %3335 = vmatpush1.msra.mxu0 %v112
  %3336 = vmatprep.subr.mxu0 0.0
  %3337 = vmatpush1.msra.mxu0 %v111
  %3338 = vmatprep.subr.mxu0 0.0
  %3339 = vmatpush1.msra.mxu0 %v110
  %3340 = vmatprep.subr.mxu0 0.0
  %3341 = vmatpush2.msra.mxu0 0.0
  %3342 = vmatprep.subr.mxu0 0.0
  %3343 = vmatpush2.msra.mxu0 0.0
  %3344 = vmatprep.subr.mxu0 0.0
  %3345 = vmatpush2.msra.mxu0 0.0
  %3346 = vmatprep.subr.mxu0 0.0
  %3347 = vmatpush2.msra.mxu0 0.0
  %3348 = vmatprep.subr.mxu0 0.0
  %3349 = vmatpush2.msra.mxu0 0.0
  %3350 = vmatprep.subr.mxu0 0.0
  %3351 = vmatpush2.msra.mxu0 0.0
  %3352 = vmatprep.subr.mxu0 0.0
  %3353 = vmatpush2.msra.mxu0 0.0
  %3354 = vmatprep.subr.mxu0 0.0
  %3355 = vmatpush2.msra.mxu0 0.0
  %3356 = vmatprep.subr.mxu0 0.0
  %3357 = vmatpush2.msra.mxu0 0.0
  %3358 = vmatprep.subr.mxu0 0.0
  %3359 = vmatpush2.msra.mxu0 0.0
  %3360 = vmatprep.subr.mxu0 0.0
  %3361 = vmatpush2.msra.mxu0 0.0
  %3362 = vmatprep.subr.mxu0 0.0
  %3363 = vmatpush2.msra.mxu0 0.0
  %3364 = vmatprep.subr.mxu0 0.0
  %3365 = vmatpush2.msra.mxu0 0.0
  %3366 = vmatprep.subr.mxu0 0.0
  %3367 = vmatpush2.msra.mxu0 0.0
  %3368 = vmatprep.subr.mxu0 0.0
  %3369 = vmatpush2.msra.mxu0 0.0
  %3370 = vmatprep.subr.mxu0 0.0
  %3371 = vmatpush2.msra.mxu0 0.0
  %3372 = vmatprep.mubr.f32.mxu0 0.0
  %3373 = vmatmul.mubr.f32.gmra.mxu0 %v3307
  %v3374 = vpop.f32.mrf.mxu0
  %v3375 = vadd.f32 0.0, %v3374
  %v3376 = vpop.f32.mrf.mxu0
  %3377 = vdwg.mxu0
  %v3378 = vsel %vm132, %v3219, 0
  %3380 = vmatprep.subr.mxu0 0.0
  %3381 = vmatpush1.msra.mxu0 0.0
  %3382 = vmatprep.subr.mxu0 0.0
  %3383 = vmatpush1.msra.mxu0 0.0
  %3384 = vmatprep.subr.mxu0 0.0
  %3385 = vmatpush1.msra.mxu0 0.0
  %3386 = vmatprep.subr.mxu0 0.0
  %3387 = vmatpush1.msra.mxu0 0.0
  %3388 = vmatprep.subr.mxu0 0.0
  %3389 = vmatpush1.msra.mxu0 0.0
  %3390 = vmatprep.subr.mxu0 0.0
  %3391 = vmatpush1.msra.mxu0 0.0
  %3392 = vmatprep.subr.mxu0 0.0
  %3393 = vmatpush1.msra.mxu0 0.0
  %3394 = vmatprep.subr.mxu0 0.0
  %3395 = vmatpush1.msra.mxu0 0.0
  %3396 = vmatprep.subr.mxu0 0.0
  %3397 = vmatpush1.msra.mxu0 0.0
  %3398 = vmatprep.subr.mxu0 0.0
  %3399 = vmatpush1.msra.mxu0 0.0
  %3400 = vmatprep.subr.mxu0 0.0
  %3401 = vmatpush1.msra.mxu0 0.0
  %3402 = vmatprep.subr.mxu0 0.0
  %3403 = vmatpush1.msra.mxu0 0.0
  %3404 = vmatprep.subr.mxu0 0.0
  %3405 = vmatpush1.msra.mxu0 %v74
  %3406 = vmatprep.subr.mxu0 0.0
  %3407 = vmatpush1.msra.mxu0 %v73
  %3408 = vmatprep.subr.mxu0 0.0
  %3409 = vmatpush1.msra.mxu0 %v72
  %3410 = vmatprep.subr.mxu0 0.0
  %3411 = vmatpush1.msra.mxu0 %v71
  %3412 = vmatprep.subr.mxu0 0.0
  %3413 = vmatpush2.msra.mxu0 0.0
  %3414 = vmatprep.subr.mxu0 0.0
  %3415 = vmatpush2.msra.mxu0 0.0
  %3416 = vmatprep.subr.mxu0 0.0
  %3417 = vmatpush2.msra.mxu0 0.0
  %3418 = vmatprep.subr.mxu0 0.0
  %3419 = vmatpush2.msra.mxu0 0.0
  %3420 = vmatprep.subr.mxu0 0.0
  %3421 = vmatpush2.msra.mxu0 0.0
  %3422 = vmatprep.subr.mxu0 0.0
  %3423 = vmatpush2.msra.mxu0 0.0
  %3424 = vmatprep.subr.mxu0 0.0
  %3425 = vmatpush2.msra.mxu0 0.0
  %3426 = vmatprep.subr.mxu0 0.0
  %3427 = vmatpush2.msra.mxu0 0.0
  %3428 = vmatprep.subr.mxu0 0.0
  %3429 = vmatpush2.msra.mxu0 0.0
  %3430 = vmatprep.subr.mxu0 0.0
  %3431 = vmatpush2.msra.mxu0 0.0
  %3432 = vmatprep.subr.mxu0 0.0
  %3433 = vmatpush2.msra.mxu0 0.0
  %3434 = vmatprep.subr.mxu0 0.0
  %3435 = vmatpush2.msra.mxu0 0.0
  %3436 = vmatprep.subr.mxu0 0.0
  %3437 = vmatpush2.msra.mxu0 0.0
  %3438 = vmatprep.subr.mxu0 0.0
  %3439 = vmatpush2.msra.mxu0 0.0
  %3440 = vmatprep.subr.mxu0 0.0
  %3441 = vmatpush2.msra.mxu0 0.0
  %3442 = vmatprep.subr.mxu0 0.0
  %3443 = vmatpush2.msra.mxu0 0.0
  %3444 = vmatprep.mubr.f32.mxu0 0.0
  %3445 = vmatmul.mubr.f32.gmra.mxu0 %v3378
  %v3446 = vpop.f32.mrf.mxu0
  %v3447 = vadd.f32 0.0, %v3446
  %v3448 = vpop.f32.mrf.mxu0
  %3449 = vdwg.mxu0
  %v3451 = vcombine.high %v3447, %v3447
  %v3453 = vunpack.c.l.s4 1966171168
  %v3454 = vunpack.c.0.s8 %v3453
  %v3455 = vlaneseq
  %v3456 = vshrl.u32 %v3455, 7
  %v3457 = vsub.s32 %v3454, %v3456
  %v3458 = vrot.slane %v3447, %v3457
  %v3460 = vunpack.c.l.s4 1966171168
  %v3461 = vunpack.c.0.s8 %v3460
  %v3462 = vlaneseq
  %v3463 = vshrl.u32 %v3462, 7
  %v3464 = vsub.s32 %v3461, %v3463
  %v3465 = vrot.slane %v3451, %v3464
  %v3466 = vcombine.high %v3458, %v3458
  %v3467 = vcombine.high %v3465, %v3465
  %v3469 = vunpack.c.l.s4 1966171168
  %v3470 = vunpack.c.0.s8 %v3469
  %v3471 = vlaneseq
  %v3472 = vshrl.u32 %v3471, 7
  %v3473 = vsub.s32 %v3470, %v3472
  %v3474 = vrot.slane %v3458, %v3473
  %v3476 = vunpack.c.l.s4 1966171168
  %v3477 = vunpack.c.0.s8 %v3476
  %v3478 = vlaneseq
  %v3479 = vshrl.u32 %v3478, 7
  %v3480 = vsub.s32 %v3477, %v3479
  %v3481 = vrot.slane %v3465, %v3480
  %v3483 = vunpack.c.l.s4 1966171168
  %v3484 = vunpack.c.0.s8 %v3483
  %v3485 = vlaneseq
  %v3486 = vshrl.u32 %v3485, 7
  %v3487 = vsub.s32 %v3484, %v3486
  %v3488 = vrot.slane %v3466, %v3487
  %v3490 = vunpack.c.l.s4 1966171168
  %v3491 = vunpack.c.0.s8 %v3490
  %v3492 = vlaneseq
  %v3493 = vshrl.u32 %v3492, 7
  %v3494 = vsub.s32 %v3491, %v3493
  %v3495 = vrot.slane %v3467, %v3494
  %v3496 = vcombine.high %v3474, %v3474
  %v3497 = vcombine.high %v3481, %v3481
  %v3498 = vcombine.high %v3488, %v3488
  %v3499 = vcombine.high %v3495, %v3495
  %v3500 = vlaneseq
  %v3501 = vshrl.u32 %v3500, 7
  %v3502 = vsub.s32 0, %v3501
  %v3503 = vrot.slane %v3474, %v3502
  %v3504 = vlaneseq
  %v3505 = vshrl.u32 %v3504, 7
  %v3506 = vsub.s32 0, %v3505
  %v3507 = vrot.slane %v3488, %v3506
  %v3508 = vlaneseq
  %v3509 = vshrl.u32 %v3508, 7
  %v3510 = vsub.s32 0, %v3509
  %v3511 = vrot.slane %v3496, %v3510
  %v3512 = vlaneseq
  %v3513 = vshrl.u32 %v3512, 7
  %v3514 = vsub.s32 0, %v3513
  %v3515 = vrot.slane %v3498, %v3514
  %v3516 = vlaneseq
  %v3517 = vshrl.u32 %v3516, 7
  %v3518 = vsub.s32 0, %v3517
  %v3519 = vrot.slane %v3481, %v3518
  %v3520 = vlaneseq
  %v3521 = vshrl.u32 %v3520, 7
  %v3522 = vsub.s32 0, %v3521
  %v3523 = vrot.slane %v3495, %v3522
  %v3524 = vlaneseq
  %v3525 = vshrl.u32 %v3524, 7
  %v3526 = vsub.s32 0, %v3525
  %v3527 = vrot.slane %v3497, %v3526
  %v3528 = vlaneseq
  %v3529 = vshrl.u32 %v3528, 7
  %v3530 = vsub.s32 0, %v3529
  %v3531 = vrot.slane %v3499, %v3530
  %v3540 = vadd.f32 %v3503, %v330
  %v3541 = vadd.f32 %v3507, %v335
  %v3542 = vadd.f32 %v3511, %v340
  %v3543 = vadd.f32 %v3515, %v345
  %v3544 = vadd.f32 %v3519, %v350
  %v3545 = vadd.f32 %v3523, %v355
  %v3546 = vadd.f32 %v3527, %v360
  %v3547 = vadd.f32 %v3531, %v365
  %v3548 = vtanh.pop %v3540
  %v3549 = vtanh.pop %v3541
  %v3550 = vtanh.pop %v3542
  %v3551 = vtanh.pop %v3543
  %v3552 = vtanh.pop %v3544
  %v3553 = vtanh.pop %v3545
  %v3554 = vtanh.pop %v3546
  %v3555 = vtanh.pop %v3547
  %v3556 = vmul.f32 %v3548, %v555
  %v3557 = vmul.f32 %v3549, %v555
  %v3558 = vmul.f32 %v3550, %v555
  %v3559 = vmul.f32 %v3551, %v555
  %v3560 = vmul.f32 %v3552, %v555
  %v3561 = vmul.f32 %v3553, %v555
  %v3562 = vmul.f32 %v3554, %v555
  %v3563 = vmul.f32 %v3555, %v555
  %v3564 = vsel %vm132, %v3556, 0.0
  %3565 = vadd.xlane.f32.xlu0 %v3564
  %v3566 = vpop.xlane.xlu0 %3565
  %v3567 = vsel %vm132, %v3557, 0.0
  %3568 = vadd.xlane.f32.xlu0 %v3567
  %v3569 = vpop.xlane.xlu0 %3568
  %v3570 = vsel %vm132, %v3558, 0.0
  %3571 = vadd.xlane.f32.xlu0 %v3570
  %v3572 = vpop.xlane.xlu0 %3571
  %v3573 = vsel %vm132, %v3559, 0.0
  %3574 = vadd.xlane.f32.xlu0 %v3573
  %v3575 = vpop.xlane.xlu0 %3574
  %v3576 = vsel %vm132, %v3560, 0.0
  %3577 = vadd.xlane.f32.xlu0 %v3576
  %v3578 = vpop.xlane.xlu0 %3577
  %v3579 = vsel %vm132, %v3561, 0.0
  %3580 = vadd.xlane.f32.xlu0 %v3579
  %v3581 = vpop.xlane.xlu0 %3580
  %v3582 = vsel %vm132, %v3562, 0.0
  %3583 = vadd.xlane.f32.xlu0 %v3582
  %v3584 = vpop.xlane.xlu0 %3583
  %v3585 = vsel %vm132, %v3563, 0.0
  %3586 = vadd.xlane.f32.xlu0 %v3585
  %v3587 = vpop.xlane.xlu0 %3586
  %v3596 = vlaneseq
  %v3597 = vshrl.u32 %v3596, 7
  %v3598 = vsub.s32 %v370, %v3597
  %v3599 = vrot.slane %v3566, %v3598
  %v3600 = vlaneseq
  %v3601 = vshrl.u32 %v3600, 7
  %v3602 = vsub.s32 %v370, %v3601
  %v3603 = vrot.slane %v3569, %v3602
  %v3604 = vlaneseq
  %v3605 = vshrl.u32 %v3604, 7
  %v3606 = vsub.s32 %v370, %v3605
  %v3607 = vrot.slane %v3572, %v3606
  %v3608 = vlaneseq
  %v3609 = vshrl.u32 %v3608, 7
  %v3610 = vsub.s32 %v370, %v3609
  %v3611 = vrot.slane %v3575, %v3610
  %v3612 = vlaneseq
  %v3613 = vshrl.u32 %v3612, 7
  %v3614 = vsub.s32 %v370, %v3613
  %v3615 = vrot.slane %v3578, %v3614
  %v3616 = vlaneseq
  %v3617 = vshrl.u32 %v3616, 7
  %v3618 = vsub.s32 %v370, %v3617
  %v3619 = vrot.slane %v3581, %v3618
  %v3620 = vlaneseq
  %v3621 = vshrl.u32 %v3620, 7
  %v3622 = vsub.s32 %v370, %v3621
  %v3623 = vrot.slane %v3584, %v3622
  %v3624 = vlaneseq
  %v3625 = vshrl.u32 %v3624, 7
  %v3626 = vsub.s32 %v370, %v3625
  %v3627 = vrot.slane %v3587, %v3626
  %v3628 = vsel %vm630, %v3603, %v3599
  %v3629 = vsel %vm632, %v3607, %v3628
  %v3630 = vsel %vm634, %v3611, %v3629
  %v3631 = vsel %vm636, %v3615, %v3630
  %v3632 = vsel %vm638, %v3619, %v3631
  %v3633 = vsel %vm640, %v3623, %v3632
  %v3634 = vsel %vm642, %v3627, %v3633
  %v3636 = vsel %vm589, -1000000.0, %v3634
  %v3637 = vsel %vm646, %v3636, -inf
  %3638 = vmax.xlane.f32.xlu0 %v3637
  %v3639 = vpop.xlane.xlu0 %3638
  %v3640 = vsub.f32 %v3636, %v3639
  %v3641 = vmul.f32 %v3640, 1.442695
  %v3642 = vpow.pop %v3641
  %v3643 = vsel %vm646, %v3642, 0.0
  %3644 = vadd.xlane.f32.xlu0 %v3643
  %v3645 = vpop.xlane.xlu0 %3644
  %v3646 = vrcp.pop %v3645
  %v3647 = vmul.f32 %v3642, %v3646
  %s3648 = scalar_lea.vmem %s19, 32
  %3649 = vst.msk [vmem:[%s3648] sm:$0xff] %vm646, %v3647
  %v3650 = vlaneseq
  %v3651 = vshrl.u32 %v3650, 7
  %v3652 = vsub.s32 0, %v3651
  %v3653 = vrot.slane %v3647, %v3652
  %3655 = vbcast.lane.b32.xlu0 %v3653, 256
  %v3656 = vpop.permute.xlu0 %3655
  %v3657 = vlaneseq
  %v3658 = vshrl.u32 %v3657, 7
  %v3659 = vsub.s32 1, %v3658
  %v3660 = vrot.slane %v3647, %v3659
  %3662 = vbcast.lane.b32.xlu0 %v3660, 256
  %v3663 = vpop.permute.xlu0 %3662
  %v3664 = vlaneseq
  %v3665 = vshrl.u32 %v3664, 7
  %v3666 = vsub.s32 2, %v3665
  %v3667 = vrot.slane %v3647, %v3666
  %3669 = vbcast.lane.b32.xlu0 %v3667, 256
  %v3670 = vpop.permute.xlu0 %3669
  %v3671 = vlaneseq
  %v3672 = vshrl.u32 %v3671, 7
  %v3673 = vsub.s32 3, %v3672
  %v3674 = vrot.slane %v3647, %v3673
  %3676 = vbcast.lane.b32.xlu0 %v3674, 256
  %v3677 = vpop.permute.xlu0 %3676
  %v3678 = vlaneseq
  %v3679 = vshrl.u32 %v3678, 7
  %v3680 = vsub.s32 4, %v3679
  %v3681 = vrot.slane %v3647, %v3680
  %3683 = vbcast.lane.b32.xlu0 %v3681, 256
  %v3684 = vpop.permute.xlu0 %3683
  %v3685 = vlaneseq
  %v3686 = vshrl.u32 %v3685, 7
  %v3687 = vsub.s32 5, %v3686
  %v3688 = vrot.slane %v3647, %v3687
  %3690 = vbcast.lane.b32.xlu0 %v3688, 256
  %v3691 = vpop.permute.xlu0 %3690
  %v3692 = vlaneseq
  %v3693 = vshrl.u32 %v3692, 7
  %v3694 = vsub.s32 6, %v3693
  %v3695 = vrot.slane %v3647, %v3694
  %3697 = vbcast.lane.b32.xlu0 %v3695, 256
  %v3698 = vpop.permute.xlu0 %3697
  %v3699 = vlaneseq
  %v3700 = vshrl.u32 %v3699, 7
  %v3701 = vsub.s32 7, %v3700
  %v3702 = vrot.slane %v3647, %v3701
  %3704 = vbcast.lane.b32.xlu0 %v3702, 256
  %v3705 = vpop.permute.xlu0 %3704
  %v3706 = vmul.f32 %v3656, %v61
  %v3707 = vmul.f32 %v3663, %v62
  %v3708 = vmul.f32 %v3670, %v63
  %v3709 = vmul.f32 %v3677, %v64
  %v3710 = vmul.f32 %v3684, %v65
  %v3711 = vmul.f32 %v3691, %v66
  %v3712 = vmul.f32 %v3698, %v67
  %v3713 = vmul.f32 %v3705, %v68
  %v3714 = vsel %vm149, %v3706, 0.0
  %v3715 = vrot.slane %v3714, 4
  %v3716 = vadd.f32 %v3714, %v3715
  %v3717 = vrot.slane %v3716, 2
  %v3718 = vadd.f32 %v3716, %v3717
  %v3719 = vrot.slane %v3718, 1
  %v3720 = vadd.f32 %v3718, %v3719
  %v3721 = vsel %vm149, %v3707, 0.0
  %v3722 = vrot.slane %v3721, 4
  %v3723 = vadd.f32 %v3721, %v3722
  %v3724 = vrot.slane %v3723, 2
  %v3725 = vadd.f32 %v3723, %v3724
  %v3726 = vrot.slane %v3725, 1
  %v3727 = vadd.f32 %v3725, %v3726
  %v3728 = vsel %vm149, %v3708, 0.0
  %v3729 = vrot.slane %v3728, 4
  %v3730 = vadd.f32 %v3728, %v3729
  %v3731 = vrot.slane %v3730, 2
  %v3732 = vadd.f32 %v3730, %v3731
  %v3733 = vrot.slane %v3732, 1
  %v3734 = vadd.f32 %v3732, %v3733
  %v3735 = vsel %vm149, %v3709, 0.0
  %v3736 = vrot.slane %v3735, 4
  %v3737 = vadd.f32 %v3735, %v3736
  %v3738 = vrot.slane %v3737, 2
  %v3739 = vadd.f32 %v3737, %v3738
  %v3740 = vrot.slane %v3739, 1
  %v3741 = vadd.f32 %v3739, %v3740
  %v3742 = vsel %vm149, %v3710, 0.0
  %v3743 = vrot.slane %v3742, 4
  %v3744 = vadd.f32 %v3742, %v3743
  %v3745 = vrot.slane %v3744, 2
  %v3746 = vadd.f32 %v3744, %v3745
  %v3747 = vrot.slane %v3746, 1
  %v3748 = vadd.f32 %v3746, %v3747
  %v3749 = vsel %vm149, %v3711, 0.0
  %v3750 = vrot.slane %v3749, 4
  %v3751 = vadd.f32 %v3749, %v3750
  %v3752 = vrot.slane %v3751, 2
  %v3753 = vadd.f32 %v3751, %v3752
  %v3754 = vrot.slane %v3753, 1
  %v3755 = vadd.f32 %v3753, %v3754
  %v3756 = vsel %vm149, %v3712, 0.0
  %v3757 = vrot.slane %v3756, 4
  %v3758 = vadd.f32 %v3756, %v3757
  %v3759 = vrot.slane %v3758, 2
  %v3760 = vadd.f32 %v3758, %v3759
  %v3761 = vrot.slane %v3760, 1
  %v3762 = vadd.f32 %v3760, %v3761
  %v3763 = vsel %vm149, %v3713, 0.0
  %v3764 = vrot.slane %v3763, 4
  %v3765 = vadd.f32 %v3763, %v3764
  %v3766 = vrot.slane %v3765, 2
  %v3767 = vadd.f32 %v3765, %v3766
  %v3768 = vrot.slane %v3767, 1
  %v3769 = vadd.f32 %v3767, %v3768
  %v3778 = vsel %vm630, %v3727, %v3720
  %v3779 = vsel %vm632, %v3734, %v3778
  %v3780 = vsel %vm634, %v3741, %v3779
  %v3781 = vsel %vm636, %v3748, %v3780
  %v3782 = vsel %vm638, %v3755, %v3781
  %v3783 = vsel %vm640, %v3762, %v3782
  %v3784 = vsel %vm642, %v3769, %v3783
  %3785 = vrot.lane.b32.xlu0 %v3784, 32
  %v3786 = vpop.permute.xlu0 %3785
  %v3788 = vsel %vm132, %v3375, %v3786
  %v3790 = vsel %vm804, %v3788, 0
  %3792 = vmatprep.subr.mxu0 0.0
  %3793 = vmatpush1.msra.mxu0 0.0
  %3794 = vmatprep.subr.mxu0 0.0
  %3795 = vmatpush1.msra.mxu0 0.0
  %3796 = vmatprep.subr.mxu0 0.0
  %3797 = vmatpush1.msra.mxu0 0.0
  %3798 = vmatprep.subr.mxu0 0.0
  %3799 = vmatpush1.msra.mxu0 0.0
  %3800 = vmatprep.subr.mxu0 0.0
  %3801 = vmatpush1.msra.mxu0 %v86
  %3802 = vmatprep.subr.mxu0 0.0
  %3803 = vmatpush1.msra.mxu0 %v85
  %3804 = vmatprep.subr.mxu0 0.0
  %3805 = vmatpush1.msra.mxu0 %v84
  %3806 = vmatprep.subr.mxu0 0.0
  %3807 = vmatpush1.msra.mxu0 %v83
  %3808 = vmatprep.subr.mxu0 0.0
  %3809 = vmatpush1.msra.mxu0 %v82
  %3810 = vmatprep.subr.mxu0 0.0
  %3811 = vmatpush1.msra.mxu0 %v81
  %3812 = vmatprep.subr.mxu0 0.0
  %3813 = vmatpush1.msra.mxu0 %v80
  %3814 = vmatprep.subr.mxu0 0.0
  %3815 = vmatpush1.msra.mxu0 %v79
  %3816 = vmatprep.subr.mxu0 0.0
  %3817 = vmatpush1.msra.mxu0 %v78
  %3818 = vmatprep.subr.mxu0 0.0
  %3819 = vmatpush1.msra.mxu0 %v77
  %3820 = vmatprep.subr.mxu0 0.0
  %3821 = vmatpush1.msra.mxu0 %v76
  %3822 = vmatprep.subr.mxu0 0.0
  %3823 = vmatpush1.msra.mxu0 %v75
  %3824 = vmatprep.subr.mxu0 0.0
  %3825 = vmatpush2.msra.mxu0 0.0
  %3826 = vmatprep.subr.mxu0 0.0
  %3827 = vmatpush2.msra.mxu0 0.0
  %3828 = vmatprep.subr.mxu0 0.0
  %3829 = vmatpush2.msra.mxu0 0.0
  %3830 = vmatprep.subr.mxu0 0.0
  %3831 = vmatpush2.msra.mxu0 0.0
  %3832 = vmatprep.subr.mxu0 0.0
  %3833 = vmatpush2.msra.mxu0 0.0
  %3834 = vmatprep.subr.mxu0 0.0
  %3835 = vmatpush2.msra.mxu0 0.0
  %3836 = vmatprep.subr.mxu0 0.0
  %3837 = vmatpush2.msra.mxu0 0.0
  %3838 = vmatprep.subr.mxu0 0.0
  %3839 = vmatpush2.msra.mxu0 0.0
  %3840 = vmatprep.subr.mxu0 0.0
  %3841 = vmatpush2.msra.mxu0 0.0
  %3842 = vmatprep.subr.mxu0 0.0
  %3843 = vmatpush2.msra.mxu0 0.0
  %3844 = vmatprep.subr.mxu0 0.0
  %3845 = vmatpush2.msra.mxu0 0.0
  %3846 = vmatprep.subr.mxu0 0.0
  %3847 = vmatpush2.msra.mxu0 0.0
  %3848 = vmatprep.subr.mxu0 0.0
  %3849 = vmatpush2.msra.mxu0 0.0
  %3850 = vmatprep.subr.mxu0 0.0
  %3851 = vmatpush2.msra.mxu0 0.0
  %3852 = vmatprep.subr.mxu0 0.0
  %3853 = vmatpush2.msra.mxu0 0.0
  %3854 = vmatprep.subr.mxu0 0.0
  %3855 = vmatpush2.msra.mxu0 0.0
  %3856 = vmatprep.mubr.f32.mxu0 0.0
  %3857 = vmatmul.mubr.f32.gmra.mxu0 %v3790
  %v3858 = vpop.f32.mrf.mxu0
  %v3859 = vadd.f32 %v802, %v3858
  %v3860 = vpop.f32.mrf.mxu0
  %3861 = vdwg.mxu0
  %3862 = vmatprep.subr.mxu0 0.0
  %3863 = vmatpush1.msra.mxu0 0.0
  %3864 = vmatprep.subr.mxu0 0.0
  %3865 = vmatpush1.msra.mxu0 0.0
  %3866 = vmatprep.subr.mxu0 0.0
  %3867 = vmatpush1.msra.mxu0 0.0
  %3868 = vmatprep.subr.mxu0 0.0
  %3869 = vmatpush1.msra.mxu0 0.0
  %3870 = vmatprep.subr.mxu0 0.0
  %3871 = vmatpush1.msra.mxu0 0.0
  %3872 = vmatprep.subr.mxu0 0.0
  %3873 = vmatpush1.msra.mxu0 0.0
  %3874 = vmatprep.subr.mxu0 0.0
  %3875 = vmatpush1.msra.mxu0 0.0
  %3876 = vmatprep.subr.mxu0 0.0
  %3877 = vmatpush1.msra.mxu0 0.0
  %3878 = vmatprep.subr.mxu0 0.0
  %3879 = vmatpush1.msra.mxu0 0.0
  %3880 = vmatprep.subr.mxu0 0.0
  %3881 = vmatpush1.msra.mxu0 0.0
  %3882 = vmatprep.subr.mxu0 0.0
  %3883 = vmatpush1.msra.mxu0 0.0
  %3884 = vmatprep.subr.mxu0 0.0
  %3885 = vmatpush1.msra.mxu0 0.0
  %3886 = vmatprep.subr.mxu0 0.0
  %3887 = vmatpush1.msra.mxu0 %v90
  %3888 = vmatprep.subr.mxu0 0.0
  %3889 = vmatpush1.msra.mxu0 %v89
  %3890 = vmatprep.subr.mxu0 0.0
  %3891 = vmatpush1.msra.mxu0 %v88
  %3892 = vmatprep.subr.mxu0 0.0
  %3893 = vmatpush1.msra.mxu0 %v87
  %3894 = vmatprep.subr.mxu0 0.0
  %3895 = vmatpush2.msra.mxu0 0.0
  %3896 = vmatprep.subr.mxu0 0.0
  %3897 = vmatpush2.msra.mxu0 0.0
  %3898 = vmatprep.subr.mxu0 0.0
  %3899 = vmatpush2.msra.mxu0 0.0
  %3900 = vmatprep.subr.mxu0 0.0
  %3901 = vmatpush2.msra.mxu0 0.0
  %3902 = vmatprep.subr.mxu0 0.0
  %3903 = vmatpush2.msra.mxu0 0.0
  %3904 = vmatprep.subr.mxu0 0.0
  %3905 = vmatpush2.msra.mxu0 0.0
  %3906 = vmatprep.subr.mxu0 0.0
  %3907 = vmatpush2.msra.mxu0 0.0
  %3908 = vmatprep.subr.mxu0 0.0
  %3909 = vmatpush2.msra.mxu0 0.0
  %3910 = vmatprep.subr.mxu0 0.0
  %3911 = vmatpush2.msra.mxu0 0.0
  %3912 = vmatprep.subr.mxu0 0.0
  %3913 = vmatpush2.msra.mxu0 0.0
  %3914 = vmatprep.subr.mxu0 0.0
  %3915 = vmatpush2.msra.mxu0 0.0
  %3916 = vmatprep.subr.mxu0 0.0
  %3917 = vmatpush2.msra.mxu0 0.0
  %3918 = vmatprep.subr.mxu0 0.0
  %3919 = vmatpush2.msra.mxu0 0.0
  %3920 = vmatprep.subr.mxu0 0.0
  %3921 = vmatpush2.msra.mxu0 0.0
  %3922 = vmatprep.subr.mxu0 0.0
  %3923 = vmatpush2.msra.mxu0 0.0
  %3924 = vmatprep.subr.mxu0 0.0
  %3925 = vmatpush2.msra.mxu0 0.0
  %3926 = vmatprep.mubr.f32.mxu0 0.0
  %3927 = vmatmul.mubr.f32.gmra.mxu0 %v3378
  %v3928 = vpop.f32.mrf.mxu0
  %v3929 = vadd.f32 0.0, %v3928
  %v3930 = vpop.f32.mrf.mxu0
  %3931 = vdwg.mxu0
  %v3932 = vadd.f32 %v3859, %v3929
  %v3933 = vxor.u32 %v3932, 2147483648
  %v3934 = vmul.f32 %v3933, 1.442695
  %v3935 = vpow.pop %v3934
  %v3936 = vadd.f32 %v3935, 1.0
  %v3937 = vrcp.pop %v3936
  %v3938 = vmul.f32 1.0, %v3937
  %v3939 = vadd.f32 %v3929, %v961
  %3941 = vrot.lane.b32.xlu0 %v3939, 64
  %v3942 = vpop.permute.xlu0 %3941
  %v3944 = vmul.f32 %v3938, %v3942
  %3946 = vrot.lane.b32.xlu0 %v3944, 64
  %v3947 = vpop.permute.xlu0 %3946
  %v3949 = vadd.f32 %v3859, %v3947
  %v3950 = vtanh.pop %v3949
  %v3951 = vsub.f32 1.0, %v3938
  %3953 = vrot.lane.b32.xlu0 %v3950, 96
  %v3954 = vpop.permute.xlu0 %3953
  %v3956 = vmul.f32 %v3951, %v3954
  %v3957 = vmul.f32 %v3938, %v3216
  %v3958 = vadd.f32 %v3956, %v3957
  %3960 = vrot.lane.b32.xlu0 %v3958, 96
  %v3961 = vpop.permute.xlu0 %3960
  %3964 = vrot.lane.b32.xlu0 %v3375, 96
  %v3965 = vpop.permute.xlu0 %3964
  %v3967 = vsel %vm132, %v3961, %v3786
  %v3968 = vsel %vm804, %v3967, %v3965
  %3969 = vmatprep.subr.mxu0 0.0
  %3970 = vmatpush1.msra.mxu0 %v108
  %3971 = vmatprep.subr.mxu0 0.0
  %3972 = vmatpush1.msra.mxu0 %v107
  %3973 = vmatprep.subr.mxu0 0.0
  %3974 = vmatpush1.msra.mxu0 %v106
  %3975 = vmatprep.subr.mxu0 0.0
  %3976 = vmatpush1.msra.mxu0 %v105
  %3977 = vmatprep.subr.mxu0 0.0
  %3978 = vmatpush1.msra.mxu0 %v104
  %3979 = vmatprep.subr.mxu0 0.0
  %3980 = vmatpush1.msra.mxu0 %v103
  %3981 = vmatprep.subr.mxu0 0.0
  %3982 = vmatpush1.msra.mxu0 %v102
  %3983 = vmatprep.subr.mxu0 0.0
  %3984 = vmatpush1.msra.mxu0 %v101
  %3985 = vmatprep.subr.mxu0 0.0
  %3986 = vmatpush1.msra.mxu0 %v100
  %3987 = vmatprep.subr.mxu0 0.0
  %3988 = vmatpush1.msra.mxu0 %v99
  %3989 = vmatprep.subr.mxu0 0.0
  %3990 = vmatpush1.msra.mxu0 %v98
  %3991 = vmatprep.subr.mxu0 0.0
  %3992 = vmatpush1.msra.mxu0 %v97
  %3993 = vmatprep.subr.mxu0 0.0
  %3994 = vmatpush1.msra.mxu0 %v96
  %3995 = vmatprep.subr.mxu0 0.0
  %3996 = vmatpush1.msra.mxu0 %v95
  %3997 = vmatprep.subr.mxu0 0.0
  %3998 = vmatpush1.msra.mxu0 %v94
  %3999 = vmatprep.subr.mxu0 0.0
  %4000 = vmatpush1.msra.mxu0 %v93
  %4001 = vmatprep.subr.mxu0 0.0
  %4002 = vmatpush2.msra.mxu0 0.0
  %4003 = vmatprep.subr.mxu0 0.0
  %4004 = vmatpush2.msra.mxu0 0.0
  %4005 = vmatprep.subr.mxu0 0.0
  %4006 = vmatpush2.msra.mxu0 0.0
  %4007 = vmatprep.subr.mxu0 0.0
  %4008 = vmatpush2.msra.mxu0 0.0
  %4009 = vmatprep.subr.mxu0 0.0
  %4010 = vmatpush2.msra.mxu0 0.0
  %4011 = vmatprep.subr.mxu0 0.0
  %4012 = vmatpush2.msra.mxu0 0.0
  %4013 = vmatprep.subr.mxu0 0.0
  %4014 = vmatpush2.msra.mxu0 0.0
  %4015 = vmatprep.subr.mxu0 0.0
  %4016 = vmatpush2.msra.mxu0 0.0
  %4017 = vmatprep.subr.mxu0 0.0
  %4018 = vmatpush2.msra.mxu0 0.0
  %4019 = vmatprep.subr.mxu0 0.0
  %4020 = vmatpush2.msra.mxu0 0.0
  %4021 = vmatprep.subr.mxu0 0.0
  %4022 = vmatpush2.msra.mxu0 0.0
  %4023 = vmatprep.subr.mxu0 0.0
  %4024 = vmatpush2.msra.mxu0 0.0
  %4025 = vmatprep.subr.mxu0 0.0
  %4026 = vmatpush2.msra.mxu0 0.0
  %4027 = vmatprep.subr.mxu0 0.0
  %4028 = vmatpush2.msra.mxu0 0.0
  %4029 = vmatprep.subr.mxu0 0.0
  %4030 = vmatpush2.msra.mxu0 0.0
  %4031 = vmatprep.subr.mxu0 0.0
  %4032 = vmatpush2.msra.mxu0 0.0
  %4033 = vmatprep.mubr.f32.mxu0 0.0
  %4034 = vmatmul.mubr.f32.gmra.mxu0 %v3968
  %v4035 = vpop.f32.mrf.mxu0
  %v4036 = vadd.f32 %v1000, %v4035
  %v4037 = vpop.f32.mrf.mxu0
  %4038 = vdwg.mxu0
  %s4039 = scalar_lea.vmem %s18, 32
  %4040 = vst [vmem:[%s4039] sm:$0xff] %v4036
  // Predicated region
  $region74: #{seq2seq_forward.3} parent=0 // pred_check
    _
  $region75: #{seq2seq_forward.3} parent=0 // pred_check_branch
    %4042 = sbr.rel (0) target = $region77
  $region76: #{seq2seq_forward.3} parent=0 // pred_region
    _
  $region77: #{seq2seq_forward.3} parent=0 // pred_fallthru
    _
  // Predicated region
  $region78: #{seq2seq_forward.3} parent=0 // pred_check
    _
  $region79: #{seq2seq_forward.3} parent=0 // pred_check_branch
    %4044 = sbr.rel (0) target = $region81
  $region80: #{seq2seq_forward.3} parent=0 // pred_region
    _
  $region81: #{seq2seq_forward.3} parent=0 // pred_fallthru
    _
  // Predicated region
  $region82: #{seq2seq_forward.3} parent=0 // pred_check
    _
  $region83: #{seq2seq_forward.3} parent=0 // pred_check_branch
    %4046 = sbr.rel (0) target = $region85
  $region84: #{seq2seq_forward.3} parent=0 // pred_region
    _
  $region85: #{seq2seq_forward.3} parent=0 // pred_fallthru
    _
  // Predicated region
  $region86: #{seq2seq_forward.3} parent=0 // pred_check
    _
  $region87: #{seq2seq_forward.3} parent=0 // pred_check_branch
    %4048 = sbr.rel (0) target = $region89
  $region88: #{seq2seq_forward.3} parent=0 // pred_region
    _
  $region89: #{seq2seq_forward.3} parent=0 // pred_fallthru
    _

</llo_original>
